<compile_context>
chip_gen: v7x
topology: tpu7x:2x2x1
jax: 0.10.0
libtpu: 0.0.40
codegen_flags: <defaults>
</compile_context>

<pallas_src>
import math
import jax
import jax.numpy as jnp
from jax import lax
from jax.experimental import pallas as pl
from jax.experimental.pallas import tpu as pltpu


# ----------------------------------------------------------------------------
# Fused kernel: n_layers LSTM layers (+ optional final Linear) over one block
# of TB consecutive timesteps.
# ----------------------------------------------------------------------------
def _make_group_kernel(n_layers, has_proj):
    def kernel(*refs):
        x_ref = refs[0]                                # (TB, Bp, Din)
        lrefs = refs[1:1 + 3 * n_layers]               # per layer: w_ih, w_hh, b
        pos = 1 + 3 * n_layers
        if has_proj:
            pw_ref, pb_ref = refs[pos], refs[pos + 1]  # (Hp, Op), (1, Op)
            pos += 2
        o_ref = refs[pos]                              # (TB, Bp, Op|Hp)
        h_st, c_st, act, gx = refs[pos + 1:pos + 5]    # scratch

        tb = pl.program_id(0)

        @pl.when(tb == 0)
        def _init():
            h_st[...] = jnp.zeros_like(h_st)
            c_st[...] = jnp.zeros_like(c_st)

        TB, Bp, Din = x_ref.shape
        Hp = h_st.shape[-1]

        # Bounded unroll: keeps the MXU back-to-back without blowing the
        # 64-vreg file at large Bp (perf review: avoid full static unroll).
        if TB % 8 == 0:
            unroll = 8
        elif TB % 4 == 0:
            unroll = 4
        elif TB % 2 == 0:
            unroll = 2
        else:
            unroll = 1

        for l in range(n_layers):
            w_ih = lrefs[3 * l][...]                   # (Din_l, 4Hp) compute dtype
            w_hh = lrefs[3 * l + 1][...]               # (Hp,   4Hp) compute dtype
            bias = lrefs[3 * l + 2][...]               # (1,    4Hp) f32

            # Hoisted input projection: ONE big MXU pass for the whole block.
            if l == 0:
                inp2d = x_ref[...].reshape(TB * Bp, Din).astype(w_ih.dtype)
            else:
                inp2d = act[...].reshape(TB * Bp, Hp).astype(w_ih.dtype)
            gx[...] = (jnp.dot(inp2d, w_ih, preferred_element_type=jnp.float32)
                       + bias).reshape(TB, Bp, 4 * Hp)

            last = (l == n_layers - 1)
            store_ref = o_ref if (last and not has_proj) else act

            def step(t, carry, w_hh=w_hh, store_ref=store_ref):
                h, c = carry                           # (Bp, Hp) f32
                gates = gx[t] + jnp.dot(h.astype(w_hh.dtype), w_hh,
                                        preferred_element_type=jnp.float32)
                # Hp is a multiple of 128 -> every gate slice is lane-aligned.
                i_g = jax.nn.sigmoid(gates[:, 0 * Hp:1 * Hp])
                f_g = jax.nn.sigmoid(gates[:, 1 * Hp:2 * Hp])
                g_g = jnp.tanh(gates[:, 2 * Hp:3 * Hp])
                o_g = jax.nn.sigmoid(gates[:, 3 * Hp:4 * Hp])
                c = f_g * c + i_g * g_g
                h = o_g * jnp.tanh(c)
                store_ref[t] = h.astype(store_ref.dtype)
                return (h, c)

            h_f, c_f = lax.fori_loop(0, TB, step, (h_st[l], c_st[l]),
                                     unroll=unroll)
            h_st[l] = h_f
            c_st[l] = c_f

        if has_proj:
            # Final Linear fused into the block epilogue (no extra HBM pass).
            pw = pw_ref[...]
            Op = pw.shape[1]
            h2d = act[...].reshape(TB * Bp, Hp).astype(pw.dtype)
            out = jnp.dot(h2d, pw, preferred_element_type=jnp.float32) + pb_ref[...]
            o_ref[...] = out.reshape(TB, Bp, Op).astype(o_ref.dtype)

    return kernel


# ----------------------------------------------------------------------------
# Wrappers
# ----------------------------------------------------------------------------
def _round_up(x, m):
    return ((x + m - 1) // m) * m


def _weight_spec(shape, single_buffer):
    if single_buffer:
        # Grid-invariant weights are fetched once; single-buffering halves
        # their VMEM footprint (critical on v7x's 64 MiB / v5e's small budget).
        return pl.BlockSpec(shape, lambda t: (0, 0), pipeline_mode=pl.Buffered(1))
    return pl.BlockSpec(shape, lambda t: (0, 0))


def _group_call(x, group_layers, prep, TB, has_proj, single_buffer_weights=True):
    """Run a group of consecutive LSTM layers (+ optional Linear) fused per time block."""
    Tp, Bp, Din = x.shape
    Hp, Op = prep["Hp"], prep["Op"]
    cd = prep["compute_dtype"]
    cd_bytes = jnp.dtype(cd).itemsize
    n_l = len(group_layers)

    out_last = Op if has_proj else Hp
    out_dtype = jnp.float32 if has_proj else cd   # inter-group acts in compute dtype

    args = [x]
    in_specs = [pl.BlockSpec((TB, Bp, Din), lambda t: (t, 0, 0))]
    for lyr in group_layers:
        args += [lyr["w_ih_t"], lyr["w_hh_t"], lyr["b"]]
        in_specs += [_weight_spec(lyr["w_ih_t"].shape, single_buffer_weights),
                     _weight_spec(lyr["w_hh_t"].shape, single_buffer_weights),
                     _weight_spec(lyr["b"].shape, single_buffer_weights)]
    if has_proj:
        args += [prep["proj_w_t"], prep["proj_b"]]
        in_specs += [_weight_spec(prep["proj_w_t"].shape, single_buffer_weights),
                     _weight_spec(prep["proj_b"].shape, single_buffer_weights)]

    scratch = [
        pltpu.VMEM((n_l, Bp, Hp), jnp.float32),       # h state, per layer (f32)
        pltpu.VMEM((n_l, Bp, Hp), jnp.float32),       # c state, per layer (f32)
        pltpu.VMEM((TB, Bp, Hp), cd),                 # inter-layer activations
        pltpu.VMEM((TB, Bp, 4 * Hp), jnp.float32),    # hoisted input-projection gates
    ]

    # Explicit scoped-VMEM budget from actual block sizes (defaults 16/32 MiB
    # would be exceeded at realistic H / TB); clamp to 64 MiB (v7x physical).
    w_bytes = sum(int(a.size) * a.dtype.itemsize for a in args[1:])
    if not single_buffer_weights:
        w_bytes *= 2
    blk_bytes = (2 * TB * Bp * Din * x.dtype.itemsize
                 + 2 * TB * Bp * out_last * jnp.dtype(out_dtype).itemsize)
    scr_bytes = (2 * n_l * Bp * Hp * 4 + TB * Bp * Hp * cd_bytes
                 + TB * Bp * 4 * Hp * 4)
    need = w_bytes + blk_bytes + scr_bytes
    vmem_limit = int(min(max(need * 5 // 4, 32 * 2**20), 64 * 2**20))

    return pl.pallas_call(
        _make_group_kernel(n_l, has_proj),
        out_shape=jax.ShapeDtypeStruct((Tp, Bp, out_last), out_dtype),
        grid_spec=pltpu.PrefetchScalarGridSpec(
            num_scalar_prefetch=0,
            grid=(Tp // TB,),
            in_specs=in_specs,
            out_specs=pl.BlockSpec((TB, Bp, out_last), lambda t: (t, 0, 0)),
            scratch_shapes=scratch,
        ),
        # Time-block axis carries the recurrence -> sequential.
        compiler_params=pltpu.CompilerParams(
            dimension_semantics=("arbitrary",),
            vmem_limit_bytes=vmem_limit),
    )(*args)


def uni_lstm_forward(feat, prep,
                     weight_vmem_budget=32 * 2**20,
                     act_vmem_budget=24 * 2**20):
    """feat: (T, B, in_dims) -> (T, B, out_dims), all f32 at the boundary."""
    T, B, Din = feat.shape
    Hp, Op = prep["Hp"], prep["Op"]
    Din_p = prep["Din_p"]
    cd = prep["compute_dtype"]
    cd_bytes = jnp.dtype(cd).itemsize

    Bp = max(_round_up(B, 8), 8)

    # --- time blocking: target TB*Bp >= 256 MXU rows, VMEM-capped; pad T UP to
    # a multiple of TB instead of shrinking TB to a divisor of T. -------------
    per_tb = Bp * (2 * Din_p * 4 + 2 * max(Hp, Op) * 4 + 4 * Hp * 4 + Hp * cd_bytes)
    tb_cap = max(1, act_vmem_budget // per_tb)
    tb_target = max(8, -(-256 // Bp))
    tb_target = max(1, min(tb_target, tb_cap, 64, T))
    n_blk = -(-T // tb_target)
    TB = -(-T // n_blk)
    Tp = n_blk * TB

    x = feat.astype(jnp.float32)
    if (Tp, Bp, Din_p) != (T, B, Din):
        x = jnp.pad(x, ((0, Tp - T), (0, Bp - B), (0, Din_p - Din)))

    # --- group layers so each group's (single-buffered) weights fit VMEM. ----
    def _wbytes(lyr):
        return sum(int(a.size) * a.dtype.itemsize
                   for a in (lyr["w_ih_t"], lyr["w_hh_t"], lyr["b"]))

    groups, cur, cur_b = [], [], 0
    for lyr in prep["layers"]:
        wb = _wbytes(lyr)
        if cur and cur_b + wb > weight_vmem_budget:
            groups.append(cur)
            cur, cur_b = [], 0
        cur.append(lyr)
        cur_b += wb
    groups.append(cur)

    def run(single_buffer):
        h = x
        for gi, grp in enumerate(groups):
            h = _group_call(h, grp, prep, TB, has_proj=(gi == len(groups) - 1),
                            single_buffer_weights=single_buffer)
        return h

    try:
        out = run(True)
    except Exception:
        # Fallback for JAX builds without BlockSpec pipeline_mode / Buffered(1).
        out = run(False)
    return out[:T, :B, :prep["O"]]


# ----------------------------------------------------------------------------
# One-time parameter preparation (transpose / gate-pad / combine biases).
# Zero padding is numerically exact: padded gate columns see weight 0 and
# bias 0, so padded hidden units stay identically 0.
# ----------------------------------------------------------------------------
def _pad_gate_matrix(w, H, Hp, din, din_p):
    """PyTorch (4H, din) -> (din_p, 4Hp), gate blocks placed at k*Hp offsets."""
    w4 = w.reshape(4, H, din)
    out = jnp.zeros((4, Hp, din_p), w.dtype)
    out = out.at[:, :H, :din].set(w4)
    return jnp.transpose(out.reshape(4 * Hp, din_p))        # (din_p, 4Hp)


def _pad_gate_bias(b, H, Hp):
    b4 = b.reshape(4, H)
    out = jnp.zeros((4, Hp), jnp.float32)
    out = out.at[:, :H].set(b4.astype(jnp.float32))
    return out.reshape(1, 4 * Hp)


def prepare_params(params, hidden_dims, compute_dtype=jnp.bfloat16):
    """Default compute dtype is bfloat16 (f32 accumulation / f32 h,c kept).

    Use compute_dtype=jnp.float32 for bit-tight checks against an f32 reference.
    """
    H = hidden_dims
    Hp = _round_up(H, 128)                    # lane-aligned gate blocks
    in_dims = params["lstm"][0]["w_ih"].shape[1]
    # Pad layer-0 Din to a lane-dense multiple of 128 when moderately large.
    if in_dims % 128 == 0 or in_dims < 64:
        Din_p = in_dims
    else:
        Din_p = _round_up(in_dims, 128)

    layers = []
    for l, layer in enumerate(params["lstm"]):
        din = layer["w_ih"].shape[1]
        din_p = Din_p if l == 0 else Hp       # layers > 0 consume padded hidden
        layers.append({
            "w_ih_t": _pad_gate_matrix(layer["w_ih"], H, Hp, din, din_p).astype(compute_dtype),
            "w_hh_t": _pad_gate_matrix(layer["w_hh"], H, Hp, H, Hp).astype(compute_dtype),
            "b": _pad_gate_bias(layer["b_ih"] + layer["b_hh"], H, Hp),   # f32
        })
    O = params["proj_w"].shape[0]
    Op = _round_up(O, 128)
    pw = jnp.zeros((Hp, Op), jnp.float32)
    pw = pw.at[:H, :O].set(jnp.transpose(params["proj_w"]))
    pb = jnp.zeros((1, Op), jnp.float32).at[0, :O].set(params["proj_b"])
    return {"layers": layers,
            "proj_w_t": pw.astype(compute_dtype), "proj_b": pb,
            "H": H, "Hp": Hp, "O": O, "Op": Op,
            "Din": in_dims, "Din_p": Din_p,
            "compute_dtype": compute_dtype}


# ----------------------------------------------------------------------------
# Deterministic parameter init (PyTorch-style uniform(-1/sqrt(H), 1/sqrt(H)))
# ----------------------------------------------------------------------------
def init_params(key, num_layers, in_dims, hidden_dims, out_dims):
    stdv = 1.0 / math.sqrt(hidden_dims)
    params = {"lstm": []}
    for l in range(num_layers):
        d_in = in_dims if l == 0 else hidden_dims
        key, k1, k2, k3, k4 = jax.random.split(key, 5)
        params["lstm"].append({
            "w_ih": jax.random.uniform(k1, (4 * hidden_dims, d_in),
                                       jnp.float32, -stdv, stdv),
            "w_hh": jax.random.uniform(k2, (4 * hidden_dims, hidden_dims),
                                       jnp.float32, -stdv, stdv),
            "b_ih": jax.random.uniform(k3, (4 * hidden_dims,),
                                       jnp.float32, -stdv, stdv),
            "b_hh": jax.random.uniform(k4, (4 * hidden_dims,),
                                       jnp.float32, -stdv, stdv),
        })
    key, k1, k2 = jax.random.split(key, 3)
    params["proj_w"] = jax.random.uniform(k1, (out_dims, hidden_dims),
                                          jnp.float32, -stdv, stdv)
    params["proj_b"] = jax.random.uniform(k2, (out_dims,),
                                          jnp.float32, -stdv, stdv)
    return params


# ----------------------------------------------------------------------------
# Pure-JAX reference (for correctness check)
# ----------------------------------------------------------------------------
def ref_forward(feat, params):
    h_seq = feat
    for layer in params["lstm"]:
        w_ih, w_hh = layer["w_ih"], layer["w_hh"]
        b = layer["b_ih"] + layer["b_hh"]
        Hd = w_hh.shape[1]
        B = h_seq.shape[1]

        def step(carry, x_t):
            h, c = carry
            g = x_t @ w_ih.T + h @ w_hh.T + b
            i = jax.nn.sigmoid(g[:, 0 * Hd:1 * Hd])
            f = jax.nn.sigmoid(g[:, 1 * Hd:2 * Hd])
            gg = jnp.tanh(g[:, 2 * Hd:3 * Hd])
            o = jax.nn.sigmoid(g[:, 3 * Hd:4 * Hd])
            c_new = f * c + i * gg
            h_new = o * jnp.tanh(c_new)
            return (h_new, c_new), h_new

        init = (jnp.zeros((B, Hd), jnp.float32), jnp.zeros((B, Hd), jnp.float32))
        _, h_seq = jax.lax.scan(step, init, h_seq)
    return h_seq @ params["proj_w"].T + params["proj_b"]


# ----------------------------------------------------------------------------
if __name__ == "__main__":
    num_layers, in_dims, hidden_dims, out_dims = 2, 16, 32, 16
    T, B = 8, 4

    key = jax.random.PRNGKey(0)
    key, pkey, xkey = jax.random.split(key, 3)
    params = init_params(pkey, num_layers, in_dims, hidden_dims, out_dims)
    feat = jax.random.normal(xkey, (T, B, in_dims), jnp.float32)

    ref = ref_forward(feat, params)

    # f32 compute path: exact check against the PyTorch-style f32 reference.
    prep_f32 = prepare_params(params, hidden_dims, compute_dtype=jnp.float32)
    out_f32 = jax.block_until_ready(uni_lstm_forward(feat, prep_f32))
    assert out_f32.shape == (T, B, out_dims)
    assert jnp.allclose(out_f32, ref, rtol=1e-5, atol=1e-5), "f32 mismatch vs reference"

    # Default bf16 weight path (half the weight DMA/VMEM): looser tolerance.
    prep_bf16 = prepare_params(params, hidden_dims)
    out_bf16 = jax.block_until_ready(uni_lstm_forward(feat, prep_bf16))
    assert out_bf16.shape == (T, B, out_dims)
    assert jnp.allclose(out_bf16, ref, rtol=3e-2, atol=3e-2), "bf16 mismatch vs reference"

    print("KERNEL_OK")
</pallas_src>

<mosaic_0001>
module attributes {stable_mosaic.version = 11 : i64} {
  func.func @kernel(%arg0: i32, %arg1: memref<8x8x16xf32, #tpu.memory_space<vmem>>, %arg2: memref<16x512xf32, #tpu.memory_space<vmem>>, %arg3: memref<128x512xf32, #tpu.memory_space<vmem>>, %arg4: memref<1x512xf32, #tpu.memory_space<vmem>>, %arg5: memref<128x512xf32, #tpu.memory_space<vmem>>, %arg6: memref<128x512xf32, #tpu.memory_space<vmem>>, %arg7: memref<1x512xf32, #tpu.memory_space<vmem>>, %arg8: memref<128x128xf32, #tpu.memory_space<vmem>>, %arg9: memref<1x128xf32, #tpu.memory_space<vmem>>, %arg10: memref<8x8x128xf32, #tpu.memory_space<vmem>>, %arg11: memref<2x8x128xf32, #tpu.memory_space<vmem>>, %arg12: memref<2x8x128xf32, #tpu.memory_space<vmem>>, %arg13: memref<8x8x128xf32, #tpu.memory_space<vmem>>, %arg14: memref<8x8x512xf32, #tpu.memory_space<vmem>>) attributes {dimension_semantics = [#tpu.dimension_semantics<arbitrary>], iteration_bounds = array<i64: 1>, scalar_prefetch = 0 : i64, scratch_operands = 4 : i64, tpu.core_type = #tpu.core_type<tc>, window_params = [{transform_indices = @transform_0, window_bounds = array<i64: 8, 8, 16>}, {pipeline_mode = #tpu.pipeline_mode<synchronous>, transform_indices = @transform_1, window_bounds = array<i64: 16, 512>}, {pipeline_mode = #tpu.pipeline_mode<synchronous>, transform_indices = @transform_2, window_bounds = array<i64: 128, 512>}, {pipeline_mode = #tpu.pipeline_mode<synchronous>, transform_indices = @transform_3, window_bounds = array<i64: 1, 512>}, {pipeline_mode = #tpu.pipeline_mode<synchronous>, transform_indices = @transform_4, window_bounds = array<i64: 128, 512>}, {pipeline_mode = #tpu.pipeline_mode<synchronous>, transform_indices = @transform_5, window_bounds = array<i64: 128, 512>}, {pipeline_mode = #tpu.pipeline_mode<synchronous>, transform_indices = @transform_6, window_bounds = array<i64: 1, 512>}, {pipeline_mode = #tpu.pipeline_mode<synchronous>, transform_indices = @transform_7, window_bounds = array<i64: 128, 128>}, {pipeline_mode = #tpu.pipeline_mode<synchronous>, transform_indices = @transform_8, window_bounds = array<i64: 1, 128>}, {transform_indices = @transform_9, window_bounds = array<i64: 8, 8, 128>}]} {
    %c0_i32 = arith.constant 0 : i32
    %0 = arith.cmpi eq, %arg0, %c0_i32 : i32
    %1 = arith.extui %0 : i1 to i32
    %c0_i32_0 = arith.constant 0 : i32
    %2 = arith.cmpi ne, %1, %c0_i32_0 : i32
    scf.if %2 {
      %cst_197 = arith.constant 0.000000e+00 : f32
      %596 = vector.broadcast %cst_197 : f32 to vector<2x8x128xf32>
      %c0_198 = arith.constant 0 : index
      %c0_199 = arith.constant 0 : index
      %c0_200 = arith.constant 0 : index
      %597 = vector.load %arg11[%c0_198, %c0_199, %c0_200] : memref<2x8x128xf32, #tpu.memory_space<vmem>>, vector<2x8x128xf32>
      tpu.vector_store %arg11[%c0_198, %c0_199, %c0_200], %596 {strides = array<i32>} : memref<2x8x128xf32, #tpu.memory_space<vmem>>, vector<2x8x128xf32>,
      %cst_201 = arith.constant 0.000000e+00 : f32
      %598 = vector.broadcast %cst_201 : f32 to vector<2x8x128xf32>
      %c0_202 = arith.constant 0 : index
      %c0_203 = arith.constant 0 : index
      %c0_204 = arith.constant 0 : index
      %599 = vector.load %arg12[%c0_202, %c0_203, %c0_204] : memref<2x8x128xf32, #tpu.memory_space<vmem>>, vector<2x8x128xf32>
      tpu.vector_store %arg12[%c0_202, %c0_203, %c0_204], %598 {strides = array<i32>} : memref<2x8x128xf32, #tpu.memory_space<vmem>>, vector<2x8x128xf32>,
    } else {
    }
    %c0 = arith.constant 0 : index
    %c0_1 = arith.constant 0 : index
    %3 = vector.load %arg2[%c0, %c0_1] : memref<16x512xf32, #tpu.memory_space<vmem>>, vector<16x512xf32>
    %c0_2 = arith.constant 0 : index
    %c0_3 = arith.constant 0 : index
    %4 = vector.load %arg3[%c0_2, %c0_3] : memref<128x512xf32, #tpu.memory_space<vmem>>, vector<128x512xf32>
    %c0_4 = arith.constant 0 : index
    %c0_5 = arith.constant 0 : index
    %5 = vector.load %arg4[%c0_4, %c0_5] : memref<1x512xf32, #tpu.memory_space<vmem>>, vector<1x512xf32>
    %c0_6 = arith.constant 0 : index
    %c0_7 = arith.constant 0 : index
    %c0_8 = arith.constant 0 : index
    %6 = vector.load %arg1[%c0_6, %c0_7, %c0_8] : memref<8x8x16xf32, #tpu.memory_space<vmem>>, vector<8x8x16xf32>
    %7 = vector.shape_cast %6 : vector<8x8x16xf32> to vector<64x16xf32>
    %cst = arith.constant dense<0.000000e+00> : vector<64x512xf32>
    %8 = tpu.matmul %7, %3, %cst {dimension_numbers = #tpu.dot_dimension_numbers<[1], [0], [0], [1], [0, 0, 1, 1], [], []>} : vector<64x16xf32>, vector<16x512xf32>, vector<64x512xf32> -> vector<64x512xf32>
    %9 = vector.broadcast %5 : vector<1x512xf32> to vector<64x512xf32>
    %10 = arith.addf %8, %9 : vector<64x512xf32>
    %11 = vector.shape_cast %10 : vector<64x512xf32> to vector<8x8x512xf32>
    %c0_9 = arith.constant 0 : index
    %c0_10 = arith.constant 0 : index
    %c0_11 = arith.constant 0 : index
    %12 = vector.load %arg14[%c0_9, %c0_10, %c0_11] : memref<8x8x512xf32, #tpu.memory_space<vmem>>, vector<8x8x512xf32>
    tpu.vector_store %arg14[%c0_9, %c0_10, %c0_11], %11 {strides = array<i32>} : memref<8x8x512xf32, #tpu.memory_space<vmem>>, vector<8x8x512xf32>,
    %c0_12 = arith.constant 0 : index
    %c0_13 = arith.constant 0 : index
    %c0_14 = arith.constant 0 : index
    %13 = vector.load %arg11[%c0_12, %c0_13, %c0_14] : memref<2x8x128xf32, #tpu.memory_space<vmem>>, vector<1x8x128xf32>
    %14 = vector.shape_cast %13 : vector<1x8x128xf32> to vector<8x128xf32>
    %c0_15 = arith.constant 0 : index
    %c0_16 = arith.constant 0 : index
    %c0_17 = arith.constant 0 : index
    %15 = vector.load %arg12[%c0_15, %c0_16, %c0_17] : memref<2x8x128xf32, #tpu.memory_space<vmem>>, vector<1x8x128xf32>
    %16 = vector.shape_cast %15 : vector<1x8x128xf32> to vector<8x128xf32>
    %c0_i32_18 = arith.constant 0 : i32
    %17 = arith.index_cast %c0_i32_18 : i32 to index
    %c0_19 = arith.constant 0 : index
    %c0_20 = arith.constant 0 : index
    %18 = vector.load %arg14[%17, %c0_19, %c0_20] : memref<8x8x512xf32, #tpu.memory_space<vmem>>, vector<1x8x512xf32>
    %19 = vector.shape_cast %18 : vector<1x8x512xf32> to vector<8x512xf32>
    %cst_21 = arith.constant dense<0.000000e+00> : vector<8x512xf32>
    %20 = tpu.matmul %14, %4, %cst_21 {dimension_numbers = #tpu.dot_dimension_numbers<[1], [0], [0], [1], [0, 0, 1, 1], [], []>} : vector<8x128xf32>, vector<128x512xf32>, vector<8x512xf32> -> vector<8x512xf32>
    %21 = arith.addf %19, %20 : vector<8x512xf32>
    %22 = vector.extract_strided_slice %21 {offsets = [0, 0], sizes = [8, 128], strides = [1, 1]} : vector<8x512xf32> to vector<8x128xf32>
    %23 = arith.negf %22 : vector<8x128xf32>
    %24 = math.exp %23 : vector<8x128xf32>
    %cst_22 = arith.constant 1.000000e+00 : f32
    %25 = vector.broadcast %cst_22 : f32 to vector<8x128xf32>
    %26 = arith.addf %25, %24 : vector<8x128xf32>
    %27 = arith.divf %25, %26 : vector<8x128xf32>
    %28 = vector.extract_strided_slice %21 {offsets = [0, 128], sizes = [8, 128], strides = [1, 1]} : vector<8x512xf32> to vector<8x128xf32>
    %29 = arith.negf %28 : vector<8x128xf32>
    %30 = math.exp %29 : vector<8x128xf32>
    %cst_23 = arith.constant 1.000000e+00 : f32
    %31 = vector.broadcast %cst_23 : f32 to vector<8x128xf32>
    %32 = arith.addf %31, %30 : vector<8x128xf32>
    %33 = arith.divf %31, %32 : vector<8x128xf32>
    %34 = vector.extract_strided_slice %21 {offsets = [0, 256], sizes = [8, 128], strides = [1, 1]} : vector<8x512xf32> to vector<8x128xf32>
    %35 = math.tanh %34 : vector<8x128xf32>
    %36 = vector.extract_strided_slice %21 {offsets = [0, 384], sizes = [8, 128], strides = [1, 1]} : vector<8x512xf32> to vector<8x128xf32>
    %37 = arith.negf %36 : vector<8x128xf32>
    %38 = math.exp %37 : vector<8x128xf32>
    %cst_24 = arith.constant 1.000000e+00 : f32
    %39 = vector.broadcast %cst_24 : f32 to vector<8x128xf32>
    %40 = arith.addf %39, %38 : vector<8x128xf32>
    %41 = arith.divf %39, %40 : vector<8x128xf32>
    %42 = arith.mulf %33, %16 : vector<8x128xf32>
    %43 = arith.mulf %27, %35 : vector<8x128xf32>
    %44 = arith.addf %42, %43 : vector<8x128xf32>
    %45 = math.tanh %44 : vector<8x128xf32>
    %46 = arith.mulf %41, %45 : vector<8x128xf32>
    %47 = arith.index_cast %c0_i32_18 : i32 to index
    %c0_25 = arith.constant 0 : index
    %c0_26 = arith.constant 0 : index
    %48 = vector.load %arg13[%47, %c0_25, %c0_26] : memref<8x8x128xf32, #tpu.memory_space<vmem>>, vector<1x8x128xf32>
    %49 = vector.shape_cast %48 : vector<1x8x128xf32> to vector<8x128xf32>
    %50 = vector.shape_cast %46 : vector<8x128xf32> to vector<1x8x128xf32>
    tpu.vector_store %arg13[%47, %c0_25, %c0_26], %50 {strides = array<i32>} : memref<8x8x128xf32, #tpu.memory_space<vmem>>, vector<1x8x128xf32>,
    %c1_i32 = arith.constant 1 : i32
    %51 = arith.index_cast %c1_i32 : i32 to index
    %c0_27 = arith.constant 0 : index
    %c0_28 = arith.constant 0 : index
    %52 = vector.load %arg14[%51, %c0_27, %c0_28] : memref<8x8x512xf32, #tpu.memory_space<vmem>>, vector<1x8x512xf32>
    %53 = vector.shape_cast %52 : vector<1x8x512xf32> to vector<8x512xf32>
    %cst_29 = arith.constant dense<0.000000e+00> : vector<8x512xf32>
    %54 = tpu.matmul %46, %4, %cst_29 {dimension_numbers = #tpu.dot_dimension_numbers<[1], [0], [0], [1], [0, 0, 1, 1], [], []>} : vector<8x128xf32>, vector<128x512xf32>, vector<8x512xf32> -> vector<8x512xf32>
    %55 = arith.addf %53, %54 : vector<8x512xf32>
    %56 = vector.extract_strided_slice %55 {offsets = [0, 0], sizes = [8, 128], strides = [1, 1]} : vector<8x512xf32> to vector<8x128xf32>
    %57 = arith.negf %56 : vector<8x128xf32>
    %58 = math.exp %57 : vector<8x128xf32>
    %cst_30 = arith.constant 1.000000e+00 : f32
    %59 = vector.broadcast %cst_30 : f32 to vector<8x128xf32>
    %60 = arith.addf %59, %58 : vector<8x128xf32>
    %61 = arith.divf %59, %60 : vector<8x128xf32>
    %62 = vector.extract_strided_slice %55 {offsets = [0, 128], sizes = [8, 128], strides = [1, 1]} : vector<8x512xf32> to vector<8x128xf32>
    %63 = arith.negf %62 : vector<8x128xf32>
    %64 = math.exp %63 : vector<8x128xf32>
    %cst_31 = arith.constant 1.000000e+00 : f32
    %65 = vector.broadcast %cst_31 : f32 to vector<8x128xf32>
    %66 = arith.addf %65, %64 : vector<8x128xf32>
    %67 = arith.divf %65, %66 : vector<8x128xf32>
    %68 = vector.extract_strided_slice %55 {offsets = [0, 256], sizes = [8, 128], strides = [1, 1]} : vector<8x512xf32> to vector<8x128xf32>
    %69 = math.tanh %68 : vector<8x128xf32>
    %70 = vector.extract_strided_slice %55 {offsets = [0, 384], sizes = [8, 128], strides = [1, 1]} : vector<8x512xf32> to vector<8x128xf32>
    %71 = arith.negf %70 : vector<8x128xf32>
    %72 = math.exp %71 : vector<8x128xf32>
    %cst_32 = arith.constant 1.000000e+00 : f32
    %73 = vector.broadcast %cst_32 : f32 to vector<8x128xf32>
    %74 = arith.addf %73, %72 : vector<8x128xf32>
    %75 = arith.divf %73, %74 : vector<8x128xf32>
    %76 = arith.mulf %67, %44 : vector<8x128xf32>
    %77 = arith.mulf %61, %69 : vector<8x128xf32>
    %78 = arith.addf %76, %77 : vector<8x128xf32>
    %79 = math.tanh %78 : vector<8x128xf32>
    %80 = arith.mulf %75, %79 : vector<8x128xf32>
    %81 = arith.index_cast %c1_i32 : i32 to index
    %c0_33 = arith.constant 0 : index
    %c0_34 = arith.constant 0 : index
    %82 = vector.load %arg13[%81, %c0_33, %c0_34] : memref<8x8x128xf32, #tpu.memory_space<vmem>>, vector<1x8x128xf32>
    %83 = vector.shape_cast %82 : vector<1x8x128xf32> to vector<8x128xf32>
    %84 = vector.shape_cast %80 : vector<8x128xf32> to vector<1x8x128xf32>
    tpu.vector_store %arg13[%81, %c0_33, %c0_34], %84 {strides = array<i32>} : memref<8x8x128xf32, #tpu.memory_space<vmem>>, vector<1x8x128xf32>,
    %c2_i32 = arith.constant 2 : i32
    %85 = arith.index_cast %c2_i32 : i32 to index
    %c0_35 = arith.constant 0 : index
    %c0_36 = arith.constant 0 : index
    %86 = vector.load %arg14[%85, %c0_35, %c0_36] : memref<8x8x512xf32, #tpu.memory_space<vmem>>, vector<1x8x512xf32>
    %87 = vector.shape_cast %86 : vector<1x8x512xf32> to vector<8x512xf32>
    %cst_37 = arith.constant dense<0.000000e+00> : vector<8x512xf32>
    %88 = tpu.matmul %80, %4, %cst_37 {dimension_numbers = #tpu.dot_dimension_numbers<[1], [0], [0], [1], [0, 0, 1, 1], [], []>} : vector<8x128xf32>, vector<128x512xf32>, vector<8x512xf32> -> vector<8x512xf32>
    %89 = arith.addf %87, %88 : vector<8x512xf32>
    %90 = vector.extract_strided_slice %89 {offsets = [0, 0], sizes = [8, 128], strides = [1, 1]} : vector<8x512xf32> to vector<8x128xf32>
    %91 = arith.negf %90 : vector<8x128xf32>
    %92 = math.exp %91 : vector<8x128xf32>
    %cst_38 = arith.constant 1.000000e+00 : f32
    %93 = vector.broadcast %cst_38 : f32 to vector<8x128xf32>
    %94 = arith.addf %93, %92 : vector<8x128xf32>
    %95 = arith.divf %93, %94 : vector<8x128xf32>
    %96 = vector.extract_strided_slice %89 {offsets = [0, 128], sizes = [8, 128], strides = [1, 1]} : vector<8x512xf32> to vector<8x128xf32>
    %97 = arith.negf %96 : vector<8x128xf32>
    %98 = math.exp %97 : vector<8x128xf32>
    %cst_39 = arith.constant 1.000000e+00 : f32
    %99 = vector.broadcast %cst_39 : f32 to vector<8x128xf32>
    %100 = arith.addf %99, %98 : vector<8x128xf32>
    %101 = arith.divf %99, %100 : vector<8x128xf32>
    %102 = vector.extract_strided_slice %89 {offsets = [0, 256], sizes = [8, 128], strides = [1, 1]} : vector<8x512xf32> to vector<8x128xf32>
    %103 = math.tanh %102 : vector<8x128xf32>
    %104 = vector.extract_strided_slice %89 {offsets = [0, 384], sizes = [8, 128], strides = [1, 1]} : vector<8x512xf32> to vector<8x128xf32>
    %105 = arith.negf %104 : vector<8x128xf32>
    %106 = math.exp %105 : vector<8x128xf32>
    %cst_40 = arith.constant 1.000000e+00 : f32
    %107 = vector.broadcast %cst_40 : f32 to vector<8x128xf32>
    %108 = arith.addf %107, %106 : vector<8x128xf32>
    %109 = arith.divf %107, %108 : vector<8x128xf32>
    %110 = arith.mulf %101, %78 : vector<8x128xf32>
    %111 = arith.mulf %95, %103 : vector<8x128xf32>
    %112 = arith.addf %110, %111 : vector<8x128xf32>
    %113 = math.tanh %112 : vector<8x128xf32>
    %114 = arith.mulf %109, %113 : vector<8x128xf32>
    %115 = arith.index_cast %c2_i32 : i32 to index
    %c0_41 = arith.constant 0 : index
    %c0_42 = arith.constant 0 : index
    %116 = vector.load %arg13[%115, %c0_41, %c0_42] : memref<8x8x128xf32, #tpu.memory_space<vmem>>, vector<1x8x128xf32>
    %117 = vector.shape_cast %116 : vector<1x8x128xf32> to vector<8x128xf32>
    %118 = vector.shape_cast %114 : vector<8x128xf32> to vector<1x8x128xf32>
    tpu.vector_store %arg13[%115, %c0_41, %c0_42], %118 {strides = array<i32>} : memref<8x8x128xf32, #tpu.memory_space<vmem>>, vector<1x8x128xf32>,
    %c3_i32 = arith.constant 3 : i32
    %119 = arith.index_cast %c3_i32 : i32 to index
    %c0_43 = arith.constant 0 : index
    %c0_44 = arith.constant 0 : index
    %120 = vector.load %arg14[%119, %c0_43, %c0_44] : memref<8x8x512xf32, #tpu.memory_space<vmem>>, vector<1x8x512xf32>
    %121 = vector.shape_cast %120 : vector<1x8x512xf32> to vector<8x512xf32>
    %cst_45 = arith.constant dense<0.000000e+00> : vector<8x512xf32>
    %122 = tpu.matmul %114, %4, %cst_45 {dimension_numbers = #tpu.dot_dimension_numbers<[1], [0], [0], [1], [0, 0, 1, 1], [], []>} : vector<8x128xf32>, vector<128x512xf32>, vector<8x512xf32> -> vector<8x512xf32>
    %123 = arith.addf %121, %122 : vector<8x512xf32>
    %124 = vector.extract_strided_slice %123 {offsets = [0, 0], sizes = [8, 128], strides = [1, 1]} : vector<8x512xf32> to vector<8x128xf32>
    %125 = arith.negf %124 : vector<8x128xf32>
    %126 = math.exp %125 : vector<8x128xf32>
    %cst_46 = arith.constant 1.000000e+00 : f32
    %127 = vector.broadcast %cst_46 : f32 to vector<8x128xf32>
    %128 = arith.addf %127, %126 : vector<8x128xf32>
    %129 = arith.divf %127, %128 : vector<8x128xf32>
    %130 = vector.extract_strided_slice %123 {offsets = [0, 128], sizes = [8, 128], strides = [1, 1]} : vector<8x512xf32> to vector<8x128xf32>
    %131 = arith.negf %130 : vector<8x128xf32>
    %132 = math.exp %131 : vector<8x128xf32>
    %cst_47 = arith.constant 1.000000e+00 : f32
    %133 = vector.broadcast %cst_47 : f32 to vector<8x128xf32>
    %134 = arith.addf %133, %132 : vector<8x128xf32>
    %135 = arith.divf %133, %134 : vector<8x128xf32>
    %136 = vector.extract_strided_slice %123 {offsets = [0, 256], sizes = [8, 128], strides = [1, 1]} : vector<8x512xf32> to vector<8x128xf32>
    %137 = math.tanh %136 : vector<8x128xf32>
    %138 = vector.extract_strided_slice %123 {offsets = [0, 384], sizes = [8, 128], strides = [1, 1]} : vector<8x512xf32> to vector<8x128xf32>
    %139 = arith.negf %138 : vector<8x128xf32>
    %140 = math.exp %139 : vector<8x128xf32>
    %cst_48 = arith.constant 1.000000e+00 : f32
    %141 = vector.broadcast %cst_48 : f32 to vector<8x128xf32>
    %142 = arith.addf %141, %140 : vector<8x128xf32>
    %143 = arith.divf %141, %142 : vector<8x128xf32>
    %144 = arith.mulf %135, %112 : vector<8x128xf32>
    %145 = arith.mulf %129, %137 : vector<8x128xf32>
    %146 = arith.addf %144, %145 : vector<8x128xf32>
    %147 = math.tanh %146 : vector<8x128xf32>
    %148 = arith.mulf %143, %147 : vector<8x128xf32>
    %149 = arith.index_cast %c3_i32 : i32 to index
    %c0_49 = arith.constant 0 : index
    %c0_50 = arith.constant 0 : index
    %150 = vector.load %arg13[%149, %c0_49, %c0_50] : memref<8x8x128xf32, #tpu.memory_space<vmem>>, vector<1x8x128xf32>
    %151 = vector.shape_cast %150 : vector<1x8x128xf32> to vector<8x128xf32>
    %152 = vector.shape_cast %148 : vector<8x128xf32> to vector<1x8x128xf32>
    tpu.vector_store %arg13[%149, %c0_49, %c0_50], %152 {strides = array<i32>} : memref<8x8x128xf32, #tpu.memory_space<vmem>>, vector<1x8x128xf32>,
    %c4_i32 = arith.constant 4 : i32
    %153 = arith.index_cast %c4_i32 : i32 to index
    %c0_51 = arith.constant 0 : index
    %c0_52 = arith.constant 0 : index
    %154 = vector.load %arg14[%153, %c0_51, %c0_52] : memref<8x8x512xf32, #tpu.memory_space<vmem>>, vector<1x8x512xf32>
    %155 = vector.shape_cast %154 : vector<1x8x512xf32> to vector<8x512xf32>
    %cst_53 = arith.constant dense<0.000000e+00> : vector<8x512xf32>
    %156 = tpu.matmul %148, %4, %cst_53 {dimension_numbers = #tpu.dot_dimension_numbers<[1], [0], [0], [1], [0, 0, 1, 1], [], []>} : vector<8x128xf32>, vector<128x512xf32>, vector<8x512xf32> -> vector<8x512xf32>
    %157 = arith.addf %155, %156 : vector<8x512xf32>
    %158 = vector.extract_strided_slice %157 {offsets = [0, 0], sizes = [8, 128], strides = [1, 1]} : vector<8x512xf32> to vector<8x128xf32>
    %159 = arith.negf %158 : vector<8x128xf32>
    %160 = math.exp %159 : vector<8x128xf32>
    %cst_54 = arith.constant 1.000000e+00 : f32
    %161 = vector.broadcast %cst_54 : f32 to vector<8x128xf32>
    %162 = arith.addf %161, %160 : vector<8x128xf32>
    %163 = arith.divf %161, %162 : vector<8x128xf32>
    %164 = vector.extract_strided_slice %157 {offsets = [0, 128], sizes = [8, 128], strides = [1, 1]} : vector<8x512xf32> to vector<8x128xf32>
    %165 = arith.negf %164 : vector<8x128xf32>
    %166 = math.exp %165 : vector<8x128xf32>
    %cst_55 = arith.constant 1.000000e+00 : f32
    %167 = vector.broadcast %cst_55 : f32 to vector<8x128xf32>
    %168 = arith.addf %167, %166 : vector<8x128xf32>
    %169 = arith.divf %167, %168 : vector<8x128xf32>
    %170 = vector.extract_strided_slice %157 {offsets = [0, 256], sizes = [8, 128], strides = [1, 1]} : vector<8x512xf32> to vector<8x128xf32>
    %171 = math.tanh %170 : vector<8x128xf32>
    %172 = vector.extract_strided_slice %157 {offsets = [0, 384], sizes = [8, 128], strides = [1, 1]} : vector<8x512xf32> to vector<8x128xf32>
    %173 = arith.negf %172 : vector<8x128xf32>
    %174 = math.exp %173 : vector<8x128xf32>
    %cst_56 = arith.constant 1.000000e+00 : f32
    %175 = vector.broadcast %cst_56 : f32 to vector<8x128xf32>
    %176 = arith.addf %175, %174 : vector<8x128xf32>
    %177 = arith.divf %175, %176 : vector<8x128xf32>
    %178 = arith.mulf %169, %146 : vector<8x128xf32>
    %179 = arith.mulf %163, %171 : vector<8x128xf32>
    %180 = arith.addf %178, %179 : vector<8x128xf32>
    %181 = math.tanh %180 : vector<8x128xf32>
    %182 = arith.mulf %177, %181 : vector<8x128xf32>
    %183 = arith.index_cast %c4_i32 : i32 to index
    %c0_57 = arith.constant 0 : index
    %c0_58 = arith.constant 0 : index
    %184 = vector.load %arg13[%183, %c0_57, %c0_58] : memref<8x8x128xf32, #tpu.memory_space<vmem>>, vector<1x8x128xf32>
    %185 = vector.shape_cast %184 : vector<1x8x128xf32> to vector<8x128xf32>
    %186 = vector.shape_cast %182 : vector<8x128xf32> to vector<1x8x128xf32>
    tpu.vector_store %arg13[%183, %c0_57, %c0_58], %186 {strides = array<i32>} : memref<8x8x128xf32, #tpu.memory_space<vmem>>, vector<1x8x128xf32>,
    %c5_i32 = arith.constant 5 : i32
    %187 = arith.index_cast %c5_i32 : i32 to index
    %c0_59 = arith.constant 0 : index
    %c0_60 = arith.constant 0 : index
    %188 = vector.load %arg14[%187, %c0_59, %c0_60] : memref<8x8x512xf32, #tpu.memory_space<vmem>>, vector<1x8x512xf32>
    %189 = vector.shape_cast %188 : vector<1x8x512xf32> to vector<8x512xf32>
    %cst_61 = arith.constant dense<0.000000e+00> : vector<8x512xf32>
    %190 = tpu.matmul %182, %4, %cst_61 {dimension_numbers = #tpu.dot_dimension_numbers<[1], [0], [0], [1], [0, 0, 1, 1], [], []>} : vector<8x128xf32>, vector<128x512xf32>, vector<8x512xf32> -> vector<8x512xf32>
    %191 = arith.addf %189, %190 : vector<8x512xf32>
    %192 = vector.extract_strided_slice %191 {offsets = [0, 0], sizes = [8, 128], strides = [1, 1]} : vector<8x512xf32> to vector<8x128xf32>
    %193 = arith.negf %192 : vector<8x128xf32>
    %194 = math.exp %193 : vector<8x128xf32>
    %cst_62 = arith.constant 1.000000e+00 : f32
    %195 = vector.broadcast %cst_62 : f32 to vector<8x128xf32>
    %196 = arith.addf %195, %194 : vector<8x128xf32>
    %197 = arith.divf %195, %196 : vector<8x128xf32>
    %198 = vector.extract_strided_slice %191 {offsets = [0, 128], sizes = [8, 128], strides = [1, 1]} : vector<8x512xf32> to vector<8x128xf32>
    %199 = arith.negf %198 : vector<8x128xf32>
    %200 = math.exp %199 : vector<8x128xf32>
    %cst_63 = arith.constant 1.000000e+00 : f32
    %201 = vector.broadcast %cst_63 : f32 to vector<8x128xf32>
    %202 = arith.addf %201, %200 : vector<8x128xf32>
    %203 = arith.divf %201, %202 : vector<8x128xf32>
    %204 = vector.extract_strided_slice %191 {offsets = [0, 256], sizes = [8, 128], strides = [1, 1]} : vector<8x512xf32> to vector<8x128xf32>
    %205 = math.tanh %204 : vector<8x128xf32>
    %206 = vector.extract_strided_slice %191 {offsets = [0, 384], sizes = [8, 128], strides = [1, 1]} : vector<8x512xf32> to vector<8x128xf32>
    %207 = arith.negf %206 : vector<8x128xf32>
    %208 = math.exp %207 : vector<8x128xf32>
    %cst_64 = arith.constant 1.000000e+00 : f32
    %209 = vector.broadcast %cst_64 : f32 to vector<8x128xf32>
    %210 = arith.addf %209, %208 : vector<8x128xf32>
    %211 = arith.divf %209, %210 : vector<8x128xf32>
    %212 = arith.mulf %203, %180 : vector<8x128xf32>
    %213 = arith.mulf %197, %205 : vector<8x128xf32>
    %214 = arith.addf %212, %213 : vector<8x128xf32>
    %215 = math.tanh %214 : vector<8x128xf32>
    %216 = arith.mulf %211, %215 : vector<8x128xf32>
    %217 = arith.index_cast %c5_i32 : i32 to index
    %c0_65 = arith.constant 0 : index
    %c0_66 = arith.constant 0 : index
    %218 = vector.load %arg13[%217, %c0_65, %c0_66] : memref<8x8x128xf32, #tpu.memory_space<vmem>>, vector<1x8x128xf32>
    %219 = vector.shape_cast %218 : vector<1x8x128xf32> to vector<8x128xf32>
    %220 = vector.shape_cast %216 : vector<8x128xf32> to vector<1x8x128xf32>
    tpu.vector_store %arg13[%217, %c0_65, %c0_66], %220 {strides = array<i32>} : memref<8x8x128xf32, #tpu.memory_space<vmem>>, vector<1x8x128xf32>,
    %c6_i32 = arith.constant 6 : i32
    %221 = arith.index_cast %c6_i32 : i32 to index
    %c0_67 = arith.constant 0 : index
    %c0_68 = arith.constant 0 : index
    %222 = vector.load %arg14[%221, %c0_67, %c0_68] : memref<8x8x512xf32, #tpu.memory_space<vmem>>, vector<1x8x512xf32>
    %223 = vector.shape_cast %222 : vector<1x8x512xf32> to vector<8x512xf32>
    %cst_69 = arith.constant dense<0.000000e+00> : vector<8x512xf32>
    %224 = tpu.matmul %216, %4, %cst_69 {dimension_numbers = #tpu.dot_dimension_numbers<[1], [0], [0], [1], [0, 0, 1, 1], [], []>} : vector<8x128xf32>, vector<128x512xf32>, vector<8x512xf32> -> vector<8x512xf32>
    %225 = arith.addf %223, %224 : vector<8x512xf32>
    %226 = vector.extract_strided_slice %225 {offsets = [0, 0], sizes = [8, 128], strides = [1, 1]} : vector<8x512xf32> to vector<8x128xf32>
    %227 = arith.negf %226 : vector<8x128xf32>
    %228 = math.exp %227 : vector<8x128xf32>
    %cst_70 = arith.constant 1.000000e+00 : f32
    %229 = vector.broadcast %cst_70 : f32 to vector<8x128xf32>
    %230 = arith.addf %229, %228 : vector<8x128xf32>
    %231 = arith.divf %229, %230 : vector<8x128xf32>
    %232 = vector.extract_strided_slice %225 {offsets = [0, 128], sizes = [8, 128], strides = [1, 1]} : vector<8x512xf32> to vector<8x128xf32>
    %233 = arith.negf %232 : vector<8x128xf32>
    %234 = math.exp %233 : vector<8x128xf32>
    %cst_71 = arith.constant 1.000000e+00 : f32
    %235 = vector.broadcast %cst_71 : f32 to vector<8x128xf32>
    %236 = arith.addf %235, %234 : vector<8x128xf32>
    %237 = arith.divf %235, %236 : vector<8x128xf32>
    %238 = vector.extract_strided_slice %225 {offsets = [0, 256], sizes = [8, 128], strides = [1, 1]} : vector<8x512xf32> to vector<8x128xf32>
    %239 = math.tanh %238 : vector<8x128xf32>
    %240 = vector.extract_strided_slice %225 {offsets = [0, 384], sizes = [8, 128], strides = [1, 1]} : vector<8x512xf32> to vector<8x128xf32>
    %241 = arith.negf %240 : vector<8x128xf32>
    %242 = math.exp %241 : vector<8x128xf32>
    %cst_72 = arith.constant 1.000000e+00 : f32
    %243 = vector.broadcast %cst_72 : f32 to vector<8x128xf32>
    %244 = arith.addf %243, %242 : vector<8x128xf32>
    %245 = arith.divf %243, %244 : vector<8x128xf32>
    %246 = arith.mulf %237, %214 : vector<8x128xf32>
    %247 = arith.mulf %231, %239 : vector<8x128xf32>
    %248 = arith.addf %246, %247 : vector<8x128xf32>
    %249 = math.tanh %248 : vector<8x128xf32>
    %250 = arith.mulf %245, %249 : vector<8x128xf32>
    %251 = arith.index_cast %c6_i32 : i32 to index
    %c0_73 = arith.constant 0 : index
    %c0_74 = arith.constant 0 : index
    %252 = vector.load %arg13[%251, %c0_73, %c0_74] : memref<8x8x128xf32, #tpu.memory_space<vmem>>, vector<1x8x128xf32>
    %253 = vector.shape_cast %252 : vector<1x8x128xf32> to vector<8x128xf32>
    %254 = vector.shape_cast %250 : vector<8x128xf32> to vector<1x8x128xf32>
    tpu.vector_store %arg13[%251, %c0_73, %c0_74], %254 {strides = array<i32>} : memref<8x8x128xf32, #tpu.memory_space<vmem>>, vector<1x8x128xf32>,
    %c7_i32 = arith.constant 7 : i32
    %255 = arith.index_cast %c7_i32 : i32 to index
    %c0_75 = arith.constant 0 : index
    %c0_76 = arith.constant 0 : index
    %256 = vector.load %arg14[%255, %c0_75, %c0_76] : memref<8x8x512xf32, #tpu.memory_space<vmem>>, vector<1x8x512xf32>
    %257 = vector.shape_cast %256 : vector<1x8x512xf32> to vector<8x512xf32>
    %cst_77 = arith.constant dense<0.000000e+00> : vector<8x512xf32>
    %258 = tpu.matmul %250, %4, %cst_77 {dimension_numbers = #tpu.dot_dimension_numbers<[1], [0], [0], [1], [0, 0, 1, 1], [], []>} : vector<8x128xf32>, vector<128x512xf32>, vector<8x512xf32> -> vector<8x512xf32>
    %259 = arith.addf %257, %258 : vector<8x512xf32>
    %260 = vector.extract_strided_slice %259 {offsets = [0, 0], sizes = [8, 128], strides = [1, 1]} : vector<8x512xf32> to vector<8x128xf32>
    %261 = arith.negf %260 : vector<8x128xf32>
    %262 = math.exp %261 : vector<8x128xf32>
    %cst_78 = arith.constant 1.000000e+00 : f32
    %263 = vector.broadcast %cst_78 : f32 to vector<8x128xf32>
    %264 = arith.addf %263, %262 : vector<8x128xf32>
    %265 = arith.divf %263, %264 : vector<8x128xf32>
    %266 = vector.extract_strided_slice %259 {offsets = [0, 128], sizes = [8, 128], strides = [1, 1]} : vector<8x512xf32> to vector<8x128xf32>
    %267 = arith.negf %266 : vector<8x128xf32>
    %268 = math.exp %267 : vector<8x128xf32>
    %cst_79 = arith.constant 1.000000e+00 : f32
    %269 = vector.broadcast %cst_79 : f32 to vector<8x128xf32>
    %270 = arith.addf %269, %268 : vector<8x128xf32>
    %271 = arith.divf %269, %270 : vector<8x128xf32>
    %272 = vector.extract_strided_slice %259 {offsets = [0, 256], sizes = [8, 128], strides = [1, 1]} : vector<8x512xf32> to vector<8x128xf32>
    %273 = math.tanh %272 : vector<8x128xf32>
    %274 = vector.extract_strided_slice %259 {offsets = [0, 384], sizes = [8, 128], strides = [1, 1]} : vector<8x512xf32> to vector<8x128xf32>
    %275 = arith.negf %274 : vector<8x128xf32>
    %276 = math.exp %275 : vector<8x128xf32>
    %cst_80 = arith.constant 1.000000e+00 : f32
    %277 = vector.broadcast %cst_80 : f32 to vector<8x128xf32>
    %278 = arith.addf %277, %276 : vector<8x128xf32>
    %279 = arith.divf %277, %278 : vector<8x128xf32>
    %280 = arith.mulf %271, %248 : vector<8x128xf32>
    %281 = arith.mulf %265, %273 : vector<8x128xf32>
    %282 = arith.addf %280, %281 : vector<8x128xf32>
    %283 = math.tanh %282 : vector<8x128xf32>
    %284 = arith.mulf %279, %283 : vector<8x128xf32>
    %285 = arith.index_cast %c7_i32 : i32 to index
    %c0_81 = arith.constant 0 : index
    %c0_82 = arith.constant 0 : index
    %286 = vector.load %arg13[%285, %c0_81, %c0_82] : memref<8x8x128xf32, #tpu.memory_space<vmem>>, vector<1x8x128xf32>
    %287 = vector.shape_cast %286 : vector<1x8x128xf32> to vector<8x128xf32>
    %288 = vector.shape_cast %284 : vector<8x128xf32> to vector<1x8x128xf32>
    tpu.vector_store %arg13[%285, %c0_81, %c0_82], %288 {strides = array<i32>} : memref<8x8x128xf32, #tpu.memory_space<vmem>>, vector<1x8x128xf32>,
    %c8_i32 = arith.constant 8 : i32
    %c0_83 = arith.constant 0 : index
    %c0_84 = arith.constant 0 : index
    %c0_85 = arith.constant 0 : index
    %289 = vector.load %arg11[%c0_83, %c0_84, %c0_85] : memref<2x8x128xf32, #tpu.memory_space<vmem>>, vector<1x8x128xf32>
    %290 = vector.shape_cast %289 : vector<1x8x128xf32> to vector<8x128xf32>
    %291 = vector.shape_cast %284 : vector<8x128xf32> to vector<1x8x128xf32>
    tpu.vector_store %arg11[%c0_83, %c0_84, %c0_85], %291 {strides = array<i32>} : memref<2x8x128xf32, #tpu.memory_space<vmem>>, vector<1x8x128xf32>,
    %c0_86 = arith.constant 0 : index
    %c0_87 = arith.constant 0 : index
    %c0_88 = arith.constant 0 : index
    %292 = vector.load %arg12[%c0_86, %c0_87, %c0_88] : memref<2x8x128xf32, #tpu.memory_space<vmem>>, vector<1x8x128xf32>
    %293 = vector.shape_cast %292 : vector<1x8x128xf32> to vector<8x128xf32>
    %294 = vector.shape_cast %282 : vector<8x128xf32> to vector<1x8x128xf32>
    tpu.vector_store %arg12[%c0_86, %c0_87, %c0_88], %294 {strides = array<i32>} : memref<2x8x128xf32, #tpu.memory_space<vmem>>, vector<1x8x128xf32>,
    %c0_89 = arith.constant 0 : index
    %c0_90 = arith.constant 0 : index
    %295 = vector.load %arg5[%c0_89, %c0_90] : memref<128x512xf32, #tpu.memory_space<vmem>>, vector<128x512xf32>
    %c0_91 = arith.constant 0 : index
    %c0_92 = arith.constant 0 : index
    %296 = vector.load %arg6[%c0_91, %c0_92] : memref<128x512xf32, #tpu.memory_space<vmem>>, vector<128x512xf32>
    %c0_93 = arith.constant 0 : index
    %c0_94 = arith.constant 0 : index
    %297 = vector.load %arg7[%c0_93, %c0_94] : memref<1x512xf32, #tpu.memory_space<vmem>>, vector<1x512xf32>
    %c0_95 = arith.constant 0 : index
    %c0_96 = arith.constant 0 : index
    %c0_97 = arith.constant 0 : index
    %298 = vector.load %arg13[%c0_95, %c0_96, %c0_97] : memref<8x8x128xf32, #tpu.memory_space<vmem>>, vector<8x8x128xf32>
    %299 = vector.shape_cast %298 : vector<8x8x128xf32> to vector<64x128xf32>
    %cst_98 = arith.constant dense<0.000000e+00> : vector<64x512xf32>
    %300 = tpu.matmul %299, %295, %cst_98 {dimension_numbers = #tpu.dot_dimension_numbers<[1], [0], [0], [1], [0, 0, 1, 1], [], []>} : vector<64x128xf32>, vector<128x512xf32>, vector<64x512xf32> -> vector<64x512xf32>
    %301 = vector.broadcast %297 : vector<1x512xf32> to vector<64x512xf32>
    %302 = arith.addf %300, %301 : vector<64x512xf32>
    %303 = vector.shape_cast %302 : vector<64x512xf32> to vector<8x8x512xf32>
    %c0_99 = arith.constant 0 : index
    %c0_100 = arith.constant 0 : index
    %c0_101 = arith.constant 0 : index
    %304 = vector.load %arg14[%c0_99, %c0_100, %c0_101] : memref<8x8x512xf32, #tpu.memory_space<vmem>>, vector<8x8x512xf32>
    tpu.vector_store %arg14[%c0_99, %c0_100, %c0_101], %303 {strides = array<i32>} : memref<8x8x512xf32, #tpu.memory_space<vmem>>, vector<8x8x512xf32>,
    %c1 = arith.constant 1 : index
    %c0_102 = arith.constant 0 : index
    %c0_103 = arith.constant 0 : index
    %305 = vector.load %arg11[%c1, %c0_102, %c0_103] : memref<2x8x128xf32, #tpu.memory_space<vmem>>, vector<1x8x128xf32>
    %306 = vector.shape_cast %305 : vector<1x8x128xf32> to vector<8x128xf32>
    %c1_104 = arith.constant 1 : index
    %c0_105 = arith.constant 0 : index
    %c0_106 = arith.constant 0 : index
    %307 = vector.load %arg12[%c1_104, %c0_105, %c0_106] : memref<2x8x128xf32, #tpu.memory_space<vmem>>, vector<1x8x128xf32>
    %308 = vector.shape_cast %307 : vector<1x8x128xf32> to vector<8x128xf32>
    %c0_i32_107 = arith.constant 0 : i32
    %309 = arith.index_cast %c0_i32_107 : i32 to index
    %c0_108 = arith.constant 0 : index
    %c0_109 = arith.constant 0 : index
    %310 = vector.load %arg14[%309, %c0_108, %c0_109] : memref<8x8x512xf32, #tpu.memory_space<vmem>>, vector<1x8x512xf32>
    %311 = vector.shape_cast %310 : vector<1x8x512xf32> to vector<8x512xf32>
    %cst_110 = arith.constant dense<0.000000e+00> : vector<8x512xf32>
    %312 = tpu.matmul %306, %296, %cst_110 {dimension_numbers = #tpu.dot_dimension_numbers<[1], [0], [0], [1], [0, 0, 1, 1], [], []>} : vector<8x128xf32>, vector<128x512xf32>, vector<8x512xf32> -> vector<8x512xf32>
    %313 = arith.addf %311, %312 : vector<8x512xf32>
    %314 = vector.extract_strided_slice %313 {offsets = [0, 0], sizes = [8, 128], strides = [1, 1]} : vector<8x512xf32> to vector<8x128xf32>
    %315 = arith.negf %314 : vector<8x128xf32>
    %316 = math.exp %315 : vector<8x128xf32>
    %cst_111 = arith.constant 1.000000e+00 : f32
    %317 = vector.broadcast %cst_111 : f32 to vector<8x128xf32>
    %318 = arith.addf %317, %316 : vector<8x128xf32>
    %319 = arith.divf %317, %318 : vector<8x128xf32>
    %320 = vector.extract_strided_slice %313 {offsets = [0, 128], sizes = [8, 128], strides = [1, 1]} : vector<8x512xf32> to vector<8x128xf32>
    %321 = arith.negf %320 : vector<8x128xf32>
    %322 = math.exp %321 : vector<8x128xf32>
    %cst_112 = arith.constant 1.000000e+00 : f32
    %323 = vector.broadcast %cst_112 : f32 to vector<8x128xf32>
    %324 = arith.addf %323, %322 : vector<8x128xf32>
    %325 = arith.divf %323, %324 : vector<8x128xf32>
    %326 = vector.extract_strided_slice %313 {offsets = [0, 256], sizes = [8, 128], strides = [1, 1]} : vector<8x512xf32> to vector<8x128xf32>
    %327 = math.tanh %326 : vector<8x128xf32>
    %328 = vector.extract_strided_slice %313 {offsets = [0, 384], sizes = [8, 128], strides = [1, 1]} : vector<8x512xf32> to vector<8x128xf32>
    %329 = arith.negf %328 : vector<8x128xf32>
    %330 = math.exp %329 : vector<8x128xf32>
    %cst_113 = arith.constant 1.000000e+00 : f32
    %331 = vector.broadcast %cst_113 : f32 to vector<8x128xf32>
    %332 = arith.addf %331, %330 : vector<8x128xf32>
    %333 = arith.divf %331, %332 : vector<8x128xf32>
    %334 = arith.mulf %325, %308 : vector<8x128xf32>
    %335 = arith.mulf %319, %327 : vector<8x128xf32>
    %336 = arith.addf %334, %335 : vector<8x128xf32>
    %337 = math.tanh %336 : vector<8x128xf32>
    %338 = arith.mulf %333, %337 : vector<8x128xf32>
    %339 = arith.index_cast %c0_i32_107 : i32 to index
    %c0_114 = arith.constant 0 : index
    %c0_115 = arith.constant 0 : index
    %340 = vector.load %arg13[%339, %c0_114, %c0_115] : memref<8x8x128xf32, #tpu.memory_space<vmem>>, vector<1x8x128xf32>
    %341 = vector.shape_cast %340 : vector<1x8x128xf32> to vector<8x128xf32>
    %342 = vector.shape_cast %338 : vector<8x128xf32> to vector<1x8x128xf32>
    tpu.vector_store %arg13[%339, %c0_114, %c0_115], %342 {strides = array<i32>} : memref<8x8x128xf32, #tpu.memory_space<vmem>>, vector<1x8x128xf32>,
    %c1_i32_116 = arith.constant 1 : i32
    %343 = arith.index_cast %c1_i32_116 : i32 to index
    %c0_117 = arith.constant 0 : index
    %c0_118 = arith.constant 0 : index
    %344 = vector.load %arg14[%343, %c0_117, %c0_118] : memref<8x8x512xf32, #tpu.memory_space<vmem>>, vector<1x8x512xf32>
    %345 = vector.shape_cast %344 : vector<1x8x512xf32> to vector<8x512xf32>
    %cst_119 = arith.constant dense<0.000000e+00> : vector<8x512xf32>
    %346 = tpu.matmul %338, %296, %cst_119 {dimension_numbers = #tpu.dot_dimension_numbers<[1], [0], [0], [1], [0, 0, 1, 1], [], []>} : vector<8x128xf32>, vector<128x512xf32>, vector<8x512xf32> -> vector<8x512xf32>
    %347 = arith.addf %345, %346 : vector<8x512xf32>
    %348 = vector.extract_strided_slice %347 {offsets = [0, 0], sizes = [8, 128], strides = [1, 1]} : vector<8x512xf32> to vector<8x128xf32>
    %349 = arith.negf %348 : vector<8x128xf32>
    %350 = math.exp %349 : vector<8x128xf32>
    %cst_120 = arith.constant 1.000000e+00 : f32
    %351 = vector.broadcast %cst_120 : f32 to vector<8x128xf32>
    %352 = arith.addf %351, %350 : vector<8x128xf32>
    %353 = arith.divf %351, %352 : vector<8x128xf32>
    %354 = vector.extract_strided_slice %347 {offsets = [0, 128], sizes = [8, 128], strides = [1, 1]} : vector<8x512xf32> to vector<8x128xf32>
    %355 = arith.negf %354 : vector<8x128xf32>
    %356 = math.exp %355 : vector<8x128xf32>
    %cst_121 = arith.constant 1.000000e+00 : f32
    %357 = vector.broadcast %cst_121 : f32 to vector<8x128xf32>
    %358 = arith.addf %357, %356 : vector<8x128xf32>
    %359 = arith.divf %357, %358 : vector<8x128xf32>
    %360 = vector.extract_strided_slice %347 {offsets = [0, 256], sizes = [8, 128], strides = [1, 1]} : vector<8x512xf32> to vector<8x128xf32>
    %361 = math.tanh %360 : vector<8x128xf32>
    %362 = vector.extract_strided_slice %347 {offsets = [0, 384], sizes = [8, 128], strides = [1, 1]} : vector<8x512xf32> to vector<8x128xf32>
    %363 = arith.negf %362 : vector<8x128xf32>
    %364 = math.exp %363 : vector<8x128xf32>
    %cst_122 = arith.constant 1.000000e+00 : f32
    %365 = vector.broadcast %cst_122 : f32 to vector<8x128xf32>
    %366 = arith.addf %365, %364 : vector<8x128xf32>
    %367 = arith.divf %365, %366 : vector<8x128xf32>
    %368 = arith.mulf %359, %336 : vector<8x128xf32>
    %369 = arith.mulf %353, %361 : vector<8x128xf32>
    %370 = arith.addf %368, %369 : vector<8x128xf32>
    %371 = math.tanh %370 : vector<8x128xf32>
    %372 = arith.mulf %367, %371 : vector<8x128xf32>
    %373 = arith.index_cast %c1_i32_116 : i32 to index
    %c0_123 = arith.constant 0 : index
    %c0_124 = arith.constant 0 : index
    %374 = vector.load %arg13[%373, %c0_123, %c0_124] : memref<8x8x128xf32, #tpu.memory_space<vmem>>, vector<1x8x128xf32>
    %375 = vector.shape_cast %374 : vector<1x8x128xf32> to vector<8x128xf32>
    %376 = vector.shape_cast %372 : vector<8x128xf32> to vector<1x8x128xf32>
    tpu.vector_store %arg13[%373, %c0_123, %c0_124], %376 {strides = array<i32>} : memref<8x8x128xf32, #tpu.memory_space<vmem>>, vector<1x8x128xf32>,
    %c2_i32_125 = arith.constant 2 : i32
    %377 = arith.index_cast %c2_i32_125 : i32 to index
    %c0_126 = arith.constant 0 : index
    %c0_127 = arith.constant 0 : index
    %378 = vector.load %arg14[%377, %c0_126, %c0_127] : memref<8x8x512xf32, #tpu.memory_space<vmem>>, vector<1x8x512xf32>
    %379 = vector.shape_cast %378 : vector<1x8x512xf32> to vector<8x512xf32>
    %cst_128 = arith.constant dense<0.000000e+00> : vector<8x512xf32>
    %380 = tpu.matmul %372, %296, %cst_128 {dimension_numbers = #tpu.dot_dimension_numbers<[1], [0], [0], [1], [0, 0, 1, 1], [], []>} : vector<8x128xf32>, vector<128x512xf32>, vector<8x512xf32> -> vector<8x512xf32>
    %381 = arith.addf %379, %380 : vector<8x512xf32>
    %382 = vector.extract_strided_slice %381 {offsets = [0, 0], sizes = [8, 128], strides = [1, 1]} : vector<8x512xf32> to vector<8x128xf32>
    %383 = arith.negf %382 : vector<8x128xf32>
    %384 = math.exp %383 : vector<8x128xf32>
    %cst_129 = arith.constant 1.000000e+00 : f32
    %385 = vector.broadcast %cst_129 : f32 to vector<8x128xf32>
    %386 = arith.addf %385, %384 : vector<8x128xf32>
    %387 = arith.divf %385, %386 : vector<8x128xf32>
    %388 = vector.extract_strided_slice %381 {offsets = [0, 128], sizes = [8, 128], strides = [1, 1]} : vector<8x512xf32> to vector<8x128xf32>
    %389 = arith.negf %388 : vector<8x128xf32>
    %390 = math.exp %389 : vector<8x128xf32>
    %cst_130 = arith.constant 1.000000e+00 : f32
    %391 = vector.broadcast %cst_130 : f32 to vector<8x128xf32>
    %392 = arith.addf %391, %390 : vector<8x128xf32>
    %393 = arith.divf %391, %392 : vector<8x128xf32>
    %394 = vector.extract_strided_slice %381 {offsets = [0, 256], sizes = [8, 128], strides = [1, 1]} : vector<8x512xf32> to vector<8x128xf32>
    %395 = math.tanh %394 : vector<8x128xf32>
    %396 = vector.extract_strided_slice %381 {offsets = [0, 384], sizes = [8, 128], strides = [1, 1]} : vector<8x512xf32> to vector<8x128xf32>
    %397 = arith.negf %396 : vector<8x128xf32>
    %398 = math.exp %397 : vector<8x128xf32>
    %cst_131 = arith.constant 1.000000e+00 : f32
    %399 = vector.broadcast %cst_131 : f32 to vector<8x128xf32>
    %400 = arith.addf %399, %398 : vector<8x128xf32>
    %401 = arith.divf %399, %400 : vector<8x128xf32>
    %402 = arith.mulf %393, %370 : vector<8x128xf32>
    %403 = arith.mulf %387, %395 : vector<8x128xf32>
    %404 = arith.addf %402, %403 : vector<8x128xf32>
    %405 = math.tanh %404 : vector<8x128xf32>
    %406 = arith.mulf %401, %405 : vector<8x128xf32>
    %407 = arith.index_cast %c2_i32_125 : i32 to index
    %c0_132 = arith.constant 0 : index
    %c0_133 = arith.constant 0 : index
    %408 = vector.load %arg13[%407, %c0_132, %c0_133] : memref<8x8x128xf32, #tpu.memory_space<vmem>>, vector<1x8x128xf32>
    %409 = vector.shape_cast %408 : vector<1x8x128xf32> to vector<8x128xf32>
    %410 = vector.shape_cast %406 : vector<8x128xf32> to vector<1x8x128xf32>
    tpu.vector_store %arg13[%407, %c0_132, %c0_133], %410 {strides = array<i32>} : memref<8x8x128xf32, #tpu.memory_space<vmem>>, vector<1x8x128xf32>,
    %c3_i32_134 = arith.constant 3 : i32
    %411 = arith.index_cast %c3_i32_134 : i32 to index
    %c0_135 = arith.constant 0 : index
    %c0_136 = arith.constant 0 : index
    %412 = vector.load %arg14[%411, %c0_135, %c0_136] : memref<8x8x512xf32, #tpu.memory_space<vmem>>, vector<1x8x512xf32>
    %413 = vector.shape_cast %412 : vector<1x8x512xf32> to vector<8x512xf32>
    %cst_137 = arith.constant dense<0.000000e+00> : vector<8x512xf32>
    %414 = tpu.matmul %406, %296, %cst_137 {dimension_numbers = #tpu.dot_dimension_numbers<[1], [0], [0], [1], [0, 0, 1, 1], [], []>} : vector<8x128xf32>, vector<128x512xf32>, vector<8x512xf32> -> vector<8x512xf32>
    %415 = arith.addf %413, %414 : vector<8x512xf32>
    %416 = vector.extract_strided_slice %415 {offsets = [0, 0], sizes = [8, 128], strides = [1, 1]} : vector<8x512xf32> to vector<8x128xf32>
    %417 = arith.negf %416 : vector<8x128xf32>
    %418 = math.exp %417 : vector<8x128xf32>
    %cst_138 = arith.constant 1.000000e+00 : f32
    %419 = vector.broadcast %cst_138 : f32 to vector<8x128xf32>
    %420 = arith.addf %419, %418 : vector<8x128xf32>
    %421 = arith.divf %419, %420 : vector<8x128xf32>
    %422 = vector.extract_strided_slice %415 {offsets = [0, 128], sizes = [8, 128], strides = [1, 1]} : vector<8x512xf32> to vector<8x128xf32>
    %423 = arith.negf %422 : vector<8x128xf32>
    %424 = math.exp %423 : vector<8x128xf32>
    %cst_139 = arith.constant 1.000000e+00 : f32
    %425 = vector.broadcast %cst_139 : f32 to vector<8x128xf32>
    %426 = arith.addf %425, %424 : vector<8x128xf32>
    %427 = arith.divf %425, %426 : vector<8x128xf32>
    %428 = vector.extract_strided_slice %415 {offsets = [0, 256], sizes = [8, 128], strides = [1, 1]} : vector<8x512xf32> to vector<8x128xf32>
    %429 = math.tanh %428 : vector<8x128xf32>
    %430 = vector.extract_strided_slice %415 {offsets = [0, 384], sizes = [8, 128], strides = [1, 1]} : vector<8x512xf32> to vector<8x128xf32>
    %431 = arith.negf %430 : vector<8x128xf32>
    %432 = math.exp %431 : vector<8x128xf32>
    %cst_140 = arith.constant 1.000000e+00 : f32
    %433 = vector.broadcast %cst_140 : f32 to vector<8x128xf32>
    %434 = arith.addf %433, %432 : vector<8x128xf32>
    %435 = arith.divf %433, %434 : vector<8x128xf32>
    %436 = arith.mulf %427, %404 : vector<8x128xf32>
    %437 = arith.mulf %421, %429 : vector<8x128xf32>
    %438 = arith.addf %436, %437 : vector<8x128xf32>
    %439 = math.tanh %438 : vector<8x128xf32>
    %440 = arith.mulf %435, %439 : vector<8x128xf32>
    %441 = arith.index_cast %c3_i32_134 : i32 to index
    %c0_141 = arith.constant 0 : index
    %c0_142 = arith.constant 0 : index
    %442 = vector.load %arg13[%441, %c0_141, %c0_142] : memref<8x8x128xf32, #tpu.memory_space<vmem>>, vector<1x8x128xf32>
    %443 = vector.shape_cast %442 : vector<1x8x128xf32> to vector<8x128xf32>
    %444 = vector.shape_cast %440 : vector<8x128xf32> to vector<1x8x128xf32>
    tpu.vector_store %arg13[%441, %c0_141, %c0_142], %444 {strides = array<i32>} : memref<8x8x128xf32, #tpu.memory_space<vmem>>, vector<1x8x128xf32>,
    %c4_i32_143 = arith.constant 4 : i32
    %445 = arith.index_cast %c4_i32_143 : i32 to index
    %c0_144 = arith.constant 0 : index
    %c0_145 = arith.constant 0 : index
    %446 = vector.load %arg14[%445, %c0_144, %c0_145] : memref<8x8x512xf32, #tpu.memory_space<vmem>>, vector<1x8x512xf32>
    %447 = vector.shape_cast %446 : vector<1x8x512xf32> to vector<8x512xf32>
    %cst_146 = arith.constant dense<0.000000e+00> : vector<8x512xf32>
    %448 = tpu.matmul %440, %296, %cst_146 {dimension_numbers = #tpu.dot_dimension_numbers<[1], [0], [0], [1], [0, 0, 1, 1], [], []>} : vector<8x128xf32>, vector<128x512xf32>, vector<8x512xf32> -> vector<8x512xf32>
    %449 = arith.addf %447, %448 : vector<8x512xf32>
    %450 = vector.extract_strided_slice %449 {offsets = [0, 0], sizes = [8, 128], strides = [1, 1]} : vector<8x512xf32> to vector<8x128xf32>
    %451 = arith.negf %450 : vector<8x128xf32>
    %452 = math.exp %451 : vector<8x128xf32>
    %cst_147 = arith.constant 1.000000e+00 : f32
    %453 = vector.broadcast %cst_147 : f32 to vector<8x128xf32>
    %454 = arith.addf %453, %452 : vector<8x128xf32>
    %455 = arith.divf %453, %454 : vector<8x128xf32>
    %456 = vector.extract_strided_slice %449 {offsets = [0, 128], sizes = [8, 128], strides = [1, 1]} : vector<8x512xf32> to vector<8x128xf32>
    %457 = arith.negf %456 : vector<8x128xf32>
    %458 = math.exp %457 : vector<8x128xf32>
    %cst_148 = arith.constant 1.000000e+00 : f32
    %459 = vector.broadcast %cst_148 : f32 to vector<8x128xf32>
    %460 = arith.addf %459, %458 : vector<8x128xf32>
    %461 = arith.divf %459, %460 : vector<8x128xf32>
    %462 = vector.extract_strided_slice %449 {offsets = [0, 256], sizes = [8, 128], strides = [1, 1]} : vector<8x512xf32> to vector<8x128xf32>
    %463 = math.tanh %462 : vector<8x128xf32>
    %464 = vector.extract_strided_slice %449 {offsets = [0, 384], sizes = [8, 128], strides = [1, 1]} : vector<8x512xf32> to vector<8x128xf32>
    %465 = arith.negf %464 : vector<8x128xf32>
    %466 = math.exp %465 : vector<8x128xf32>
    %cst_149 = arith.constant 1.000000e+00 : f32
    %467 = vector.broadcast %cst_149 : f32 to vector<8x128xf32>
    %468 = arith.addf %467, %466 : vector<8x128xf32>
    %469 = arith.divf %467, %468 : vector<8x128xf32>
    %470 = arith.mulf %461, %438 : vector<8x128xf32>
    %471 = arith.mulf %455, %463 : vector<8x128xf32>
    %472 = arith.addf %470, %471 : vector<8x128xf32>
    %473 = math.tanh %472 : vector<8x128xf32>
    %474 = arith.mulf %469, %473 : vector<8x128xf32>
    %475 = arith.index_cast %c4_i32_143 : i32 to index
    %c0_150 = arith.constant 0 : index
    %c0_151 = arith.constant 0 : index
    %476 = vector.load %arg13[%475, %c0_150, %c0_151] : memref<8x8x128xf32, #tpu.memory_space<vmem>>, vector<1x8x128xf32>
    %477 = vector.shape_cast %476 : vector<1x8x128xf32> to vector<8x128xf32>
    %478 = vector.shape_cast %474 : vector<8x128xf32> to vector<1x8x128xf32>
    tpu.vector_store %arg13[%475, %c0_150, %c0_151], %478 {strides = array<i32>} : memref<8x8x128xf32, #tpu.memory_space<vmem>>, vector<1x8x128xf32>,
    %c5_i32_152 = arith.constant 5 : i32
    %479 = arith.index_cast %c5_i32_152 : i32 to index
    %c0_153 = arith.constant 0 : index
    %c0_154 = arith.constant 0 : index
    %480 = vector.load %arg14[%479, %c0_153, %c0_154] : memref<8x8x512xf32, #tpu.memory_space<vmem>>, vector<1x8x512xf32>
    %481 = vector.shape_cast %480 : vector<1x8x512xf32> to vector<8x512xf32>
    %cst_155 = arith.constant dense<0.000000e+00> : vector<8x512xf32>
    %482 = tpu.matmul %474, %296, %cst_155 {dimension_numbers = #tpu.dot_dimension_numbers<[1], [0], [0], [1], [0, 0, 1, 1], [], []>} : vector<8x128xf32>, vector<128x512xf32>, vector<8x512xf32> -> vector<8x512xf32>
    %483 = arith.addf %481, %482 : vector<8x512xf32>
    %484 = vector.extract_strided_slice %483 {offsets = [0, 0], sizes = [8, 128], strides = [1, 1]} : vector<8x512xf32> to vector<8x128xf32>
    %485 = arith.negf %484 : vector<8x128xf32>
    %486 = math.exp %485 : vector<8x128xf32>
    %cst_156 = arith.constant 1.000000e+00 : f32
    %487 = vector.broadcast %cst_156 : f32 to vector<8x128xf32>
    %488 = arith.addf %487, %486 : vector<8x128xf32>
    %489 = arith.divf %487, %488 : vector<8x128xf32>
    %490 = vector.extract_strided_slice %483 {offsets = [0, 128], sizes = [8, 128], strides = [1, 1]} : vector<8x512xf32> to vector<8x128xf32>
    %491 = arith.negf %490 : vector<8x128xf32>
    %492 = math.exp %491 : vector<8x128xf32>
    %cst_157 = arith.constant 1.000000e+00 : f32
    %493 = vector.broadcast %cst_157 : f32 to vector<8x128xf32>
    %494 = arith.addf %493, %492 : vector<8x128xf32>
    %495 = arith.divf %493, %494 : vector<8x128xf32>
    %496 = vector.extract_strided_slice %483 {offsets = [0, 256], sizes = [8, 128], strides = [1, 1]} : vector<8x512xf32> to vector<8x128xf32>
    %497 = math.tanh %496 : vector<8x128xf32>
    %498 = vector.extract_strided_slice %483 {offsets = [0, 384], sizes = [8, 128], strides = [1, 1]} : vector<8x512xf32> to vector<8x128xf32>
    %499 = arith.negf %498 : vector<8x128xf32>
    %500 = math.exp %499 : vector<8x128xf32>
    %cst_158 = arith.constant 1.000000e+00 : f32
    %501 = vector.broadcast %cst_158 : f32 to vector<8x128xf32>
    %502 = arith.addf %501, %500 : vector<8x128xf32>
    %503 = arith.divf %501, %502 : vector<8x128xf32>
    %504 = arith.mulf %495, %472 : vector<8x128xf32>
    %505 = arith.mulf %489, %497 : vector<8x128xf32>
    %506 = arith.addf %504, %505 : vector<8x128xf32>
    %507 = math.tanh %506 : vector<8x128xf32>
    %508 = arith.mulf %503, %507 : vector<8x128xf32>
    %509 = arith.index_cast %c5_i32_152 : i32 to index
    %c0_159 = arith.constant 0 : index
    %c0_160 = arith.constant 0 : index
    %510 = vector.load %arg13[%509, %c0_159, %c0_160] : memref<8x8x128xf32, #tpu.memory_space<vmem>>, vector<1x8x128xf32>
    %511 = vector.shape_cast %510 : vector<1x8x128xf32> to vector<8x128xf32>
    %512 = vector.shape_cast %508 : vector<8x128xf32> to vector<1x8x128xf32>
    tpu.vector_store %arg13[%509, %c0_159, %c0_160], %512 {strides = array<i32>} : memref<8x8x128xf32, #tpu.memory_space<vmem>>, vector<1x8x128xf32>,
    %c6_i32_161 = arith.constant 6 : i32
    %513 = arith.index_cast %c6_i32_161 : i32 to index
    %c0_162 = arith.constant 0 : index
    %c0_163 = arith.constant 0 : index
    %514 = vector.load %arg14[%513, %c0_162, %c0_163] : memref<8x8x512xf32, #tpu.memory_space<vmem>>, vector<1x8x512xf32>
    %515 = vector.shape_cast %514 : vector<1x8x512xf32> to vector<8x512xf32>
    %cst_164 = arith.constant dense<0.000000e+00> : vector<8x512xf32>
    %516 = tpu.matmul %508, %296, %cst_164 {dimension_numbers = #tpu.dot_dimension_numbers<[1], [0], [0], [1], [0, 0, 1, 1], [], []>} : vector<8x128xf32>, vector<128x512xf32>, vector<8x512xf32> -> vector<8x512xf32>
    %517 = arith.addf %515, %516 : vector<8x512xf32>
    %518 = vector.extract_strided_slice %517 {offsets = [0, 0], sizes = [8, 128], strides = [1, 1]} : vector<8x512xf32> to vector<8x128xf32>
    %519 = arith.negf %518 : vector<8x128xf32>
    %520 = math.exp %519 : vector<8x128xf32>
    %cst_165 = arith.constant 1.000000e+00 : f32
    %521 = vector.broadcast %cst_165 : f32 to vector<8x128xf32>
    %522 = arith.addf %521, %520 : vector<8x128xf32>
    %523 = arith.divf %521, %522 : vector<8x128xf32>
    %524 = vector.extract_strided_slice %517 {offsets = [0, 128], sizes = [8, 128], strides = [1, 1]} : vector<8x512xf32> to vector<8x128xf32>
    %525 = arith.negf %524 : vector<8x128xf32>
    %526 = math.exp %525 : vector<8x128xf32>
    %cst_166 = arith.constant 1.000000e+00 : f32
    %527 = vector.broadcast %cst_166 : f32 to vector<8x128xf32>
    %528 = arith.addf %527, %526 : vector<8x128xf32>
    %529 = arith.divf %527, %528 : vector<8x128xf32>
    %530 = vector.extract_strided_slice %517 {offsets = [0, 256], sizes = [8, 128], strides = [1, 1]} : vector<8x512xf32> to vector<8x128xf32>
    %531 = math.tanh %530 : vector<8x128xf32>
    %532 = vector.extract_strided_slice %517 {offsets = [0, 384], sizes = [8, 128], strides = [1, 1]} : vector<8x512xf32> to vector<8x128xf32>
    %533 = arith.negf %532 : vector<8x128xf32>
    %534 = math.exp %533 : vector<8x128xf32>
    %cst_167 = arith.constant 1.000000e+00 : f32
    %535 = vector.broadcast %cst_167 : f32 to vector<8x128xf32>
    %536 = arith.addf %535, %534 : vector<8x128xf32>
    %537 = arith.divf %535, %536 : vector<8x128xf32>
    %538 = arith.mulf %529, %506 : vector<8x128xf32>
    %539 = arith.mulf %523, %531 : vector<8x128xf32>
    %540 = arith.addf %538, %539 : vector<8x128xf32>
    %541 = math.tanh %540 : vector<8x128xf32>
    %542 = arith.mulf %537, %541 : vector<8x128xf32>
    %543 = arith.index_cast %c6_i32_161 : i32 to index
    %c0_168 = arith.constant 0 : index
    %c0_169 = arith.constant 0 : index
    %544 = vector.load %arg13[%543, %c0_168, %c0_169] : memref<8x8x128xf32, #tpu.memory_space<vmem>>, vector<1x8x128xf32>
    %545 = vector.shape_cast %544 : vector<1x8x128xf32> to vector<8x128xf32>
    %546 = vector.shape_cast %542 : vector<8x128xf32> to vector<1x8x128xf32>
    tpu.vector_store %arg13[%543, %c0_168, %c0_169], %546 {strides = array<i32>} : memref<8x8x128xf32, #tpu.memory_space<vmem>>, vector<1x8x128xf32>,
    %c7_i32_170 = arith.constant 7 : i32
    %547 = arith.index_cast %c7_i32_170 : i32 to index
    %c0_171 = arith.constant 0 : index
    %c0_172 = arith.constant 0 : index
    %548 = vector.load %arg14[%547, %c0_171, %c0_172] : memref<8x8x512xf32, #tpu.memory_space<vmem>>, vector<1x8x512xf32>
    %549 = vector.shape_cast %548 : vector<1x8x512xf32> to vector<8x512xf32>
    %cst_173 = arith.constant dense<0.000000e+00> : vector<8x512xf32>
    %550 = tpu.matmul %542, %296, %cst_173 {dimension_numbers = #tpu.dot_dimension_numbers<[1], [0], [0], [1], [0, 0, 1, 1], [], []>} : vector<8x128xf32>, vector<128x512xf32>, vector<8x512xf32> -> vector<8x512xf32>
    %551 = arith.addf %549, %550 : vector<8x512xf32>
    %552 = vector.extract_strided_slice %551 {offsets = [0, 0], sizes = [8, 128], strides = [1, 1]} : vector<8x512xf32> to vector<8x128xf32>
    %553 = arith.negf %552 : vector<8x128xf32>
    %554 = math.exp %553 : vector<8x128xf32>
    %cst_174 = arith.constant 1.000000e+00 : f32
    %555 = vector.broadcast %cst_174 : f32 to vector<8x128xf32>
    %556 = arith.addf %555, %554 : vector<8x128xf32>
    %557 = arith.divf %555, %556 : vector<8x128xf32>
    %558 = vector.extract_strided_slice %551 {offsets = [0, 128], sizes = [8, 128], strides = [1, 1]} : vector<8x512xf32> to vector<8x128xf32>
    %559 = arith.negf %558 : vector<8x128xf32>
    %560 = math.exp %559 : vector<8x128xf32>
    %cst_175 = arith.constant 1.000000e+00 : f32
    %561 = vector.broadcast %cst_175 : f32 to vector<8x128xf32>
    %562 = arith.addf %561, %560 : vector<8x128xf32>
    %563 = arith.divf %561, %562 : vector<8x128xf32>
    %564 = vector.extract_strided_slice %551 {offsets = [0, 256], sizes = [8, 128], strides = [1, 1]} : vector<8x512xf32> to vector<8x128xf32>
    %565 = math.tanh %564 : vector<8x128xf32>
    %566 = vector.extract_strided_slice %551 {offsets = [0, 384], sizes = [8, 128], strides = [1, 1]} : vector<8x512xf32> to vector<8x128xf32>
    %567 = arith.negf %566 : vector<8x128xf32>
    %568 = math.exp %567 : vector<8x128xf32>
    %cst_176 = arith.constant 1.000000e+00 : f32
    %569 = vector.broadcast %cst_176 : f32 to vector<8x128xf32>
    %570 = arith.addf %569, %568 : vector<8x128xf32>
    %571 = arith.divf %569, %570 : vector<8x128xf32>
    %572 = arith.mulf %563, %540 : vector<8x128xf32>
    %573 = arith.mulf %557, %565 : vector<8x128xf32>
    %574 = arith.addf %572, %573 : vector<8x128xf32>
    %575 = math.tanh %574 : vector<8x128xf32>
    %576 = arith.mulf %571, %575 : vector<8x128xf32>
    %577 = arith.index_cast %c7_i32_170 : i32 to index
    %c0_177 = arith.constant 0 : index
    %c0_178 = arith.constant 0 : index
    %578 = vector.load %arg13[%577, %c0_177, %c0_178] : memref<8x8x128xf32, #tpu.memory_space<vmem>>, vector<1x8x128xf32>
    %579 = vector.shape_cast %578 : vector<1x8x128xf32> to vector<8x128xf32>
    %580 = vector.shape_cast %576 : vector<8x128xf32> to vector<1x8x128xf32>
    tpu.vector_store %arg13[%577, %c0_177, %c0_178], %580 {strides = array<i32>} : memref<8x8x128xf32, #tpu.memory_space<vmem>>, vector<1x8x128xf32>,
    %c8_i32_179 = arith.constant 8 : i32
    %c1_180 = arith.constant 1 : index
    %c0_181 = arith.constant 0 : index
    %c0_182 = arith.constant 0 : index
    %581 = vector.load %arg11[%c1_180, %c0_181, %c0_182] : memref<2x8x128xf32, #tpu.memory_space<vmem>>, vector<1x8x128xf32>
    %582 = vector.shape_cast %581 : vector<1x8x128xf32> to vector<8x128xf32>
    %583 = vector.shape_cast %576 : vector<8x128xf32> to vector<1x8x128xf32>
    tpu.vector_store %arg11[%c1_180, %c0_181, %c0_182], %583 {strides = array<i32>} : memref<2x8x128xf32, #tpu.memory_space<vmem>>, vector<1x8x128xf32>,
    %c1_183 = arith.constant 1 : index
    %c0_184 = arith.constant 0 : index
    %c0_185 = arith.constant 0 : index
    %584 = vector.load %arg12[%c1_183, %c0_184, %c0_185] : memref<2x8x128xf32, #tpu.memory_space<vmem>>, vector<1x8x128xf32>
    %585 = vector.shape_cast %584 : vector<1x8x128xf32> to vector<8x128xf32>
    %586 = vector.shape_cast %574 : vector<8x128xf32> to vector<1x8x128xf32>
    tpu.vector_store %arg12[%c1_183, %c0_184, %c0_185], %586 {strides = array<i32>} : memref<2x8x128xf32, #tpu.memory_space<vmem>>, vector<1x8x128xf32>,
    %c0_186 = arith.constant 0 : index
    %c0_187 = arith.constant 0 : index
    %587 = vector.load %arg8[%c0_186, %c0_187] : memref<128x128xf32, #tpu.memory_space<vmem>>, vector<128x128xf32>
    %c0_188 = arith.constant 0 : index
    %c0_189 = arith.constant 0 : index
    %c0_190 = arith.constant 0 : index
    %588 = vector.load %arg13[%c0_188, %c0_189, %c0_190] : memref<8x8x128xf32, #tpu.memory_space<vmem>>, vector<8x8x128xf32>
    %589 = vector.shape_cast %588 : vector<8x8x128xf32> to vector<64x128xf32>
    %cst_191 = arith.constant dense<0.000000e+00> : vector<64x128xf32>
    %590 = tpu.matmul %589, %587, %cst_191 {dimension_numbers = #tpu.dot_dimension_numbers<[1], [0], [0], [1], [0, 0, 1, 1], [], []>} : vector<64x128xf32>, vector<128x128xf32>, vector<64x128xf32> -> vector<64x128xf32>
    %c0_192 = arith.constant 0 : index
    %c0_193 = arith.constant 0 : index
    %591 = vector.load %arg9[%c0_192, %c0_193] : memref<1x128xf32, #tpu.memory_space<vmem>>, vector<1x128xf32>
    %592 = vector.broadcast %591 : vector<1x128xf32> to vector<64x128xf32>
    %593 = arith.addf %590, %592 : vector<64x128xf32>
    %594 = vector.shape_cast %593 : vector<64x128xf32> to vector<8x8x128xf32>
    %c0_194 = arith.constant 0 : index
    %c0_195 = arith.constant 0 : index
    %c0_196 = arith.constant 0 : index
    %595 = vector.load %arg10[%c0_194, %c0_195, %c0_196] : memref<8x8x128xf32, #tpu.memory_space<vmem>>, vector<8x8x128xf32>
    tpu.vector_store %arg10[%c0_194, %c0_195, %c0_196], %594 {strides = array<i32>} : memref<8x8x128xf32, #tpu.memory_space<vmem>>, vector<8x8x128xf32>,
    return
  }
  func.func @transform_0(%arg0: i32) -> (i32, i32, i32) {
    %c0_i32 = arith.constant 0 : i32
    %c0_i32_0 = arith.constant 0 : i32
    %c0_i32_1 = arith.constant 0 : i32
    return %arg0, %c0_i32, %c0_i32_0 : i32, i32, i32
  }
  func.func @transform_1(%arg0: i32) -> (i32, i32) {
    %c0_i32 = arith.constant 0 : i32
    %c0_i32_0 = arith.constant 0 : i32
    %c0_i32_1 = arith.constant 0 : i32
    return %c0_i32, %c0_i32_0 : i32, i32
  }
  func.func @transform_2(%arg0: i32) -> (i32, i32) {
    %c0_i32 = arith.constant 0 : i32
    %c0_i32_0 = arith.constant 0 : i32
    %c0_i32_1 = arith.constant 0 : i32
    return %c0_i32, %c0_i32_0 : i32, i32
  }
  func.func @transform_3(%arg0: i32) -> (i32, i32) {
    %c0_i32 = arith.constant 0 : i32
    %c0_i32_0 = arith.constant 0 : i32
    %c0_i32_1 = arith.constant 0 : i32
    return %c0_i32, %c0_i32_0 : i32, i32
  }
  func.func @transform_4(%arg0: i32) -> (i32, i32) {
    %c0_i32 = arith.constant 0 : i32
    %c0_i32_0 = arith.constant 0 : i32
    %c0_i32_1 = arith.constant 0 : i32
    return %c0_i32, %c0_i32_0 : i32, i32
  }
  func.func @transform_5(%arg0: i32) -> (i32, i32) {
    %c0_i32 = arith.constant 0 : i32
    %c0_i32_0 = arith.constant 0 : i32
    %c0_i32_1 = arith.constant 0 : i32
    return %c0_i32, %c0_i32_0 : i32, i32
  }
  func.func @transform_6(%arg0: i32) -> (i32, i32) {
    %c0_i32 = arith.constant 0 : i32
    %c0_i32_0 = arith.constant 0 : i32
    %c0_i32_1 = arith.constant 0 : i32
    return %c0_i32, %c0_i32_0 : i32, i32
  }
  func.func @transform_7(%arg0: i32) -> (i32, i32) {
    %c0_i32 = arith.constant 0 : i32
    %c0_i32_0 = arith.constant 0 : i32
    %c0_i32_1 = arith.constant 0 : i32
    return %c0_i32, %c0_i32_0 : i32, i32
  }
  func.func @transform_8(%arg0: i32) -> (i32, i32) {
    %c0_i32 = arith.constant 0 : i32
    %c0_i32_0 = arith.constant 0 : i32
    %c0_i32_1 = arith.constant 0 : i32
    return %c0_i32, %c0_i32_0 : i32, i32
  }
  func.func @transform_9(%arg0: i32) -> (i32, i32, i32) {
    %c0_i32 = arith.constant 0 : i32
    %c0_i32_0 = arith.constant 0 : i32
    %c0_i32_1 = arith.constant 0 : i32
    return %arg0, %c0_i32, %c0_i32_0 : i32, i32, i32
  }
}

module attributes {stable_mosaic.version = 11 : i64} {
  func.func @kernel(%arg0: i32, %arg1: memref<8x8x16xf32, #tpu.memory_space<vmem>>, %arg2: memref<16x512xf32, #tpu.memory_space<vmem>>, %arg3: memref<128x512xf32, #tpu.memory_space<vmem>>, %arg4: memref<1x512xf32, #tpu.memory_space<vmem>>, %arg5: memref<128x512xf32, #tpu.memory_space<vmem>>, %arg6: memref<128x512xf32, #tpu.memory_space<vmem>>, %arg7: memref<1x512xf32, #tpu.memory_space<vmem>>, %arg8: memref<128x128xf32, #tpu.memory_space<vmem>>, %arg9: memref<1x128xf32, #tpu.memory_space<vmem>>, %arg10: memref<8x8x128xf32, #tpu.memory_space<vmem>>, %arg11: memref<2x8x128xf32, #tpu.memory_space<vmem>>, %arg12: memref<2x8x128xf32, #tpu.memory_space<vmem>>, %arg13: memref<8x8x128xf32, #tpu.memory_space<vmem>>, %arg14: memref<8x8x512xf32, #tpu.memory_space<vmem>>) attributes {dimension_semantics = [#tpu.dimension_semantics<arbitrary>], iteration_bounds = array<i64: 1>, scalar_prefetch = 0 : i64, scratch_operands = 4 : i64, tpu.core_type = #tpu.core_type<tc>, window_params = [{transform_indices = @transform_0, window_bounds = array<i64: 8, 8, 16>}, {pipeline_mode = #tpu.pipeline_mode<synchronous>, transform_indices = @transform_1, window_bounds = array<i64: 16, 512>}, {pipeline_mode = #tpu.pipeline_mode<synchronous>, transform_indices = @transform_2, window_bounds = array<i64: 128, 512>}, {pipeline_mode = #tpu.pipeline_mode<synchronous>, transform_indices = @transform_3, window_bounds = array<i64: 1, 512>}, {pipeline_mode = #tpu.pipeline_mode<synchronous>, transform_indices = @transform_4, window_bounds = array<i64: 128, 512>}, {pipeline_mode = #tpu.pipeline_mode<synchronous>, transform_indices = @transform_5, window_bounds = array<i64: 128, 512>}, {pipeline_mode = #tpu.pipeline_mode<synchronous>, transform_indices = @transform_6, window_bounds = array<i64: 1, 512>}, {pipeline_mode = #tpu.pipeline_mode<synchronous>, transform_indices = @transform_7, window_bounds = array<i64: 128, 128>}, {pipeline_mode = #tpu.pipeline_mode<synchronous>, transform_indices = @transform_8, window_bounds = array<i64: 1, 128>}, {transform_indices = @transform_9, window_bounds = array<i64: 8, 8, 128>}]} {
    %c0_i32 = arith.constant 0 : i32
    %0 = arith.cmpi eq, %arg0, %c0_i32 : i32
    %1 = arith.extui %0 : i1 to i32
    %c0_i32_0 = arith.constant 0 : i32
    %2 = arith.cmpi ne, %1, %c0_i32_0 : i32
    scf.if %2 {
      %cst_197 = arith.constant 0.000000e+00 : f32
      %596 = vector.broadcast %cst_197 : f32 to vector<2x8x128xf32>
      %c0_198 = arith.constant 0 : index
      %c0_199 = arith.constant 0 : index
      %c0_200 = arith.constant 0 : index
      %597 = vector.load %arg11[%c0_198, %c0_199, %c0_200] : memref<2x8x128xf32, #tpu.memory_space<vmem>>, vector<2x8x128xf32>
      tpu.vector_store %arg11[%c0_198, %c0_199, %c0_200], %596 {strides = array<i32>} : memref<2x8x128xf32, #tpu.memory_space<vmem>>, vector<2x8x128xf32>,
      %cst_201 = arith.constant 0.000000e+00 : f32
      %598 = vector.broadcast %cst_201 : f32 to vector<2x8x128xf32>
      %c0_202 = arith.constant 0 : index
      %c0_203 = arith.constant 0 : index
      %c0_204 = arith.constant 0 : index
      %599 = vector.load %arg12[%c0_202, %c0_203, %c0_204] : memref<2x8x128xf32, #tpu.memory_space<vmem>>, vector<2x8x128xf32>
      tpu.vector_store %arg12[%c0_202, %c0_203, %c0_204], %598 {strides = array<i32>} : memref<2x8x128xf32, #tpu.memory_space<vmem>>, vector<2x8x128xf32>,
    } else {
    }
    %c0 = arith.constant 0 : index
    %c0_1 = arith.constant 0 : index
    %3 = vector.load %arg2[%c0, %c0_1] : memref<16x512xf32, #tpu.memory_space<vmem>>, vector<16x512xf32>
    %c0_2 = arith.constant 0 : index
    %c0_3 = arith.constant 0 : index
    %4 = vector.load %arg3[%c0_2, %c0_3] : memref<128x512xf32, #tpu.memory_space<vmem>>, vector<128x512xf32>
    %c0_4 = arith.constant 0 : index
    %c0_5 = arith.constant 0 : index
    %5 = vector.load %arg4[%c0_4, %c0_5] : memref<1x512xf32, #tpu.memory_space<vmem>>, vector<1x512xf32>
    %c0_6 = arith.constant 0 : index
    %c0_7 = arith.constant 0 : index
    %c0_8 = arith.constant 0 : index
    %6 = vector.load %arg1[%c0_6, %c0_7, %c0_8] : memref<8x8x16xf32, #tpu.memory_space<vmem>>, vector<8x8x16xf32>
    %7 = vector.shape_cast %6 : vector<8x8x16xf32> to vector<64x16xf32>
    %cst = arith.constant dense<0.000000e+00> : vector<64x512xf32>
    %8 = tpu.matmul %7, %3, %cst {dimension_numbers = #tpu.dot_dimension_numbers<[1], [0], [0], [1], [0, 0, 1, 1], [], []>} : vector<64x16xf32>, vector<16x512xf32>, vector<64x512xf32> -> vector<64x512xf32>
    %9 = vector.broadcast %5 : vector<1x512xf32> to vector<64x512xf32>
    %10 = arith.addf %8, %9 : vector<64x512xf32>
    %11 = vector.shape_cast %10 : vector<64x512xf32> to vector<8x8x512xf32>
    %c0_9 = arith.constant 0 : index
    %c0_10 = arith.constant 0 : index
    %c0_11 = arith.constant 0 : index
    %12 = vector.load %arg14[%c0_9, %c0_10, %c0_11] : memref<8x8x512xf32, #tpu.memory_space<vmem>>, vector<8x8x512xf32>
    tpu.vector_store %arg14[%c0_9, %c0_10, %c0_11], %11 {strides = array<i32>} : memref<8x8x512xf32, #tpu.memory_space<vmem>>, vector<8x8x512xf32>,
    %c0_12 = arith.constant 0 : index
    %c0_13 = arith.constant 0 : index
    %c0_14 = arith.constant 0 : index
    %13 = vector.load %arg11[%c0_12, %c0_13, %c0_14] : memref<2x8x128xf32, #tpu.memory_space<vmem>>, vector<1x8x128xf32>
    %14 = vector.shape_cast %13 : vector<1x8x128xf32> to vector<8x128xf32>
    %c0_15 = arith.constant 0 : index
    %c0_16 = arith.constant 0 : index
    %c0_17 = arith.constant 0 : index
    %15 = vector.load %arg12[%c0_15, %c0_16, %c0_17] : memref<2x8x128xf32, #tpu.memory_space<vmem>>, vector<1x8x128xf32>
    %16 = vector.shape_cast %15 : vector<1x8x128xf32> to vector<8x128xf32>
    %c0_i32_18 = arith.constant 0 : i32
    %17 = arith.index_cast %c0_i32_18 : i32 to index
    %c0_19 = arith.constant 0 : index
    %c0_20 = arith.constant 0 : index
    %18 = vector.load %arg14[%17, %c0_19, %c0_20] : memref<8x8x512xf32, #tpu.memory_space<vmem>>, vector<1x8x512xf32>
    %19 = vector.shape_cast %18 : vector<1x8x512xf32> to vector<8x512xf32>
    %cst_21 = arith.constant dense<0.000000e+00> : vector<8x512xf32>
    %20 = tpu.matmul %14, %4, %cst_21 {dimension_numbers = #tpu.dot_dimension_numbers<[1], [0], [0], [1], [0, 0, 1, 1], [], []>} : vector<8x128xf32>, vector<128x512xf32>, vector<8x512xf32> -> vector<8x512xf32>
    %21 = arith.addf %19, %20 : vector<8x512xf32>
    %22 = vector.extract_strided_slice %21 {offsets = [0, 0], sizes = [8, 128], strides = [1, 1]} : vector<8x512xf32> to vector<8x128xf32>
    %23 = arith.negf %22 : vector<8x128xf32>
    %24 = math.exp %23 : vector<8x128xf32>
    %cst_22 = arith.constant 1.000000e+00 : f32
    %25 = vector.broadcast %cst_22 : f32 to vector<8x128xf32>
    %26 = arith.addf %25, %24 : vector<8x128xf32>
    %27 = arith.divf %25, %26 : vector<8x128xf32>
    %28 = vector.extract_strided_slice %21 {offsets = [0, 128], sizes = [8, 128], strides = [1, 1]} : vector<8x512xf32> to vector<8x128xf32>
    %29 = arith.negf %28 : vector<8x128xf32>
    %30 = math.exp %29 : vector<8x128xf32>
    %cst_23 = arith.constant 1.000000e+00 : f32
    %31 = vector.broadcast %cst_23 : f32 to vector<8x128xf32>
    %32 = arith.addf %31, %30 : vector<8x128xf32>
    %33 = arith.divf %31, %32 : vector<8x128xf32>
    %34 = vector.extract_strided_slice %21 {offsets = [0, 256], sizes = [8, 128], strides = [1, 1]} : vector<8x512xf32> to vector<8x128xf32>
    %35 = math.tanh %34 : vector<8x128xf32>
    %36 = vector.extract_strided_slice %21 {offsets = [0, 384], sizes = [8, 128], strides = [1, 1]} : vector<8x512xf32> to vector<8x128xf32>
    %37 = arith.negf %36 : vector<8x128xf32>
    %38 = math.exp %37 : vector<8x128xf32>
    %cst_24 = arith.constant 1.000000e+00 : f32
    %39 = vector.broadcast %cst_24 : f32 to vector<8x128xf32>
    %40 = arith.addf %39, %38 : vector<8x128xf32>
    %41 = arith.divf %39, %40 : vector<8x128xf32>
    %42 = arith.mulf %33, %16 : vector<8x128xf32>
    %43 = arith.mulf %27, %35 : vector<8x128xf32>
    %44 = arith.addf %42, %43 : vector<8x128xf32>
    %45 = math.tanh %44 : vector<8x128xf32>
    %46 = arith.mulf %41, %45 : vector<8x128xf32>
    %47 = arith.index_cast %c0_i32_18 : i32 to index
    %c0_25 = arith.constant 0 : index
    %c0_26 = arith.constant 0 : index
    %48 = vector.load %arg13[%47, %c0_25, %c0_26] : memref<8x8x128xf32, #tpu.memory_space<vmem>>, vector<1x8x128xf32>
    %49 = vector.shape_cast %48 : vector<1x8x128xf32> to vector<8x128xf32>
    %50 = vector.shape_cast %46 : vector<8x128xf32> to vector<1x8x128xf32>
    tpu.vector_store %arg13[%47, %c0_25, %c0_26], %50 {strides = array<i32>} : memref<8x8x128xf32, #tpu.memory_space<vmem>>, vector<1x8x128xf32>,
    %c1_i32 = arith.constant 1 : i32
    %51 = arith.index_cast %c1_i32 : i32 to index
    %c0_27 = arith.constant 0 : index
    %c0_28 = arith.constant 0 : index
    %52 = vector.load %arg14[%51, %c0_27, %c0_28] : memref<8x8x512xf32, #tpu.memory_space<vmem>>, vector<1x8x512xf32>
    %53 = vector.shape_cast %52 : vector<1x8x512xf32> to vector<8x512xf32>
    %cst_29 = arith.constant dense<0.000000e+00> : vector<8x512xf32>
    %54 = tpu.matmul %46, %4, %cst_29 {dimension_numbers = #tpu.dot_dimension_numbers<[1], [0], [0], [1], [0, 0, 1, 1], [], []>} : vector<8x128xf32>, vector<128x512xf32>, vector<8x512xf32> -> vector<8x512xf32>
    %55 = arith.addf %53, %54 : vector<8x512xf32>
    %56 = vector.extract_strided_slice %55 {offsets = [0, 0], sizes = [8, 128], strides = [1, 1]} : vector<8x512xf32> to vector<8x128xf32>
    %57 = arith.negf %56 : vector<8x128xf32>
    %58 = math.exp %57 : vector<8x128xf32>
    %cst_30 = arith.constant 1.000000e+00 : f32
    %59 = vector.broadcast %cst_30 : f32 to vector<8x128xf32>
    %60 = arith.addf %59, %58 : vector<8x128xf32>
    %61 = arith.divf %59, %60 : vector<8x128xf32>
    %62 = vector.extract_strided_slice %55 {offsets = [0, 128], sizes = [8, 128], strides = [1, 1]} : vector<8x512xf32> to vector<8x128xf32>
    %63 = arith.negf %62 : vector<8x128xf32>
    %64 = math.exp %63 : vector<8x128xf32>
    %cst_31 = arith.constant 1.000000e+00 : f32
    %65 = vector.broadcast %cst_31 : f32 to vector<8x128xf32>
    %66 = arith.addf %65, %64 : vector<8x128xf32>
    %67 = arith.divf %65, %66 : vector<8x128xf32>
    %68 = vector.extract_strided_slice %55 {offsets = [0, 256], sizes = [8, 128], strides = [1, 1]} : vector<8x512xf32> to vector<8x128xf32>
    %69 = math.tanh %68 : vector<8x128xf32>
    %70 = vector.extract_strided_slice %55 {offsets = [0, 384], sizes = [8, 128], strides = [1, 1]} : vector<8x512xf32> to vector<8x128xf32>
    %71 = arith.negf %70 : vector<8x128xf32>
    %72 = math.exp %71 : vector<8x128xf32>
    %cst_32 = arith.constant 1.000000e+00 : f32
    %73 = vector.broadcast %cst_32 : f32 to vector<8x128xf32>
    %74 = arith.addf %73, %72 : vector<8x128xf32>
    %75 = arith.divf %73, %74 : vector<8x128xf32>
    %76 = arith.mulf %67, %44 : vector<8x128xf32>
    %77 = arith.mulf %61, %69 : vector<8x128xf32>
    %78 = arith.addf %76, %77 : vector<8x128xf32>
    %79 = math.tanh %78 : vector<8x128xf32>
    %80 = arith.mulf %75, %79 : vector<8x128xf32>
    %81 = arith.index_cast %c1_i32 : i32 to index
    %c0_33 = arith.constant 0 : index
    %c0_34 = arith.constant 0 : index
    %82 = vector.load %arg13[%81, %c0_33, %c0_34] : memref<8x8x128xf32, #tpu.memory_space<vmem>>, vector<1x8x128xf32>
    %83 = vector.shape_cast %82 : vector<1x8x128xf32> to vector<8x128xf32>
    %84 = vector.shape_cast %80 : vector<8x128xf32> to vector<1x8x128xf32>
    tpu.vector_store %arg13[%81, %c0_33, %c0_34], %84 {strides = array<i32>} : memref<8x8x128xf32, #tpu.memory_space<vmem>>, vector<1x8x128xf32>,
    %c2_i32 = arith.constant 2 : i32
    %85 = arith.index_cast %c2_i32 : i32 to index
    %c0_35 = arith.constant 0 : index
    %c0_36 = arith.constant 0 : index
    %86 = vector.load %arg14[%85, %c0_35, %c0_36] : memref<8x8x512xf32, #tpu.memory_space<vmem>>, vector<1x8x512xf32>
    %87 = vector.shape_cast %86 : vector<1x8x512xf32> to vector<8x512xf32>
    %cst_37 = arith.constant dense<0.000000e+00> : vector<8x512xf32>
    %88 = tpu.matmul %80, %4, %cst_37 {dimension_numbers = #tpu.dot_dimension_numbers<[1], [0], [0], [1], [0, 0, 1, 1], [], []>} : vector<8x128xf32>, vector<128x512xf32>, vector<8x512xf32> -> vector<8x512xf32>
    %89 = arith.addf %87, %88 : vector<8x512xf32>
    %90 = vector.extract_strided_slice %89 {offsets = [0, 0], sizes = [8, 128], strides = [1, 1]} : vector<8x512xf32> to vector<8x128xf32>
    %91 = arith.negf %90 : vector<8x128xf32>
    %92 = math.exp %91 : vector<8x128xf32>
    %cst_38 = arith.constant 1.000000e+00 : f32
    %93 = vector.broadcast %cst_38 : f32 to vector<8x128xf32>
    %94 = arith.addf %93, %92 : vector<8x128xf32>
    %95 = arith.divf %93, %94 : vector<8x128xf32>
    %96 = vector.extract_strided_slice %89 {offsets = [0, 128], sizes = [8, 128], strides = [1, 1]} : vector<8x512xf32> to vector<8x128xf32>
    %97 = arith.negf %96 : vector<8x128xf32>
    %98 = math.exp %97 : vector<8x128xf32>
    %cst_39 = arith.constant 1.000000e+00 : f32
    %99 = vector.broadcast %cst_39 : f32 to vector<8x128xf32>
    %100 = arith.addf %99, %98 : vector<8x128xf32>
    %101 = arith.divf %99, %100 : vector<8x128xf32>
    %102 = vector.extract_strided_slice %89 {offsets = [0, 256], sizes = [8, 128], strides = [1, 1]} : vector<8x512xf32> to vector<8x128xf32>
    %103 = math.tanh %102 : vector<8x128xf32>
    %104 = vector.extract_strided_slice %89 {offsets = [0, 384], sizes = [8, 128], strides = [1, 1]} : vector<8x512xf32> to vector<8x128xf32>
    %105 = arith.negf %104 : vector<8x128xf32>
    %106 = math.exp %105 : vector<8x128xf32>
    %cst_40 = arith.constant 1.000000e+00 : f32
    %107 = vector.broadcast %cst_40 : f32 to vector<8x128xf32>
    %108 = arith.addf %107, %106 : vector<8x128xf32>
    %109 = arith.divf %107, %108 : vector<8x128xf32>
    %110 = arith.mulf %101, %78 : vector<8x128xf32>
    %111 = arith.mulf %95, %103 : vector<8x128xf32>
    %112 = arith.addf %110, %111 : vector<8x128xf32>
    %113 = math.tanh %112 : vector<8x128xf32>
    %114 = arith.mulf %109, %113 : vector<8x128xf32>
    %115 = arith.index_cast %c2_i32 : i32 to index
    %c0_41 = arith.constant 0 : index
    %c0_42 = arith.constant 0 : index
    %116 = vector.load %arg13[%115, %c0_41, %c0_42] : memref<8x8x128xf32, #tpu.memory_space<vmem>>, vector<1x8x128xf32>
    %117 = vector.shape_cast %116 : vector<1x8x128xf32> to vector<8x128xf32>
    %118 = vector.shape_cast %114 : vector<8x128xf32> to vector<1x8x128xf32>
    tpu.vector_store %arg13[%115, %c0_41, %c0_42], %118 {strides = array<i32>} : memref<8x8x128xf32, #tpu.memory_space<vmem>>, vector<1x8x128xf32>,
    %c3_i32 = arith.constant 3 : i32
    %119 = arith.index_cast %c3_i32 : i32 to index
    %c0_43 = arith.constant 0 : index
    %c0_44 = arith.constant 0 : index
    %120 = vector.load %arg14[%119, %c0_43, %c0_44] : memref<8x8x512xf32, #tpu.memory_space<vmem>>, vector<1x8x512xf32>
    %121 = vector.shape_cast %120 : vector<1x8x512xf32> to vector<8x512xf32>
    %cst_45 = arith.constant dense<0.000000e+00> : vector<8x512xf32>
    %122 = tpu.matmul %114, %4, %cst_45 {dimension_numbers = #tpu.dot_dimension_numbers<[1], [0], [0], [1], [0, 0, 1, 1], [], []>} : vector<8x128xf32>, vector<128x512xf32>, vector<8x512xf32> -> vector<8x512xf32>
    %123 = arith.addf %121, %122 : vector<8x512xf32>
    %124 = vector.extract_strided_slice %123 {offsets = [0, 0], sizes = [8, 128], strides = [1, 1]} : vector<8x512xf32> to vector<8x128xf32>
    %125 = arith.negf %124 : vector<8x128xf32>
    %126 = math.exp %125 : vector<8x128xf32>
    %cst_46 = arith.constant 1.000000e+00 : f32
    %127 = vector.broadcast %cst_46 : f32 to vector<8x128xf32>
    %128 = arith.addf %127, %126 : vector<8x128xf32>
    %129 = arith.divf %127, %128 : vector<8x128xf32>
    %130 = vector.extract_strided_slice %123 {offsets = [0, 128], sizes = [8, 128], strides = [1, 1]} : vector<8x512xf32> to vector<8x128xf32>
    %131 = arith.negf %130 : vector<8x128xf32>
    %132 = math.exp %131 : vector<8x128xf32>
    %cst_47 = arith.constant 1.000000e+00 : f32
    %133 = vector.broadcast %cst_47 : f32 to vector<8x128xf32>
    %134 = arith.addf %133, %132 : vector<8x128xf32>
    %135 = arith.divf %133, %134 : vector<8x128xf32>
    %136 = vector.extract_strided_slice %123 {offsets = [0, 256], sizes = [8, 128], strides = [1, 1]} : vector<8x512xf32> to vector<8x128xf32>
    %137 = math.tanh %136 : vector<8x128xf32>
    %138 = vector.extract_strided_slice %123 {offsets = [0, 384], sizes = [8, 128], strides = [1, 1]} : vector<8x512xf32> to vector<8x128xf32>
    %139 = arith.negf %138 : vector<8x128xf32>
    %140 = math.exp %139 : vector<8x128xf32>
    %cst_48 = arith.constant 1.000000e+00 : f32
    %141 = vector.broadcast %cst_48 : f32 to vector<8x128xf32>
    %142 = arith.addf %141, %140 : vector<8x128xf32>
    %143 = arith.divf %141, %142 : vector<8x128xf32>
    %144 = arith.mulf %135, %112 : vector<8x128xf32>
    %145 = arith.mulf %129, %137 : vector<8x128xf32>
    %146 = arith.addf %144, %145 : vector<8x128xf32>
    %147 = math.tanh %146 : vector<8x128xf32>
    %148 = arith.mulf %143, %147 : vector<8x128xf32>
    %149 = arith.index_cast %c3_i32 : i32 to index
    %c0_49 = arith.constant 0 : index
    %c0_50 = arith.constant 0 : index
    %150 = vector.load %arg13[%149, %c0_49, %c0_50] : memref<8x8x128xf32, #tpu.memory_space<vmem>>, vector<1x8x128xf32>
    %151 = vector.shape_cast %150 : vector<1x8x128xf32> to vector<8x128xf32>
    %152 = vector.shape_cast %148 : vector<8x128xf32> to vector<1x8x128xf32>
    tpu.vector_store %arg13[%149, %c0_49, %c0_50], %152 {strides = array<i32>} : memref<8x8x128xf32, #tpu.memory_space<vmem>>, vector<1x8x128xf32>,
    %c4_i32 = arith.constant 4 : i32
    %153 = arith.index_cast %c4_i32 : i32 to index
    %c0_51 = arith.constant 0 : index
    %c0_52 = arith.constant 0 : index
    %154 = vector.load %arg14[%153, %c0_51, %c0_52] : memref<8x8x512xf32, #tpu.memory_space<vmem>>, vector<1x8x512xf32>
    %155 = vector.shape_cast %154 : vector<1x8x512xf32> to vector<8x512xf32>
    %cst_53 = arith.constant dense<0.000000e+00> : vector<8x512xf32>
    %156 = tpu.matmul %148, %4, %cst_53 {dimension_numbers = #tpu.dot_dimension_numbers<[1], [0], [0], [1], [0, 0, 1, 1], [], []>} : vector<8x128xf32>, vector<128x512xf32>, vector<8x512xf32> -> vector<8x512xf32>
    %157 = arith.addf %155, %156 : vector<8x512xf32>
    %158 = vector.extract_strided_slice %157 {offsets = [0, 0], sizes = [8, 128], strides = [1, 1]} : vector<8x512xf32> to vector<8x128xf32>
    %159 = arith.negf %158 : vector<8x128xf32>
    %160 = math.exp %159 : vector<8x128xf32>
    %cst_54 = arith.constant 1.000000e+00 : f32
    %161 = vector.broadcast %cst_54 : f32 to vector<8x128xf32>
    %162 = arith.addf %161, %160 : vector<8x128xf32>
    %163 = arith.divf %161, %162 : vector<8x128xf32>
    %164 = vector.extract_strided_slice %157 {offsets = [0, 128], sizes = [8, 128], strides = [1, 1]} : vector<8x512xf32> to vector<8x128xf32>
    %165 = arith.negf %164 : vector<8x128xf32>
    %166 = math.exp %165 : vector<8x128xf32>
    %cst_55 = arith.constant 1.000000e+00 : f32
    %167 = vector.broadcast %cst_55 : f32 to vector<8x128xf32>
    %168 = arith.addf %167, %166 : vector<8x128xf32>
    %169 = arith.divf %167, %168 : vector<8x128xf32>
    %170 = vector.extract_strided_slice %157 {offsets = [0, 256], sizes = [8, 128], strides = [1, 1]} : vector<8x512xf32> to vector<8x128xf32>
    %171 = math.tanh %170 : vector<8x128xf32>
    %172 = vector.extract_strided_slice %157 {offsets = [0, 384], sizes = [8, 128], strides = [1, 1]} : vector<8x512xf32> to vector<8x128xf32>
    %173 = arith.negf %172 : vector<8x128xf32>
    %174 = math.exp %173 : vector<8x128xf32>
    %cst_56 = arith.constant 1.000000e+00 : f32
    %175 = vector.broadcast %cst_56 : f32 to vector<8x128xf32>
    %176 = arith.addf %175, %174 : vector<8x128xf32>
    %177 = arith.divf %175, %176 : vector<8x128xf32>
    %178 = arith.mulf %169, %146 : vector<8x128xf32>
    %179 = arith.mulf %163, %171 : vector<8x128xf32>
    %180 = arith.addf %178, %179 : vector<8x128xf32>
    %181 = math.tanh %180 : vector<8x128xf32>
    %182 = arith.mulf %177, %181 : vector<8x128xf32>
    %183 = arith.index_cast %c4_i32 : i32 to index
    %c0_57 = arith.constant 0 : index
    %c0_58 = arith.constant 0 : index
    %184 = vector.load %arg13[%183, %c0_57, %c0_58] : memref<8x8x128xf32, #tpu.memory_space<vmem>>, vector<1x8x128xf32>
    %185 = vector.shape_cast %184 : vector<1x8x128xf32> to vector<8x128xf32>
    %186 = vector.shape_cast %182 : vector<8x128xf32> to vector<1x8x128xf32>
    tpu.vector_store %arg13[%183, %c0_57, %c0_58], %186 {strides = array<i32>} : memref<8x8x128xf32, #tpu.memory_space<vmem>>, vector<1x8x128xf32>,
    %c5_i32 = arith.constant 5 : i32
    %187 = arith.index_cast %c5_i32 : i32 to index
    %c0_59 = arith.constant 0 : index
    %c0_60 = arith.constant 0 : index
    %188 = vector.load %arg14[%187, %c0_59, %c0_60] : memref<8x8x512xf32, #tpu.memory_space<vmem>>, vector<1x8x512xf32>
    %189 = vector.shape_cast %188 : vector<1x8x512xf32> to vector<8x512xf32>
    %cst_61 = arith.constant dense<0.000000e+00> : vector<8x512xf32>
    %190 = tpu.matmul %182, %4, %cst_61 {dimension_numbers = #tpu.dot_dimension_numbers<[1], [0], [0], [1], [0, 0, 1, 1], [], []>} : vector<8x128xf32>, vector<128x512xf32>, vector<8x512xf32> -> vector<8x512xf32>
    %191 = arith.addf %189, %190 : vector<8x512xf32>
    %192 = vector.extract_strided_slice %191 {offsets = [0, 0], sizes = [8, 128], strides = [1, 1]} : vector<8x512xf32> to vector<8x128xf32>
    %193 = arith.negf %192 : vector<8x128xf32>
    %194 = math.exp %193 : vector<8x128xf32>
    %cst_62 = arith.constant 1.000000e+00 : f32
    %195 = vector.broadcast %cst_62 : f32 to vector<8x128xf32>
    %196 = arith.addf %195, %194 : vector<8x128xf32>
    %197 = arith.divf %195, %196 : vector<8x128xf32>
    %198 = vector.extract_strided_slice %191 {offsets = [0, 128], sizes = [8, 128], strides = [1, 1]} : vector<8x512xf32> to vector<8x128xf32>
    %199 = arith.negf %198 : vector<8x128xf32>
    %200 = math.exp %199 : vector<8x128xf32>
    %cst_63 = arith.constant 1.000000e+00 : f32
    %201 = vector.broadcast %cst_63 : f32 to vector<8x128xf32>
    %202 = arith.addf %201, %200 : vector<8x128xf32>
    %203 = arith.divf %201, %202 : vector<8x128xf32>
    %204 = vector.extract_strided_slice %191 {offsets = [0, 256], sizes = [8, 128], strides = [1, 1]} : vector<8x512xf32> to vector<8x128xf32>
    %205 = math.tanh %204 : vector<8x128xf32>
    %206 = vector.extract_strided_slice %191 {offsets = [0, 384], sizes = [8, 128], strides = [1, 1]} : vector<8x512xf32> to vector<8x128xf32>
    %207 = arith.negf %206 : vector<8x128xf32>
    %208 = math.exp %207 : vector<8x128xf32>
    %cst_64 = arith.constant 1.000000e+00 : f32
    %209 = vector.broadcast %cst_64 : f32 to vector<8x128xf32>
    %210 = arith.addf %209, %208 : vector<8x128xf32>
    %211 = arith.divf %209, %210 : vector<8x128xf32>
    %212 = arith.mulf %203, %180 : vector<8x128xf32>
    %213 = arith.mulf %197, %205 : vector<8x128xf32>
    %214 = arith.addf %212, %213 : vector<8x128xf32>
    %215 = math.tanh %214 : vector<8x128xf32>
    %216 = arith.mulf %211, %215 : vector<8x128xf32>
    %217 = arith.index_cast %c5_i32 : i32 to index
    %c0_65 = arith.constant 0 : index
    %c0_66 = arith.constant 0 : index
    %218 = vector.load %arg13[%217, %c0_65, %c0_66] : memref<8x8x128xf32, #tpu.memory_space<vmem>>, vector<1x8x128xf32>
    %219 = vector.shape_cast %218 : vector<1x8x128xf32> to vector<8x128xf32>
    %220 = vector.shape_cast %216 : vector<8x128xf32> to vector<1x8x128xf32>
    tpu.vector_store %arg13[%217, %c0_65, %c0_66], %220 {strides = array<i32>} : memref<8x8x128xf32, #tpu.memory_space<vmem>>, vector<1x8x128xf32>,
    %c6_i32 = arith.constant 6 : i32
    %221 = arith.index_cast %c6_i32 : i32 to index
    %c0_67 = arith.constant 0 : index
    %c0_68 = arith.constant 0 : index
    %222 = vector.load %arg14[%221, %c0_67, %c0_68] : memref<8x8x512xf32, #tpu.memory_space<vmem>>, vector<1x8x512xf32>
    %223 = vector.shape_cast %222 : vector<1x8x512xf32> to vector<8x512xf32>
    %cst_69 = arith.constant dense<0.000000e+00> : vector<8x512xf32>
    %224 = tpu.matmul %216, %4, %cst_69 {dimension_numbers = #tpu.dot_dimension_numbers<[1], [0], [0], [1], [0, 0, 1, 1], [], []>} : vector<8x128xf32>, vector<128x512xf32>, vector<8x512xf32> -> vector<8x512xf32>
    %225 = arith.addf %223, %224 : vector<8x512xf32>
    %226 = vector.extract_strided_slice %225 {offsets = [0, 0], sizes = [8, 128], strides = [1, 1]} : vector<8x512xf32> to vector<8x128xf32>
    %227 = arith.negf %226 : vector<8x128xf32>
    %228 = math.exp %227 : vector<8x128xf32>
    %cst_70 = arith.constant 1.000000e+00 : f32
    %229 = vector.broadcast %cst_70 : f32 to vector<8x128xf32>
    %230 = arith.addf %229, %228 : vector<8x128xf32>
    %231 = arith.divf %229, %230 : vector<8x128xf32>
    %232 = vector.extract_strided_slice %225 {offsets = [0, 128], sizes = [8, 128], strides = [1, 1]} : vector<8x512xf32> to vector<8x128xf32>
    %233 = arith.negf %232 : vector<8x128xf32>
    %234 = math.exp %233 : vector<8x128xf32>
    %cst_71 = arith.constant 1.000000e+00 : f32
    %235 = vector.broadcast %cst_71 : f32 to vector<8x128xf32>
    %236 = arith.addf %235, %234 : vector<8x128xf32>
    %237 = arith.divf %235, %236 : vector<8x128xf32>
    %238 = vector.extract_strided_slice %225 {offsets = [0, 256], sizes = [8, 128], strides = [1, 1]} : vector<8x512xf32> to vector<8x128xf32>
    %239 = math.tanh %238 : vector<8x128xf32>
    %240 = vector.extract_strided_slice %225 {offsets = [0, 384], sizes = [8, 128], strides = [1, 1]} : vector<8x512xf32> to vector<8x128xf32>
    %241 = arith.negf %240 : vector<8x128xf32>
    %242 = math.exp %241 : vector<8x128xf32>
    %cst_72 = arith.constant 1.000000e+00 : f32
    %243 = vector.broadcast %cst_72 : f32 to vector<8x128xf32>
    %244 = arith.addf %243, %242 : vector<8x128xf32>
    %245 = arith.divf %243, %244 : vector<8x128xf32>
    %246 = arith.mulf %237, %214 : vector<8x128xf32>
    %247 = arith.mulf %231, %239 : vector<8x128xf32>
    %248 = arith.addf %246, %247 : vector<8x128xf32>
    %249 = math.tanh %248 : vector<8x128xf32>
    %250 = arith.mulf %245, %249 : vector<8x128xf32>
    %251 = arith.index_cast %c6_i32 : i32 to index
    %c0_73 = arith.constant 0 : index
    %c0_74 = arith.constant 0 : index
    %252 = vector.load %arg13[%251, %c0_73, %c0_74] : memref<8x8x128xf32, #tpu.memory_space<vmem>>, vector<1x8x128xf32>
    %253 = vector.shape_cast %252 : vector<1x8x128xf32> to vector<8x128xf32>
    %254 = vector.shape_cast %250 : vector<8x128xf32> to vector<1x8x128xf32>
    tpu.vector_store %arg13[%251, %c0_73, %c0_74], %254 {strides = array<i32>} : memref<8x8x128xf32, #tpu.memory_space<vmem>>, vector<1x8x128xf32>,
    %c7_i32 = arith.constant 7 : i32
    %255 = arith.index_cast %c7_i32 : i32 to index
    %c0_75 = arith.constant 0 : index
    %c0_76 = arith.constant 0 : index
    %256 = vector.load %arg14[%255, %c0_75, %c0_76] : memref<8x8x512xf32, #tpu.memory_space<vmem>>, vector<1x8x512xf32>
    %257 = vector.shape_cast %256 : vector<1x8x512xf32> to vector<8x512xf32>
    %cst_77 = arith.constant dense<0.000000e+00> : vector<8x512xf32>
    %258 = tpu.matmul %250, %4, %cst_77 {dimension_numbers = #tpu.dot_dimension_numbers<[1], [0], [0], [1], [0, 0, 1, 1], [], []>} : vector<8x128xf32>, vector<128x512xf32>, vector<8x512xf32> -> vector<8x512xf32>
    %259 = arith.addf %257, %258 : vector<8x512xf32>
    %260 = vector.extract_strided_slice %259 {offsets = [0, 0], sizes = [8, 128], strides = [1, 1]} : vector<8x512xf32> to vector<8x128xf32>
    %261 = arith.negf %260 : vector<8x128xf32>
    %262 = math.exp %261 : vector<8x128xf32>
    %cst_78 = arith.constant 1.000000e+00 : f32
    %263 = vector.broadcast %cst_78 : f32 to vector<8x128xf32>
    %264 = arith.addf %263, %262 : vector<8x128xf32>
    %265 = arith.divf %263, %264 : vector<8x128xf32>
    %266 = vector.extract_strided_slice %259 {offsets = [0, 128], sizes = [8, 128], strides = [1, 1]} : vector<8x512xf32> to vector<8x128xf32>
    %267 = arith.negf %266 : vector<8x128xf32>
    %268 = math.exp %267 : vector<8x128xf32>
    %cst_79 = arith.constant 1.000000e+00 : f32
    %269 = vector.broadcast %cst_79 : f32 to vector<8x128xf32>
    %270 = arith.addf %269, %268 : vector<8x128xf32>
    %271 = arith.divf %269, %270 : vector<8x128xf32>
    %272 = vector.extract_strided_slice %259 {offsets = [0, 256], sizes = [8, 128], strides = [1, 1]} : vector<8x512xf32> to vector<8x128xf32>
    %273 = math.tanh %272 : vector<8x128xf32>
    %274 = vector.extract_strided_slice %259 {offsets = [0, 384], sizes = [8, 128], strides = [1, 1]} : vector<8x512xf32> to vector<8x128xf32>
    %275 = arith.negf %274 : vector<8x128xf32>
    %276 = math.exp %275 : vector<8x128xf32>
    %cst_80 = arith.constant 1.000000e+00 : f32
    %277 = vector.broadcast %cst_80 : f32 to vector<8x128xf32>
    %278 = arith.addf %277, %276 : vector<8x128xf32>
    %279 = arith.divf %277, %278 : vector<8x128xf32>
    %280 = arith.mulf %271, %248 : vector<8x128xf32>
    %281 = arith.mulf %265, %273 : vector<8x128xf32>
    %282 = arith.addf %280, %281 : vector<8x128xf32>
    %283 = math.tanh %282 : vector<8x128xf32>
    %284 = arith.mulf %279, %283 : vector<8x128xf32>
    %285 = arith.index_cast %c7_i32 : i32 to index
    %c0_81 = arith.constant 0 : index
    %c0_82 = arith.constant 0 : index
    %286 = vector.load %arg13[%285, %c0_81, %c0_82] : memref<8x8x128xf32, #tpu.memory_space<vmem>>, vector<1x8x128xf32>
    %287 = vector.shape_cast %286 : vector<1x8x128xf32> to vector<8x128xf32>
    %288 = vector.shape_cast %284 : vector<8x128xf32> to vector<1x8x128xf32>
    tpu.vector_store %arg13[%285, %c0_81, %c0_82], %288 {strides = array<i32>} : memref<8x8x128xf32, #tpu.memory_space<vmem>>, vector<1x8x128xf32>,
    %c8_i32 = arith.constant 8 : i32
    %c0_83 = arith.constant 0 : index
    %c0_84 = arith.constant 0 : index
    %c0_85 = arith.constant 0 : index
    %289 = vector.load %arg11[%c0_83, %c0_84, %c0_85] : memref<2x8x128xf32, #tpu.memory_space<vmem>>, vector<1x8x128xf32>
    %290 = vector.shape_cast %289 : vector<1x8x128xf32> to vector<8x128xf32>
    %291 = vector.shape_cast %284 : vector<8x128xf32> to vector<1x8x128xf32>
    tpu.vector_store %arg11[%c0_83, %c0_84, %c0_85], %291 {strides = array<i32>} : memref<2x8x128xf32, #tpu.memory_space<vmem>>, vector<1x8x128xf32>,
    %c0_86 = arith.constant 0 : index
    %c0_87 = arith.constant 0 : index
    %c0_88 = arith.constant 0 : index
    %292 = vector.load %arg12[%c0_86, %c0_87, %c0_88] : memref<2x8x128xf32, #tpu.memory_space<vmem>>, vector<1x8x128xf32>
    %293 = vector.shape_cast %292 : vector<1x8x128xf32> to vector<8x128xf32>
    %294 = vector.shape_cast %282 : vector<8x128xf32> to vector<1x8x128xf32>
    tpu.vector_store %arg12[%c0_86, %c0_87, %c0_88], %294 {strides = array<i32>} : memref<2x8x128xf32, #tpu.memory_space<vmem>>, vector<1x8x128xf32>,
    %c0_89 = arith.constant 0 : index
    %c0_90 = arith.constant 0 : index
    %295 = vector.load %arg5[%c0_89, %c0_90] : memref<128x512xf32, #tpu.memory_space<vmem>>, vector<128x512xf32>
    %c0_91 = arith.constant 0 : index
    %c0_92 = arith.constant 0 : index
    %296 = vector.load %arg6[%c0_91, %c0_92] : memref<128x512xf32, #tpu.memory_space<vmem>>, vector<128x512xf32>
    %c0_93 = arith.constant 0 : index
    %c0_94 = arith.constant 0 : index
    %297 = vector.load %arg7[%c0_93, %c0_94] : memref<1x512xf32, #tpu.memory_space<vmem>>, vector<1x512xf32>
    %c0_95 = arith.constant 0 : index
    %c0_96 = arith.constant 0 : index
    %c0_97 = arith.constant 0 : index
    %298 = vector.load %arg13[%c0_95, %c0_96, %c0_97] : memref<8x8x128xf32, #tpu.memory_space<vmem>>, vector<8x8x128xf32>
    %299 = vector.shape_cast %298 : vector<8x8x128xf32> to vector<64x128xf32>
    %cst_98 = arith.constant dense<0.000000e+00> : vector<64x512xf32>
    %300 = tpu.matmul %299, %295, %cst_98 {dimension_numbers = #tpu.dot_dimension_numbers<[1], [0], [0], [1], [0, 0, 1, 1], [], []>} : vector<64x128xf32>, vector<128x512xf32>, vector<64x512xf32> -> vector<64x512xf32>
    %301 = vector.broadcast %297 : vector<1x512xf32> to vector<64x512xf32>
    %302 = arith.addf %300, %301 : vector<64x512xf32>
    %303 = vector.shape_cast %302 : vector<64x512xf32> to vector<8x8x512xf32>
    %c0_99 = arith.constant 0 : index
    %c0_100 = arith.constant 0 : index
    %c0_101 = arith.constant 0 : index
    %304 = vector.load %arg14[%c0_99, %c0_100, %c0_101] : memref<8x8x512xf32, #tpu.memory_space<vmem>>, vector<8x8x512xf32>
    tpu.vector_store %arg14[%c0_99, %c0_100, %c0_101], %303 {strides = array<i32>} : memref<8x8x512xf32, #tpu.memory_space<vmem>>, vector<8x8x512xf32>,
    %c1 = arith.constant 1 : index
    %c0_102 = arith.constant 0 : index
    %c0_103 = arith.constant 0 : index
    %305 = vector.load %arg11[%c1, %c0_102, %c0_103] : memref<2x8x128xf32, #tpu.memory_space<vmem>>, vector<1x8x128xf32>
    %306 = vector.shape_cast %305 : vector<1x8x128xf32> to vector<8x128xf32>
    %c1_104 = arith.constant 1 : index
    %c0_105 = arith.constant 0 : index
    %c0_106 = arith.constant 0 : index
    %307 = vector.load %arg12[%c1_104, %c0_105, %c0_106] : memref<2x8x128xf32, #tpu.memory_space<vmem>>, vector<1x8x128xf32>
    %308 = vector.shape_cast %307 : vector<1x8x128xf32> to vector<8x128xf32>
    %c0_i32_107 = arith.constant 0 : i32
    %309 = arith.index_cast %c0_i32_107 : i32 to index
    %c0_108 = arith.constant 0 : index
    %c0_109 = arith.constant 0 : index
    %310 = vector.load %arg14[%309, %c0_108, %c0_109] : memref<8x8x512xf32, #tpu.memory_space<vmem>>, vector<1x8x512xf32>
    %311 = vector.shape_cast %310 : vector<1x8x512xf32> to vector<8x512xf32>
    %cst_110 = arith.constant dense<0.000000e+00> : vector<8x512xf32>
    %312 = tpu.matmul %306, %296, %cst_110 {dimension_numbers = #tpu.dot_dimension_numbers<[1], [0], [0], [1], [0, 0, 1, 1], [], []>} : vector<8x128xf32>, vector<128x512xf32>, vector<8x512xf32> -> vector<8x512xf32>
    %313 = arith.addf %311, %312 : vector<8x512xf32>
    %314 = vector.extract_strided_slice %313 {offsets = [0, 0], sizes = [8, 128], strides = [1, 1]} : vector<8x512xf32> to vector<8x128xf32>
    %315 = arith.negf %314 : vector<8x128xf32>
    %316 = math.exp %315 : vector<8x128xf32>
    %cst_111 = arith.constant 1.000000e+00 : f32
    %317 = vector.broadcast %cst_111 : f32 to vector<8x128xf32>
    %318 = arith.addf %317, %316 : vector<8x128xf32>
    %319 = arith.divf %317, %318 : vector<8x128xf32>
    %320 = vector.extract_strided_slice %313 {offsets = [0, 128], sizes = [8, 128], strides = [1, 1]} : vector<8x512xf32> to vector<8x128xf32>
    %321 = arith.negf %320 : vector<8x128xf32>
    %322 = math.exp %321 : vector<8x128xf32>
    %cst_112 = arith.constant 1.000000e+00 : f32
    %323 = vector.broadcast %cst_112 : f32 to vector<8x128xf32>
    %324 = arith.addf %323, %322 : vector<8x128xf32>
    %325 = arith.divf %323, %324 : vector<8x128xf32>
    %326 = vector.extract_strided_slice %313 {offsets = [0, 256], sizes = [8, 128], strides = [1, 1]} : vector<8x512xf32> to vector<8x128xf32>
    %327 = math.tanh %326 : vector<8x128xf32>
    %328 = vector.extract_strided_slice %313 {offsets = [0, 384], sizes = [8, 128], strides = [1, 1]} : vector<8x512xf32> to vector<8x128xf32>
    %329 = arith.negf %328 : vector<8x128xf32>
    %330 = math.exp %329 : vector<8x128xf32>
    %cst_113 = arith.constant 1.000000e+00 : f32
    %331 = vector.broadcast %cst_113 : f32 to vector<8x128xf32>
    %332 = arith.addf %331, %330 : vector<8x128xf32>
    %333 = arith.divf %331, %332 : vector<8x128xf32>
    %334 = arith.mulf %325, %308 : vector<8x128xf32>
    %335 = arith.mulf %319, %327 : vector<8x128xf32>
    %336 = arith.addf %334, %335 : vector<8x128xf32>
    %337 = math.tanh %336 : vector<8x128xf32>
    %338 = arith.mulf %333, %337 : vector<8x128xf32>
    %339 = arith.index_cast %c0_i32_107 : i32 to index
    %c0_114 = arith.constant 0 : index
    %c0_115 = arith.constant 0 : index
    %340 = vector.load %arg13[%339, %c0_114, %c0_115] : memref<8x8x128xf32, #tpu.memory_space<vmem>>, vector<1x8x128xf32>
    %341 = vector.shape_cast %340 : vector<1x8x128xf32> to vector<8x128xf32>
    %342 = vector.shape_cast %338 : vector<8x128xf32> to vector<1x8x128xf32>
    tpu.vector_store %arg13[%339, %c0_114, %c0_115], %342 {strides = array<i32>} : memref<8x8x128xf32, #tpu.memory_space<vmem>>, vector<1x8x128xf32>,
    %c1_i32_116 = arith.constant 1 : i32
    %343 = arith.index_cast %c1_i32_116 : i32 to index
    %c0_117 = arith.constant 0 : index
    %c0_118 = arith.constant 0 : index
    %344 = vector.load %arg14[%343, %c0_117, %c0_118] : memref<8x8x512xf32, #tpu.memory_space<vmem>>, vector<1x8x512xf32>
    %345 = vector.shape_cast %344 : vector<1x8x512xf32> to vector<8x512xf32>
    %cst_119 = arith.constant dense<0.000000e+00> : vector<8x512xf32>
    %346 = tpu.matmul %338, %296, %cst_119 {dimension_numbers = #tpu.dot_dimension_numbers<[1], [0], [0], [1], [0, 0, 1, 1], [], []>} : vector<8x128xf32>, vector<128x512xf32>, vector<8x512xf32> -> vector<8x512xf32>
    %347 = arith.addf %345, %346 : vector<8x512xf32>
    %348 = vector.extract_strided_slice %347 {offsets = [0, 0], sizes = [8, 128], strides = [1, 1]} : vector<8x512xf32> to vector<8x128xf32>
    %349 = arith.negf %348 : vector<8x128xf32>
    %350 = math.exp %349 : vector<8x128xf32>
    %cst_120 = arith.constant 1.000000e+00 : f32
    %351 = vector.broadcast %cst_120 : f32 to vector<8x128xf32>
    %352 = arith.addf %351, %350 : vector<8x128xf32>
    %353 = arith.divf %351, %352 : vector<8x128xf32>
    %354 = vector.extract_strided_slice %347 {offsets = [0, 128], sizes = [8, 128], strides = [1, 1]} : vector<8x512xf32> to vector<8x128xf32>
    %355 = arith.negf %354 : vector<8x128xf32>
    %356 = math.exp %355 : vector<8x128xf32>
    %cst_121 = arith.constant 1.000000e+00 : f32
    %357 = vector.broadcast %cst_121 : f32 to vector<8x128xf32>
    %358 = arith.addf %357, %356 : vector<8x128xf32>
    %359 = arith.divf %357, %358 : vector<8x128xf32>
    %360 = vector.extract_strided_slice %347 {offsets = [0, 256], sizes = [8, 128], strides = [1, 1]} : vector<8x512xf32> to vector<8x128xf32>
    %361 = math.tanh %360 : vector<8x128xf32>
    %362 = vector.extract_strided_slice %347 {offsets = [0, 384], sizes = [8, 128], strides = [1, 1]} : vector<8x512xf32> to vector<8x128xf32>
    %363 = arith.negf %362 : vector<8x128xf32>
    %364 = math.exp %363 : vector<8x128xf32>
    %cst_122 = arith.constant 1.000000e+00 : f32
    %365 = vector.broadcast %cst_122 : f32 to vector<8x128xf32>
    %366 = arith.addf %365, %364 : vector<8x128xf32>
    %367 = arith.divf %365, %366 : vector<8x128xf32>
    %368 = arith.mulf %359, %336 : vector<8x128xf32>
    %369 = arith.mulf %353, %361 : vector<8x128xf32>
    %370 = arith.addf %368, %369 : vector<8x128xf32>
    %371 = math.tanh %370 : vector<8x128xf32>
    %372 = arith.mulf %367, %371 : vector<8x128xf32>
    %373 = arith.index_cast %c1_i32_116 : i32 to index
    %c0_123 = arith.constant 0 : index
    %c0_124 = arith.constant 0 : index
    %374 = vector.load %arg13[%373, %c0_123, %c0_124] : memref<8x8x128xf32, #tpu.memory_space<vmem>>, vector<1x8x128xf32>
    %375 = vector.shape_cast %374 : vector<1x8x128xf32> to vector<8x128xf32>
    %376 = vector.shape_cast %372 : vector<8x128xf32> to vector<1x8x128xf32>
    tpu.vector_store %arg13[%373, %c0_123, %c0_124], %376 {strides = array<i32>} : memref<8x8x128xf32, #tpu.memory_space<vmem>>, vector<1x8x128xf32>,
    %c2_i32_125 = arith.constant 2 : i32
    %377 = arith.index_cast %c2_i32_125 : i32 to index
    %c0_126 = arith.constant 0 : index
    %c0_127 = arith.constant 0 : index
    %378 = vector.load %arg14[%377, %c0_126, %c0_127] : memref<8x8x512xf32, #tpu.memory_space<vmem>>, vector<1x8x512xf32>
    %379 = vector.shape_cast %378 : vector<1x8x512xf32> to vector<8x512xf32>
    %cst_128 = arith.constant dense<0.000000e+00> : vector<8x512xf32>
    %380 = tpu.matmul %372, %296, %cst_128 {dimension_numbers = #tpu.dot_dimension_numbers<[1], [0], [0], [1], [0, 0, 1, 1], [], []>} : vector<8x128xf32>, vector<128x512xf32>, vector<8x512xf32> -> vector<8x512xf32>
    %381 = arith.addf %379, %380 : vector<8x512xf32>
    %382 = vector.extract_strided_slice %381 {offsets = [0, 0], sizes = [8, 128], strides = [1, 1]} : vector<8x512xf32> to vector<8x128xf32>
    %383 = arith.negf %382 : vector<8x128xf32>
    %384 = math.exp %383 : vector<8x128xf32>
    %cst_129 = arith.constant 1.000000e+00 : f32
    %385 = vector.broadcast %cst_129 : f32 to vector<8x128xf32>
    %386 = arith.addf %385, %384 : vector<8x128xf32>
    %387 = arith.divf %385, %386 : vector<8x128xf32>
    %388 = vector.extract_strided_slice %381 {offsets = [0, 128], sizes = [8, 128], strides = [1, 1]} : vector<8x512xf32> to vector<8x128xf32>
    %389 = arith.negf %388 : vector<8x128xf32>
    %390 = math.exp %389 : vector<8x128xf32>
    %cst_130 = arith.constant 1.000000e+00 : f32
    %391 = vector.broadcast %cst_130 : f32 to vector<8x128xf32>
    %392 = arith.addf %391, %390 : vector<8x128xf32>
    %393 = arith.divf %391, %392 : vector<8x128xf32>
    %394 = vector.extract_strided_slice %381 {offsets = [0, 256], sizes = [8, 128], strides = [1, 1]} : vector<8x512xf32> to vector<8x128xf32>
    %395 = math.tanh %394 : vector<8x128xf32>
    %396 = vector.extract_strided_slice %381 {offsets = [0, 384], sizes = [8, 128], strides = [1, 1]} : vector<8x512xf32> to vector<8x128xf32>
    %397 = arith.negf %396 : vector<8x128xf32>
    %398 = math.exp %397 : vector<8x128xf32>
    %cst_131 = arith.constant 1.000000e+00 : f32
    %399 = vector.broadcast %cst_131 : f32 to vector<8x128xf32>
    %400 = arith.addf %399, %398 : vector<8x128xf32>
    %401 = arith.divf %399, %400 : vector<8x128xf32>
    %402 = arith.mulf %393, %370 : vector<8x128xf32>
    %403 = arith.mulf %387, %395 : vector<8x128xf32>
    %404 = arith.addf %402, %403 : vector<8x128xf32>
    %405 = math.tanh %404 : vector<8x128xf32>
    %406 = arith.mulf %401, %405 : vector<8x128xf32>
    %407 = arith.index_cast %c2_i32_125 : i32 to index
    %c0_132 = arith.constant 0 : index
    %c0_133 = arith.constant 0 : index
    %408 = vector.load %arg13[%407, %c0_132, %c0_133] : memref<8x8x128xf32, #tpu.memory_space<vmem>>, vector<1x8x128xf32>
    %409 = vector.shape_cast %408 : vector<1x8x128xf32> to vector<8x128xf32>
    %410 = vector.shape_cast %406 : vector<8x128xf32> to vector<1x8x128xf32>
    tpu.vector_store %arg13[%407, %c0_132, %c0_133], %410 {strides = array<i32>} : memref<8x8x128xf32, #tpu.memory_space<vmem>>, vector<1x8x128xf32>,
    %c3_i32_134 = arith.constant 3 : i32
    %411 = arith.index_cast %c3_i32_134 : i32 to index
    %c0_135 = arith.constant 0 : index
    %c0_136 = arith.constant 0 : index
    %412 = vector.load %arg14[%411, %c0_135, %c0_136] : memref<8x8x512xf32, #tpu.memory_space<vmem>>, vector<1x8x512xf32>
    %413 = vector.shape_cast %412 : vector<1x8x512xf32> to vector<8x512xf32>
    %cst_137 = arith.constant dense<0.000000e+00> : vector<8x512xf32>
    %414 = tpu.matmul %406, %296, %cst_137 {dimension_numbers = #tpu.dot_dimension_numbers<[1], [0], [0], [1], [0, 0, 1, 1], [], []>} : vector<8x128xf32>, vector<128x512xf32>, vector<8x512xf32> -> vector<8x512xf32>
    %415 = arith.addf %413, %414 : vector<8x512xf32>
    %416 = vector.extract_strided_slice %415 {offsets = [0, 0], sizes = [8, 128], strides = [1, 1]} : vector<8x512xf32> to vector<8x128xf32>
    %417 = arith.negf %416 : vector<8x128xf32>
    %418 = math.exp %417 : vector<8x128xf32>
    %cst_138 = arith.constant 1.000000e+00 : f32
    %419 = vector.broadcast %cst_138 : f32 to vector<8x128xf32>
    %420 = arith.addf %419, %418 : vector<8x128xf32>
    %421 = arith.divf %419, %420 : vector<8x128xf32>
    %422 = vector.extract_strided_slice %415 {offsets = [0, 128], sizes = [8, 128], strides = [1, 1]} : vector<8x512xf32> to vector<8x128xf32>
    %423 = arith.negf %422 : vector<8x128xf32>
    %424 = math.exp %423 : vector<8x128xf32>
    %cst_139 = arith.constant 1.000000e+00 : f32
    %425 = vector.broadcast %cst_139 : f32 to vector<8x128xf32>
    %426 = arith.addf %425, %424 : vector<8x128xf32>
    %427 = arith.divf %425, %426 : vector<8x128xf32>
    %428 = vector.extract_strided_slice %415 {offsets = [0, 256], sizes = [8, 128], strides = [1, 1]} : vector<8x512xf32> to vector<8x128xf32>
    %429 = math.tanh %428 : vector<8x128xf32>
    %430 = vector.extract_strided_slice %415 {offsets = [0, 384], sizes = [8, 128], strides = [1, 1]} : vector<8x512xf32> to vector<8x128xf32>
    %431 = arith.negf %430 : vector<8x128xf32>
    %432 = math.exp %431 : vector<8x128xf32>
    %cst_140 = arith.constant 1.000000e+00 : f32
    %433 = vector.broadcast %cst_140 : f32 to vector<8x128xf32>
    %434 = arith.addf %433, %432 : vector<8x128xf32>
    %435 = arith.divf %433, %434 : vector<8x128xf32>
    %436 = arith.mulf %427, %404 : vector<8x128xf32>
    %437 = arith.mulf %421, %429 : vector<8x128xf32>
    %438 = arith.addf %436, %437 : vector<8x128xf32>
    %439 = math.tanh %438 : vector<8x128xf32>
    %440 = arith.mulf %435, %439 : vector<8x128xf32>
    %441 = arith.index_cast %c3_i32_134 : i32 to index
    %c0_141 = arith.constant 0 : index
    %c0_142 = arith.constant 0 : index
    %442 = vector.load %arg13[%441, %c0_141, %c0_142] : memref<8x8x128xf32, #tpu.memory_space<vmem>>, vector<1x8x128xf32>
    %443 = vector.shape_cast %442 : vector<1x8x128xf32> to vector<8x128xf32>
    %444 = vector.shape_cast %440 : vector<8x128xf32> to vector<1x8x128xf32>
    tpu.vector_store %arg13[%441, %c0_141, %c0_142], %444 {strides = array<i32>} : memref<8x8x128xf32, #tpu.memory_space<vmem>>, vector<1x8x128xf32>,
    %c4_i32_143 = arith.constant 4 : i32
    %445 = arith.index_cast %c4_i32_143 : i32 to index
    %c0_144 = arith.constant 0 : index
    %c0_145 = arith.constant 0 : index
    %446 = vector.load %arg14[%445, %c0_144, %c0_145] : memref<8x8x512xf32, #tpu.memory_space<vmem>>, vector<1x8x512xf32>
    %447 = vector.shape_cast %446 : vector<1x8x512xf32> to vector<8x512xf32>
    %cst_146 = arith.constant dense<0.000000e+00> : vector<8x512xf32>
    %448 = tpu.matmul %440, %296, %cst_146 {dimension_numbers = #tpu.dot_dimension_numbers<[1], [0], [0], [1], [0, 0, 1, 1], [], []>} : vector<8x128xf32>, vector<128x512xf32>, vector<8x512xf32> -> vector<8x512xf32>
    %449 = arith.addf %447, %448 : vector<8x512xf32>
    %450 = vector.extract_strided_slice %449 {offsets = [0, 0], sizes = [8, 128], strides = [1, 1]} : vector<8x512xf32> to vector<8x128xf32>
    %451 = arith.negf %450 : vector<8x128xf32>
    %452 = math.exp %451 : vector<8x128xf32>
    %cst_147 = arith.constant 1.000000e+00 : f32
    %453 = vector.broadcast %cst_147 : f32 to vector<8x128xf32>
    %454 = arith.addf %453, %452 : vector<8x128xf32>
    %455 = arith.divf %453, %454 : vector<8x128xf32>
    %456 = vector.extract_strided_slice %449 {offsets = [0, 128], sizes = [8, 128], strides = [1, 1]} : vector<8x512xf32> to vector<8x128xf32>
    %457 = arith.negf %456 : vector<8x128xf32>
    %458 = math.exp %457 : vector<8x128xf32>
    %cst_148 = arith.constant 1.000000e+00 : f32
    %459 = vector.broadcast %cst_148 : f32 to vector<8x128xf32>
    %460 = arith.addf %459, %458 : vector<8x128xf32>
    %461 = arith.divf %459, %460 : vector<8x128xf32>
    %462 = vector.extract_strided_slice %449 {offsets = [0, 256], sizes = [8, 128], strides = [1, 1]} : vector<8x512xf32> to vector<8x128xf32>
    %463 = math.tanh %462 : vector<8x128xf32>
    %464 = vector.extract_strided_slice %449 {offsets = [0, 384], sizes = [8, 128], strides = [1, 1]} : vector<8x512xf32> to vector<8x128xf32>
    %465 = arith.negf %464 : vector<8x128xf32>
    %466 = math.exp %465 : vector<8x128xf32>
    %cst_149 = arith.constant 1.000000e+00 : f32
    %467 = vector.broadcast %cst_149 : f32 to vector<8x128xf32>
    %468 = arith.addf %467, %466 : vector<8x128xf32>
    %469 = arith.divf %467, %468 : vector<8x128xf32>
    %470 = arith.mulf %461, %438 : vector<8x128xf32>
    %471 = arith.mulf %455, %463 : vector<8x128xf32>
    %472 = arith.addf %470, %471 : vector<8x128xf32>
    %473 = math.tanh %472 : vector<8x128xf32>
    %474 = arith.mulf %469, %473 : vector<8x128xf32>
    %475 = arith.index_cast %c4_i32_143 : i32 to index
    %c0_150 = arith.constant 0 : index
    %c0_151 = arith.constant 0 : index
    %476 = vector.load %arg13[%475, %c0_150, %c0_151] : memref<8x8x128xf32, #tpu.memory_space<vmem>>, vector<1x8x128xf32>
    %477 = vector.shape_cast %476 : vector<1x8x128xf32> to vector<8x128xf32>
    %478 = vector.shape_cast %474 : vector<8x128xf32> to vector<1x8x128xf32>
    tpu.vector_store %arg13[%475, %c0_150, %c0_151], %478 {strides = array<i32>} : memref<8x8x128xf32, #tpu.memory_space<vmem>>, vector<1x8x128xf32>,
    %c5_i32_152 = arith.constant 5 : i32
    %479 = arith.index_cast %c5_i32_152 : i32 to index
    %c0_153 = arith.constant 0 : index
    %c0_154 = arith.constant 0 : index
    %480 = vector.load %arg14[%479, %c0_153, %c0_154] : memref<8x8x512xf32, #tpu.memory_space<vmem>>, vector<1x8x512xf32>
    %481 = vector.shape_cast %480 : vector<1x8x512xf32> to vector<8x512xf32>
    %cst_155 = arith.constant dense<0.000000e+00> : vector<8x512xf32>
    %482 = tpu.matmul %474, %296, %cst_155 {dimension_numbers = #tpu.dot_dimension_numbers<[1], [0], [0], [1], [0, 0, 1, 1], [], []>} : vector<8x128xf32>, vector<128x512xf32>, vector<8x512xf32> -> vector<8x512xf32>
    %483 = arith.addf %481, %482 : vector<8x512xf32>
    %484 = vector.extract_strided_slice %483 {offsets = [0, 0], sizes = [8, 128], strides = [1, 1]} : vector<8x512xf32> to vector<8x128xf32>
    %485 = arith.negf %484 : vector<8x128xf32>
    %486 = math.exp %485 : vector<8x128xf32>
    %cst_156 = arith.constant 1.000000e+00 : f32
    %487 = vector.broadcast %cst_156 : f32 to vector<8x128xf32>
    %488 = arith.addf %487, %486 : vector<8x128xf32>
    %489 = arith.divf %487, %488 : vector<8x128xf32>
    %490 = vector.extract_strided_slice %483 {offsets = [0, 128], sizes = [8, 128], strides = [1, 1]} : vector<8x512xf32> to vector<8x128xf32>
    %491 = arith.negf %490 : vector<8x128xf32>
    %492 = math.exp %491 : vector<8x128xf32>
    %cst_157 = arith.constant 1.000000e+00 : f32
    %493 = vector.broadcast %cst_157 : f32 to vector<8x128xf32>
    %494 = arith.addf %493, %492 : vector<8x128xf32>
    %495 = arith.divf %493, %494 : vector<8x128xf32>
    %496 = vector.extract_strided_slice %483 {offsets = [0, 256], sizes = [8, 128], strides = [1, 1]} : vector<8x512xf32> to vector<8x128xf32>
    %497 = math.tanh %496 : vector<8x128xf32>
    %498 = vector.extract_strided_slice %483 {offsets = [0, 384], sizes = [8, 128], strides = [1, 1]} : vector<8x512xf32> to vector<8x128xf32>
    %499 = arith.negf %498 : vector<8x128xf32>
    %500 = math.exp %499 : vector<8x128xf32>
    %cst_158 = arith.constant 1.000000e+00 : f32
    %501 = vector.broadcast %cst_158 : f32 to vector<8x128xf32>
    %502 = arith.addf %501, %500 : vector<8x128xf32>
    %503 = arith.divf %501, %502 : vector<8x128xf32>
    %504 = arith.mulf %495, %472 : vector<8x128xf32>
    %505 = arith.mulf %489, %497 : vector<8x128xf32>
    %506 = arith.addf %504, %505 : vector<8x128xf32>
    %507 = math.tanh %506 : vector<8x128xf32>
    %508 = arith.mulf %503, %507 : vector<8x128xf32>
    %509 = arith.index_cast %c5_i32_152 : i32 to index
    %c0_159 = arith.constant 0 : index
    %c0_160 = arith.constant 0 : index
    %510 = vector.load %arg13[%509, %c0_159, %c0_160] : memref<8x8x128xf32, #tpu.memory_space<vmem>>, vector<1x8x128xf32>
    %511 = vector.shape_cast %510 : vector<1x8x128xf32> to vector<8x128xf32>
    %512 = vector.shape_cast %508 : vector<8x128xf32> to vector<1x8x128xf32>
    tpu.vector_store %arg13[%509, %c0_159, %c0_160], %512 {strides = array<i32>} : memref<8x8x128xf32, #tpu.memory_space<vmem>>, vector<1x8x128xf32>,
    %c6_i32_161 = arith.constant 6 : i32
    %513 = arith.index_cast %c6_i32_161 : i32 to index
    %c0_162 = arith.constant 0 : index
    %c0_163 = arith.constant 0 : index
    %514 = vector.load %arg14[%513, %c0_162, %c0_163] : memref<8x8x512xf32, #tpu.memory_space<vmem>>, vector<1x8x512xf32>
    %515 = vector.shape_cast %514 : vector<1x8x512xf32> to vector<8x512xf32>
    %cst_164 = arith.constant dense<0.000000e+00> : vector<8x512xf32>
    %516 = tpu.matmul %508, %296, %cst_164 {dimension_numbers = #tpu.dot_dimension_numbers<[1], [0], [0], [1], [0, 0, 1, 1], [], []>} : vector<8x128xf32>, vector<128x512xf32>, vector<8x512xf32> -> vector<8x512xf32>
    %517 = arith.addf %515, %516 : vector<8x512xf32>
    %518 = vector.extract_strided_slice %517 {offsets = [0, 0], sizes = [8, 128], strides = [1, 1]} : vector<8x512xf32> to vector<8x128xf32>
    %519 = arith.negf %518 : vector<8x128xf32>
    %520 = math.exp %519 : vector<8x128xf32>
    %cst_165 = arith.constant 1.000000e+00 : f32
    %521 = vector.broadcast %cst_165 : f32 to vector<8x128xf32>
    %522 = arith.addf %521, %520 : vector<8x128xf32>
    %523 = arith.divf %521, %522 : vector<8x128xf32>
    %524 = vector.extract_strided_slice %517 {offsets = [0, 128], sizes = [8, 128], strides = [1, 1]} : vector<8x512xf32> to vector<8x128xf32>
    %525 = arith.negf %524 : vector<8x128xf32>
    %526 = math.exp %525 : vector<8x128xf32>
    %cst_166 = arith.constant 1.000000e+00 : f32
    %527 = vector.broadcast %cst_166 : f32 to vector<8x128xf32>
    %528 = arith.addf %527, %526 : vector<8x128xf32>
    %529 = arith.divf %527, %528 : vector<8x128xf32>
    %530 = vector.extract_strided_slice %517 {offsets = [0, 256], sizes = [8, 128], strides = [1, 1]} : vector<8x512xf32> to vector<8x128xf32>
    %531 = math.tanh %530 : vector<8x128xf32>
    %532 = vector.extract_strided_slice %517 {offsets = [0, 384], sizes = [8, 128], strides = [1, 1]} : vector<8x512xf32> to vector<8x128xf32>
    %533 = arith.negf %532 : vector<8x128xf32>
    %534 = math.exp %533 : vector<8x128xf32>
    %cst_167 = arith.constant 1.000000e+00 : f32
    %535 = vector.broadcast %cst_167 : f32 to vector<8x128xf32>
    %536 = arith.addf %535, %534 : vector<8x128xf32>
    %537 = arith.divf %535, %536 : vector<8x128xf32>
    %538 = arith.mulf %529, %506 : vector<8x128xf32>
    %539 = arith.mulf %523, %531 : vector<8x128xf32>
    %540 = arith.addf %538, %539 : vector<8x128xf32>
    %541 = math.tanh %540 : vector<8x128xf32>
    %542 = arith.mulf %537, %541 : vector<8x128xf32>
    %543 = arith.index_cast %c6_i32_161 : i32 to index
    %c0_168 = arith.constant 0 : index
    %c0_169 = arith.constant 0 : index
    %544 = vector.load %arg13[%543, %c0_168, %c0_169] : memref<8x8x128xf32, #tpu.memory_space<vmem>>, vector<1x8x128xf32>
    %545 = vector.shape_cast %544 : vector<1x8x128xf32> to vector<8x128xf32>
    %546 = vector.shape_cast %542 : vector<8x128xf32> to vector<1x8x128xf32>
    tpu.vector_store %arg13[%543, %c0_168, %c0_169], %546 {strides = array<i32>} : memref<8x8x128xf32, #tpu.memory_space<vmem>>, vector<1x8x128xf32>,
    %c7_i32_170 = arith.constant 7 : i32
    %547 = arith.index_cast %c7_i32_170 : i32 to index
    %c0_171 = arith.constant 0 : index
    %c0_172 = arith.constant 0 : index
    %548 = vector.load %arg14[%547, %c0_171, %c0_172] : memref<8x8x512xf32, #tpu.memory_space<vmem>>, vector<1x8x512xf32>
    %549 = vector.shape_cast %548 : vector<1x8x512xf32> to vector<8x512xf32>
    %cst_173 = arith.constant dense<0.000000e+00> : vector<8x512xf32>
    %550 = tpu.matmul %542, %296, %cst_173 {dimension_numbers = #tpu.dot_dimension_numbers<[1], [0], [0], [1], [0, 0, 1, 1], [], []>} : vector<8x128xf32>, vector<128x512xf32>, vector<8x512xf32> -> vector<8x512xf32>
    %551 = arith.addf %549, %550 : vector<8x512xf32>
    %552 = vector.extract_strided_slice %551 {offsets = [0, 0], sizes = [8, 128], strides = [1, 1]} : vector<8x512xf32> to vector<8x128xf32>
    %553 = arith.negf %552 : vector<8x128xf32>
    %554 = math.exp %553 : vector<8x128xf32>
    %cst_174 = arith.constant 1.000000e+00 : f32
    %555 = vector.broadcast %cst_174 : f32 to vector<8x128xf32>
    %556 = arith.addf %555, %554 : vector<8x128xf32>
    %557 = arith.divf %555, %556 : vector<8x128xf32>
    %558 = vector.extract_strided_slice %551 {offsets = [0, 128], sizes = [8, 128], strides = [1, 1]} : vector<8x512xf32> to vector<8x128xf32>
    %559 = arith.negf %558 : vector<8x128xf32>
    %560 = math.exp %559 : vector<8x128xf32>
    %cst_175 = arith.constant 1.000000e+00 : f32
    %561 = vector.broadcast %cst_175 : f32 to vector<8x128xf32>
    %562 = arith.addf %561, %560 : vector<8x128xf32>
    %563 = arith.divf %561, %562 : vector<8x128xf32>
    %564 = vector.extract_strided_slice %551 {offsets = [0, 256], sizes = [8, 128], strides = [1, 1]} : vector<8x512xf32> to vector<8x128xf32>
    %565 = math.tanh %564 : vector<8x128xf32>
    %566 = vector.extract_strided_slice %551 {offsets = [0, 384], sizes = [8, 128], strides = [1, 1]} : vector<8x512xf32> to vector<8x128xf32>
    %567 = arith.negf %566 : vector<8x128xf32>
    %568 = math.exp %567 : vector<8x128xf32>
    %cst_176 = arith.constant 1.000000e+00 : f32
    %569 = vector.broadcast %cst_176 : f32 to vector<8x128xf32>
    %570 = arith.addf %569, %568 : vector<8x128xf32>
    %571 = arith.divf %569, %570 : vector<8x128xf32>
    %572 = arith.mulf %563, %540 : vector<8x128xf32>
    %573 = arith.mulf %557, %565 : vector<8x128xf32>
    %574 = arith.addf %572, %573 : vector<8x128xf32>
    %575 = math.tanh %574 : vector<8x128xf32>
    %576 = arith.mulf %571, %575 : vector<8x128xf32>
    %577 = arith.index_cast %c7_i32_170 : i32 to index
    %c0_177 = arith.constant 0 : index
    %c0_178 = arith.constant 0 : index
    %578 = vector.load %arg13[%577, %c0_177, %c0_178] : memref<8x8x128xf32, #tpu.memory_space<vmem>>, vector<1x8x128xf32>
    %579 = vector.shape_cast %578 : vector<1x8x128xf32> to vector<8x128xf32>
    %580 = vector.shape_cast %576 : vector<8x128xf32> to vector<1x8x128xf32>
    tpu.vector_store %arg13[%577, %c0_177, %c0_178], %580 {strides = array<i32>} : memref<8x8x128xf32, #tpu.memory_space<vmem>>, vector<1x8x128xf32>,
    %c8_i32_179 = arith.constant 8 : i32
    %c1_180 = arith.constant 1 : index
    %c0_181 = arith.constant 0 : index
    %c0_182 = arith.constant 0 : index
    %581 = vector.load %arg11[%c1_180, %c0_181, %c0_182] : memref<2x8x128xf32, #tpu.memory_space<vmem>>, vector<1x8x128xf32>
    %582 = vector.shape_cast %581 : vector<1x8x128xf32> to vector<8x128xf32>
    %583 = vector.shape_cast %576 : vector<8x128xf32> to vector<1x8x128xf32>
    tpu.vector_store %arg11[%c1_180, %c0_181, %c0_182], %583 {strides = array<i32>} : memref<2x8x128xf32, #tpu.memory_space<vmem>>, vector<1x8x128xf32>,
    %c1_183 = arith.constant 1 : index
    %c0_184 = arith.constant 0 : index
    %c0_185 = arith.constant 0 : index
    %584 = vector.load %arg12[%c1_183, %c0_184, %c0_185] : memref<2x8x128xf32, #tpu.memory_space<vmem>>, vector<1x8x128xf32>
    %585 = vector.shape_cast %584 : vector<1x8x128xf32> to vector<8x128xf32>
    %586 = vector.shape_cast %574 : vector<8x128xf32> to vector<1x8x128xf32>
    tpu.vector_store %arg12[%c1_183, %c0_184, %c0_185], %586 {strides = array<i32>} : memref<2x8x128xf32, #tpu.memory_space<vmem>>, vector<1x8x128xf32>,
    %c0_186 = arith.constant 0 : index
    %c0_187 = arith.constant 0 : index
    %587 = vector.load %arg8[%c0_186, %c0_187] : memref<128x128xf32, #tpu.memory_space<vmem>>, vector<128x128xf32>
    %c0_188 = arith.constant 0 : index
    %c0_189 = arith.constant 0 : index
    %c0_190 = arith.constant 0 : index
    %588 = vector.load %arg13[%c0_188, %c0_189, %c0_190] : memref<8x8x128xf32, #tpu.memory_space<vmem>>, vector<8x8x128xf32>
    %589 = vector.shape_cast %588 : vector<8x8x128xf32> to vector<64x128xf32>
    %cst_191 = arith.constant dense<0.000000e+00> : vector<64x128xf32>
    %590 = tpu.matmul %589, %587, %cst_191 {dimension_numbers = #tpu.dot_dimension_numbers<[1], [0], [0], [1], [0, 0, 1, 1], [], []>} : vector<64x128xf32>, vector<128x128xf32>, vector<64x128xf32> -> vector<64x128xf32>
    %c0_192 = arith.constant 0 : index
    %c0_193 = arith.constant 0 : index
    %591 = vector.load %arg9[%c0_192, %c0_193] : memref<1x128xf32, #tpu.memory_space<vmem>>, vector<1x128xf32>
    %592 = vector.broadcast %591 : vector<1x128xf32> to vector<64x128xf32>
    %593 = arith.addf %590, %592 : vector<64x128xf32>
    %594 = vector.shape_cast %593 : vector<64x128xf32> to vector<8x8x128xf32>
    %c0_194 = arith.constant 0 : index
    %c0_195 = arith.constant 0 : index
    %c0_196 = arith.constant 0 : index
    %595 = vector.load %arg10[%c0_194, %c0_195, %c0_196] : memref<8x8x128xf32, #tpu.memory_space<vmem>>, vector<8x8x128xf32>
    tpu.vector_store %arg10[%c0_194, %c0_195, %c0_196], %594 {strides = array<i32>} : memref<8x8x128xf32, #tpu.memory_space<vmem>>, vector<8x8x128xf32>,
    return
  }
  func.func @transform_0(%arg0: i32) -> (i32, i32, i32) {
    %c0_i32 = arith.constant 0 : i32
    %c0_i32_0 = arith.constant 0 : i32
    %c0_i32_1 = arith.constant 0 : i32
    return %arg0, %c0_i32, %c0_i32_0 : i32, i32, i32
  }
  func.func @transform_1(%arg0: i32) -> (i32, i32) {
    %c0_i32 = arith.constant 0 : i32
    %c0_i32_0 = arith.constant 0 : i32
    %c0_i32_1 = arith.constant 0 : i32
    return %c0_i32, %c0_i32_0 : i32, i32
  }
  func.func @transform_2(%arg0: i32) -> (i32, i32) {
    %c0_i32 = arith.constant 0 : i32
    %c0_i32_0 = arith.constant 0 : i32
    %c0_i32_1 = arith.constant 0 : i32
    return %c0_i32, %c0_i32_0 : i32, i32
  }
  func.func @transform_3(%arg0: i32) -> (i32, i32) {
    %c0_i32 = arith.constant 0 : i32
    %c0_i32_0 = arith.constant 0 : i32
    %c0_i32_1 = arith.constant 0 : i32
    return %c0_i32, %c0_i32_0 : i32, i32
  }
  func.func @transform_4(%arg0: i32) -> (i32, i32) {
    %c0_i32 = arith.constant 0 : i32
    %c0_i32_0 = arith.constant 0 : i32
    %c0_i32_1 = arith.constant 0 : i32
    return %c0_i32, %c0_i32_0 : i32, i32
  }
  func.func @transform_5(%arg0: i32) -> (i32, i32) {
    %c0_i32 = arith.constant 0 : i32
    %c0_i32_0 = arith.constant 0 : i32
    %c0_i32_1 = arith.constant 0 : i32
    return %c0_i32, %c0_i32_0 : i32, i32
  }
  func.func @transform_6(%arg0: i32) -> (i32, i32) {
    %c0_i32 = arith.constant 0 : i32
    %c0_i32_0 = arith.constant 0 : i32
    %c0_i32_1 = arith.constant 0 : i32
    return %c0_i32, %c0_i32_0 : i32, i32
  }
  func.func @transform_7(%arg0: i32) -> (i32, i32) {
    %c0_i32 = arith.constant 0 : i32
    %c0_i32_0 = arith.constant 0 : i32
    %c0_i32_1 = arith.constant 0 : i32
    return %c0_i32, %c0_i32_0 : i32, i32
  }
  func.func @transform_8(%arg0: i32) -> (i32, i32) {
    %c0_i32 = arith.constant 0 : i32
    %c0_i32_0 = arith.constant 0 : i32
    %c0_i32_1 = arith.constant 0 : i32
    return %c0_i32, %c0_i32_0 : i32, i32
  }
  func.func @transform_9(%arg0: i32) -> (i32, i32, i32) {
    %c0_i32 = arith.constant 0 : i32
    %c0_i32_0 = arith.constant 0 : i32
    %c0_i32_1 = arith.constant 0 : i32
    return %arg0, %c0_i32, %c0_i32_0 : i32, i32, i32
  }
}

</mosaic_0001>

<llo_original>
// kernel: tpu_custom_call.1
$region0: #{tpu_custom_call.1}
  #allocation0 [shape = 'u32[]', space=smem, size = 0x4, offset = 0x4, fixed_abs, tag = 'smem constant byte address 0x4 - core index']
  #allocation1 [shape = 'u32[144,128]{1,0:T(1,128)}', space=vmem, size = 0x12000, scoped, tag = 'internal scratch']
  #allocation2 [shape = 'f32[2,8,128]{2,1,0:T(8,128)}', space=vmem, size = 0x2000, scoped, tag = 'scratch operand']
  #allocation3 [shape = 'f32[2,8,128]{2,1,0:T(8,128)}', space=vmem, size = 0x2000, scoped, tag = 'scratch operand']
  #allocation4 [shape = 'f32[8,8,128]{2,1,0:T(8,128)}', space=vmem, size = 0x8000, scoped, tag = 'scratch operand']
  #allocation5 [shape = 'f32[8,8,512]{2,1,0:T(8,128)}', space=vmem, size = 0x20000, scoped, tag = 'scratch operand']
  %s0 = inlined_call_operand.hbm [shape: f32[8,8,16], index: 0, kind: input, shape index: {}]
  %s1 = inlined_call_operand.hbm [shape: f32[16,512], index: 1, kind: input, shape index: {}]
  %s2 = inlined_call_operand.hbm [shape: f32[128,512], index: 2, kind: input, shape index: {}]
  %s3 = inlined_call_operand.vmem [shape: f32[1,512], index: 3, kind: input, shape index: {}]
  %s4 = inlined_call_operand.hbm [shape: f32[128,512], index: 4, kind: input, shape index: {}]
  %s5 = inlined_call_operand.hbm [shape: f32[128,512], index: 5, kind: input, shape index: {}]
  %s6 = inlined_call_operand.vmem [shape: f32[1,512], index: 6, kind: input, shape index: {}]
  %s7 = inlined_call_operand.hbm [shape: f32[128,128], index: 7, kind: input, shape index: {}]
  %s8 = inlined_call_operand.vmem [shape: f32[1,128], index: 8, kind: input, shape index: {}]
  %s9 = inlined_call_operand.hbm [shape: f32[8,8,128], index: 9, kind: output, shape index: {}]
  %s10 = sld [smem:[#allocation0]]
  $region74: #{tpu_custom_call.1} parent=0
    _
  %s12 = ssub.s32 1, %s10
  %s13 = scalar_select 0, %s12, %s10
  $region1: #{tpu_custom_call.1} parent=0
    #allocation6 [shape = 'u8[32768]{0}', space=vmem, size = 0x8000, scoped, tag = 'input window, operand 0, single buffered']
    #allocation7 [shape = 's32[1]{0}', space=sflag, size = 0x4, scoped, tag = 'scoped memory for tpu_custom_call.1']
    #allocation8 [shape = 's32[1]{0}', space=sflag, size = 0x4, scoped, tag = 'scoped memory for tpu_custom_call.1']
    #allocation9 [shape = 'u8[32768]{0}', space=vmem, size = 0x8000, scoped, tag = 'input window, operand 1, single buffered']
    #allocation10 [shape = 's32[1]{0}', space=sflag, size = 0x4, scoped, tag = 'scoped memory for tpu_custom_call.1']
    #allocation11 [shape = 'u8[262144]{0}', space=vmem, size = 0x40000, scoped, tag = 'input window, operand 2, single buffered']
    #allocation12 [shape = 'u8[262144]{0}', space=vmem, size = 0x40000, scoped, tag = 'input window, operand 4, single buffered']
    #allocation13 [shape = 's32[1]{0}', space=sflag, size = 0x4, scoped, tag = 'scoped memory for tpu_custom_call.1']
    #allocation14 [shape = 'u8[262144]{0}', space=vmem, size = 0x40000, scoped, tag = 'input window, operand 5, single buffered']
    #allocation15 [shape = 'u8[65536]{0}', space=vmem, size = 0x10000, scoped, tag = 'input window, operand 7, single buffered']
    #allocation16 [shape = 's32[1]{0}', space=sflag, size = 0x4, scoped, tag = 'scoped memory for tpu_custom_call.1']
    #allocation17 [shape = 'u8[32768]{0}', space=vmem, size = 0x8000, scoped, tag = 'output window, operand 0, single buffered']
    %14 = vsyncpa [#allocation7], 0
    %15 = vsyncpa [#allocation10], 0
    %16 = vsyncpa [#allocation13], 0
    %17 = vsyncpa [#allocation16], 0
    %18 = vsyncpa [#allocation8], 0
    // Predicated region
    $region2: #{tpu_custom_call.1} parent=1 // pred_check
      _
    $region3: #{tpu_custom_call.1} parent=1 // pred_check_branch
      %20 = sbr.rel (0) target = $region5
    $region4: #{tpu_custom_call.1} parent=1 // pred_region
      %s22 = ssub.s32 1024, 1024
      %23 = vsyncadd [#allocation7], %s22
      %s24 = sshll.u32 [#allocation6], 4
      %s25 = int_to_ptr.vmem [resolvable:$true] %s24
      %30 = dma.hbm_to_vmem [thread:$0]  %s0, 1024, %s25, [#allocation7], 128, 128, 8
    $region5: #{tpu_custom_call.1} parent=1 // pred_fallthru
      _
    // Predicated region
    $region6: #{tpu_custom_call.1} parent=1 // pred_check
      _
    $region7: #{tpu_custom_call.1} parent=1 // pred_check_branch
      %32 = sbr.rel (0) target = $region9
    $region8: #{tpu_custom_call.1} parent=1 // pred_region
      %s34 = ssub.s32 1024, 1024
      %35 = vsyncadd [#allocation10], %s34
      %s36 = sshll.u32 [#allocation9], 4
      %s37 = int_to_ptr.vmem [resolvable:$true] %s36
      %42 = dma.hbm_to_vmem [thread:$0]  %s1, 1024, %s37, [#allocation10], 512, 512, 32
    $region9: #{tpu_custom_call.1} parent=1 // pred_fallthru
      _
    // Predicated region
    $region10: #{tpu_custom_call.1} parent=1 // pred_check
      _
    $region11: #{tpu_custom_call.1} parent=1 // pred_check_branch
      %44 = sbr.rel (0) target = $region13
    $region12: #{tpu_custom_call.1} parent=1 // pred_region
      %s46 = ssub.s32 8192, 8192
      %47 = vsyncadd [#allocation10], %s46
      %s48 = sshll.u32 [#allocation11], 4
      %s49 = int_to_ptr.vmem [resolvable:$true] %s48
      %54 = dma.hbm_to_vmem [thread:$0]  %s2, 8192, %s49, [#allocation10], 512, 512, 32
    $region13: #{tpu_custom_call.1} parent=1 // pred_fallthru
      _
    // Predicated region
    $region14: #{tpu_custom_call.1} parent=1 // pred_check
      _
    $region15: #{tpu_custom_call.1} parent=1 // pred_check_branch
      %56 = sbr.rel (0) target = $region17
    $region16: #{tpu_custom_call.1} parent=1 // pred_region
      _
    $region17: #{tpu_custom_call.1} parent=1 // pred_fallthru
      _
    // Predicated region
    $region18: #{tpu_custom_call.1} parent=1 // pred_check
      _
    $region19: #{tpu_custom_call.1} parent=1 // pred_check_branch
      %58 = sbr.rel (0) target = $region21
    $region20: #{tpu_custom_call.1} parent=1 // pred_region
      %s60 = ssub.s32 8192, 8192
      %61 = vsyncadd [#allocation13], %s60
      %s62 = sshll.u32 [#allocation12], 4
      %s63 = int_to_ptr.vmem [resolvable:$true] %s62
      %68 = dma.hbm_to_vmem [thread:$0]  %s4, 8192, %s63, [#allocation13], 512, 512, 32
    $region21: #{tpu_custom_call.1} parent=1 // pred_fallthru
      _
    // Predicated region
    $region22: #{tpu_custom_call.1} parent=1 // pred_check
      _
    $region23: #{tpu_custom_call.1} parent=1 // pred_check_branch
      %70 = sbr.rel (0) target = $region25
    $region24: #{tpu_custom_call.1} parent=1 // pred_region
      %s72 = ssub.s32 8192, 8192
      %73 = vsyncadd [#allocation13], %s72
      %s74 = sshll.u32 [#allocation14], 4
      %s75 = int_to_ptr.vmem [resolvable:$true] %s74
      %80 = dma.hbm_to_vmem [thread:$0]  %s5, 8192, %s75, [#allocation13], 512, 512, 32
    $region25: #{tpu_custom_call.1} parent=1 // pred_fallthru
      _
    // Predicated region
    $region26: #{tpu_custom_call.1} parent=1 // pred_check
      _
    $region27: #{tpu_custom_call.1} parent=1 // pred_check_branch
      %82 = sbr.rel (0) target = $region29
    $region28: #{tpu_custom_call.1} parent=1 // pred_region
      _
    $region29: #{tpu_custom_call.1} parent=1 // pred_fallthru
      _
    // Predicated region
    $region30: #{tpu_custom_call.1} parent=1 // pred_check
      _
    $region31: #{tpu_custom_call.1} parent=1 // pred_check_branch
      %84 = sbr.rel (0) target = $region33
    $region32: #{tpu_custom_call.1} parent=1 // pred_region
      %s86 = ssub.s32 2048, 2048
      %87 = vsyncadd [#allocation16], %s86
      %s88 = sshll.u32 [#allocation15], 4
      %s89 = int_to_ptr.vmem [resolvable:$true] %s88
      %94 = dma.hbm_to_vmem [thread:$0]  %s7, 2048, %s89, [#allocation16], 128, 128, 8
    $region33: #{tpu_custom_call.1} parent=1 // pred_fallthru
      _
    // Predicated region
    $region34: #{tpu_custom_call.1} parent=1 // pred_check
      _
    $region35: #{tpu_custom_call.1} parent=1 // pred_check_branch
      %96 = sbr.rel (0) target = $region37
    $region36: #{tpu_custom_call.1} parent=1 // pred_region
      _
    $region37: #{tpu_custom_call.1} parent=1 // pred_fallthru
      _
    // Predicated region
    $region38: #{tpu_custom_call.1} parent=1 // pred_check
      _
    $region39: #{tpu_custom_call.1} parent=1 // pred_check_branch
      %98 = sbr.rel (0) target = $region41
    $region40: #{tpu_custom_call.1} parent=1 // pred_region
      %99 = dma.done [#allocation7], 1024
    $region41: #{tpu_custom_call.1} parent=1 // pred_fallthru
      _
    // Predicated region
    $region42: #{tpu_custom_call.1} parent=1 // pred_check
      _
    $region43: #{tpu_custom_call.1} parent=1 // pred_check_branch
      %101 = sbr.rel (0) target = $region45
    $region44: #{tpu_custom_call.1} parent=1 // pred_region
      %102 = dma.done [#allocation10], 1024
    $region45: #{tpu_custom_call.1} parent=1 // pred_fallthru
      _
    // Predicated region
    $region46: #{tpu_custom_call.1} parent=1 // pred_check
      _
    $region47: #{tpu_custom_call.1} parent=1 // pred_check_branch
      %104 = sbr.rel (0) target = $region49
    $region48: #{tpu_custom_call.1} parent=1 // pred_region
      %105 = dma.done [#allocation10], 8192
    $region49: #{tpu_custom_call.1} parent=1 // pred_fallthru
      _
    // Predicated region
    $region50: #{tpu_custom_call.1} parent=1 // pred_check
      _
    $region51: #{tpu_custom_call.1} parent=1 // pred_check_branch
      %107 = sbr.rel (0) target = $region53
    $region52: #{tpu_custom_call.1} parent=1 // pred_region
      %108 = dma.done [#allocation13], 8192
    $region53: #{tpu_custom_call.1} parent=1 // pred_fallthru
      _
    // Predicated region
    $region54: #{tpu_custom_call.1} parent=1 // pred_check
      _
    $region55: #{tpu_custom_call.1} parent=1 // pred_check_branch
      %110 = sbr.rel (0) target = $region57
    $region56: #{tpu_custom_call.1} parent=1 // pred_region
      %111 = dma.done [#allocation13], 8192
    $region57: #{tpu_custom_call.1} parent=1 // pred_fallthru
      _
    // Predicated region
    $region58: #{tpu_custom_call.1} parent=1 // pred_check
      _
    $region59: #{tpu_custom_call.1} parent=1 // pred_check_branch
      %113 = sbr.rel (0) target = $region61
    $region60: #{tpu_custom_call.1} parent=1 // pred_region
      %114 = dma.done [#allocation16], 2048
    $region61: #{tpu_custom_call.1} parent=1 // pred_fallthru
      _
    %p115 = scmp.eq.s32.totalorder 0, 0
    // Predicated region
    $region62: #{tpu_custom_call.1} parent=1 // pred_check
      %p116 = pneg %p115
    $region63: #{tpu_custom_call.1} parent=1 // pred_check_branch
      %118 = sbr.rel (%p116) target = $region65
    $region64: #{tpu_custom_call.1} parent=1 // pred_region
      %119 = vst [vmem:[#allocation2] sm:$0xff] 0.0
      %120 = vst [vmem:[#allocation2 + $0x8] sm:$0xff] 0.0
      %121 = vst [vmem:[#allocation3] sm:$0xff] 0.0
      %122 = vst [vmem:[#allocation3 + $0x8] sm:$0xff] 0.0
    $region65: #{tpu_custom_call.1} parent=1 // pred_fallthru
      _
    %v123 = vld [vmem:[#allocation9] sm:$0xff]
    %v124 = vld [vmem:[#allocation9 + $0x8] sm:$0xff]
    %v125 = vld [vmem:[#allocation9 + $0x10] sm:$0xff]
    %v126 = vld [vmem:[#allocation9 + $0x18] sm:$0xff]
    %v127 = vld [vmem:[#allocation9 + $0x20] sm:$0xff]
    %v128 = vld [vmem:[#allocation9 + $0x28] sm:$0xff]
    %v129 = vld [vmem:[#allocation9 + $0x30] sm:$0xff]
    %v130 = vld [vmem:[#allocation9 + $0x38] sm:$0xff]
    %v131 = vld [vmem:[#allocation11] sm:$0xff]
    %v132 = vld [vmem:[#allocation11 + $0x8] sm:$0xff]
    %v133 = vld [vmem:[#allocation11 + $0x10] sm:$0xff]
    %v134 = vld [vmem:[#allocation11 + $0x18] sm:$0xff]
    %v135 = vld [vmem:[#allocation11 + $0x20] sm:$0xff]
    %v136 = vld [vmem:[#allocation11 + $0x28] sm:$0xff]
    %v137 = vld [vmem:[#allocation11 + $0x30] sm:$0xff]
    %v138 = vld [vmem:[#allocation11 + $0x38] sm:$0xff]
    %v139 = vld [vmem:[#allocation11 + $0x40] sm:$0xff]
    %v140 = vld [vmem:[#allocation11 + $0x48] sm:$0xff]
    %v141 = vld [vmem:[#allocation11 + $0x50] sm:$0xff]
    %v142 = vld [vmem:[#allocation11 + $0x58] sm:$0xff]
    %v143 = vld [vmem:[#allocation11 + $0x60] sm:$0xff]
    %v144 = vld [vmem:[#allocation11 + $0x68] sm:$0xff]
    %v145 = vld [vmem:[#allocation11 + $0x70] sm:$0xff]
    %v146 = vld [vmem:[#allocation11 + $0x78] sm:$0xff]
    %v147 = vld [vmem:[#allocation11 + $0x80] sm:$0xff]
    %v148 = vld [vmem:[#allocation11 + $0x88] sm:$0xff]
    %v149 = vld [vmem:[#allocation11 + $0x90] sm:$0xff]
    %v150 = vld [vmem:[#allocation11 + $0x98] sm:$0xff]
    %v151 = vld [vmem:[#allocation11 + $0xa0] sm:$0xff]
    %v152 = vld [vmem:[#allocation11 + $0xa8] sm:$0xff]
    %v153 = vld [vmem:[#allocation11 + $0xb0] sm:$0xff]
    %v154 = vld [vmem:[#allocation11 + $0xb8] sm:$0xff]
    %v155 = vld [vmem:[#allocation11 + $0xc0] sm:$0xff]
    %v156 = vld [vmem:[#allocation11 + $0xc8] sm:$0xff]
    %v157 = vld [vmem:[#allocation11 + $0xd0] sm:$0xff]
    %v158 = vld [vmem:[#allocation11 + $0xd8] sm:$0xff]
    %v159 = vld [vmem:[#allocation11 + $0xe0] sm:$0xff]
    %v160 = vld [vmem:[#allocation11 + $0xe8] sm:$0xff]
    %v161 = vld [vmem:[#allocation11 + $0xf0] sm:$0xff]
    %v162 = vld [vmem:[#allocation11 + $0xf8] sm:$0xff]
    %v163 = vld [vmem:[#allocation11 + $0x100] sm:$0xff]
    %v164 = vld [vmem:[#allocation11 + $0x108] sm:$0xff]
    %v165 = vld [vmem:[#allocation11 + $0x110] sm:$0xff]
    %v166 = vld [vmem:[#allocation11 + $0x118] sm:$0xff]
    %v167 = vld [vmem:[#allocation11 + $0x120] sm:$0xff]
    %v168 = vld [vmem:[#allocation11 + $0x128] sm:$0xff]
    %v169 = vld [vmem:[#allocation11 + $0x130] sm:$0xff]
    %v170 = vld [vmem:[#allocation11 + $0x138] sm:$0xff]
    %v171 = vld [vmem:[#allocation11 + $0x140] sm:$0xff]
    %v172 = vld [vmem:[#allocation11 + $0x148] sm:$0xff]
    %v173 = vld [vmem:[#allocation11 + $0x150] sm:$0xff]
    %v174 = vld [vmem:[#allocation11 + $0x158] sm:$0xff]
    %v175 = vld [vmem:[#allocation11 + $0x160] sm:$0xff]
    %v176 = vld [vmem:[#allocation11 + $0x168] sm:$0xff]
    %v177 = vld [vmem:[#allocation11 + $0x170] sm:$0xff]
    %v178 = vld [vmem:[#allocation11 + $0x178] sm:$0xff]
    %v179 = vld [vmem:[#allocation11 + $0x180] sm:$0xff]
    %v180 = vld [vmem:[#allocation11 + $0x188] sm:$0xff]
    %v181 = vld [vmem:[#allocation11 + $0x190] sm:$0xff]
    %v182 = vld [vmem:[#allocation11 + $0x198] sm:$0xff]
    %v183 = vld [vmem:[#allocation11 + $0x1a0] sm:$0xff]
    %v184 = vld [vmem:[#allocation11 + $0x1a8] sm:$0xff]
    %v185 = vld [vmem:[#allocation11 + $0x1b0] sm:$0xff]
    %v186 = vld [vmem:[#allocation11 + $0x1b8] sm:$0xff]
    %v187 = vld [vmem:[#allocation11 + $0x1c0] sm:$0xff]
    %v188 = vld [vmem:[#allocation11 + $0x1c8] sm:$0xff]
    %v189 = vld [vmem:[#allocation11 + $0x1d0] sm:$0xff]
    %v190 = vld [vmem:[#allocation11 + $0x1d8] sm:$0xff]
    %v191 = vld [vmem:[#allocation11 + $0x1e0] sm:$0xff]
    %v192 = vld [vmem:[#allocation11 + $0x1e8] sm:$0xff]
    %v193 = vld [vmem:[#allocation11 + $0x1f0] sm:$0xff]
    %v194 = vld [vmem:[#allocation11 + $0x1f8] sm:$0xff]
    %v195 = vld [vmem:[%s3] sm:$0xf]
    %v196 = vld [vmem:[#allocation6] sm:$0xff]
    %v197 = vld [vmem:[#allocation6 + $0x8] sm:$0xff]
    %v198 = vld [vmem:[#allocation6 + $0x10] sm:$0xff]
    %v199 = vld [vmem:[#allocation6 + $0x18] sm:$0xff]
    %v200 = vld [vmem:[#allocation6 + $0x20] sm:$0xff]
    %v201 = vld [vmem:[#allocation6 + $0x28] sm:$0xff]
    %v202 = vld [vmem:[#allocation6 + $0x30] sm:$0xff]
    %v203 = vld [vmem:[#allocation6 + $0x38] sm:$0xff]
    %v205 = vlaneseq
    %v206 = vshrl.u32 %v205, 7
    %v207 = vsub.s32 0, %v206
    %v208 = vrot.slane %v195, %v207
    %v209 = vlaneseq
    %v210 = vshrl.u32 %v209, 7
    %v211 = vsub.s32 1, %v210
    %v212 = vrot.slane %v195, %v211
    %v213 = vlaneseq
    %v214 = vshrl.u32 %v213, 7
    %v215 = vsub.s32 2, %v214
    %v216 = vrot.slane %v195, %v215
    %v217 = vlaneseq
    %v218 = vshrl.u32 %v217, 7
    %v219 = vsub.s32 3, %v218
    %v220 = vrot.slane %v195, %v219
    %vm225 = vcmask 130048
    %v227 = vsel %vm225, %v196, 0
    %v230 = vsel %vm225, %v197, 0
    %v233 = vsel %vm225, %v198, 0
    %v236 = vsel %vm225, %v199, 0
    %v239 = vsel %vm225, %v200, 0
    %v242 = vsel %vm225, %v201, 0
    %v245 = vsel %vm225, %v202, 0
    %v248 = vsel %vm225, %v203, 0
    %250 = vmatprep.subr.mxu0 %v124
    %251 = vmatpush1.msra.mxu0 %v123
    %252 = vmatprep.subr.mxu0 %v128
    %253 = vmatpush1.msra.mxu0 %v127
    %254 = vmatprep.subr.mxu0 0.0
    %255 = vmatpush1.msra.mxu0 0.0
    %256 = vmatprep.subr.mxu0 0.0
    %257 = vmatpush1.msra.mxu0 0.0
    %258 = vmatprep.subr.mxu0 0.0
    %259 = vmatpush1.msra.mxu0 0.0
    %260 = vmatprep.subr.mxu0 0.0
    %261 = vmatpush1.msra.mxu0 0.0
    %262 = vmatprep.subr.mxu0 0.0
    %263 = vmatpush1.msra.mxu0 0.0
    %264 = vmatprep.subr.mxu0 0.0
    %265 = vmatpush1.msra.mxu0 0.0
    %266 = vmatprep.subr.mxu0 0.0
    %267 = vmatpush1.msra.mxu0 0.0
    %268 = vmatprep.subr.mxu0 0.0
    %269 = vmatpush1.msra.mxu0 0.0
    %270 = vmatprep.subr.mxu0 0.0
    %271 = vmatpush1.msra.mxu0 0.0
    %272 = vmatprep.subr.mxu0 0.0
    %273 = vmatpush1.msra.mxu0 0.0
    %274 = vmatprep.subr.mxu0 0.0
    %275 = vmatpush1.msra.mxu0 0.0
    %276 = vmatprep.subr.mxu0 0.0
    %277 = vmatpush1.msra.mxu0 0.0
    %278 = vmatprep.subr.mxu0 0.0
    %279 = vmatpush1.msra.mxu0 0.0
    %280 = vmatprep.subr.mxu0 0.0
    %281 = vmatpush1.msra.mxu0 0.0
    %282 = vmatprep.subr.mxu0 0.0
    %283 = vmatpush1.msra.mxu0 0.0
    %284 = vmatprep.subr.mxu0 0.0
    %285 = vmatpush1.msra.mxu0 0.0
    %286 = vmatprep.subr.mxu0 0.0
    %287 = vmatpush1.msra.mxu0 0.0
    %288 = vmatprep.subr.mxu0 0.0
    %289 = vmatpush1.msra.mxu0 0.0
    %290 = vmatprep.subr.mxu0 0.0
    %291 = vmatpush1.msra.mxu0 0.0
    %292 = vmatprep.subr.mxu0 0.0
    %293 = vmatpush1.msra.mxu0 0.0
    %294 = vmatprep.subr.mxu0 0.0
    %295 = vmatpush1.msra.mxu0 0.0
    %296 = vmatprep.subr.mxu0 0.0
    %297 = vmatpush1.msra.mxu0 0.0
    %298 = vmatprep.subr.mxu0 0.0
    %299 = vmatpush1.msra.mxu0 0.0
    %300 = vmatprep.subr.mxu0 0.0
    %301 = vmatpush1.msra.mxu0 0.0
    %302 = vmatprep.subr.mxu0 0.0
    %303 = vmatpush1.msra.mxu0 0.0
    %304 = vmatprep.subr.mxu0 0.0
    %305 = vmatpush1.msra.mxu0 0.0
    %306 = vmatprep.subr.mxu0 0.0
    %307 = vmatpush1.msra.mxu0 0.0
    %308 = vmatprep.subr.mxu0 0.0
    %309 = vmatpush1.msra.mxu0 0.0
    %310 = vmatprep.subr.mxu0 0.0
    %311 = vmatpush1.msra.mxu0 0.0
    %312 = vmatprep.subr.mxu0 0.0
    %313 = vmatpush1.msra.mxu0 0.0
    %314 = vmatprep.mubr.f32.mxu0 0.0
    %315 = vmatmul.mubr.f32.gmra.mrb[0].mxu0 %v227
    %v316 = vpop.f32.mrb[0].mxu0
    %v317 = vadd.f32 %v208, %v316
    %v318 = vpop.f32.mrb[0].mxu0
    %v319 = vadd.f32 %v212, %v318
    %320 = vmatprep.mubr.f32.mxu0 0.0
    %321 = vmatmul.mubr.f32.gmra.mrb[0].mxu0 %v230
    %v322 = vpop.f32.mrb[0].mxu0
    %v323 = vadd.f32 %v208, %v322
    %v324 = vpop.f32.mrb[0].mxu0
    %v325 = vadd.f32 %v212, %v324
    %326 = vmatprep.mubr.f32.mxu0 0.0
    %327 = vmatmul.mubr.f32.gmra.mrb[0].mxu0 %v233
    %v328 = vpop.f32.mrb[0].mxu0
    %v329 = vadd.f32 %v208, %v328
    %v330 = vpop.f32.mrb[0].mxu0
    %v331 = vadd.f32 %v212, %v330
    %332 = vmatprep.mubr.f32.mxu0 0.0
    %333 = vmatmul.mubr.f32.gmra.mrb[0].mxu0 %v236
    %v334 = vpop.f32.mrb[0].mxu0
    %v335 = vadd.f32 %v208, %v334
    %v336 = vpop.f32.mrb[0].mxu0
    %v337 = vadd.f32 %v212, %v336
    %338 = vmatprep.mubr.f32.mxu0 0.0
    %339 = vmatmul.mubr.f32.gmra.mrb[0].mxu0 %v239
    %v340 = vpop.f32.mrb[0].mxu0
    %v341 = vadd.f32 %v208, %v340
    %v342 = vpop.f32.mrb[0].mxu0
    %v343 = vadd.f32 %v212, %v342
    %344 = vmatprep.mubr.f32.mxu0 0.0
    %345 = vmatmul.mubr.f32.gmra.mrb[0].mxu0 %v242
    %v346 = vpop.f32.mrb[0].mxu0
    %v347 = vadd.f32 %v208, %v346
    %v348 = vpop.f32.mrb[0].mxu0
    %v349 = vadd.f32 %v212, %v348
    %350 = vmatprep.mubr.f32.mxu0 0.0
    %351 = vmatmul.mubr.f32.gmra.mrb[0].mxu0 %v245
    %v352 = vpop.f32.mrb[0].mxu0
    %v353 = vadd.f32 %v208, %v352
    %v354 = vpop.f32.mrb[0].mxu0
    %v355 = vadd.f32 %v212, %v354
    %356 = vmatprep.mubr.f32.mxu0 0.0
    %357 = vmatmul.mubr.f32.gmra.mrb[0].mxu0 %v248
    %v358 = vpop.f32.mrb[0].mxu0
    %v359 = vadd.f32 %v208, %v358
    %v360 = vpop.f32.mrb[0].mxu0
    %v361 = vadd.f32 %v212, %v360
    %362 = vdwg.mxu0
    %363 = vmatprep.subr.mxu0 %v126
    %364 = vmatpush1.msra.mxu0 %v125
    %365 = vmatprep.subr.mxu0 %v130
    %366 = vmatpush1.msra.mxu0 %v129
    %367 = vmatprep.subr.mxu0 0.0
    %368 = vmatpush1.msra.mxu0 0.0
    %369 = vmatprep.subr.mxu0 0.0
    %370 = vmatpush1.msra.mxu0 0.0
    %371 = vmatprep.subr.mxu0 0.0
    %372 = vmatpush1.msra.mxu0 0.0
    %373 = vmatprep.subr.mxu0 0.0
    %374 = vmatpush1.msra.mxu0 0.0
    %375 = vmatprep.subr.mxu0 0.0
    %376 = vmatpush1.msra.mxu0 0.0
    %377 = vmatprep.subr.mxu0 0.0
    %378 = vmatpush1.msra.mxu0 0.0
    %379 = vmatprep.subr.mxu0 0.0
    %380 = vmatpush1.msra.mxu0 0.0
    %381 = vmatprep.subr.mxu0 0.0
    %382 = vmatpush1.msra.mxu0 0.0
    %383 = vmatprep.subr.mxu0 0.0
    %384 = vmatpush1.msra.mxu0 0.0
    %385 = vmatprep.subr.mxu0 0.0
    %386 = vmatpush1.msra.mxu0 0.0
    %387 = vmatprep.subr.mxu0 0.0
    %388 = vmatpush1.msra.mxu0 0.0
    %389 = vmatprep.subr.mxu0 0.0
    %390 = vmatpush1.msra.mxu0 0.0
    %391 = vmatprep.subr.mxu0 0.0
    %392 = vmatpush1.msra.mxu0 0.0
    %393 = vmatprep.subr.mxu0 0.0
    %394 = vmatpush1.msra.mxu0 0.0
    %395 = vmatprep.subr.mxu0 0.0
    %396 = vmatpush1.msra.mxu0 0.0
    %397 = vmatprep.subr.mxu0 0.0
    %398 = vmatpush1.msra.mxu0 0.0
    %399 = vmatprep.subr.mxu0 0.0
    %400 = vmatpush1.msra.mxu0 0.0
    %401 = vmatprep.subr.mxu0 0.0
    %402 = vmatpush1.msra.mxu0 0.0
    %403 = vmatprep.subr.mxu0 0.0
    %404 = vmatpush1.msra.mxu0 0.0
    %405 = vmatprep.subr.mxu0 0.0
    %406 = vmatpush1.msra.mxu0 0.0
    %407 = vmatprep.subr.mxu0 0.0
    %408 = vmatpush1.msra.mxu0 0.0
    %409 = vmatprep.subr.mxu0 0.0
    %410 = vmatpush1.msra.mxu0 0.0
    %411 = vmatprep.subr.mxu0 0.0
    %412 = vmatpush1.msra.mxu0 0.0
    %413 = vmatprep.subr.mxu0 0.0
    %414 = vmatpush1.msra.mxu0 0.0
    %415 = vmatprep.subr.mxu0 0.0
    %416 = vmatpush1.msra.mxu0 0.0
    %417 = vmatprep.subr.mxu0 0.0
    %418 = vmatpush1.msra.mxu0 0.0
    %419 = vmatprep.subr.mxu0 0.0
    %420 = vmatpush1.msra.mxu0 0.0
    %421 = vmatprep.subr.mxu0 0.0
    %422 = vmatpush1.msra.mxu0 0.0
    %423 = vmatprep.subr.mxu0 0.0
    %424 = vmatpush1.msra.mxu0 0.0
    %425 = vmatprep.subr.mxu0 0.0
    %426 = vmatpush1.msra.mxu0 0.0
    %427 = vmatprep.mubr.f32.mxu0 0.0
    %428 = vmatmul.mubr.f32.gmra.mrb[0].mxu0 %v227
    %v429 = vpop.f32.mrb[0].mxu0
    %v430 = vadd.f32 %v216, %v429
    %v431 = vpop.f32.mrb[0].mxu0
    %v432 = vadd.f32 %v220, %v431
    %433 = vmatprep.mubr.f32.mxu0 0.0
    %434 = vmatmul.mubr.f32.gmra.mrb[0].mxu0 %v230
    %v435 = vpop.f32.mrb[0].mxu0
    %v436 = vadd.f32 %v216, %v435
    %v437 = vpop.f32.mrb[0].mxu0
    %v438 = vadd.f32 %v220, %v437
    %439 = vmatprep.mubr.f32.mxu0 0.0
    %440 = vmatmul.mubr.f32.gmra.mrb[0].mxu0 %v233
    %v441 = vpop.f32.mrb[0].mxu0
    %v442 = vadd.f32 %v216, %v441
    %v443 = vpop.f32.mrb[0].mxu0
    %v444 = vadd.f32 %v220, %v443
    %445 = vmatprep.mubr.f32.mxu0 0.0
    %446 = vmatmul.mubr.f32.gmra.mrb[0].mxu0 %v236
    %v447 = vpop.f32.mrb[0].mxu0
    %v448 = vadd.f32 %v216, %v447
    %v449 = vpop.f32.mrb[0].mxu0
    %v450 = vadd.f32 %v220, %v449
    %451 = vmatprep.mubr.f32.mxu0 0.0
    %452 = vmatmul.mubr.f32.gmra.mrb[0].mxu0 %v239
    %v453 = vpop.f32.mrb[0].mxu0
    %v454 = vadd.f32 %v216, %v453
    %v455 = vpop.f32.mrb[0].mxu0
    %v456 = vadd.f32 %v220, %v455
    %457 = vmatprep.mubr.f32.mxu0 0.0
    %458 = vmatmul.mubr.f32.gmra.mrb[0].mxu0 %v242
    %v459 = vpop.f32.mrb[0].mxu0
    %v460 = vadd.f32 %v216, %v459
    %v461 = vpop.f32.mrb[0].mxu0
    %v462 = vadd.f32 %v220, %v461
    %463 = vmatprep.mubr.f32.mxu0 0.0
    %464 = vmatmul.mubr.f32.gmra.mrb[0].mxu0 %v245
    %v465 = vpop.f32.mrb[0].mxu0
    %v466 = vadd.f32 %v216, %v465
    %v467 = vpop.f32.mrb[0].mxu0
    %v468 = vadd.f32 %v220, %v467
    %469 = vmatprep.mubr.f32.mxu0 0.0
    %470 = vmatmul.mubr.f32.gmra.mrb[0].mxu0 %v248
    %v471 = vpop.f32.mrb[0].mxu0
    %v472 = vadd.f32 %v216, %v471
    %v473 = vpop.f32.mrb[0].mxu0
    %v474 = vadd.f32 %v220, %v473
    %475 = vdwg.mxu0
    %476 = vst [vmem:[#allocation5] sm:$0xff] %v317
    %477 = vst [vmem:[#allocation5 + $0x8] sm:$0xff] %v319
    %478 = vst [vmem:[#allocation5 + $0x10] sm:$0xff] %v430
    %479 = vst [vmem:[#allocation5 + $0x18] sm:$0xff] %v432
    %480 = vst [vmem:[#allocation5 + $0x20] sm:$0xff] %v323
    %481 = vst [vmem:[#allocation5 + $0x28] sm:$0xff] %v325
    %482 = vst [vmem:[#allocation5 + $0x30] sm:$0xff] %v436
    %483 = vst [vmem:[#allocation5 + $0x38] sm:$0xff] %v438
    %484 = vst [vmem:[#allocation5 + $0x40] sm:$0xff] %v329
    %485 = vst [vmem:[#allocation5 + $0x48] sm:$0xff] %v331
    %486 = vst [vmem:[#allocation5 + $0x50] sm:$0xff] %v442
    %487 = vst [vmem:[#allocation5 + $0x58] sm:$0xff] %v444
    %488 = vst [vmem:[#allocation5 + $0x60] sm:$0xff] %v335
    %489 = vst [vmem:[#allocation5 + $0x68] sm:$0xff] %v337
    %490 = vst [vmem:[#allocation5 + $0x70] sm:$0xff] %v448
    %491 = vst [vmem:[#allocation5 + $0x78] sm:$0xff] %v450
    %492 = vst [vmem:[#allocation5 + $0x80] sm:$0xff] %v341
    %493 = vst [vmem:[#allocation5 + $0x88] sm:$0xff] %v343
    %494 = vst [vmem:[#allocation5 + $0x90] sm:$0xff] %v454
    %495 = vst [vmem:[#allocation5 + $0x98] sm:$0xff] %v456
    %496 = vst [vmem:[#allocation5 + $0xa0] sm:$0xff] %v347
    %497 = vst [vmem:[#allocation5 + $0xa8] sm:$0xff] %v349
    %498 = vst [vmem:[#allocation5 + $0xb0] sm:$0xff] %v460
    %499 = vst [vmem:[#allocation5 + $0xb8] sm:$0xff] %v462
    %500 = vst [vmem:[#allocation5 + $0xc0] sm:$0xff] %v353
    %501 = vst [vmem:[#allocation5 + $0xc8] sm:$0xff] %v355
    %502 = vst [vmem:[#allocation5 + $0xd0] sm:$0xff] %v466
    %503 = vst [vmem:[#allocation5 + $0xd8] sm:$0xff] %v468
    %504 = vst [vmem:[#allocation5 + $0xe0] sm:$0xff] %v359
    %505 = vst [vmem:[#allocation5 + $0xe8] sm:$0xff] %v361
    %506 = vst [vmem:[#allocation5 + $0xf0] sm:$0xff] %v472
    %507 = vst [vmem:[#allocation5 + $0xf8] sm:$0xff] %v474
    %v508 = vld [vmem:[#allocation2] sm:$0xff]
    %v509 = vld [vmem:[#allocation3] sm:$0xff]
    %v510 = vld [vmem:[#allocation5] sm:$0xff]
    %v511 = vld [vmem:[#allocation5 + $0x8] sm:$0xff]
    %v512 = vld [vmem:[#allocation5 + $0x10] sm:$0xff]
    %v513 = vld [vmem:[#allocation5 + $0x18] sm:$0xff]
    %514 = vmatprep.subr.mxu0 %v132
    %515 = vmatpush1.msra.mxu0 %v131
    %516 = vmatprep.subr.mxu0 %v136
    %517 = vmatpush1.msra.mxu0 %v135
    %518 = vmatprep.subr.mxu0 %v140
    %519 = vmatpush1.msra.mxu0 %v139
    %520 = vmatprep.subr.mxu0 %v144
    %521 = vmatpush1.msra.mxu0 %v143
    %522 = vmatprep.subr.mxu0 %v148
    %523 = vmatpush1.msra.mxu0 %v147
    %524 = vmatprep.subr.mxu0 %v152
    %525 = vmatpush1.msra.mxu0 %v151
    %526 = vmatprep.subr.mxu0 %v156
    %527 = vmatpush1.msra.mxu0 %v155
    %528 = vmatprep.subr.mxu0 %v160
    %529 = vmatpush1.msra.mxu0 %v159
    %530 = vmatprep.subr.mxu0 %v164
    %531 = vmatpush1.msra.mxu0 %v163
    %532 = vmatprep.subr.mxu0 %v168
    %533 = vmatpush1.msra.mxu0 %v167
    %534 = vmatprep.subr.mxu0 %v172
    %535 = vmatpush1.msra.mxu0 %v171
    %536 = vmatprep.subr.mxu0 %v176
    %537 = vmatpush1.msra.mxu0 %v175
    %538 = vmatprep.subr.mxu0 %v180
    %539 = vmatpush1.msra.mxu0 %v179
    %540 = vmatprep.subr.mxu0 %v184
    %541 = vmatpush1.msra.mxu0 %v183
    %542 = vmatprep.subr.mxu0 %v188
    %543 = vmatpush1.msra.mxu0 %v187
    %544 = vmatprep.subr.mxu0 %v192
    %545 = vmatpush1.msra.mxu0 %v191
    %546 = vmatprep.subr.mxu0 0.0
    %547 = vmatpush1.msra.mxu0 0.0
    %548 = vmatprep.subr.mxu0 0.0
    %549 = vmatpush1.msra.mxu0 0.0
    %550 = vmatprep.subr.mxu0 0.0
    %551 = vmatpush1.msra.mxu0 0.0
    %552 = vmatprep.subr.mxu0 0.0
    %553 = vmatpush1.msra.mxu0 0.0
    %554 = vmatprep.subr.mxu0 0.0
    %555 = vmatpush1.msra.mxu0 0.0
    %556 = vmatprep.subr.mxu0 0.0
    %557 = vmatpush1.msra.mxu0 0.0
    %558 = vmatprep.subr.mxu0 0.0
    %559 = vmatpush1.msra.mxu0 0.0
    %560 = vmatprep.subr.mxu0 0.0
    %561 = vmatpush1.msra.mxu0 0.0
    %562 = vmatprep.subr.mxu0 0.0
    %563 = vmatpush1.msra.mxu0 0.0
    %564 = vmatprep.subr.mxu0 0.0
    %565 = vmatpush1.msra.mxu0 0.0
    %566 = vmatprep.subr.mxu0 0.0
    %567 = vmatpush1.msra.mxu0 0.0
    %568 = vmatprep.subr.mxu0 0.0
    %569 = vmatpush1.msra.mxu0 0.0
    %570 = vmatprep.subr.mxu0 0.0
    %571 = vmatpush1.msra.mxu0 0.0
    %572 = vmatprep.subr.mxu0 0.0
    %573 = vmatpush1.msra.mxu0 0.0
    %574 = vmatprep.subr.mxu0 0.0
    %575 = vmatpush1.msra.mxu0 0.0
    %576 = vmatprep.subr.mxu0 0.0
    %577 = vmatpush1.msra.mxu0 0.0
    %578 = vmatprep.mubr.f32.mxu0 0.0
    %579 = vmatmul.mubr.f32.gmra.mrb[0].mxu0 %v508
    %v580 = vpop.f32.mrb[0].mxu0
    %v581 = vadd.f32 0.0, %v580
    %v582 = vpop.f32.mrb[0].mxu0
    %v583 = vadd.f32 0.0, %v582
    %584 = vdwg.mxu0
    %585 = vmatprep.subr.mxu0 %v134
    %586 = vmatpush1.msra.mxu0 %v133
    %587 = vmatprep.subr.mxu0 %v138
    %588 = vmatpush1.msra.mxu0 %v137
    %589 = vmatprep.subr.mxu0 %v142
    %590 = vmatpush1.msra.mxu0 %v141
    %591 = vmatprep.subr.mxu0 %v146
    %592 = vmatpush1.msra.mxu0 %v145
    %593 = vmatprep.subr.mxu0 %v150
    %594 = vmatpush1.msra.mxu0 %v149
    %595 = vmatprep.subr.mxu0 %v154
    %596 = vmatpush1.msra.mxu0 %v153
    %597 = vmatprep.subr.mxu0 %v158
    %598 = vmatpush1.msra.mxu0 %v157
    %599 = vmatprep.subr.mxu0 %v162
    %600 = vmatpush1.msra.mxu0 %v161
    %601 = vmatprep.subr.mxu0 %v166
    %602 = vmatpush1.msra.mxu0 %v165
    %603 = vmatprep.subr.mxu0 %v170
    %604 = vmatpush1.msra.mxu0 %v169
    %605 = vmatprep.subr.mxu0 %v174
    %606 = vmatpush1.msra.mxu0 %v173
    %607 = vmatprep.subr.mxu0 %v178
    %608 = vmatpush1.msra.mxu0 %v177
    %609 = vmatprep.subr.mxu0 %v182
    %610 = vmatpush1.msra.mxu0 %v181
    %611 = vmatprep.subr.mxu0 %v186
    %612 = vmatpush1.msra.mxu0 %v185
    %613 = vmatprep.subr.mxu0 %v190
    %614 = vmatpush1.msra.mxu0 %v189
    %615 = vmatprep.subr.mxu0 %v194
    %616 = vmatpush1.msra.mxu0 %v193
    %617 = vmatprep.subr.mxu0 0.0
    %618 = vmatpush1.msra.mxu0 0.0
    %619 = vmatprep.subr.mxu0 0.0
    %620 = vmatpush1.msra.mxu0 0.0
    %621 = vmatprep.subr.mxu0 0.0
    %622 = vmatpush1.msra.mxu0 0.0
    %623 = vmatprep.subr.mxu0 0.0
    %624 = vmatpush1.msra.mxu0 0.0
    %625 = vmatprep.subr.mxu0 0.0
    %626 = vmatpush1.msra.mxu0 0.0
    %627 = vmatprep.subr.mxu0 0.0
    %628 = vmatpush1.msra.mxu0 0.0
    %629 = vmatprep.subr.mxu0 0.0
    %630 = vmatpush1.msra.mxu0 0.0
    %631 = vmatprep.subr.mxu0 0.0
    %632 = vmatpush1.msra.mxu0 0.0
    %633 = vmatprep.subr.mxu0 0.0
    %634 = vmatpush1.msra.mxu0 0.0
    %635 = vmatprep.subr.mxu0 0.0
    %636 = vmatpush1.msra.mxu0 0.0
    %637 = vmatprep.subr.mxu0 0.0
    %638 = vmatpush1.msra.mxu0 0.0
    %639 = vmatprep.subr.mxu0 0.0
    %640 = vmatpush1.msra.mxu0 0.0
    %641 = vmatprep.subr.mxu0 0.0
    %642 = vmatpush1.msra.mxu0 0.0
    %643 = vmatprep.subr.mxu0 0.0
    %644 = vmatpush1.msra.mxu0 0.0
    %645 = vmatprep.subr.mxu0 0.0
    %646 = vmatpush1.msra.mxu0 0.0
    %647 = vmatprep.subr.mxu0 0.0
    %648 = vmatpush1.msra.mxu0 0.0
    %649 = vmatprep.mubr.f32.mxu0 0.0
    %650 = vmatmul.mubr.f32.gmra.mrb[0].mxu0 %v508
    %v651 = vpop.f32.mrb[0].mxu0
    %v652 = vadd.f32 0.0, %v651
    %v653 = vpop.f32.mrb[0].mxu0
    %v654 = vadd.f32 0.0, %v653
    %655 = vdwg.mxu0
    %v656 = vadd.f32 %v510, %v581
    %v657 = vadd.f32 %v511, %v583
    %v658 = vadd.f32 %v512, %v652
    %v659 = vadd.f32 %v513, %v654
    %v660 = vxor.u32 %v656, 2147483648
    %v661 = vmul.f32 %v660, 1.442695
    %v662 = vpow.pop %v661
    %v663 = vadd.f32 %v662, 1.0
    %v664 = vrcp.pop %v663
    %v665 = vmul.f32 1.0, %v664
    %v666 = vxor.u32 %v657, 2147483648
    %v667 = vmul.f32 %v666, 1.442695
    %v668 = vpow.pop %v667
    %v669 = vadd.f32 %v668, 1.0
    %v670 = vrcp.pop %v669
    %v671 = vmul.f32 1.0, %v670
    %v672 = vtanh.pop %v658
    %v673 = vxor.u32 %v659, 2147483648
    %v674 = vmul.f32 %v673, 1.442695
    %v675 = vpow.pop %v674
    %v676 = vadd.f32 %v675, 1.0
    %v677 = vrcp.pop %v676
    %v678 = vmul.f32 1.0, %v677
    %v679 = vmul.f32 %v671, %v509
    %v680 = vmul.f32 %v665, %v672
    %v681 = vadd.f32 %v679, %v680
    %v682 = vtanh.pop %v681
    %v683 = vmul.f32 %v678, %v682
    %684 = vst [vmem:[#allocation4] sm:$0xff] %v683
    %s685 = scalar_lea.vmem [#allocation5], 32
    %v686 = vld [vmem:[%s685] sm:$0xff]
    %v687 = vld [vmem:[%s685 + $0x8] sm:$0xff]
    %v688 = vld [vmem:[%s685 + $0x10] sm:$0xff]
    %v689 = vld [vmem:[%s685 + $0x18] sm:$0xff]
    %690 = vmatprep.subr.mxu0 %v132
    %691 = vmatpush1.msra.mxu0 %v131
    %692 = vmatprep.subr.mxu0 %v136
    %693 = vmatpush1.msra.mxu0 %v135
    %694 = vmatprep.subr.mxu0 %v140
    %695 = vmatpush1.msra.mxu0 %v139
    %696 = vmatprep.subr.mxu0 %v144
    %697 = vmatpush1.msra.mxu0 %v143
    %698 = vmatprep.subr.mxu0 %v148
    %699 = vmatpush1.msra.mxu0 %v147
    %700 = vmatprep.subr.mxu0 %v152
    %701 = vmatpush1.msra.mxu0 %v151
    %702 = vmatprep.subr.mxu0 %v156
    %703 = vmatpush1.msra.mxu0 %v155
    %704 = vmatprep.subr.mxu0 %v160
    %705 = vmatpush1.msra.mxu0 %v159
    %706 = vmatprep.subr.mxu0 %v164
    %707 = vmatpush1.msra.mxu0 %v163
    %708 = vmatprep.subr.mxu0 %v168
    %709 = vmatpush1.msra.mxu0 %v167
    %710 = vmatprep.subr.mxu0 %v172
    %711 = vmatpush1.msra.mxu0 %v171
    %712 = vmatprep.subr.mxu0 %v176
    %713 = vmatpush1.msra.mxu0 %v175
    %714 = vmatprep.subr.mxu0 %v180
    %715 = vmatpush1.msra.mxu0 %v179
    %716 = vmatprep.subr.mxu0 %v184
    %717 = vmatpush1.msra.mxu0 %v183
    %718 = vmatprep.subr.mxu0 %v188
    %719 = vmatpush1.msra.mxu0 %v187
    %720 = vmatprep.subr.mxu0 %v192
    %721 = vmatpush1.msra.mxu0 %v191
    %722 = vmatprep.subr.mxu0 0.0
    %723 = vmatpush1.msra.mxu0 0.0
    %724 = vmatprep.subr.mxu0 0.0
    %725 = vmatpush1.msra.mxu0 0.0
    %726 = vmatprep.subr.mxu0 0.0
    %727 = vmatpush1.msra.mxu0 0.0
    %728 = vmatprep.subr.mxu0 0.0
    %729 = vmatpush1.msra.mxu0 0.0
    %730 = vmatprep.subr.mxu0 0.0
    %731 = vmatpush1.msra.mxu0 0.0
    %732 = vmatprep.subr.mxu0 0.0
    %733 = vmatpush1.msra.mxu0 0.0
    %734 = vmatprep.subr.mxu0 0.0
    %735 = vmatpush1.msra.mxu0 0.0
    %736 = vmatprep.subr.mxu0 0.0
    %737 = vmatpush1.msra.mxu0 0.0
    %738 = vmatprep.subr.mxu0 0.0
    %739 = vmatpush1.msra.mxu0 0.0
    %740 = vmatprep.subr.mxu0 0.0
    %741 = vmatpush1.msra.mxu0 0.0
    %742 = vmatprep.subr.mxu0 0.0
    %743 = vmatpush1.msra.mxu0 0.0
    %744 = vmatprep.subr.mxu0 0.0
    %745 = vmatpush1.msra.mxu0 0.0
    %746 = vmatprep.subr.mxu0 0.0
    %747 = vmatpush1.msra.mxu0 0.0
    %748 = vmatprep.subr.mxu0 0.0
    %749 = vmatpush1.msra.mxu0 0.0
    %750 = vmatprep.subr.mxu0 0.0
    %751 = vmatpush1.msra.mxu0 0.0
    %752 = vmatprep.subr.mxu0 0.0
    %753 = vmatpush1.msra.mxu0 0.0
    %754 = vmatprep.mubr.f32.mxu0 0.0
    %755 = vmatmul.mubr.f32.gmra.mrb[0].mxu0 %v683
    %v756 = vpop.f32.mrb[0].mxu0
    %v757 = vadd.f32 0.0, %v756
    %v758 = vpop.f32.mrb[0].mxu0
    %v759 = vadd.f32 0.0, %v758
    %760 = vdwg.mxu0
    %761 = vmatprep.subr.mxu0 %v134
    %762 = vmatpush1.msra.mxu0 %v133
    %763 = vmatprep.subr.mxu0 %v138
    %764 = vmatpush1.msra.mxu0 %v137
    %765 = vmatprep.subr.mxu0 %v142
    %766 = vmatpush1.msra.mxu0 %v141
    %767 = vmatprep.subr.mxu0 %v146
    %768 = vmatpush1.msra.mxu0 %v145
    %769 = vmatprep.subr.mxu0 %v150
    %770 = vmatpush1.msra.mxu0 %v149
    %771 = vmatprep.subr.mxu0 %v154
    %772 = vmatpush1.msra.mxu0 %v153
    %773 = vmatprep.subr.mxu0 %v158
    %774 = vmatpush1.msra.mxu0 %v157
    %775 = vmatprep.subr.mxu0 %v162
    %776 = vmatpush1.msra.mxu0 %v161
    %777 = vmatprep.subr.mxu0 %v166
    %778 = vmatpush1.msra.mxu0 %v165
    %779 = vmatprep.subr.mxu0 %v170
    %780 = vmatpush1.msra.mxu0 %v169
    %781 = vmatprep.subr.mxu0 %v174
    %782 = vmatpush1.msra.mxu0 %v173
    %783 = vmatprep.subr.mxu0 %v178
    %784 = vmatpush1.msra.mxu0 %v177
    %785 = vmatprep.subr.mxu0 %v182
    %786 = vmatpush1.msra.mxu0 %v181
    %787 = vmatprep.subr.mxu0 %v186
    %788 = vmatpush1.msra.mxu0 %v185
    %789 = vmatprep.subr.mxu0 %v190
    %790 = vmatpush1.msra.mxu0 %v189
    %791 = vmatprep.subr.mxu0 %v194
    %792 = vmatpush1.msra.mxu0 %v193
    %793 = vmatprep.subr.mxu0 0.0
    %794 = vmatpush1.msra.mxu0 0.0
    %795 = vmatprep.subr.mxu0 0.0
    %796 = vmatpush1.msra.mxu0 0.0
    %797 = vmatprep.subr.mxu0 0.0
    %798 = vmatpush1.msra.mxu0 0.0
    %799 = vmatprep.subr.mxu0 0.0
    %800 = vmatpush1.msra.mxu0 0.0
    %801 = vmatprep.subr.mxu0 0.0
    %802 = vmatpush1.msra.mxu0 0.0
    %803 = vmatprep.subr.mxu0 0.0
    %804 = vmatpush1.msra.mxu0 0.0
    %805 = vmatprep.subr.mxu0 0.0
    %806 = vmatpush1.msra.mxu0 0.0
    %807 = vmatprep.subr.mxu0 0.0
    %808 = vmatpush1.msra.mxu0 0.0
    %809 = vmatprep.subr.mxu0 0.0
    %810 = vmatpush1.msra.mxu0 0.0
    %811 = vmatprep.subr.mxu0 0.0
    %812 = vmatpush1.msra.mxu0 0.0
    %813 = vmatprep.subr.mxu0 0.0
    %814 = vmatpush1.msra.mxu0 0.0
    %815 = vmatprep.subr.mxu0 0.0
    %816 = vmatpush1.msra.mxu0 0.0
    %817 = vmatprep.subr.mxu0 0.0
    %818 = vmatpush1.msra.mxu0 0.0
    %819 = vmatprep.subr.mxu0 0.0
    %820 = vmatpush1.msra.mxu0 0.0
    %821 = vmatprep.subr.mxu0 0.0
    %822 = vmatpush1.msra.mxu0 0.0
    %823 = vmatprep.subr.mxu0 0.0
    %824 = vmatpush1.msra.mxu0 0.0
    %825 = vmatprep.mubr.f32.mxu0 0.0
    %826 = vmatmul.mubr.f32.gmra.mrb[0].mxu0 %v683
    %v827 = vpop.f32.mrb[0].mxu0
    %v828 = vadd.f32 0.0, %v827
    %v829 = vpop.f32.mrb[0].mxu0
    %v830 = vadd.f32 0.0, %v829
    %831 = vdwg.mxu0
    %v832 = vadd.f32 %v686, %v757
    %v833 = vadd.f32 %v687, %v759
    %v834 = vadd.f32 %v688, %v828
    %v835 = vadd.f32 %v689, %v830
    %v836 = vxor.u32 %v832, 2147483648
    %v837 = vmul.f32 %v836, 1.442695
    %v838 = vpow.pop %v837
    %v839 = vadd.f32 %v838, 1.0
    %v840 = vrcp.pop %v839
    %v841 = vmul.f32 1.0, %v840
    %v842 = vxor.u32 %v833, 2147483648
    %v843 = vmul.f32 %v842, 1.442695
    %v844 = vpow.pop %v843
    %v845 = vadd.f32 %v844, 1.0
    %v846 = vrcp.pop %v845
    %v847 = vmul.f32 1.0, %v846
    %v848 = vtanh.pop %v834
    %v849 = vxor.u32 %v835, 2147483648
    %v850 = vmul.f32 %v849, 1.442695
    %v851 = vpow.pop %v850
    %v852 = vadd.f32 %v851, 1.0
    %v853 = vrcp.pop %v852
    %v854 = vmul.f32 1.0, %v853
    %v855 = vmul.f32 %v847, %v681
    %v856 = vmul.f32 %v841, %v848
    %v857 = vadd.f32 %v855, %v856
    %v858 = vtanh.pop %v857
    %v859 = vmul.f32 %v854, %v858
    %s860 = scalar_lea.vmem [#allocation4], 8
    %861 = vst [vmem:[%s860] sm:$0xff] %v859
    %s862 = scalar_lea.vmem [#allocation5], 64
    %v863 = vld [vmem:[%s862] sm:$0xff]
    %v864 = vld [vmem:[%s862 + $0x8] sm:$0xff]
    %v865 = vld [vmem:[%s862 + $0x10] sm:$0xff]
    %v866 = vld [vmem:[%s862 + $0x18] sm:$0xff]
    %867 = vmatprep.subr.mxu0 %v132
    %868 = vmatpush1.msra.mxu0 %v131
    %869 = vmatprep.subr.mxu0 %v136
    %870 = vmatpush1.msra.mxu0 %v135
    %871 = vmatprep.subr.mxu0 %v140
    %872 = vmatpush1.msra.mxu0 %v139
    %873 = vmatprep.subr.mxu0 %v144
    %874 = vmatpush1.msra.mxu0 %v143
    %875 = vmatprep.subr.mxu0 %v148
    %876 = vmatpush1.msra.mxu0 %v147
    %877 = vmatprep.subr.mxu0 %v152
    %878 = vmatpush1.msra.mxu0 %v151
    %879 = vmatprep.subr.mxu0 %v156
    %880 = vmatpush1.msra.mxu0 %v155
    %881 = vmatprep.subr.mxu0 %v160
    %882 = vmatpush1.msra.mxu0 %v159
    %883 = vmatprep.subr.mxu0 %v164
    %884 = vmatpush1.msra.mxu0 %v163
    %885 = vmatprep.subr.mxu0 %v168
    %886 = vmatpush1.msra.mxu0 %v167
    %887 = vmatprep.subr.mxu0 %v172
    %888 = vmatpush1.msra.mxu0 %v171
    %889 = vmatprep.subr.mxu0 %v176
    %890 = vmatpush1.msra.mxu0 %v175
    %891 = vmatprep.subr.mxu0 %v180
    %892 = vmatpush1.msra.mxu0 %v179
    %893 = vmatprep.subr.mxu0 %v184
    %894 = vmatpush1.msra.mxu0 %v183
    %895 = vmatprep.subr.mxu0 %v188
    %896 = vmatpush1.msra.mxu0 %v187
    %897 = vmatprep.subr.mxu0 %v192
    %898 = vmatpush1.msra.mxu0 %v191
    %899 = vmatprep.subr.mxu0 0.0
    %900 = vmatpush1.msra.mxu0 0.0
    %901 = vmatprep.subr.mxu0 0.0
    %902 = vmatpush1.msra.mxu0 0.0
    %903 = vmatprep.subr.mxu0 0.0
    %904 = vmatpush1.msra.mxu0 0.0
    %905 = vmatprep.subr.mxu0 0.0
    %906 = vmatpush1.msra.mxu0 0.0
    %907 = vmatprep.subr.mxu0 0.0
    %908 = vmatpush1.msra.mxu0 0.0
    %909 = vmatprep.subr.mxu0 0.0
    %910 = vmatpush1.msra.mxu0 0.0
    %911 = vmatprep.subr.mxu0 0.0
    %912 = vmatpush1.msra.mxu0 0.0
    %913 = vmatprep.subr.mxu0 0.0
    %914 = vmatpush1.msra.mxu0 0.0
    %915 = vmatprep.subr.mxu0 0.0
    %916 = vmatpush1.msra.mxu0 0.0
    %917 = vmatprep.subr.mxu0 0.0
    %918 = vmatpush1.msra.mxu0 0.0
    %919 = vmatprep.subr.mxu0 0.0
    %920 = vmatpush1.msra.mxu0 0.0
    %921 = vmatprep.subr.mxu0 0.0
    %922 = vmatpush1.msra.mxu0 0.0
    %923 = vmatprep.subr.mxu0 0.0
    %924 = vmatpush1.msra.mxu0 0.0
    %925 = vmatprep.subr.mxu0 0.0
    %926 = vmatpush1.msra.mxu0 0.0
    %927 = vmatprep.subr.mxu0 0.0
    %928 = vmatpush1.msra.mxu0 0.0
    %929 = vmatprep.subr.mxu0 0.0
    %930 = vmatpush1.msra.mxu0 0.0
    %931 = vmatprep.mubr.f32.mxu0 0.0
    %932 = vmatmul.mubr.f32.gmra.mrb[0].mxu0 %v859
    %v933 = vpop.f32.mrb[0].mxu0
    %v934 = vadd.f32 0.0, %v933
    %v935 = vpop.f32.mrb[0].mxu0
    %v936 = vadd.f32 0.0, %v935
    %937 = vdwg.mxu0
    %938 = vmatprep.subr.mxu0 %v134
    %939 = vmatpush1.msra.mxu0 %v133
    %940 = vmatprep.subr.mxu0 %v138
    %941 = vmatpush1.msra.mxu0 %v137
    %942 = vmatprep.subr.mxu0 %v142
    %943 = vmatpush1.msra.mxu0 %v141
    %944 = vmatprep.subr.mxu0 %v146
    %945 = vmatpush1.msra.mxu0 %v145
    %946 = vmatprep.subr.mxu0 %v150
    %947 = vmatpush1.msra.mxu0 %v149
    %948 = vmatprep.subr.mxu0 %v154
    %949 = vmatpush1.msra.mxu0 %v153
    %950 = vmatprep.subr.mxu0 %v158
    %951 = vmatpush1.msra.mxu0 %v157
    %952 = vmatprep.subr.mxu0 %v162
    %953 = vmatpush1.msra.mxu0 %v161
    %954 = vmatprep.subr.mxu0 %v166
    %955 = vmatpush1.msra.mxu0 %v165
    %956 = vmatprep.subr.mxu0 %v170
    %957 = vmatpush1.msra.mxu0 %v169
    %958 = vmatprep.subr.mxu0 %v174
    %959 = vmatpush1.msra.mxu0 %v173
    %960 = vmatprep.subr.mxu0 %v178
    %961 = vmatpush1.msra.mxu0 %v177
    %962 = vmatprep.subr.mxu0 %v182
    %963 = vmatpush1.msra.mxu0 %v181
    %964 = vmatprep.subr.mxu0 %v186
    %965 = vmatpush1.msra.mxu0 %v185
    %966 = vmatprep.subr.mxu0 %v190
    %967 = vmatpush1.msra.mxu0 %v189
    %968 = vmatprep.subr.mxu0 %v194
    %969 = vmatpush1.msra.mxu0 %v193
    %970 = vmatprep.subr.mxu0 0.0
    %971 = vmatpush1.msra.mxu0 0.0
    %972 = vmatprep.subr.mxu0 0.0
    %973 = vmatpush1.msra.mxu0 0.0
    %974 = vmatprep.subr.mxu0 0.0
    %975 = vmatpush1.msra.mxu0 0.0
    %976 = vmatprep.subr.mxu0 0.0
    %977 = vmatpush1.msra.mxu0 0.0
    %978 = vmatprep.subr.mxu0 0.0
    %979 = vmatpush1.msra.mxu0 0.0
    %980 = vmatprep.subr.mxu0 0.0
    %981 = vmatpush1.msra.mxu0 0.0
    %982 = vmatprep.subr.mxu0 0.0
    %983 = vmatpush1.msra.mxu0 0.0
    %984 = vmatprep.subr.mxu0 0.0
    %985 = vmatpush1.msra.mxu0 0.0
    %986 = vmatprep.subr.mxu0 0.0
    %987 = vmatpush1.msra.mxu0 0.0
    %988 = vmatprep.subr.mxu0 0.0
    %989 = vmatpush1.msra.mxu0 0.0
    %990 = vmatprep.subr.mxu0 0.0
    %991 = vmatpush1.msra.mxu0 0.0
    %992 = vmatprep.subr.mxu0 0.0
    %993 = vmatpush1.msra.mxu0 0.0
    %994 = vmatprep.subr.mxu0 0.0
    %995 = vmatpush1.msra.mxu0 0.0
    %996 = vmatprep.subr.mxu0 0.0
    %997 = vmatpush1.msra.mxu0 0.0
    %998 = vmatprep.subr.mxu0 0.0
    %999 = vmatpush1.msra.mxu0 0.0
    %1000 = vmatprep.subr.mxu0 0.0
    %1001 = vmatpush1.msra.mxu0 0.0
    %1002 = vmatprep.mubr.f32.mxu0 0.0
    %1003 = vmatmul.mubr.f32.gmra.mrb[0].mxu0 %v859
    %v1004 = vpop.f32.mrb[0].mxu0
    %v1005 = vadd.f32 0.0, %v1004
    %v1006 = vpop.f32.mrb[0].mxu0
    %v1007 = vadd.f32 0.0, %v1006
    %1008 = vdwg.mxu0
    %v1009 = vadd.f32 %v863, %v934
    %v1010 = vadd.f32 %v864, %v936
    %v1011 = vadd.f32 %v865, %v1005
    %v1012 = vadd.f32 %v866, %v1007
    %v1013 = vxor.u32 %v1009, 2147483648
    %v1014 = vmul.f32 %v1013, 1.442695
    %v1015 = vpow.pop %v1014
    %v1016 = vadd.f32 %v1015, 1.0
    %v1017 = vrcp.pop %v1016
    %v1018 = vmul.f32 1.0, %v1017
    %v1019 = vxor.u32 %v1010, 2147483648
    %v1020 = vmul.f32 %v1019, 1.442695
    %v1021 = vpow.pop %v1020
    %v1022 = vadd.f32 %v1021, 1.0
    %v1023 = vrcp.pop %v1022
    %v1024 = vmul.f32 1.0, %v1023
    %v1025 = vtanh.pop %v1011
    %v1026 = vxor.u32 %v1012, 2147483648
    %v1027 = vmul.f32 %v1026, 1.442695
    %v1028 = vpow.pop %v1027
    %v1029 = vadd.f32 %v1028, 1.0
    %v1030 = vrcp.pop %v1029
    %v1031 = vmul.f32 1.0, %v1030
    %v1032 = vmul.f32 %v1024, %v857
    %v1033 = vmul.f32 %v1018, %v1025
    %v1034 = vadd.f32 %v1032, %v1033
    %v1035 = vtanh.pop %v1034
    %v1036 = vmul.f32 %v1031, %v1035
    %s1037 = scalar_lea.vmem [#allocation4], 16
    %1038 = vst [vmem:[%s1037] sm:$0xff] %v1036
    %s1039 = scalar_lea.vmem [#allocation5], 96
    %v1040 = vld [vmem:[%s1039] sm:$0xff]
    %v1041 = vld [vmem:[%s1039 + $0x8] sm:$0xff]
    %v1042 = vld [vmem:[%s1039 + $0x10] sm:$0xff]
    %v1043 = vld [vmem:[%s1039 + $0x18] sm:$0xff]
    %1044 = vmatprep.subr.mxu0 %v132
    %1045 = vmatpush1.msra.mxu0 %v131
    %1046 = vmatprep.subr.mxu0 %v136
    %1047 = vmatpush1.msra.mxu0 %v135
    %1048 = vmatprep.subr.mxu0 %v140
    %1049 = vmatpush1.msra.mxu0 %v139
    %1050 = vmatprep.subr.mxu0 %v144
    %1051 = vmatpush1.msra.mxu0 %v143
    %1052 = vmatprep.subr.mxu0 %v148
    %1053 = vmatpush1.msra.mxu0 %v147
    %1054 = vmatprep.subr.mxu0 %v152
    %1055 = vmatpush1.msra.mxu0 %v151
    %1056 = vmatprep.subr.mxu0 %v156
    %1057 = vmatpush1.msra.mxu0 %v155
    %1058 = vmatprep.subr.mxu0 %v160
    %1059 = vmatpush1.msra.mxu0 %v159
    %1060 = vmatprep.subr.mxu0 %v164
    %1061 = vmatpush1.msra.mxu0 %v163
    %1062 = vmatprep.subr.mxu0 %v168
    %1063 = vmatpush1.msra.mxu0 %v167
    %1064 = vmatprep.subr.mxu0 %v172
    %1065 = vmatpush1.msra.mxu0 %v171
    %1066 = vmatprep.subr.mxu0 %v176
    %1067 = vmatpush1.msra.mxu0 %v175
    %1068 = vmatprep.subr.mxu0 %v180
    %1069 = vmatpush1.msra.mxu0 %v179
    %1070 = vmatprep.subr.mxu0 %v184
    %1071 = vmatpush1.msra.mxu0 %v183
    %1072 = vmatprep.subr.mxu0 %v188
    %1073 = vmatpush1.msra.mxu0 %v187
    %1074 = vmatprep.subr.mxu0 %v192
    %1075 = vmatpush1.msra.mxu0 %v191
    %1076 = vmatprep.subr.mxu0 0.0
    %1077 = vmatpush1.msra.mxu0 0.0
    %1078 = vmatprep.subr.mxu0 0.0
    %1079 = vmatpush1.msra.mxu0 0.0
    %1080 = vmatprep.subr.mxu0 0.0
    %1081 = vmatpush1.msra.mxu0 0.0
    %1082 = vmatprep.subr.mxu0 0.0
    %1083 = vmatpush1.msra.mxu0 0.0
    %1084 = vmatprep.subr.mxu0 0.0
    %1085 = vmatpush1.msra.mxu0 0.0
    %1086 = vmatprep.subr.mxu0 0.0
    %1087 = vmatpush1.msra.mxu0 0.0
    %1088 = vmatprep.subr.mxu0 0.0
    %1089 = vmatpush1.msra.mxu0 0.0
    %1090 = vmatprep.subr.mxu0 0.0
    %1091 = vmatpush1.msra.mxu0 0.0
    %1092 = vmatprep.subr.mxu0 0.0
    %1093 = vmatpush1.msra.mxu0 0.0
    %1094 = vmatprep.subr.mxu0 0.0
    %1095 = vmatpush1.msra.mxu0 0.0
    %1096 = vmatprep.subr.mxu0 0.0
    %1097 = vmatpush1.msra.mxu0 0.0
    %1098 = vmatprep.subr.mxu0 0.0
    %1099 = vmatpush1.msra.mxu0 0.0
    %1100 = vmatprep.subr.mxu0 0.0
    %1101 = vmatpush1.msra.mxu0 0.0
    %1102 = vmatprep.subr.mxu0 0.0
    %1103 = vmatpush1.msra.mxu0 0.0
    %1104 = vmatprep.subr.mxu0 0.0
    %1105 = vmatpush1.msra.mxu0 0.0
    %1106 = vmatprep.subr.mxu0 0.0
    %1107 = vmatpush1.msra.mxu0 0.0
    %1108 = vmatprep.mubr.f32.mxu0 0.0
    %1109 = vmatmul.mubr.f32.gmra.mrb[0].mxu0 %v1036
    %v1110 = vpop.f32.mrb[0].mxu0
    %v1111 = vadd.f32 0.0, %v1110
    %v1112 = vpop.f32.mrb[0].mxu0
    %v1113 = vadd.f32 0.0, %v1112
    %1114 = vdwg.mxu0
    %1115 = vmatprep.subr.mxu0 %v134
    %1116 = vmatpush1.msra.mxu0 %v133
    %1117 = vmatprep.subr.mxu0 %v138
    %1118 = vmatpush1.msra.mxu0 %v137
    %1119 = vmatprep.subr.mxu0 %v142
    %1120 = vmatpush1.msra.mxu0 %v141
    %1121 = vmatprep.subr.mxu0 %v146
    %1122 = vmatpush1.msra.mxu0 %v145
    %1123 = vmatprep.subr.mxu0 %v150
    %1124 = vmatpush1.msra.mxu0 %v149
    %1125 = vmatprep.subr.mxu0 %v154
    %1126 = vmatpush1.msra.mxu0 %v153
    %1127 = vmatprep.subr.mxu0 %v158
    %1128 = vmatpush1.msra.mxu0 %v157
    %1129 = vmatprep.subr.mxu0 %v162
    %1130 = vmatpush1.msra.mxu0 %v161
    %1131 = vmatprep.subr.mxu0 %v166
    %1132 = vmatpush1.msra.mxu0 %v165
    %1133 = vmatprep.subr.mxu0 %v170
    %1134 = vmatpush1.msra.mxu0 %v169
    %1135 = vmatprep.subr.mxu0 %v174
    %1136 = vmatpush1.msra.mxu0 %v173
    %1137 = vmatprep.subr.mxu0 %v178
    %1138 = vmatpush1.msra.mxu0 %v177
    %1139 = vmatprep.subr.mxu0 %v182
    %1140 = vmatpush1.msra.mxu0 %v181
    %1141 = vmatprep.subr.mxu0 %v186
    %1142 = vmatpush1.msra.mxu0 %v185
    %1143 = vmatprep.subr.mxu0 %v190
    %1144 = vmatpush1.msra.mxu0 %v189
    %1145 = vmatprep.subr.mxu0 %v194
    %1146 = vmatpush1.msra.mxu0 %v193
    %1147 = vmatprep.subr.mxu0 0.0
    %1148 = vmatpush1.msra.mxu0 0.0
    %1149 = vmatprep.subr.mxu0 0.0
    %1150 = vmatpush1.msra.mxu0 0.0
    %1151 = vmatprep.subr.mxu0 0.0
    %1152 = vmatpush1.msra.mxu0 0.0
    %1153 = vmatprep.subr.mxu0 0.0
    %1154 = vmatpush1.msra.mxu0 0.0
    %1155 = vmatprep.subr.mxu0 0.0
    %1156 = vmatpush1.msra.mxu0 0.0
    %1157 = vmatprep.subr.mxu0 0.0
    %1158 = vmatpush1.msra.mxu0 0.0
    %1159 = vmatprep.subr.mxu0 0.0
    %1160 = vmatpush1.msra.mxu0 0.0
    %1161 = vmatprep.subr.mxu0 0.0
    %1162 = vmatpush1.msra.mxu0 0.0
    %1163 = vmatprep.subr.mxu0 0.0
    %1164 = vmatpush1.msra.mxu0 0.0
    %1165 = vmatprep.subr.mxu0 0.0
    %1166 = vmatpush1.msra.mxu0 0.0
    %1167 = vmatprep.subr.mxu0 0.0
    %1168 = vmatpush1.msra.mxu0 0.0
    %1169 = vmatprep.subr.mxu0 0.0
    %1170 = vmatpush1.msra.mxu0 0.0
    %1171 = vmatprep.subr.mxu0 0.0
    %1172 = vmatpush1.msra.mxu0 0.0
    %1173 = vmatprep.subr.mxu0 0.0
    %1174 = vmatpush1.msra.mxu0 0.0
    %1175 = vmatprep.subr.mxu0 0.0
    %1176 = vmatpush1.msra.mxu0 0.0
    %1177 = vmatprep.subr.mxu0 0.0
    %1178 = vmatpush1.msra.mxu0 0.0
    %1179 = vmatprep.mubr.f32.mxu0 0.0
    %1180 = vmatmul.mubr.f32.gmra.mrb[0].mxu0 %v1036
    %v1181 = vpop.f32.mrb[0].mxu0
    %v1182 = vadd.f32 0.0, %v1181
    %v1183 = vpop.f32.mrb[0].mxu0
    %v1184 = vadd.f32 0.0, %v1183
    %1185 = vdwg.mxu0
    %v1186 = vadd.f32 %v1040, %v1111
    %v1187 = vadd.f32 %v1041, %v1113
    %v1188 = vadd.f32 %v1042, %v1182
    %v1189 = vadd.f32 %v1043, %v1184
    %v1190 = vxor.u32 %v1186, 2147483648
    %v1191 = vmul.f32 %v1190, 1.442695
    %v1192 = vpow.pop %v1191
    %v1193 = vadd.f32 %v1192, 1.0
    %v1194 = vrcp.pop %v1193
    %v1195 = vmul.f32 1.0, %v1194
    %v1196 = vxor.u32 %v1187, 2147483648
    %v1197 = vmul.f32 %v1196, 1.442695
    %v1198 = vpow.pop %v1197
    %v1199 = vadd.f32 %v1198, 1.0
    %v1200 = vrcp.pop %v1199
    %v1201 = vmul.f32 1.0, %v1200
    %v1202 = vtanh.pop %v1188
    %v1203 = vxor.u32 %v1189, 2147483648
    %v1204 = vmul.f32 %v1203, 1.442695
    %v1205 = vpow.pop %v1204
    %v1206 = vadd.f32 %v1205, 1.0
    %v1207 = vrcp.pop %v1206
    %v1208 = vmul.f32 1.0, %v1207
    %v1209 = vmul.f32 %v1201, %v1034
    %v1210 = vmul.f32 %v1195, %v1202
    %v1211 = vadd.f32 %v1209, %v1210
    %v1212 = vtanh.pop %v1211
    %v1213 = vmul.f32 %v1208, %v1212
    %s1214 = scalar_lea.vmem [#allocation4], 24
    %1215 = vst [vmem:[%s1214] sm:$0xff] %v1213
    %s1216 = scalar_lea.vmem [#allocation5], 128
    %v1217 = vld [vmem:[%s1216] sm:$0xff]
    %v1218 = vld [vmem:[%s1216 + $0x8] sm:$0xff]
    %v1219 = vld [vmem:[%s1216 + $0x10] sm:$0xff]
    %v1220 = vld [vmem:[%s1216 + $0x18] sm:$0xff]
    %1221 = vmatprep.subr.mxu0 %v132
    %1222 = vmatpush1.msra.mxu0 %v131
    %1223 = vmatprep.subr.mxu0 %v136
    %1224 = vmatpush1.msra.mxu0 %v135
    %1225 = vmatprep.subr.mxu0 %v140
    %1226 = vmatpush1.msra.mxu0 %v139
    %1227 = vmatprep.subr.mxu0 %v144
    %1228 = vmatpush1.msra.mxu0 %v143
    %1229 = vmatprep.subr.mxu0 %v148
    %1230 = vmatpush1.msra.mxu0 %v147
    %1231 = vmatprep.subr.mxu0 %v152
    %1232 = vmatpush1.msra.mxu0 %v151
    %1233 = vmatprep.subr.mxu0 %v156
    %1234 = vmatpush1.msra.mxu0 %v155
    %1235 = vmatprep.subr.mxu0 %v160
    %1236 = vmatpush1.msra.mxu0 %v159
    %1237 = vmatprep.subr.mxu0 %v164
    %1238 = vmatpush1.msra.mxu0 %v163
    %1239 = vmatprep.subr.mxu0 %v168
    %1240 = vmatpush1.msra.mxu0 %v167
    %1241 = vmatprep.subr.mxu0 %v172
    %1242 = vmatpush1.msra.mxu0 %v171
    %1243 = vmatprep.subr.mxu0 %v176
    %1244 = vmatpush1.msra.mxu0 %v175
    %1245 = vmatprep.subr.mxu0 %v180
    %1246 = vmatpush1.msra.mxu0 %v179
    %1247 = vmatprep.subr.mxu0 %v184
    %1248 = vmatpush1.msra.mxu0 %v183
    %1249 = vmatprep.subr.mxu0 %v188
    %1250 = vmatpush1.msra.mxu0 %v187
    %1251 = vmatprep.subr.mxu0 %v192
    %1252 = vmatpush1.msra.mxu0 %v191
    %1253 = vmatprep.subr.mxu0 0.0
    %1254 = vmatpush1.msra.mxu0 0.0
    %1255 = vmatprep.subr.mxu0 0.0
    %1256 = vmatpush1.msra.mxu0 0.0
    %1257 = vmatprep.subr.mxu0 0.0
    %1258 = vmatpush1.msra.mxu0 0.0
    %1259 = vmatprep.subr.mxu0 0.0
    %1260 = vmatpush1.msra.mxu0 0.0
    %1261 = vmatprep.subr.mxu0 0.0
    %1262 = vmatpush1.msra.mxu0 0.0
    %1263 = vmatprep.subr.mxu0 0.0
    %1264 = vmatpush1.msra.mxu0 0.0
    %1265 = vmatprep.subr.mxu0 0.0
    %1266 = vmatpush1.msra.mxu0 0.0
    %1267 = vmatprep.subr.mxu0 0.0
    %1268 = vmatpush1.msra.mxu0 0.0
    %1269 = vmatprep.subr.mxu0 0.0
    %1270 = vmatpush1.msra.mxu0 0.0
    %1271 = vmatprep.subr.mxu0 0.0
    %1272 = vmatpush1.msra.mxu0 0.0
    %1273 = vmatprep.subr.mxu0 0.0
    %1274 = vmatpush1.msra.mxu0 0.0
    %1275 = vmatprep.subr.mxu0 0.0
    %1276 = vmatpush1.msra.mxu0 0.0
    %1277 = vmatprep.subr.mxu0 0.0
    %1278 = vmatpush1.msra.mxu0 0.0
    %1279 = vmatprep.subr.mxu0 0.0
    %1280 = vmatpush1.msra.mxu0 0.0
    %1281 = vmatprep.subr.mxu0 0.0
    %1282 = vmatpush1.msra.mxu0 0.0
    %1283 = vmatprep.subr.mxu0 0.0
    %1284 = vmatpush1.msra.mxu0 0.0
    %1285 = vmatprep.mubr.f32.mxu0 0.0
    %1286 = vmatmul.mubr.f32.gmra.mrb[0].mxu0 %v1213
    %v1287 = vpop.f32.mrb[0].mxu0
    %v1288 = vadd.f32 0.0, %v1287
    %v1289 = vpop.f32.mrb[0].mxu0
    %v1290 = vadd.f32 0.0, %v1289
    %1291 = vdwg.mxu0
    %1292 = vmatprep.subr.mxu0 %v134
    %1293 = vmatpush1.msra.mxu0 %v133
    %1294 = vmatprep.subr.mxu0 %v138
    %1295 = vmatpush1.msra.mxu0 %v137
    %1296 = vmatprep.subr.mxu0 %v142
    %1297 = vmatpush1.msra.mxu0 %v141
    %1298 = vmatprep.subr.mxu0 %v146
    %1299 = vmatpush1.msra.mxu0 %v145
    %1300 = vmatprep.subr.mxu0 %v150
    %1301 = vmatpush1.msra.mxu0 %v149
    %1302 = vmatprep.subr.mxu0 %v154
    %1303 = vmatpush1.msra.mxu0 %v153
    %1304 = vmatprep.subr.mxu0 %v158
    %1305 = vmatpush1.msra.mxu0 %v157
    %1306 = vmatprep.subr.mxu0 %v162
    %1307 = vmatpush1.msra.mxu0 %v161
    %1308 = vmatprep.subr.mxu0 %v166
    %1309 = vmatpush1.msra.mxu0 %v165
    %1310 = vmatprep.subr.mxu0 %v170
    %1311 = vmatpush1.msra.mxu0 %v169
    %1312 = vmatprep.subr.mxu0 %v174
    %1313 = vmatpush1.msra.mxu0 %v173
    %1314 = vmatprep.subr.mxu0 %v178
    %1315 = vmatpush1.msra.mxu0 %v177
    %1316 = vmatprep.subr.mxu0 %v182
    %1317 = vmatpush1.msra.mxu0 %v181
    %1318 = vmatprep.subr.mxu0 %v186
    %1319 = vmatpush1.msra.mxu0 %v185
    %1320 = vmatprep.subr.mxu0 %v190
    %1321 = vmatpush1.msra.mxu0 %v189
    %1322 = vmatprep.subr.mxu0 %v194
    %1323 = vmatpush1.msra.mxu0 %v193
    %1324 = vmatprep.subr.mxu0 0.0
    %1325 = vmatpush1.msra.mxu0 0.0
    %1326 = vmatprep.subr.mxu0 0.0
    %1327 = vmatpush1.msra.mxu0 0.0
    %1328 = vmatprep.subr.mxu0 0.0
    %1329 = vmatpush1.msra.mxu0 0.0
    %1330 = vmatprep.subr.mxu0 0.0
    %1331 = vmatpush1.msra.mxu0 0.0
    %1332 = vmatprep.subr.mxu0 0.0
    %1333 = vmatpush1.msra.mxu0 0.0
    %1334 = vmatprep.subr.mxu0 0.0
    %1335 = vmatpush1.msra.mxu0 0.0
    %1336 = vmatprep.subr.mxu0 0.0
    %1337 = vmatpush1.msra.mxu0 0.0
    %1338 = vmatprep.subr.mxu0 0.0
    %1339 = vmatpush1.msra.mxu0 0.0
    %1340 = vmatprep.subr.mxu0 0.0
    %1341 = vmatpush1.msra.mxu0 0.0
    %1342 = vmatprep.subr.mxu0 0.0
    %1343 = vmatpush1.msra.mxu0 0.0
    %1344 = vmatprep.subr.mxu0 0.0
    %1345 = vmatpush1.msra.mxu0 0.0
    %1346 = vmatprep.subr.mxu0 0.0
    %1347 = vmatpush1.msra.mxu0 0.0
    %1348 = vmatprep.subr.mxu0 0.0
    %1349 = vmatpush1.msra.mxu0 0.0
    %1350 = vmatprep.subr.mxu0 0.0
    %1351 = vmatpush1.msra.mxu0 0.0
    %1352 = vmatprep.subr.mxu0 0.0
    %1353 = vmatpush1.msra.mxu0 0.0
    %1354 = vmatprep.subr.mxu0 0.0
    %1355 = vmatpush1.msra.mxu0 0.0
    %1356 = vmatprep.mubr.f32.mxu0 0.0
    %1357 = vmatmul.mubr.f32.gmra.mrb[0].mxu0 %v1213
    %v1358 = vpop.f32.mrb[0].mxu0
    %v1359 = vadd.f32 0.0, %v1358
    %v1360 = vpop.f32.mrb[0].mxu0
    %v1361 = vadd.f32 0.0, %v1360
    %1362 = vdwg.mxu0
    %v1363 = vadd.f32 %v1217, %v1288
    %v1364 = vadd.f32 %v1218, %v1290
    %v1365 = vadd.f32 %v1219, %v1359
    %v1366 = vadd.f32 %v1220, %v1361
    %v1367 = vxor.u32 %v1363, 2147483648
    %v1368 = vmul.f32 %v1367, 1.442695
    %v1369 = vpow.pop %v1368
    %v1370 = vadd.f32 %v1369, 1.0
    %v1371 = vrcp.pop %v1370
    %v1372 = vmul.f32 1.0, %v1371
    %v1373 = vxor.u32 %v1364, 2147483648
    %v1374 = vmul.f32 %v1373, 1.442695
    %v1375 = vpow.pop %v1374
    %v1376 = vadd.f32 %v1375, 1.0
    %v1377 = vrcp.pop %v1376
    %v1378 = vmul.f32 1.0, %v1377
    %v1379 = vtanh.pop %v1365
    %v1380 = vxor.u32 %v1366, 2147483648
    %v1381 = vmul.f32 %v1380, 1.442695
    %v1382 = vpow.pop %v1381
    %v1383 = vadd.f32 %v1382, 1.0
    %v1384 = vrcp.pop %v1383
    %v1385 = vmul.f32 1.0, %v1384
    %v1386 = vmul.f32 %v1378, %v1211
    %v1387 = vmul.f32 %v1372, %v1379
    %v1388 = vadd.f32 %v1386, %v1387
    %v1389 = vtanh.pop %v1388
    %v1390 = vmul.f32 %v1385, %v1389
    %s1391 = scalar_lea.vmem [#allocation4], 32
    %1392 = vst [vmem:[%s1391] sm:$0xff] %v1390
    %s1393 = scalar_lea.vmem [#allocation5], 160
    %v1394 = vld [vmem:[%s1393] sm:$0xff]
    %v1395 = vld [vmem:[%s1393 + $0x8] sm:$0xff]
    %v1396 = vld [vmem:[%s1393 + $0x10] sm:$0xff]
    %v1397 = vld [vmem:[%s1393 + $0x18] sm:$0xff]
    %1398 = vmatprep.subr.mxu0 %v132
    %1399 = vmatpush1.msra.mxu0 %v131
    %1400 = vmatprep.subr.mxu0 %v136
    %1401 = vmatpush1.msra.mxu0 %v135
    %1402 = vmatprep.subr.mxu0 %v140
    %1403 = vmatpush1.msra.mxu0 %v139
    %1404 = vmatprep.subr.mxu0 %v144
    %1405 = vmatpush1.msra.mxu0 %v143
    %1406 = vmatprep.subr.mxu0 %v148
    %1407 = vmatpush1.msra.mxu0 %v147
    %1408 = vmatprep.subr.mxu0 %v152
    %1409 = vmatpush1.msra.mxu0 %v151
    %1410 = vmatprep.subr.mxu0 %v156
    %1411 = vmatpush1.msra.mxu0 %v155
    %1412 = vmatprep.subr.mxu0 %v160
    %1413 = vmatpush1.msra.mxu0 %v159
    %1414 = vmatprep.subr.mxu0 %v164
    %1415 = vmatpush1.msra.mxu0 %v163
    %1416 = vmatprep.subr.mxu0 %v168
    %1417 = vmatpush1.msra.mxu0 %v167
    %1418 = vmatprep.subr.mxu0 %v172
    %1419 = vmatpush1.msra.mxu0 %v171
    %1420 = vmatprep.subr.mxu0 %v176
    %1421 = vmatpush1.msra.mxu0 %v175
    %1422 = vmatprep.subr.mxu0 %v180
    %1423 = vmatpush1.msra.mxu0 %v179
    %1424 = vmatprep.subr.mxu0 %v184
    %1425 = vmatpush1.msra.mxu0 %v183
    %1426 = vmatprep.subr.mxu0 %v188
    %1427 = vmatpush1.msra.mxu0 %v187
    %1428 = vmatprep.subr.mxu0 %v192
    %1429 = vmatpush1.msra.mxu0 %v191
    %1430 = vmatprep.subr.mxu0 0.0
    %1431 = vmatpush1.msra.mxu0 0.0
    %1432 = vmatprep.subr.mxu0 0.0
    %1433 = vmatpush1.msra.mxu0 0.0
    %1434 = vmatprep.subr.mxu0 0.0
    %1435 = vmatpush1.msra.mxu0 0.0
    %1436 = vmatprep.subr.mxu0 0.0
    %1437 = vmatpush1.msra.mxu0 0.0
    %1438 = vmatprep.subr.mxu0 0.0
    %1439 = vmatpush1.msra.mxu0 0.0
    %1440 = vmatprep.subr.mxu0 0.0
    %1441 = vmatpush1.msra.mxu0 0.0
    %1442 = vmatprep.subr.mxu0 0.0
    %1443 = vmatpush1.msra.mxu0 0.0
    %1444 = vmatprep.subr.mxu0 0.0
    %1445 = vmatpush1.msra.mxu0 0.0
    %1446 = vmatprep.subr.mxu0 0.0
    %1447 = vmatpush1.msra.mxu0 0.0
    %1448 = vmatprep.subr.mxu0 0.0
    %1449 = vmatpush1.msra.mxu0 0.0
    %1450 = vmatprep.subr.mxu0 0.0
    %1451 = vmatpush1.msra.mxu0 0.0
    %1452 = vmatprep.subr.mxu0 0.0
    %1453 = vmatpush1.msra.mxu0 0.0
    %1454 = vmatprep.subr.mxu0 0.0
    %1455 = vmatpush1.msra.mxu0 0.0
    %1456 = vmatprep.subr.mxu0 0.0
    %1457 = vmatpush1.msra.mxu0 0.0
    %1458 = vmatprep.subr.mxu0 0.0
    %1459 = vmatpush1.msra.mxu0 0.0
    %1460 = vmatprep.subr.mxu0 0.0
    %1461 = vmatpush1.msra.mxu0 0.0
    %1462 = vmatprep.mubr.f32.mxu0 0.0
    %1463 = vmatmul.mubr.f32.gmra.mrb[0].mxu0 %v1390
    %v1464 = vpop.f32.mrb[0].mxu0
    %v1465 = vadd.f32 0.0, %v1464
    %v1466 = vpop.f32.mrb[0].mxu0
    %v1467 = vadd.f32 0.0, %v1466
    %1468 = vdwg.mxu0
    %1469 = vmatprep.subr.mxu0 %v134
    %1470 = vmatpush1.msra.mxu0 %v133
    %1471 = vmatprep.subr.mxu0 %v138
    %1472 = vmatpush1.msra.mxu0 %v137
    %1473 = vmatprep.subr.mxu0 %v142
    %1474 = vmatpush1.msra.mxu0 %v141
    %1475 = vmatprep.subr.mxu0 %v146
    %1476 = vmatpush1.msra.mxu0 %v145
    %1477 = vmatprep.subr.mxu0 %v150
    %1478 = vmatpush1.msra.mxu0 %v149
    %1479 = vmatprep.subr.mxu0 %v154
    %1480 = vmatpush1.msra.mxu0 %v153
    %1481 = vmatprep.subr.mxu0 %v158
    %1482 = vmatpush1.msra.mxu0 %v157
    %1483 = vmatprep.subr.mxu0 %v162
    %1484 = vmatpush1.msra.mxu0 %v161
    %1485 = vmatprep.subr.mxu0 %v166
    %1486 = vmatpush1.msra.mxu0 %v165
    %1487 = vmatprep.subr.mxu0 %v170
    %1488 = vmatpush1.msra.mxu0 %v169
    %1489 = vmatprep.subr.mxu0 %v174
    %1490 = vmatpush1.msra.mxu0 %v173
    %1491 = vmatprep.subr.mxu0 %v178
    %1492 = vmatpush1.msra.mxu0 %v177
    %1493 = vmatprep.subr.mxu0 %v182
    %1494 = vmatpush1.msra.mxu0 %v181
    %1495 = vmatprep.subr.mxu0 %v186
    %1496 = vmatpush1.msra.mxu0 %v185
    %1497 = vmatprep.subr.mxu0 %v190
    %1498 = vmatpush1.msra.mxu0 %v189
    %1499 = vmatprep.subr.mxu0 %v194
    %1500 = vmatpush1.msra.mxu0 %v193
    %1501 = vmatprep.subr.mxu0 0.0
    %1502 = vmatpush1.msra.mxu0 0.0
    %1503 = vmatprep.subr.mxu0 0.0
    %1504 = vmatpush1.msra.mxu0 0.0
    %1505 = vmatprep.subr.mxu0 0.0
    %1506 = vmatpush1.msra.mxu0 0.0
    %1507 = vmatprep.subr.mxu0 0.0
    %1508 = vmatpush1.msra.mxu0 0.0
    %1509 = vmatprep.subr.mxu0 0.0
    %1510 = vmatpush1.msra.mxu0 0.0
    %1511 = vmatprep.subr.mxu0 0.0
    %1512 = vmatpush1.msra.mxu0 0.0
    %1513 = vmatprep.subr.mxu0 0.0
    %1514 = vmatpush1.msra.mxu0 0.0
    %1515 = vmatprep.subr.mxu0 0.0
    %1516 = vmatpush1.msra.mxu0 0.0
    %1517 = vmatprep.subr.mxu0 0.0
    %1518 = vmatpush1.msra.mxu0 0.0
    %1519 = vmatprep.subr.mxu0 0.0
    %1520 = vmatpush1.msra.mxu0 0.0
    %1521 = vmatprep.subr.mxu0 0.0
    %1522 = vmatpush1.msra.mxu0 0.0
    %1523 = vmatprep.subr.mxu0 0.0
    %1524 = vmatpush1.msra.mxu0 0.0
    %1525 = vmatprep.subr.mxu0 0.0
    %1526 = vmatpush1.msra.mxu0 0.0
    %1527 = vmatprep.subr.mxu0 0.0
    %1528 = vmatpush1.msra.mxu0 0.0
    %1529 = vmatprep.subr.mxu0 0.0
    %1530 = vmatpush1.msra.mxu0 0.0
    %1531 = vmatprep.subr.mxu0 0.0
    %1532 = vmatpush1.msra.mxu0 0.0
    %1533 = vmatprep.mubr.f32.mxu0 0.0
    %1534 = vmatmul.mubr.f32.gmra.mrb[0].mxu0 %v1390
    %v1535 = vpop.f32.mrb[0].mxu0
    %v1536 = vadd.f32 0.0, %v1535
    %v1537 = vpop.f32.mrb[0].mxu0
    %v1538 = vadd.f32 0.0, %v1537
    %1539 = vdwg.mxu0
    %v1540 = vadd.f32 %v1394, %v1465
    %v1541 = vadd.f32 %v1395, %v1467
    %v1542 = vadd.f32 %v1396, %v1536
    %v1543 = vadd.f32 %v1397, %v1538
    %v1544 = vxor.u32 %v1540, 2147483648
    %v1545 = vmul.f32 %v1544, 1.442695
    %v1546 = vpow.pop %v1545
    %v1547 = vadd.f32 %v1546, 1.0
    %v1548 = vrcp.pop %v1547
    %v1549 = vmul.f32 1.0, %v1548
    %v1550 = vxor.u32 %v1541, 2147483648
    %v1551 = vmul.f32 %v1550, 1.442695
    %v1552 = vpow.pop %v1551
    %v1553 = vadd.f32 %v1552, 1.0
    %v1554 = vrcp.pop %v1553
    %v1555 = vmul.f32 1.0, %v1554
    %v1556 = vtanh.pop %v1542
    %v1557 = vxor.u32 %v1543, 2147483648
    %v1558 = vmul.f32 %v1557, 1.442695
    %v1559 = vpow.pop %v1558
    %v1560 = vadd.f32 %v1559, 1.0
    %v1561 = vrcp.pop %v1560
    %v1562 = vmul.f32 1.0, %v1561
    %v1563 = vmul.f32 %v1555, %v1388
    %v1564 = vmul.f32 %v1549, %v1556
    %v1565 = vadd.f32 %v1563, %v1564
    %v1566 = vtanh.pop %v1565
    %v1567 = vmul.f32 %v1562, %v1566
    %s1568 = scalar_lea.vmem [#allocation4], 40
    %1569 = vst [vmem:[%s1568] sm:$0xff] %v1567
    %s1570 = scalar_lea.vmem [#allocation5], 192
    %v1571 = vld [vmem:[%s1570] sm:$0xff]
    %v1572 = vld [vmem:[%s1570 + $0x8] sm:$0xff]
    %v1573 = vld [vmem:[%s1570 + $0x10] sm:$0xff]
    %v1574 = vld [vmem:[%s1570 + $0x18] sm:$0xff]
    %1575 = vmatprep.subr.mxu0 %v132
    %1576 = vmatpush1.msra.mxu0 %v131
    %1577 = vmatprep.subr.mxu0 %v136
    %1578 = vmatpush1.msra.mxu0 %v135
    %1579 = vmatprep.subr.mxu0 %v140
    %1580 = vmatpush1.msra.mxu0 %v139
    %1581 = vmatprep.subr.mxu0 %v144
    %1582 = vmatpush1.msra.mxu0 %v143
    %1583 = vmatprep.subr.mxu0 %v148
    %1584 = vmatpush1.msra.mxu0 %v147
    %1585 = vmatprep.subr.mxu0 %v152
    %1586 = vmatpush1.msra.mxu0 %v151
    %1587 = vmatprep.subr.mxu0 %v156
    %1588 = vmatpush1.msra.mxu0 %v155
    %1589 = vmatprep.subr.mxu0 %v160
    %1590 = vmatpush1.msra.mxu0 %v159
    %1591 = vmatprep.subr.mxu0 %v164
    %1592 = vmatpush1.msra.mxu0 %v163
    %1593 = vmatprep.subr.mxu0 %v168
    %1594 = vmatpush1.msra.mxu0 %v167
    %1595 = vmatprep.subr.mxu0 %v172
    %1596 = vmatpush1.msra.mxu0 %v171
    %1597 = vmatprep.subr.mxu0 %v176
    %1598 = vmatpush1.msra.mxu0 %v175
    %1599 = vmatprep.subr.mxu0 %v180
    %1600 = vmatpush1.msra.mxu0 %v179
    %1601 = vmatprep.subr.mxu0 %v184
    %1602 = vmatpush1.msra.mxu0 %v183
    %1603 = vmatprep.subr.mxu0 %v188
    %1604 = vmatpush1.msra.mxu0 %v187
    %1605 = vmatprep.subr.mxu0 %v192
    %1606 = vmatpush1.msra.mxu0 %v191
    %1607 = vmatprep.subr.mxu0 0.0
    %1608 = vmatpush1.msra.mxu0 0.0
    %1609 = vmatprep.subr.mxu0 0.0
    %1610 = vmatpush1.msra.mxu0 0.0
    %1611 = vmatprep.subr.mxu0 0.0
    %1612 = vmatpush1.msra.mxu0 0.0
    %1613 = vmatprep.subr.mxu0 0.0
    %1614 = vmatpush1.msra.mxu0 0.0
    %1615 = vmatprep.subr.mxu0 0.0
    %1616 = vmatpush1.msra.mxu0 0.0
    %1617 = vmatprep.subr.mxu0 0.0
    %1618 = vmatpush1.msra.mxu0 0.0
    %1619 = vmatprep.subr.mxu0 0.0
    %1620 = vmatpush1.msra.mxu0 0.0
    %1621 = vmatprep.subr.mxu0 0.0
    %1622 = vmatpush1.msra.mxu0 0.0
    %1623 = vmatprep.subr.mxu0 0.0
    %1624 = vmatpush1.msra.mxu0 0.0
    %1625 = vmatprep.subr.mxu0 0.0
    %1626 = vmatpush1.msra.mxu0 0.0
    %1627 = vmatprep.subr.mxu0 0.0
    %1628 = vmatpush1.msra.mxu0 0.0
    %1629 = vmatprep.subr.mxu0 0.0
    %1630 = vmatpush1.msra.mxu0 0.0
    %1631 = vmatprep.subr.mxu0 0.0
    %1632 = vmatpush1.msra.mxu0 0.0
    %1633 = vmatprep.subr.mxu0 0.0
    %1634 = vmatpush1.msra.mxu0 0.0
    %1635 = vmatprep.subr.mxu0 0.0
    %1636 = vmatpush1.msra.mxu0 0.0
    %1637 = vmatprep.subr.mxu0 0.0
    %1638 = vmatpush1.msra.mxu0 0.0
    %1639 = vmatprep.mubr.f32.mxu0 0.0
    %1640 = vmatmul.mubr.f32.gmra.mrb[0].mxu0 %v1567
    %v1641 = vpop.f32.mrb[0].mxu0
    %v1642 = vadd.f32 0.0, %v1641
    %v1643 = vpop.f32.mrb[0].mxu0
    %v1644 = vadd.f32 0.0, %v1643
    %1645 = vdwg.mxu0
    %1646 = vmatprep.subr.mxu0 %v134
    %1647 = vmatpush1.msra.mxu0 %v133
    %1648 = vmatprep.subr.mxu0 %v138
    %1649 = vmatpush1.msra.mxu0 %v137
    %1650 = vmatprep.subr.mxu0 %v142
    %1651 = vmatpush1.msra.mxu0 %v141
    %1652 = vmatprep.subr.mxu0 %v146
    %1653 = vmatpush1.msra.mxu0 %v145
    %1654 = vmatprep.subr.mxu0 %v150
    %1655 = vmatpush1.msra.mxu0 %v149
    %1656 = vmatprep.subr.mxu0 %v154
    %1657 = vmatpush1.msra.mxu0 %v153
    %1658 = vmatprep.subr.mxu0 %v158
    %1659 = vmatpush1.msra.mxu0 %v157
    %1660 = vmatprep.subr.mxu0 %v162
    %1661 = vmatpush1.msra.mxu0 %v161
    %1662 = vmatprep.subr.mxu0 %v166
    %1663 = vmatpush1.msra.mxu0 %v165
    %1664 = vmatprep.subr.mxu0 %v170
    %1665 = vmatpush1.msra.mxu0 %v169
    %1666 = vmatprep.subr.mxu0 %v174
    %1667 = vmatpush1.msra.mxu0 %v173
    %1668 = vmatprep.subr.mxu0 %v178
    %1669 = vmatpush1.msra.mxu0 %v177
    %1670 = vmatprep.subr.mxu0 %v182
    %1671 = vmatpush1.msra.mxu0 %v181
    %1672 = vmatprep.subr.mxu0 %v186
    %1673 = vmatpush1.msra.mxu0 %v185
    %1674 = vmatprep.subr.mxu0 %v190
    %1675 = vmatpush1.msra.mxu0 %v189
    %1676 = vmatprep.subr.mxu0 %v194
    %1677 = vmatpush1.msra.mxu0 %v193
    %1678 = vmatprep.subr.mxu0 0.0
    %1679 = vmatpush1.msra.mxu0 0.0
    %1680 = vmatprep.subr.mxu0 0.0
    %1681 = vmatpush1.msra.mxu0 0.0
    %1682 = vmatprep.subr.mxu0 0.0
    %1683 = vmatpush1.msra.mxu0 0.0
    %1684 = vmatprep.subr.mxu0 0.0
    %1685 = vmatpush1.msra.mxu0 0.0
    %1686 = vmatprep.subr.mxu0 0.0
    %1687 = vmatpush1.msra.mxu0 0.0
    %1688 = vmatprep.subr.mxu0 0.0
    %1689 = vmatpush1.msra.mxu0 0.0
    %1690 = vmatprep.subr.mxu0 0.0
    %1691 = vmatpush1.msra.mxu0 0.0
    %1692 = vmatprep.subr.mxu0 0.0
    %1693 = vmatpush1.msra.mxu0 0.0
    %1694 = vmatprep.subr.mxu0 0.0
    %1695 = vmatpush1.msra.mxu0 0.0
    %1696 = vmatprep.subr.mxu0 0.0
    %1697 = vmatpush1.msra.mxu0 0.0
    %1698 = vmatprep.subr.mxu0 0.0
    %1699 = vmatpush1.msra.mxu0 0.0
    %1700 = vmatprep.subr.mxu0 0.0
    %1701 = vmatpush1.msra.mxu0 0.0
    %1702 = vmatprep.subr.mxu0 0.0
    %1703 = vmatpush1.msra.mxu0 0.0
    %1704 = vmatprep.subr.mxu0 0.0
    %1705 = vmatpush1.msra.mxu0 0.0
    %1706 = vmatprep.subr.mxu0 0.0
    %1707 = vmatpush1.msra.mxu0 0.0
    %1708 = vmatprep.subr.mxu0 0.0
    %1709 = vmatpush1.msra.mxu0 0.0
    %1710 = vmatprep.mubr.f32.mxu0 0.0
    %1711 = vmatmul.mubr.f32.gmra.mrb[0].mxu0 %v1567
    %v1712 = vpop.f32.mrb[0].mxu0
    %v1713 = vadd.f32 0.0, %v1712
    %v1714 = vpop.f32.mrb[0].mxu0
    %v1715 = vadd.f32 0.0, %v1714
    %1716 = vdwg.mxu0
    %v1717 = vadd.f32 %v1571, %v1642
    %v1718 = vadd.f32 %v1572, %v1644
    %v1719 = vadd.f32 %v1573, %v1713
    %v1720 = vadd.f32 %v1574, %v1715
    %v1721 = vxor.u32 %v1717, 2147483648
    %v1722 = vmul.f32 %v1721, 1.442695
    %v1723 = vpow.pop %v1722
    %v1724 = vadd.f32 %v1723, 1.0
    %v1725 = vrcp.pop %v1724
    %v1726 = vmul.f32 1.0, %v1725
    %v1727 = vxor.u32 %v1718, 2147483648
    %v1728 = vmul.f32 %v1727, 1.442695
    %v1729 = vpow.pop %v1728
    %v1730 = vadd.f32 %v1729, 1.0
    %v1731 = vrcp.pop %v1730
    %v1732 = vmul.f32 1.0, %v1731
    %v1733 = vtanh.pop %v1719
    %v1734 = vxor.u32 %v1720, 2147483648
    %v1735 = vmul.f32 %v1734, 1.442695
    %v1736 = vpow.pop %v1735
    %v1737 = vadd.f32 %v1736, 1.0
    %v1738 = vrcp.pop %v1737
    %v1739 = vmul.f32 1.0, %v1738
    %v1740 = vmul.f32 %v1732, %v1565
    %v1741 = vmul.f32 %v1726, %v1733
    %v1742 = vadd.f32 %v1740, %v1741
    %v1743 = vtanh.pop %v1742
    %v1744 = vmul.f32 %v1739, %v1743
    %s1745 = scalar_lea.vmem [#allocation4], 48
    %1746 = vst [vmem:[%s1745] sm:$0xff] %v1744
    %s1747 = scalar_lea.vmem [#allocation5], 224
    %v1748 = vld [vmem:[%s1747] sm:$0xff]
    %v1749 = vld [vmem:[%s1747 + $0x8] sm:$0xff]
    %v1750 = vld [vmem:[%s1747 + $0x10] sm:$0xff]
    %v1751 = vld [vmem:[%s1747 + $0x18] sm:$0xff]
    %1752 = vmatprep.subr.mxu0 %v132
    %1753 = vmatpush1.msra.mxu0 %v131
    %1754 = vmatprep.subr.mxu0 %v136
    %1755 = vmatpush1.msra.mxu0 %v135
    %1756 = vmatprep.subr.mxu0 %v140
    %1757 = vmatpush1.msra.mxu0 %v139
    %1758 = vmatprep.subr.mxu0 %v144
    %1759 = vmatpush1.msra.mxu0 %v143
    %1760 = vmatprep.subr.mxu0 %v148
    %1761 = vmatpush1.msra.mxu0 %v147
    %1762 = vmatprep.subr.mxu0 %v152
    %1763 = vmatpush1.msra.mxu0 %v151
    %1764 = vmatprep.subr.mxu0 %v156
    %1765 = vmatpush1.msra.mxu0 %v155
    %1766 = vmatprep.subr.mxu0 %v160
    %1767 = vmatpush1.msra.mxu0 %v159
    %1768 = vmatprep.subr.mxu0 %v164
    %1769 = vmatpush1.msra.mxu0 %v163
    %1770 = vmatprep.subr.mxu0 %v168
    %1771 = vmatpush1.msra.mxu0 %v167
    %1772 = vmatprep.subr.mxu0 %v172
    %1773 = vmatpush1.msra.mxu0 %v171
    %1774 = vmatprep.subr.mxu0 %v176
    %1775 = vmatpush1.msra.mxu0 %v175
    %1776 = vmatprep.subr.mxu0 %v180
    %1777 = vmatpush1.msra.mxu0 %v179
    %1778 = vmatprep.subr.mxu0 %v184
    %1779 = vmatpush1.msra.mxu0 %v183
    %1780 = vmatprep.subr.mxu0 %v188
    %1781 = vmatpush1.msra.mxu0 %v187
    %1782 = vmatprep.subr.mxu0 %v192
    %1783 = vmatpush1.msra.mxu0 %v191
    %1784 = vmatprep.subr.mxu0 0.0
    %1785 = vmatpush1.msra.mxu0 0.0
    %1786 = vmatprep.subr.mxu0 0.0
    %1787 = vmatpush1.msra.mxu0 0.0
    %1788 = vmatprep.subr.mxu0 0.0
    %1789 = vmatpush1.msra.mxu0 0.0
    %1790 = vmatprep.subr.mxu0 0.0
    %1791 = vmatpush1.msra.mxu0 0.0
    %1792 = vmatprep.subr.mxu0 0.0
    %1793 = vmatpush1.msra.mxu0 0.0
    %1794 = vmatprep.subr.mxu0 0.0
    %1795 = vmatpush1.msra.mxu0 0.0
    %1796 = vmatprep.subr.mxu0 0.0
    %1797 = vmatpush1.msra.mxu0 0.0
    %1798 = vmatprep.subr.mxu0 0.0
    %1799 = vmatpush1.msra.mxu0 0.0
    %1800 = vmatprep.subr.mxu0 0.0
    %1801 = vmatpush1.msra.mxu0 0.0
    %1802 = vmatprep.subr.mxu0 0.0
    %1803 = vmatpush1.msra.mxu0 0.0
    %1804 = vmatprep.subr.mxu0 0.0
    %1805 = vmatpush1.msra.mxu0 0.0
    %1806 = vmatprep.subr.mxu0 0.0
    %1807 = vmatpush1.msra.mxu0 0.0
    %1808 = vmatprep.subr.mxu0 0.0
    %1809 = vmatpush1.msra.mxu0 0.0
    %1810 = vmatprep.subr.mxu0 0.0
    %1811 = vmatpush1.msra.mxu0 0.0
    %1812 = vmatprep.subr.mxu0 0.0
    %1813 = vmatpush1.msra.mxu0 0.0
    %1814 = vmatprep.subr.mxu0 0.0
    %1815 = vmatpush1.msra.mxu0 0.0
    %1816 = vmatprep.mubr.f32.mxu0 0.0
    %1817 = vmatmul.mubr.f32.gmra.mrb[0].mxu0 %v1744
    %v1818 = vpop.f32.mrb[0].mxu0
    %v1819 = vadd.f32 0.0, %v1818
    %v1820 = vpop.f32.mrb[0].mxu0
    %v1821 = vadd.f32 0.0, %v1820
    %1822 = vdwg.mxu0
    %1823 = vmatprep.subr.mxu0 %v134
    %1824 = vmatpush1.msra.mxu0 %v133
    %1825 = vmatprep.subr.mxu0 %v138
    %1826 = vmatpush1.msra.mxu0 %v137
    %1827 = vmatprep.subr.mxu0 %v142
    %1828 = vmatpush1.msra.mxu0 %v141
    %1829 = vmatprep.subr.mxu0 %v146
    %1830 = vmatpush1.msra.mxu0 %v145
    %1831 = vmatprep.subr.mxu0 %v150
    %1832 = vmatpush1.msra.mxu0 %v149
    %1833 = vmatprep.subr.mxu0 %v154
    %1834 = vmatpush1.msra.mxu0 %v153
    %1835 = vmatprep.subr.mxu0 %v158
    %1836 = vmatpush1.msra.mxu0 %v157
    %1837 = vmatprep.subr.mxu0 %v162
    %1838 = vmatpush1.msra.mxu0 %v161
    %1839 = vmatprep.subr.mxu0 %v166
    %1840 = vmatpush1.msra.mxu0 %v165
    %1841 = vmatprep.subr.mxu0 %v170
    %1842 = vmatpush1.msra.mxu0 %v169
    %1843 = vmatprep.subr.mxu0 %v174
    %1844 = vmatpush1.msra.mxu0 %v173
    %1845 = vmatprep.subr.mxu0 %v178
    %1846 = vmatpush1.msra.mxu0 %v177
    %1847 = vmatprep.subr.mxu0 %v182
    %1848 = vmatpush1.msra.mxu0 %v181
    %1849 = vmatprep.subr.mxu0 %v186
    %1850 = vmatpush1.msra.mxu0 %v185
    %1851 = vmatprep.subr.mxu0 %v190
    %1852 = vmatpush1.msra.mxu0 %v189
    %1853 = vmatprep.subr.mxu0 %v194
    %1854 = vmatpush1.msra.mxu0 %v193
    %1855 = vmatprep.subr.mxu0 0.0
    %1856 = vmatpush1.msra.mxu0 0.0
    %1857 = vmatprep.subr.mxu0 0.0
    %1858 = vmatpush1.msra.mxu0 0.0
    %1859 = vmatprep.subr.mxu0 0.0
    %1860 = vmatpush1.msra.mxu0 0.0
    %1861 = vmatprep.subr.mxu0 0.0
    %1862 = vmatpush1.msra.mxu0 0.0
    %1863 = vmatprep.subr.mxu0 0.0
    %1864 = vmatpush1.msra.mxu0 0.0
    %1865 = vmatprep.subr.mxu0 0.0
    %1866 = vmatpush1.msra.mxu0 0.0
    %1867 = vmatprep.subr.mxu0 0.0
    %1868 = vmatpush1.msra.mxu0 0.0
    %1869 = vmatprep.subr.mxu0 0.0
    %1870 = vmatpush1.msra.mxu0 0.0
    %1871 = vmatprep.subr.mxu0 0.0
    %1872 = vmatpush1.msra.mxu0 0.0
    %1873 = vmatprep.subr.mxu0 0.0
    %1874 = vmatpush1.msra.mxu0 0.0
    %1875 = vmatprep.subr.mxu0 0.0
    %1876 = vmatpush1.msra.mxu0 0.0
    %1877 = vmatprep.subr.mxu0 0.0
    %1878 = vmatpush1.msra.mxu0 0.0
    %1879 = vmatprep.subr.mxu0 0.0
    %1880 = vmatpush1.msra.mxu0 0.0
    %1881 = vmatprep.subr.mxu0 0.0
    %1882 = vmatpush1.msra.mxu0 0.0
    %1883 = vmatprep.subr.mxu0 0.0
    %1884 = vmatpush1.msra.mxu0 0.0
    %1885 = vmatprep.subr.mxu0 0.0
    %1886 = vmatpush1.msra.mxu0 0.0
    %1887 = vmatprep.mubr.f32.mxu0 0.0
    %1888 = vmatmul.mubr.f32.gmra.mrb[0].mxu0 %v1744
    %v1889 = vpop.f32.mrb[0].mxu0
    %v1890 = vadd.f32 0.0, %v1889
    %v1891 = vpop.f32.mrb[0].mxu0
    %v1892 = vadd.f32 0.0, %v1891
    %1893 = vdwg.mxu0
    %v1894 = vadd.f32 %v1748, %v1819
    %v1895 = vadd.f32 %v1749, %v1821
    %v1896 = vadd.f32 %v1750, %v1890
    %v1897 = vadd.f32 %v1751, %v1892
    %v1898 = vxor.u32 %v1894, 2147483648
    %v1899 = vmul.f32 %v1898, 1.442695
    %v1900 = vpow.pop %v1899
    %v1901 = vadd.f32 %v1900, 1.0
    %v1902 = vrcp.pop %v1901
    %v1903 = vmul.f32 1.0, %v1902
    %v1904 = vxor.u32 %v1895, 2147483648
    %v1905 = vmul.f32 %v1904, 1.442695
    %v1906 = vpow.pop %v1905
    %v1907 = vadd.f32 %v1906, 1.0
    %v1908 = vrcp.pop %v1907
    %v1909 = vmul.f32 1.0, %v1908
    %v1910 = vtanh.pop %v1896
    %v1911 = vxor.u32 %v1897, 2147483648
    %v1912 = vmul.f32 %v1911, 1.442695
    %v1913 = vpow.pop %v1912
    %v1914 = vadd.f32 %v1913, 1.0
    %v1915 = vrcp.pop %v1914
    %v1916 = vmul.f32 1.0, %v1915
    %v1917 = vmul.f32 %v1909, %v1742
    %v1918 = vmul.f32 %v1903, %v1910
    %v1919 = vadd.f32 %v1917, %v1918
    %v1920 = vtanh.pop %v1919
    %v1921 = vmul.f32 %v1916, %v1920
    %s1922 = scalar_lea.vmem [#allocation4], 56
    %1923 = vst [vmem:[%s1922] sm:$0xff] %v1921
    %1924 = vst [vmem:[#allocation2] sm:$0xff] %v1921
    %1925 = vst [vmem:[#allocation3] sm:$0xff] %v1919
    %v1926 = vld [vmem:[#allocation12] sm:$0xff]
    %v1927 = vld [vmem:[#allocation12 + $0x8] sm:$0xff]
    %v1928 = vld [vmem:[#allocation12 + $0x10] sm:$0xff]
    %v1929 = vld [vmem:[#allocation12 + $0x18] sm:$0xff]
    %v1930 = vld [vmem:[#allocation12 + $0x20] sm:$0xff]
    %v1931 = vld [vmem:[#allocation12 + $0x28] sm:$0xff]
    %v1932 = vld [vmem:[#allocation12 + $0x30] sm:$0xff]
    %v1933 = vld [vmem:[#allocation12 + $0x38] sm:$0xff]
    %v1934 = vld [vmem:[#allocation12 + $0x40] sm:$0xff]
    %v1935 = vld [vmem:[#allocation12 + $0x48] sm:$0xff]
    %v1936 = vld [vmem:[#allocation12 + $0x50] sm:$0xff]
    %v1937 = vld [vmem:[#allocation12 + $0x58] sm:$0xff]
    %v1938 = vld [vmem:[#allocation12 + $0x60] sm:$0xff]
    %v1939 = vld [vmem:[#allocation12 + $0x68] sm:$0xff]
    %v1940 = vld [vmem:[#allocation12 + $0x70] sm:$0xff]
    %v1941 = vld [vmem:[#allocation12 + $0x78] sm:$0xff]
    %v1942 = vld [vmem:[#allocation12 + $0x80] sm:$0xff]
    %v1943 = vld [vmem:[#allocation12 + $0x88] sm:$0xff]
    %v1944 = vld [vmem:[#allocation12 + $0x90] sm:$0xff]
    %v1945 = vld [vmem:[#allocation12 + $0x98] sm:$0xff]
    %v1946 = vld [vmem:[#allocation12 + $0xa0] sm:$0xff]
    %v1947 = vld [vmem:[#allocation12 + $0xa8] sm:$0xff]
    %v1948 = vld [vmem:[#allocation12 + $0xb0] sm:$0xff]
    %v1949 = vld [vmem:[#allocation12 + $0xb8] sm:$0xff]
    %v1950 = vld [vmem:[#allocation12 + $0xc0] sm:$0xff]
    %v1951 = vld [vmem:[#allocation12 + $0xc8] sm:$0xff]
    %v1952 = vld [vmem:[#allocation12 + $0xd0] sm:$0xff]
    %v1953 = vld [vmem:[#allocation12 + $0xd8] sm:$0xff]
    %v1954 = vld [vmem:[#allocation12 + $0xe0] sm:$0xff]
    %v1955 = vld [vmem:[#allocation12 + $0xe8] sm:$0xff]
    %v1956 = vld [vmem:[#allocation12 + $0xf0] sm:$0xff]
    %v1957 = vld [vmem:[#allocation12 + $0xf8] sm:$0xff]
    %v1958 = vld [vmem:[#allocation12 + $0x100] sm:$0xff]
    %v1959 = vld [vmem:[#allocation12 + $0x108] sm:$0xff]
    %v1960 = vld [vmem:[#allocation12 + $0x110] sm:$0xff]
    %v1961 = vld [vmem:[#allocation12 + $0x118] sm:$0xff]
    %v1962 = vld [vmem:[#allocation12 + $0x120] sm:$0xff]
    %v1963 = vld [vmem:[#allocation12 + $0x128] sm:$0xff]
    %v1964 = vld [vmem:[#allocation12 + $0x130] sm:$0xff]
    %v1965 = vld [vmem:[#allocation12 + $0x138] sm:$0xff]
    %v1966 = vld [vmem:[#allocation12 + $0x140] sm:$0xff]
    %v1967 = vld [vmem:[#allocation12 + $0x148] sm:$0xff]
    %v1968 = vld [vmem:[#allocation12 + $0x150] sm:$0xff]
    %v1969 = vld [vmem:[#allocation12 + $0x158] sm:$0xff]
    %v1970 = vld [vmem:[#allocation12 + $0x160] sm:$0xff]
    %v1971 = vld [vmem:[#allocation12 + $0x168] sm:$0xff]
    %v1972 = vld [vmem:[#allocation12 + $0x170] sm:$0xff]
    %v1973 = vld [vmem:[#allocation12 + $0x178] sm:$0xff]
    %v1974 = vld [vmem:[#allocation12 + $0x180] sm:$0xff]
    %v1975 = vld [vmem:[#allocation12 + $0x188] sm:$0xff]
    %v1976 = vld [vmem:[#allocation12 + $0x190] sm:$0xff]
    %v1977 = vld [vmem:[#allocation12 + $0x198] sm:$0xff]
    %v1978 = vld [vmem:[#allocation12 + $0x1a0] sm:$0xff]
    %v1979 = vld [vmem:[#allocation12 + $0x1a8] sm:$0xff]
    %v1980 = vld [vmem:[#allocation12 + $0x1b0] sm:$0xff]
    %v1981 = vld [vmem:[#allocation12 + $0x1b8] sm:$0xff]
    %v1982 = vld [vmem:[#allocation12 + $0x1c0] sm:$0xff]
    %v1983 = vld [vmem:[#allocation12 + $0x1c8] sm:$0xff]
    %v1984 = vld [vmem:[#allocation12 + $0x1d0] sm:$0xff]
    %v1985 = vld [vmem:[#allocation12 + $0x1d8] sm:$0xff]
    %v1986 = vld [vmem:[#allocation12 + $0x1e0] sm:$0xff]
    %v1987 = vld [vmem:[#allocation12 + $0x1e8] sm:$0xff]
    %v1988 = vld [vmem:[#allocation12 + $0x1f0] sm:$0xff]
    %v1989 = vld [vmem:[#allocation12 + $0x1f8] sm:$0xff]
    %v1990 = vld [vmem:[#allocation14] sm:$0xff]
    %v1991 = vld [vmem:[#allocation14 + $0x8] sm:$0xff]
    %v1992 = vld [vmem:[#allocation14 + $0x10] sm:$0xff]
    %v1993 = vld [vmem:[#allocation14 + $0x18] sm:$0xff]
    %v1994 = vld [vmem:[#allocation14 + $0x20] sm:$0xff]
    %v1995 = vld [vmem:[#allocation14 + $0x28] sm:$0xff]
    %v1996 = vld [vmem:[#allocation14 + $0x30] sm:$0xff]
    %v1997 = vld [vmem:[#allocation14 + $0x38] sm:$0xff]
    %v1998 = vld [vmem:[#allocation14 + $0x40] sm:$0xff]
    %v1999 = vld [vmem:[#allocation14 + $0x48] sm:$0xff]
    %v2000 = vld [vmem:[#allocation14 + $0x50] sm:$0xff]
    %v2001 = vld [vmem:[#allocation14 + $0x58] sm:$0xff]
    %v2002 = vld [vmem:[#allocation14 + $0x60] sm:$0xff]
    %v2003 = vld [vmem:[#allocation14 + $0x68] sm:$0xff]
    %v2004 = vld [vmem:[#allocation14 + $0x70] sm:$0xff]
    %v2005 = vld [vmem:[#allocation14 + $0x78] sm:$0xff]
    %v2006 = vld [vmem:[#allocation14 + $0x80] sm:$0xff]
    %v2007 = vld [vmem:[#allocation14 + $0x88] sm:$0xff]
    %v2008 = vld [vmem:[#allocation14 + $0x90] sm:$0xff]
    %v2009 = vld [vmem:[#allocation14 + $0x98] sm:$0xff]
    %v2010 = vld [vmem:[#allocation14 + $0xa0] sm:$0xff]
    %v2011 = vld [vmem:[#allocation14 + $0xa8] sm:$0xff]
    %v2012 = vld [vmem:[#allocation14 + $0xb0] sm:$0xff]
    %v2013 = vld [vmem:[#allocation14 + $0xb8] sm:$0xff]
    %v2014 = vld [vmem:[#allocation14 + $0xc0] sm:$0xff]
    %v2015 = vld [vmem:[#allocation14 + $0xc8] sm:$0xff]
    %v2016 = vld [vmem:[#allocation14 + $0xd0] sm:$0xff]
    %v2017 = vld [vmem:[#allocation14 + $0xd8] sm:$0xff]
    %v2018 = vld [vmem:[#allocation14 + $0xe0] sm:$0xff]
    %v2019 = vld [vmem:[#allocation14 + $0xe8] sm:$0xff]
    %v2020 = vld [vmem:[#allocation14 + $0xf0] sm:$0xff]
    %v2021 = vld [vmem:[#allocation14 + $0xf8] sm:$0xff]
    %v2022 = vld [vmem:[#allocation14 + $0x100] sm:$0xff]
    %v2023 = vld [vmem:[#allocation14 + $0x108] sm:$0xff]
    %v2024 = vld [vmem:[#allocation14 + $0x110] sm:$0xff]
    %v2025 = vld [vmem:[#allocation14 + $0x118] sm:$0xff]
    %v2026 = vld [vmem:[#allocation14 + $0x120] sm:$0xff]
    %v2027 = vld [vmem:[#allocation14 + $0x128] sm:$0xff]
    %v2028 = vld [vmem:[#allocation14 + $0x130] sm:$0xff]
    %v2029 = vld [vmem:[#allocation14 + $0x138] sm:$0xff]
    %v2030 = vld [vmem:[#allocation14 + $0x140] sm:$0xff]
    %v2031 = vld [vmem:[#allocation14 + $0x148] sm:$0xff]
    %v2032 = vld [vmem:[#allocation14 + $0x150] sm:$0xff]
    %v2033 = vld [vmem:[#allocation14 + $0x158] sm:$0xff]
    %v2034 = vld [vmem:[#allocation14 + $0x160] sm:$0xff]
    %v2035 = vld [vmem:[#allocation14 + $0x168] sm:$0xff]
    %v2036 = vld [vmem:[#allocation14 + $0x170] sm:$0xff]
    %v2037 = vld [vmem:[#allocation14 + $0x178] sm:$0xff]
    %v2038 = vld [vmem:[#allocation14 + $0x180] sm:$0xff]
    %v2039 = vld [vmem:[#allocation14 + $0x188] sm:$0xff]
    %v2040 = vld [vmem:[#allocation14 + $0x190] sm:$0xff]
    %v2041 = vld [vmem:[#allocation14 + $0x198] sm:$0xff]
    %v2042 = vld [vmem:[#allocation14 + $0x1a0] sm:$0xff]
    %v2043 = vld [vmem:[#allocation14 + $0x1a8] sm:$0xff]
    %v2044 = vld [vmem:[#allocation14 + $0x1b0] sm:$0xff]
    %v2045 = vld [vmem:[#allocation14 + $0x1b8] sm:$0xff]
    %v2046 = vld [vmem:[#allocation14 + $0x1c0] sm:$0xff]
    %v2047 = vld [vmem:[#allocation14 + $0x1c8] sm:$0xff]
    %v2048 = vld [vmem:[#allocation14 + $0x1d0] sm:$0xff]
    %v2049 = vld [vmem:[#allocation14 + $0x1d8] sm:$0xff]
    %v2050 = vld [vmem:[#allocation14 + $0x1e0] sm:$0xff]
    %v2051 = vld [vmem:[#allocation14 + $0x1e8] sm:$0xff]
    %v2052 = vld [vmem:[#allocation14 + $0x1f0] sm:$0xff]
    %v2053 = vld [vmem:[#allocation14 + $0x1f8] sm:$0xff]
    %v2054 = vld [vmem:[%s6] sm:$0xf]
    %v2055 = vld [vmem:[#allocation4] sm:$0xff]
    %v2056 = vld [vmem:[#allocation4 + $0x8] sm:$0xff]
    %v2057 = vld [vmem:[#allocation4 + $0x10] sm:$0xff]
    %v2058 = vld [vmem:[#allocation4 + $0x18] sm:$0xff]
    %v2059 = vld [vmem:[#allocation4 + $0x20] sm:$0xff]
    %v2060 = vld [vmem:[#allocation4 + $0x28] sm:$0xff]
    %v2061 = vld [vmem:[#allocation4 + $0x30] sm:$0xff]
    %v2062 = vld [vmem:[#allocation4 + $0x38] sm:$0xff]
    %v2064 = vlaneseq
    %v2065 = vshrl.u32 %v2064, 7
    %v2066 = vsub.s32 0, %v2065
    %v2067 = vrot.slane %v2054, %v2066
    %v2068 = vlaneseq
    %v2069 = vshrl.u32 %v2068, 7
    %v2070 = vsub.s32 1, %v2069
    %v2071 = vrot.slane %v2054, %v2070
    %v2072 = vlaneseq
    %v2073 = vshrl.u32 %v2072, 7
    %v2074 = vsub.s32 2, %v2073
    %v2075 = vrot.slane %v2054, %v2074
    %v2076 = vlaneseq
    %v2077 = vshrl.u32 %v2076, 7
    %v2078 = vsub.s32 3, %v2077
    %v2079 = vrot.slane %v2054, %v2078
    %2084 = vmatprep.subr.mxu0 %v1927
    %2085 = vmatpush1.msra.mxu0 %v1926
    %2086 = vmatprep.subr.mxu0 %v1931
    %2087 = vmatpush1.msra.mxu0 %v1930
    %2088 = vmatprep.subr.mxu0 %v1935
    %2089 = vmatpush1.msra.mxu0 %v1934
    %2090 = vmatprep.subr.mxu0 %v1939
    %2091 = vmatpush1.msra.mxu0 %v1938
    %2092 = vmatprep.subr.mxu0 %v1943
    %2093 = vmatpush1.msra.mxu0 %v1942
    %2094 = vmatprep.subr.mxu0 %v1947
    %2095 = vmatpush1.msra.mxu0 %v1946
    %2096 = vmatprep.subr.mxu0 %v1951
    %2097 = vmatpush1.msra.mxu0 %v1950
    %2098 = vmatprep.subr.mxu0 %v1955
    %2099 = vmatpush1.msra.mxu0 %v1954
    %2100 = vmatprep.subr.mxu0 %v1959
    %2101 = vmatpush1.msra.mxu0 %v1958
    %2102 = vmatprep.subr.mxu0 %v1963
    %2103 = vmatpush1.msra.mxu0 %v1962
    %2104 = vmatprep.subr.mxu0 %v1967
    %2105 = vmatpush1.msra.mxu0 %v1966
    %2106 = vmatprep.subr.mxu0 %v1971
    %2107 = vmatpush1.msra.mxu0 %v1970
    %2108 = vmatprep.subr.mxu0 %v1975
    %2109 = vmatpush1.msra.mxu0 %v1974
    %2110 = vmatprep.subr.mxu0 %v1979
    %2111 = vmatpush1.msra.mxu0 %v1978
    %2112 = vmatprep.subr.mxu0 %v1983
    %2113 = vmatpush1.msra.mxu0 %v1982
    %2114 = vmatprep.subr.mxu0 %v1987
    %2115 = vmatpush1.msra.mxu0 %v1986
    %2116 = vmatprep.subr.mxu0 0.0
    %2117 = vmatpush1.msra.mxu0 0.0
    %2118 = vmatprep.subr.mxu0 0.0
    %2119 = vmatpush1.msra.mxu0 0.0
    %2120 = vmatprep.subr.mxu0 0.0
    %2121 = vmatpush1.msra.mxu0 0.0
    %2122 = vmatprep.subr.mxu0 0.0
    %2123 = vmatpush1.msra.mxu0 0.0
    %2124 = vmatprep.subr.mxu0 0.0
    %2125 = vmatpush1.msra.mxu0 0.0
    %2126 = vmatprep.subr.mxu0 0.0
    %2127 = vmatpush1.msra.mxu0 0.0
    %2128 = vmatprep.subr.mxu0 0.0
    %2129 = vmatpush1.msra.mxu0 0.0
    %2130 = vmatprep.subr.mxu0 0.0
    %2131 = vmatpush1.msra.mxu0 0.0
    %2132 = vmatprep.subr.mxu0 0.0
    %2133 = vmatpush1.msra.mxu0 0.0
    %2134 = vmatprep.subr.mxu0 0.0
    %2135 = vmatpush1.msra.mxu0 0.0
    %2136 = vmatprep.subr.mxu0 0.0
    %2137 = vmatpush1.msra.mxu0 0.0
    %2138 = vmatprep.subr.mxu0 0.0
    %2139 = vmatpush1.msra.mxu0 0.0
    %2140 = vmatprep.subr.mxu0 0.0
    %2141 = vmatpush1.msra.mxu0 0.0
    %2142 = vmatprep.subr.mxu0 0.0
    %2143 = vmatpush1.msra.mxu0 0.0
    %2144 = vmatprep.subr.mxu0 0.0
    %2145 = vmatpush1.msra.mxu0 0.0
    %2146 = vmatprep.subr.mxu0 0.0
    %2147 = vmatpush1.msra.mxu0 0.0
    %2148 = vmatprep.mubr.f32.mxu0 0.0
    %2149 = vmatmul.mubr.f32.gmra.mrb[0].mxu0 %v2055
    %v2150 = vpop.f32.mrb[0].mxu0
    %v2151 = vadd.f32 %v2067, %v2150
    %v2152 = vpop.f32.mrb[0].mxu0
    %v2153 = vadd.f32 %v2071, %v2152
    %2154 = vmatprep.mubr.f32.mxu0 0.0
    %2155 = vmatmul.mubr.f32.gmra.mrb[0].mxu0 %v2056
    %v2156 = vpop.f32.mrb[0].mxu0
    %v2157 = vadd.f32 %v2067, %v2156
    %v2158 = vpop.f32.mrb[0].mxu0
    %v2159 = vadd.f32 %v2071, %v2158
    %2160 = vmatprep.mubr.f32.mxu0 0.0
    %2161 = vmatmul.mubr.f32.gmra.mrb[0].mxu0 %v2057
    %v2162 = vpop.f32.mrb[0].mxu0
    %v2163 = vadd.f32 %v2067, %v2162
    %v2164 = vpop.f32.mrb[0].mxu0
    %v2165 = vadd.f32 %v2071, %v2164
    %2166 = vmatprep.mubr.f32.mxu0 0.0
    %2167 = vmatmul.mubr.f32.gmra.mrb[0].mxu0 %v2058
    %v2168 = vpop.f32.mrb[0].mxu0
    %v2169 = vadd.f32 %v2067, %v2168
    %v2170 = vpop.f32.mrb[0].mxu0
    %v2171 = vadd.f32 %v2071, %v2170
    %2172 = vmatprep.mubr.f32.mxu0 0.0
    %2173 = vmatmul.mubr.f32.gmra.mrb[0].mxu0 %v2059
    %v2174 = vpop.f32.mrb[0].mxu0
    %v2175 = vadd.f32 %v2067, %v2174
    %v2176 = vpop.f32.mrb[0].mxu0
    %v2177 = vadd.f32 %v2071, %v2176
    %2178 = vmatprep.mubr.f32.mxu0 0.0
    %2179 = vmatmul.mubr.f32.gmra.mrb[0].mxu0 %v2060
    %v2180 = vpop.f32.mrb[0].mxu0
    %v2181 = vadd.f32 %v2067, %v2180
    %v2182 = vpop.f32.mrb[0].mxu0
    %v2183 = vadd.f32 %v2071, %v2182
    %2184 = vmatprep.mubr.f32.mxu0 0.0
    %2185 = vmatmul.mubr.f32.gmra.mrb[0].mxu0 %v2061
    %v2186 = vpop.f32.mrb[0].mxu0
    %v2187 = vadd.f32 %v2067, %v2186
    %v2188 = vpop.f32.mrb[0].mxu0
    %v2189 = vadd.f32 %v2071, %v2188
    %2190 = vmatprep.mubr.f32.mxu0 0.0
    %2191 = vmatmul.mubr.f32.gmra.mrb[0].mxu0 %v2062
    %v2192 = vpop.f32.mrb[0].mxu0
    %v2193 = vadd.f32 %v2067, %v2192
    %v2194 = vpop.f32.mrb[0].mxu0
    %v2195 = vadd.f32 %v2071, %v2194
    %2196 = vdwg.mxu0
    %2197 = vmatprep.subr.mxu0 %v1929
    %2198 = vmatpush1.msra.mxu0 %v1928
    %2199 = vmatprep.subr.mxu0 %v1933
    %2200 = vmatpush1.msra.mxu0 %v1932
    %2201 = vmatprep.subr.mxu0 %v1937
    %2202 = vmatpush1.msra.mxu0 %v1936
    %2203 = vmatprep.subr.mxu0 %v1941
    %2204 = vmatpush1.msra.mxu0 %v1940
    %2205 = vmatprep.subr.mxu0 %v1945
    %2206 = vmatpush1.msra.mxu0 %v1944
    %2207 = vmatprep.subr.mxu0 %v1949
    %2208 = vmatpush1.msra.mxu0 %v1948
    %2209 = vmatprep.subr.mxu0 %v1953
    %2210 = vmatpush1.msra.mxu0 %v1952
    %2211 = vmatprep.subr.mxu0 %v1957
    %2212 = vmatpush1.msra.mxu0 %v1956
    %2213 = vmatprep.subr.mxu0 %v1961
    %2214 = vmatpush1.msra.mxu0 %v1960
    %2215 = vmatprep.subr.mxu0 %v1965
    %2216 = vmatpush1.msra.mxu0 %v1964
    %2217 = vmatprep.subr.mxu0 %v1969
    %2218 = vmatpush1.msra.mxu0 %v1968
    %2219 = vmatprep.subr.mxu0 %v1973
    %2220 = vmatpush1.msra.mxu0 %v1972
    %2221 = vmatprep.subr.mxu0 %v1977
    %2222 = vmatpush1.msra.mxu0 %v1976
    %2223 = vmatprep.subr.mxu0 %v1981
    %2224 = vmatpush1.msra.mxu0 %v1980
    %2225 = vmatprep.subr.mxu0 %v1985
    %2226 = vmatpush1.msra.mxu0 %v1984
    %2227 = vmatprep.subr.mxu0 %v1989
    %2228 = vmatpush1.msra.mxu0 %v1988
    %2229 = vmatprep.subr.mxu0 0.0
    %2230 = vmatpush1.msra.mxu0 0.0
    %2231 = vmatprep.subr.mxu0 0.0
    %2232 = vmatpush1.msra.mxu0 0.0
    %2233 = vmatprep.subr.mxu0 0.0
    %2234 = vmatpush1.msra.mxu0 0.0
    %2235 = vmatprep.subr.mxu0 0.0
    %2236 = vmatpush1.msra.mxu0 0.0
    %2237 = vmatprep.subr.mxu0 0.0
    %2238 = vmatpush1.msra.mxu0 0.0
    %2239 = vmatprep.subr.mxu0 0.0
    %2240 = vmatpush1.msra.mxu0 0.0
    %2241 = vmatprep.subr.mxu0 0.0
    %2242 = vmatpush1.msra.mxu0 0.0
    %2243 = vmatprep.subr.mxu0 0.0
    %2244 = vmatpush1.msra.mxu0 0.0
    %2245 = vmatprep.subr.mxu0 0.0
    %2246 = vmatpush1.msra.mxu0 0.0
    %2247 = vmatprep.subr.mxu0 0.0
    %2248 = vmatpush1.msra.mxu0 0.0
    %2249 = vmatprep.subr.mxu0 0.0
    %2250 = vmatpush1.msra.mxu0 0.0
    %2251 = vmatprep.subr.mxu0 0.0
    %2252 = vmatpush1.msra.mxu0 0.0
    %2253 = vmatprep.subr.mxu0 0.0
    %2254 = vmatpush1.msra.mxu0 0.0
    %2255 = vmatprep.subr.mxu0 0.0
    %2256 = vmatpush1.msra.mxu0 0.0
    %2257 = vmatprep.subr.mxu0 0.0
    %2258 = vmatpush1.msra.mxu0 0.0
    %2259 = vmatprep.subr.mxu0 0.0
    %2260 = vmatpush1.msra.mxu0 0.0
    %2261 = vmatprep.mubr.f32.mxu0 0.0
    %2262 = vmatmul.mubr.f32.gmra.mrb[0].mxu0 %v2055
    %v2263 = vpop.f32.mrb[0].mxu0
    %v2264 = vadd.f32 %v2075, %v2263
    %v2265 = vpop.f32.mrb[0].mxu0
    %v2266 = vadd.f32 %v2079, %v2265
    %2267 = vmatprep.mubr.f32.mxu0 0.0
    %2268 = vmatmul.mubr.f32.gmra.mrb[0].mxu0 %v2056
    %v2269 = vpop.f32.mrb[0].mxu0
    %v2270 = vadd.f32 %v2075, %v2269
    %v2271 = vpop.f32.mrb[0].mxu0
    %v2272 = vadd.f32 %v2079, %v2271
    %2273 = vmatprep.mubr.f32.mxu0 0.0
    %2274 = vmatmul.mubr.f32.gmra.mrb[0].mxu0 %v2057
    %v2275 = vpop.f32.mrb[0].mxu0
    %v2276 = vadd.f32 %v2075, %v2275
    %v2277 = vpop.f32.mrb[0].mxu0
    %v2278 = vadd.f32 %v2079, %v2277
    %2279 = vmatprep.mubr.f32.mxu0 0.0
    %2280 = vmatmul.mubr.f32.gmra.mrb[0].mxu0 %v2058
    %v2281 = vpop.f32.mrb[0].mxu0
    %v2282 = vadd.f32 %v2075, %v2281
    %v2283 = vpop.f32.mrb[0].mxu0
    %v2284 = vadd.f32 %v2079, %v2283
    %2285 = vmatprep.mubr.f32.mxu0 0.0
    %2286 = vmatmul.mubr.f32.gmra.mrb[0].mxu0 %v2059
    %v2287 = vpop.f32.mrb[0].mxu0
    %v2288 = vadd.f32 %v2075, %v2287
    %v2289 = vpop.f32.mrb[0].mxu0
    %v2290 = vadd.f32 %v2079, %v2289
    %2291 = vmatprep.mubr.f32.mxu0 0.0
    %2292 = vmatmul.mubr.f32.gmra.mrb[0].mxu0 %v2060
    %v2293 = vpop.f32.mrb[0].mxu0
    %v2294 = vadd.f32 %v2075, %v2293
    %v2295 = vpop.f32.mrb[0].mxu0
    %v2296 = vadd.f32 %v2079, %v2295
    %2297 = vmatprep.mubr.f32.mxu0 0.0
    %2298 = vmatmul.mubr.f32.gmra.mrb[0].mxu0 %v2061
    %v2299 = vpop.f32.mrb[0].mxu0
    %v2300 = vadd.f32 %v2075, %v2299
    %v2301 = vpop.f32.mrb[0].mxu0
    %v2302 = vadd.f32 %v2079, %v2301
    %2303 = vmatprep.mubr.f32.mxu0 0.0
    %2304 = vmatmul.mubr.f32.gmra.mrb[0].mxu0 %v2062
    %v2305 = vpop.f32.mrb[0].mxu0
    %v2306 = vadd.f32 %v2075, %v2305
    %v2307 = vpop.f32.mrb[0].mxu0
    %v2308 = vadd.f32 %v2079, %v2307
    %2309 = vdwg.mxu0
    %2310 = vst [vmem:[#allocation5] sm:$0xff] %v2151
    %2311 = vst [vmem:[#allocation5 + $0x8] sm:$0xff] %v2153
    %2312 = vst [vmem:[#allocation5 + $0x10] sm:$0xff] %v2264
    %2313 = vst [vmem:[#allocation5 + $0x18] sm:$0xff] %v2266
    %2314 = vst [vmem:[#allocation5 + $0x20] sm:$0xff] %v2157
    %2315 = vst [vmem:[#allocation5 + $0x28] sm:$0xff] %v2159
    %2316 = vst [vmem:[#allocation5 + $0x30] sm:$0xff] %v2270
    %2317 = vst [vmem:[#allocation5 + $0x38] sm:$0xff] %v2272
    %2318 = vst [vmem:[#allocation5 + $0x40] sm:$0xff] %v2163
    %2319 = vst [vmem:[#allocation5 + $0x48] sm:$0xff] %v2165
    %2320 = vst [vmem:[#allocation5 + $0x50] sm:$0xff] %v2276
    %2321 = vst [vmem:[#allocation5 + $0x58] sm:$0xff] %v2278
    %2322 = vst [vmem:[#allocation5 + $0x60] sm:$0xff] %v2169
    %2323 = vst [vmem:[#allocation5 + $0x68] sm:$0xff] %v2171
    %2324 = vst [vmem:[#allocation5 + $0x70] sm:$0xff] %v2282
    %2325 = vst [vmem:[#allocation5 + $0x78] sm:$0xff] %v2284
    %2326 = vst [vmem:[#allocation5 + $0x80] sm:$0xff] %v2175
    %2327 = vst [vmem:[#allocation5 + $0x88] sm:$0xff] %v2177
    %2328 = vst [vmem:[#allocation5 + $0x90] sm:$0xff] %v2288
    %2329 = vst [vmem:[#allocation5 + $0x98] sm:$0xff] %v2290
    %2330 = vst [vmem:[#allocation5 + $0xa0] sm:$0xff] %v2181
    %2331 = vst [vmem:[#allocation5 + $0xa8] sm:$0xff] %v2183
    %2332 = vst [vmem:[#allocation5 + $0xb0] sm:$0xff] %v2294
    %2333 = vst [vmem:[#allocation5 + $0xb8] sm:$0xff] %v2296
    %2334 = vst [vmem:[#allocation5 + $0xc0] sm:$0xff] %v2187
    %2335 = vst [vmem:[#allocation5 + $0xc8] sm:$0xff] %v2189
    %2336 = vst [vmem:[#allocation5 + $0xd0] sm:$0xff] %v2300
    %2337 = vst [vmem:[#allocation5 + $0xd8] sm:$0xff] %v2302
    %2338 = vst [vmem:[#allocation5 + $0xe0] sm:$0xff] %v2193
    %2339 = vst [vmem:[#allocation5 + $0xe8] sm:$0xff] %v2195
    %2340 = vst [vmem:[#allocation5 + $0xf0] sm:$0xff] %v2306
    %2341 = vst [vmem:[#allocation5 + $0xf8] sm:$0xff] %v2308
    %s2342 = scalar_lea.vmem [#allocation2], 8
    %v2343 = vld [vmem:[%s2342] sm:$0xff]
    %s2344 = scalar_lea.vmem [#allocation3], 8
    %v2345 = vld [vmem:[%s2344] sm:$0xff]
    %v2346 = vld [vmem:[#allocation5] sm:$0xff]
    %v2347 = vld [vmem:[#allocation5 + $0x8] sm:$0xff]
    %v2348 = vld [vmem:[#allocation5 + $0x10] sm:$0xff]
    %v2349 = vld [vmem:[#allocation5 + $0x18] sm:$0xff]
    %2350 = vmatprep.subr.mxu0 %v1991
    %2351 = vmatpush1.msra.mxu0 %v1990
    %2352 = vmatprep.subr.mxu0 %v1995
    %2353 = vmatpush1.msra.mxu0 %v1994
    %2354 = vmatprep.subr.mxu0 %v1999
    %2355 = vmatpush1.msra.mxu0 %v1998
    %2356 = vmatprep.subr.mxu0 %v2003
    %2357 = vmatpush1.msra.mxu0 %v2002
    %2358 = vmatprep.subr.mxu0 %v2007
    %2359 = vmatpush1.msra.mxu0 %v2006
    %2360 = vmatprep.subr.mxu0 %v2011
    %2361 = vmatpush1.msra.mxu0 %v2010
    %2362 = vmatprep.subr.mxu0 %v2015
    %2363 = vmatpush1.msra.mxu0 %v2014
    %2364 = vmatprep.subr.mxu0 %v2019
    %2365 = vmatpush1.msra.mxu0 %v2018
    %2366 = vmatprep.subr.mxu0 %v2023
    %2367 = vmatpush1.msra.mxu0 %v2022
    %2368 = vmatprep.subr.mxu0 %v2027
    %2369 = vmatpush1.msra.mxu0 %v2026
    %2370 = vmatprep.subr.mxu0 %v2031
    %2371 = vmatpush1.msra.mxu0 %v2030
    %2372 = vmatprep.subr.mxu0 %v2035
    %2373 = vmatpush1.msra.mxu0 %v2034
    %2374 = vmatprep.subr.mxu0 %v2039
    %2375 = vmatpush1.msra.mxu0 %v2038
    %2376 = vmatprep.subr.mxu0 %v2043
    %2377 = vmatpush1.msra.mxu0 %v2042
    %2378 = vmatprep.subr.mxu0 %v2047
    %2379 = vmatpush1.msra.mxu0 %v2046
    %2380 = vmatprep.subr.mxu0 %v2051
    %2381 = vmatpush1.msra.mxu0 %v2050
    %2382 = vmatprep.subr.mxu0 0.0
    %2383 = vmatpush1.msra.mxu0 0.0
    %2384 = vmatprep.subr.mxu0 0.0
    %2385 = vmatpush1.msra.mxu0 0.0
    %2386 = vmatprep.subr.mxu0 0.0
    %2387 = vmatpush1.msra.mxu0 0.0
    %2388 = vmatprep.subr.mxu0 0.0
    %2389 = vmatpush1.msra.mxu0 0.0
    %2390 = vmatprep.subr.mxu0 0.0
    %2391 = vmatpush1.msra.mxu0 0.0
    %2392 = vmatprep.subr.mxu0 0.0
    %2393 = vmatpush1.msra.mxu0 0.0
    %2394 = vmatprep.subr.mxu0 0.0
    %2395 = vmatpush1.msra.mxu0 0.0
    %2396 = vmatprep.subr.mxu0 0.0
    %2397 = vmatpush1.msra.mxu0 0.0
    %2398 = vmatprep.subr.mxu0 0.0
    %2399 = vmatpush1.msra.mxu0 0.0
    %2400 = vmatprep.subr.mxu0 0.0
    %2401 = vmatpush1.msra.mxu0 0.0
    %2402 = vmatprep.subr.mxu0 0.0
    %2403 = vmatpush1.msra.mxu0 0.0
    %2404 = vmatprep.subr.mxu0 0.0
    %2405 = vmatpush1.msra.mxu0 0.0
    %2406 = vmatprep.subr.mxu0 0.0
    %2407 = vmatpush1.msra.mxu0 0.0
    %2408 = vmatprep.subr.mxu0 0.0
    %2409 = vmatpush1.msra.mxu0 0.0
    %2410 = vmatprep.subr.mxu0 0.0
    %2411 = vmatpush1.msra.mxu0 0.0
    %2412 = vmatprep.subr.mxu0 0.0
    %2413 = vmatpush1.msra.mxu0 0.0
    %2414 = vmatprep.mubr.f32.mxu0 0.0
    %2415 = vmatmul.mubr.f32.gmra.mrb[0].mxu0 %v2343
    %v2416 = vpop.f32.mrb[0].mxu0
    %v2417 = vadd.f32 0.0, %v2416
    %v2418 = vpop.f32.mrb[0].mxu0
    %v2419 = vadd.f32 0.0, %v2418
    %2420 = vdwg.mxu0
    %2421 = vmatprep.subr.mxu0 %v1993
    %2422 = vmatpush1.msra.mxu0 %v1992
    %2423 = vmatprep.subr.mxu0 %v1997
    %2424 = vmatpush1.msra.mxu0 %v1996
    %2425 = vmatprep.subr.mxu0 %v2001
    %2426 = vmatpush1.msra.mxu0 %v2000
    %2427 = vmatprep.subr.mxu0 %v2005
    %2428 = vmatpush1.msra.mxu0 %v2004
    %2429 = vmatprep.subr.mxu0 %v2009
    %2430 = vmatpush1.msra.mxu0 %v2008
    %2431 = vmatprep.subr.mxu0 %v2013
    %2432 = vmatpush1.msra.mxu0 %v2012
    %2433 = vmatprep.subr.mxu0 %v2017
    %2434 = vmatpush1.msra.mxu0 %v2016
    %2435 = vmatprep.subr.mxu0 %v2021
    %2436 = vmatpush1.msra.mxu0 %v2020
    %2437 = vmatprep.subr.mxu0 %v2025
    %2438 = vmatpush1.msra.mxu0 %v2024
    %2439 = vmatprep.subr.mxu0 %v2029
    %2440 = vmatpush1.msra.mxu0 %v2028
    %2441 = vmatprep.subr.mxu0 %v2033
    %2442 = vmatpush1.msra.mxu0 %v2032
    %2443 = vmatprep.subr.mxu0 %v2037
    %2444 = vmatpush1.msra.mxu0 %v2036
    %2445 = vmatprep.subr.mxu0 %v2041
    %2446 = vmatpush1.msra.mxu0 %v2040
    %2447 = vmatprep.subr.mxu0 %v2045
    %2448 = vmatpush1.msra.mxu0 %v2044
    %2449 = vmatprep.subr.mxu0 %v2049
    %2450 = vmatpush1.msra.mxu0 %v2048
    %2451 = vmatprep.subr.mxu0 %v2053
    %2452 = vmatpush1.msra.mxu0 %v2052
    %2453 = vmatprep.subr.mxu0 0.0
    %2454 = vmatpush1.msra.mxu0 0.0
    %2455 = vmatprep.subr.mxu0 0.0
    %2456 = vmatpush1.msra.mxu0 0.0
    %2457 = vmatprep.subr.mxu0 0.0
    %2458 = vmatpush1.msra.mxu0 0.0
    %2459 = vmatprep.subr.mxu0 0.0
    %2460 = vmatpush1.msra.mxu0 0.0
    %2461 = vmatprep.subr.mxu0 0.0
    %2462 = vmatpush1.msra.mxu0 0.0
    %2463 = vmatprep.subr.mxu0 0.0
    %2464 = vmatpush1.msra.mxu0 0.0
    %2465 = vmatprep.subr.mxu0 0.0
    %2466 = vmatpush1.msra.mxu0 0.0
    %2467 = vmatprep.subr.mxu0 0.0
    %2468 = vmatpush1.msra.mxu0 0.0
    %2469 = vmatprep.subr.mxu0 0.0
    %2470 = vmatpush1.msra.mxu0 0.0
    %2471 = vmatprep.subr.mxu0 0.0
    %2472 = vmatpush1.msra.mxu0 0.0
    %2473 = vmatprep.subr.mxu0 0.0
    %2474 = vmatpush1.msra.mxu0 0.0
    %2475 = vmatprep.subr.mxu0 0.0
    %2476 = vmatpush1.msra.mxu0 0.0
    %2477 = vmatprep.subr.mxu0 0.0
    %2478 = vmatpush1.msra.mxu0 0.0
    %2479 = vmatprep.subr.mxu0 0.0
    %2480 = vmatpush1.msra.mxu0 0.0
    %2481 = vmatprep.subr.mxu0 0.0
    %2482 = vmatpush1.msra.mxu0 0.0
    %2483 = vmatprep.subr.mxu0 0.0
    %2484 = vmatpush1.msra.mxu0 0.0
    %2485 = vmatprep.mubr.f32.mxu0 0.0
    %2486 = vmatmul.mubr.f32.gmra.mrb[0].mxu0 %v2343
    %v2487 = vpop.f32.mrb[0].mxu0
    %v2488 = vadd.f32 0.0, %v2487
    %v2489 = vpop.f32.mrb[0].mxu0
    %v2490 = vadd.f32 0.0, %v2489
    %2491 = vdwg.mxu0
    %v2492 = vadd.f32 %v2346, %v2417
    %v2493 = vadd.f32 %v2347, %v2419
    %v2494 = vadd.f32 %v2348, %v2488
    %v2495 = vadd.f32 %v2349, %v2490
    %v2496 = vxor.u32 %v2492, 2147483648
    %v2497 = vmul.f32 %v2496, 1.442695
    %v2498 = vpow.pop %v2497
    %v2499 = vadd.f32 %v2498, 1.0
    %v2500 = vrcp.pop %v2499
    %v2501 = vmul.f32 1.0, %v2500
    %v2502 = vxor.u32 %v2493, 2147483648
    %v2503 = vmul.f32 %v2502, 1.442695
    %v2504 = vpow.pop %v2503
    %v2505 = vadd.f32 %v2504, 1.0
    %v2506 = vrcp.pop %v2505
    %v2507 = vmul.f32 1.0, %v2506
    %v2508 = vtanh.pop %v2494
    %v2509 = vxor.u32 %v2495, 2147483648
    %v2510 = vmul.f32 %v2509, 1.442695
    %v2511 = vpow.pop %v2510
    %v2512 = vadd.f32 %v2511, 1.0
    %v2513 = vrcp.pop %v2512
    %v2514 = vmul.f32 1.0, %v2513
    %v2515 = vmul.f32 %v2507, %v2345
    %v2516 = vmul.f32 %v2501, %v2508
    %v2517 = vadd.f32 %v2515, %v2516
    %v2518 = vtanh.pop %v2517
    %v2519 = vmul.f32 %v2514, %v2518
    %2520 = vst [vmem:[#allocation4] sm:$0xff] %v2519
    %v2521 = vld [vmem:[%s685] sm:$0xff]
    %v2522 = vld [vmem:[%s685 + $0x8] sm:$0xff]
    %v2523 = vld [vmem:[%s685 + $0x10] sm:$0xff]
    %v2524 = vld [vmem:[%s685 + $0x18] sm:$0xff]
    %2525 = vmatprep.subr.mxu0 %v1991
    %2526 = vmatpush1.msra.mxu0 %v1990
    %2527 = vmatprep.subr.mxu0 %v1995
    %2528 = vmatpush1.msra.mxu0 %v1994
    %2529 = vmatprep.subr.mxu0 %v1999
    %2530 = vmatpush1.msra.mxu0 %v1998
    %2531 = vmatprep.subr.mxu0 %v2003
    %2532 = vmatpush1.msra.mxu0 %v2002
    %2533 = vmatprep.subr.mxu0 %v2007
    %2534 = vmatpush1.msra.mxu0 %v2006
    %2535 = vmatprep.subr.mxu0 %v2011
    %2536 = vmatpush1.msra.mxu0 %v2010
    %2537 = vmatprep.subr.mxu0 %v2015
    %2538 = vmatpush1.msra.mxu0 %v2014
    %2539 = vmatprep.subr.mxu0 %v2019
    %2540 = vmatpush1.msra.mxu0 %v2018
    %2541 = vmatprep.subr.mxu0 %v2023
    %2542 = vmatpush1.msra.mxu0 %v2022
    %2543 = vmatprep.subr.mxu0 %v2027
    %2544 = vmatpush1.msra.mxu0 %v2026
    %2545 = vmatprep.subr.mxu0 %v2031
    %2546 = vmatpush1.msra.mxu0 %v2030
    %2547 = vmatprep.subr.mxu0 %v2035
    %2548 = vmatpush1.msra.mxu0 %v2034
    %2549 = vmatprep.subr.mxu0 %v2039
    %2550 = vmatpush1.msra.mxu0 %v2038
    %2551 = vmatprep.subr.mxu0 %v2043
    %2552 = vmatpush1.msra.mxu0 %v2042
    %2553 = vmatprep.subr.mxu0 %v2047
    %2554 = vmatpush1.msra.mxu0 %v2046
    %2555 = vmatprep.subr.mxu0 %v2051
    %2556 = vmatpush1.msra.mxu0 %v2050
    %2557 = vmatprep.subr.mxu0 0.0
    %2558 = vmatpush1.msra.mxu0 0.0
    %2559 = vmatprep.subr.mxu0 0.0
    %2560 = vmatpush1.msra.mxu0 0.0
    %2561 = vmatprep.subr.mxu0 0.0
    %2562 = vmatpush1.msra.mxu0 0.0
    %2563 = vmatprep.subr.mxu0 0.0
    %2564 = vmatpush1.msra.mxu0 0.0
    %2565 = vmatprep.subr.mxu0 0.0
    %2566 = vmatpush1.msra.mxu0 0.0
    %2567 = vmatprep.subr.mxu0 0.0
    %2568 = vmatpush1.msra.mxu0 0.0
    %2569 = vmatprep.subr.mxu0 0.0
    %2570 = vmatpush1.msra.mxu0 0.0
    %2571 = vmatprep.subr.mxu0 0.0
    %2572 = vmatpush1.msra.mxu0 0.0
    %2573 = vmatprep.subr.mxu0 0.0
    %2574 = vmatpush1.msra.mxu0 0.0
    %2575 = vmatprep.subr.mxu0 0.0
    %2576 = vmatpush1.msra.mxu0 0.0
    %2577 = vmatprep.subr.mxu0 0.0
    %2578 = vmatpush1.msra.mxu0 0.0
    %2579 = vmatprep.subr.mxu0 0.0
    %2580 = vmatpush1.msra.mxu0 0.0
    %2581 = vmatprep.subr.mxu0 0.0
    %2582 = vmatpush1.msra.mxu0 0.0
    %2583 = vmatprep.subr.mxu0 0.0
    %2584 = vmatpush1.msra.mxu0 0.0
    %2585 = vmatprep.subr.mxu0 0.0
    %2586 = vmatpush1.msra.mxu0 0.0
    %2587 = vmatprep.subr.mxu0 0.0
    %2588 = vmatpush1.msra.mxu0 0.0
    %2589 = vmatprep.mubr.f32.mxu0 0.0
    %2590 = vmatmul.mubr.f32.gmra.mrb[0].mxu0 %v2519
    %v2591 = vpop.f32.mrb[0].mxu0
    %v2592 = vadd.f32 0.0, %v2591
    %v2593 = vpop.f32.mrb[0].mxu0
    %v2594 = vadd.f32 0.0, %v2593
    %2595 = vdwg.mxu0
    %2596 = vmatprep.subr.mxu0 %v1993
    %2597 = vmatpush1.msra.mxu0 %v1992
    %2598 = vmatprep.subr.mxu0 %v1997
    %2599 = vmatpush1.msra.mxu0 %v1996
    %2600 = vmatprep.subr.mxu0 %v2001
    %2601 = vmatpush1.msra.mxu0 %v2000
    %2602 = vmatprep.subr.mxu0 %v2005
    %2603 = vmatpush1.msra.mxu0 %v2004
    %2604 = vmatprep.subr.mxu0 %v2009
    %2605 = vmatpush1.msra.mxu0 %v2008
    %2606 = vmatprep.subr.mxu0 %v2013
    %2607 = vmatpush1.msra.mxu0 %v2012
    %2608 = vmatprep.subr.mxu0 %v2017
    %2609 = vmatpush1.msra.mxu0 %v2016
    %2610 = vmatprep.subr.mxu0 %v2021
    %2611 = vmatpush1.msra.mxu0 %v2020
    %2612 = vmatprep.subr.mxu0 %v2025
    %2613 = vmatpush1.msra.mxu0 %v2024
    %2614 = vmatprep.subr.mxu0 %v2029
    %2615 = vmatpush1.msra.mxu0 %v2028
    %2616 = vmatprep.subr.mxu0 %v2033
    %2617 = vmatpush1.msra.mxu0 %v2032
    %2618 = vmatprep.subr.mxu0 %v2037
    %2619 = vmatpush1.msra.mxu0 %v2036
    %2620 = vmatprep.subr.mxu0 %v2041
    %2621 = vmatpush1.msra.mxu0 %v2040
    %2622 = vmatprep.subr.mxu0 %v2045
    %2623 = vmatpush1.msra.mxu0 %v2044
    %2624 = vmatprep.subr.mxu0 %v2049
    %2625 = vmatpush1.msra.mxu0 %v2048
    %2626 = vmatprep.subr.mxu0 %v2053
    %2627 = vmatpush1.msra.mxu0 %v2052
    %2628 = vmatprep.subr.mxu0 0.0
    %2629 = vmatpush1.msra.mxu0 0.0
    %2630 = vmatprep.subr.mxu0 0.0
    %2631 = vmatpush1.msra.mxu0 0.0
    %2632 = vmatprep.subr.mxu0 0.0
    %2633 = vmatpush1.msra.mxu0 0.0
    %2634 = vmatprep.subr.mxu0 0.0
    %2635 = vmatpush1.msra.mxu0 0.0
    %2636 = vmatprep.subr.mxu0 0.0
    %2637 = vmatpush1.msra.mxu0 0.0
    %2638 = vmatprep.subr.mxu0 0.0
    %2639 = vmatpush1.msra.mxu0 0.0
    %2640 = vmatprep.subr.mxu0 0.0
    %2641 = vmatpush1.msra.mxu0 0.0
    %2642 = vmatprep.subr.mxu0 0.0
    %2643 = vmatpush1.msra.mxu0 0.0
    %2644 = vmatprep.subr.mxu0 0.0
    %2645 = vmatpush1.msra.mxu0 0.0
    %2646 = vmatprep.subr.mxu0 0.0
    %2647 = vmatpush1.msra.mxu0 0.0
    %2648 = vmatprep.subr.mxu0 0.0
    %2649 = vmatpush1.msra.mxu0 0.0
    %2650 = vmatprep.subr.mxu0 0.0
    %2651 = vmatpush1.msra.mxu0 0.0
    %2652 = vmatprep.subr.mxu0 0.0
    %2653 = vmatpush1.msra.mxu0 0.0
    %2654 = vmatprep.subr.mxu0 0.0
    %2655 = vmatpush1.msra.mxu0 0.0
    %2656 = vmatprep.subr.mxu0 0.0
    %2657 = vmatpush1.msra.mxu0 0.0
    %2658 = vmatprep.subr.mxu0 0.0
    %2659 = vmatpush1.msra.mxu0 0.0
    %2660 = vmatprep.mubr.f32.mxu0 0.0
    %2661 = vmatmul.mubr.f32.gmra.mrb[0].mxu0 %v2519
    %v2662 = vpop.f32.mrb[0].mxu0
    %v2663 = vadd.f32 0.0, %v2662
    %v2664 = vpop.f32.mrb[0].mxu0
    %v2665 = vadd.f32 0.0, %v2664
    %2666 = vdwg.mxu0
    %v2667 = vadd.f32 %v2521, %v2592
    %v2668 = vadd.f32 %v2522, %v2594
    %v2669 = vadd.f32 %v2523, %v2663
    %v2670 = vadd.f32 %v2524, %v2665
    %v2671 = vxor.u32 %v2667, 2147483648
    %v2672 = vmul.f32 %v2671, 1.442695
    %v2673 = vpow.pop %v2672
    %v2674 = vadd.f32 %v2673, 1.0
    %v2675 = vrcp.pop %v2674
    %v2676 = vmul.f32 1.0, %v2675
    %v2677 = vxor.u32 %v2668, 2147483648
    %v2678 = vmul.f32 %v2677, 1.442695
    %v2679 = vpow.pop %v2678
    %v2680 = vadd.f32 %v2679, 1.0
    %v2681 = vrcp.pop %v2680
    %v2682 = vmul.f32 1.0, %v2681
    %v2683 = vtanh.pop %v2669
    %v2684 = vxor.u32 %v2670, 2147483648
    %v2685 = vmul.f32 %v2684, 1.442695
    %v2686 = vpow.pop %v2685
    %v2687 = vadd.f32 %v2686, 1.0
    %v2688 = vrcp.pop %v2687
    %v2689 = vmul.f32 1.0, %v2688
    %v2690 = vmul.f32 %v2682, %v2517
    %v2691 = vmul.f32 %v2676, %v2683
    %v2692 = vadd.f32 %v2690, %v2691
    %v2693 = vtanh.pop %v2692
    %v2694 = vmul.f32 %v2689, %v2693
    %2695 = vst [vmem:[%s860] sm:$0xff] %v2694
    %v2696 = vld [vmem:[%s862] sm:$0xff]
    %v2697 = vld [vmem:[%s862 + $0x8] sm:$0xff]
    %v2698 = vld [vmem:[%s862 + $0x10] sm:$0xff]
    %v2699 = vld [vmem:[%s862 + $0x18] sm:$0xff]
    %2700 = vmatprep.subr.mxu0 %v1991
    %2701 = vmatpush1.msra.mxu0 %v1990
    %2702 = vmatprep.subr.mxu0 %v1995
    %2703 = vmatpush1.msra.mxu0 %v1994
    %2704 = vmatprep.subr.mxu0 %v1999
    %2705 = vmatpush1.msra.mxu0 %v1998
    %2706 = vmatprep.subr.mxu0 %v2003
    %2707 = vmatpush1.msra.mxu0 %v2002
    %2708 = vmatprep.subr.mxu0 %v2007
    %2709 = vmatpush1.msra.mxu0 %v2006
    %2710 = vmatprep.subr.mxu0 %v2011
    %2711 = vmatpush1.msra.mxu0 %v2010
    %2712 = vmatprep.subr.mxu0 %v2015
    %2713 = vmatpush1.msra.mxu0 %v2014
    %2714 = vmatprep.subr.mxu0 %v2019
    %2715 = vmatpush1.msra.mxu0 %v2018
    %2716 = vmatprep.subr.mxu0 %v2023
    %2717 = vmatpush1.msra.mxu0 %v2022
    %2718 = vmatprep.subr.mxu0 %v2027
    %2719 = vmatpush1.msra.mxu0 %v2026
    %2720 = vmatprep.subr.mxu0 %v2031
    %2721 = vmatpush1.msra.mxu0 %v2030
    %2722 = vmatprep.subr.mxu0 %v2035
    %2723 = vmatpush1.msra.mxu0 %v2034
    %2724 = vmatprep.subr.mxu0 %v2039
    %2725 = vmatpush1.msra.mxu0 %v2038
    %2726 = vmatprep.subr.mxu0 %v2043
    %2727 = vmatpush1.msra.mxu0 %v2042
    %2728 = vmatprep.subr.mxu0 %v2047
    %2729 = vmatpush1.msra.mxu0 %v2046
    %2730 = vmatprep.subr.mxu0 %v2051
    %2731 = vmatpush1.msra.mxu0 %v2050
    %2732 = vmatprep.subr.mxu0 0.0
    %2733 = vmatpush1.msra.mxu0 0.0
    %2734 = vmatprep.subr.mxu0 0.0
    %2735 = vmatpush1.msra.mxu0 0.0
    %2736 = vmatprep.subr.mxu0 0.0
    %2737 = vmatpush1.msra.mxu0 0.0
    %2738 = vmatprep.subr.mxu0 0.0
    %2739 = vmatpush1.msra.mxu0 0.0
    %2740 = vmatprep.subr.mxu0 0.0
    %2741 = vmatpush1.msra.mxu0 0.0
    %2742 = vmatprep.subr.mxu0 0.0
    %2743 = vmatpush1.msra.mxu0 0.0
    %2744 = vmatprep.subr.mxu0 0.0
    %2745 = vmatpush1.msra.mxu0 0.0
    %2746 = vmatprep.subr.mxu0 0.0
    %2747 = vmatpush1.msra.mxu0 0.0
    %2748 = vmatprep.subr.mxu0 0.0
    %2749 = vmatpush1.msra.mxu0 0.0
    %2750 = vmatprep.subr.mxu0 0.0
    %2751 = vmatpush1.msra.mxu0 0.0
    %2752 = vmatprep.subr.mxu0 0.0
    %2753 = vmatpush1.msra.mxu0 0.0
    %2754 = vmatprep.subr.mxu0 0.0
    %2755 = vmatpush1.msra.mxu0 0.0
    %2756 = vmatprep.subr.mxu0 0.0
    %2757 = vmatpush1.msra.mxu0 0.0
    %2758 = vmatprep.subr.mxu0 0.0
    %2759 = vmatpush1.msra.mxu0 0.0
    %2760 = vmatprep.subr.mxu0 0.0
    %2761 = vmatpush1.msra.mxu0 0.0
    %2762 = vmatprep.subr.mxu0 0.0
    %2763 = vmatpush1.msra.mxu0 0.0
    %2764 = vmatprep.mubr.f32.mxu0 0.0
    %2765 = vmatmul.mubr.f32.gmra.mrb[0].mxu0 %v2694
    %v2766 = vpop.f32.mrb[0].mxu0
    %v2767 = vadd.f32 0.0, %v2766
    %v2768 = vpop.f32.mrb[0].mxu0
    %v2769 = vadd.f32 0.0, %v2768
    %2770 = vdwg.mxu0
    %2771 = vmatprep.subr.mxu0 %v1993
    %2772 = vmatpush1.msra.mxu0 %v1992
    %2773 = vmatprep.subr.mxu0 %v1997
    %2774 = vmatpush1.msra.mxu0 %v1996
    %2775 = vmatprep.subr.mxu0 %v2001
    %2776 = vmatpush1.msra.mxu0 %v2000
    %2777 = vmatprep.subr.mxu0 %v2005
    %2778 = vmatpush1.msra.mxu0 %v2004
    %2779 = vmatprep.subr.mxu0 %v2009
    %2780 = vmatpush1.msra.mxu0 %v2008
    %2781 = vmatprep.subr.mxu0 %v2013
    %2782 = vmatpush1.msra.mxu0 %v2012
    %2783 = vmatprep.subr.mxu0 %v2017
    %2784 = vmatpush1.msra.mxu0 %v2016
    %2785 = vmatprep.subr.mxu0 %v2021
    %2786 = vmatpush1.msra.mxu0 %v2020
    %2787 = vmatprep.subr.mxu0 %v2025
    %2788 = vmatpush1.msra.mxu0 %v2024
    %2789 = vmatprep.subr.mxu0 %v2029
    %2790 = vmatpush1.msra.mxu0 %v2028
    %2791 = vmatprep.subr.mxu0 %v2033
    %2792 = vmatpush1.msra.mxu0 %v2032
    %2793 = vmatprep.subr.mxu0 %v2037
    %2794 = vmatpush1.msra.mxu0 %v2036
    %2795 = vmatprep.subr.mxu0 %v2041
    %2796 = vmatpush1.msra.mxu0 %v2040
    %2797 = vmatprep.subr.mxu0 %v2045
    %2798 = vmatpush1.msra.mxu0 %v2044
    %2799 = vmatprep.subr.mxu0 %v2049
    %2800 = vmatpush1.msra.mxu0 %v2048
    %2801 = vmatprep.subr.mxu0 %v2053
    %2802 = vmatpush1.msra.mxu0 %v2052
    %2803 = vmatprep.subr.mxu0 0.0
    %2804 = vmatpush1.msra.mxu0 0.0
    %2805 = vmatprep.subr.mxu0 0.0
    %2806 = vmatpush1.msra.mxu0 0.0
    %2807 = vmatprep.subr.mxu0 0.0
    %2808 = vmatpush1.msra.mxu0 0.0
    %2809 = vmatprep.subr.mxu0 0.0
    %2810 = vmatpush1.msra.mxu0 0.0
    %2811 = vmatprep.subr.mxu0 0.0
    %2812 = vmatpush1.msra.mxu0 0.0
    %2813 = vmatprep.subr.mxu0 0.0
    %2814 = vmatpush1.msra.mxu0 0.0
    %2815 = vmatprep.subr.mxu0 0.0
    %2816 = vmatpush1.msra.mxu0 0.0
    %2817 = vmatprep.subr.mxu0 0.0
    %2818 = vmatpush1.msra.mxu0 0.0
    %2819 = vmatprep.subr.mxu0 0.0
    %2820 = vmatpush1.msra.mxu0 0.0
    %2821 = vmatprep.subr.mxu0 0.0
    %2822 = vmatpush1.msra.mxu0 0.0
    %2823 = vmatprep.subr.mxu0 0.0
    %2824 = vmatpush1.msra.mxu0 0.0
    %2825 = vmatprep.subr.mxu0 0.0
    %2826 = vmatpush1.msra.mxu0 0.0
    %2827 = vmatprep.subr.mxu0 0.0
    %2828 = vmatpush1.msra.mxu0 0.0
    %2829 = vmatprep.subr.mxu0 0.0
    %2830 = vmatpush1.msra.mxu0 0.0
    %2831 = vmatprep.subr.mxu0 0.0
    %2832 = vmatpush1.msra.mxu0 0.0
    %2833 = vmatprep.subr.mxu0 0.0
    %2834 = vmatpush1.msra.mxu0 0.0
    %2835 = vmatprep.mubr.f32.mxu0 0.0
    %2836 = vmatmul.mubr.f32.gmra.mrb[0].mxu0 %v2694
    %v2837 = vpop.f32.mrb[0].mxu0
    %v2838 = vadd.f32 0.0, %v2837
    %v2839 = vpop.f32.mrb[0].mxu0
    %v2840 = vadd.f32 0.0, %v2839
    %2841 = vdwg.mxu0
    %v2842 = vadd.f32 %v2696, %v2767
    %v2843 = vadd.f32 %v2697, %v2769
    %v2844 = vadd.f32 %v2698, %v2838
    %v2845 = vadd.f32 %v2699, %v2840
    %v2846 = vxor.u32 %v2842, 2147483648
    %v2847 = vmul.f32 %v2846, 1.442695
    %v2848 = vpow.pop %v2847
    %v2849 = vadd.f32 %v2848, 1.0
    %v2850 = vrcp.pop %v2849
    %v2851 = vmul.f32 1.0, %v2850
    %v2852 = vxor.u32 %v2843, 2147483648
    %v2853 = vmul.f32 %v2852, 1.442695
    %v2854 = vpow.pop %v2853
    %v2855 = vadd.f32 %v2854, 1.0
    %v2856 = vrcp.pop %v2855
    %v2857 = vmul.f32 1.0, %v2856
    %v2858 = vtanh.pop %v2844
    %v2859 = vxor.u32 %v2845, 2147483648
    %v2860 = vmul.f32 %v2859, 1.442695
    %v2861 = vpow.pop %v2860
    %v2862 = vadd.f32 %v2861, 1.0
    %v2863 = vrcp.pop %v2862
    %v2864 = vmul.f32 1.0, %v2863
    %v2865 = vmul.f32 %v2857, %v2692
    %v2866 = vmul.f32 %v2851, %v2858
    %v2867 = vadd.f32 %v2865, %v2866
    %v2868 = vtanh.pop %v2867
    %v2869 = vmul.f32 %v2864, %v2868
    %2870 = vst [vmem:[%s1037] sm:$0xff] %v2869
    %v2871 = vld [vmem:[%s1039] sm:$0xff]
    %v2872 = vld [vmem:[%s1039 + $0x8] sm:$0xff]
    %v2873 = vld [vmem:[%s1039 + $0x10] sm:$0xff]
    %v2874 = vld [vmem:[%s1039 + $0x18] sm:$0xff]
    %2875 = vmatprep.subr.mxu0 %v1991
    %2876 = vmatpush1.msra.mxu0 %v1990
    %2877 = vmatprep.subr.mxu0 %v1995
    %2878 = vmatpush1.msra.mxu0 %v1994
    %2879 = vmatprep.subr.mxu0 %v1999
    %2880 = vmatpush1.msra.mxu0 %v1998
    %2881 = vmatprep.subr.mxu0 %v2003
    %2882 = vmatpush1.msra.mxu0 %v2002
    %2883 = vmatprep.subr.mxu0 %v2007
    %2884 = vmatpush1.msra.mxu0 %v2006
    %2885 = vmatprep.subr.mxu0 %v2011
    %2886 = vmatpush1.msra.mxu0 %v2010
    %2887 = vmatprep.subr.mxu0 %v2015
    %2888 = vmatpush1.msra.mxu0 %v2014
    %2889 = vmatprep.subr.mxu0 %v2019
    %2890 = vmatpush1.msra.mxu0 %v2018
    %2891 = vmatprep.subr.mxu0 %v2023
    %2892 = vmatpush1.msra.mxu0 %v2022
    %2893 = vmatprep.subr.mxu0 %v2027
    %2894 = vmatpush1.msra.mxu0 %v2026
    %2895 = vmatprep.subr.mxu0 %v2031
    %2896 = vmatpush1.msra.mxu0 %v2030
    %2897 = vmatprep.subr.mxu0 %v2035
    %2898 = vmatpush1.msra.mxu0 %v2034
    %2899 = vmatprep.subr.mxu0 %v2039
    %2900 = vmatpush1.msra.mxu0 %v2038
    %2901 = vmatprep.subr.mxu0 %v2043
    %2902 = vmatpush1.msra.mxu0 %v2042
    %2903 = vmatprep.subr.mxu0 %v2047
    %2904 = vmatpush1.msra.mxu0 %v2046
    %2905 = vmatprep.subr.mxu0 %v2051
    %2906 = vmatpush1.msra.mxu0 %v2050
    %2907 = vmatprep.subr.mxu0 0.0
    %2908 = vmatpush1.msra.mxu0 0.0
    %2909 = vmatprep.subr.mxu0 0.0
    %2910 = vmatpush1.msra.mxu0 0.0
    %2911 = vmatprep.subr.mxu0 0.0
    %2912 = vmatpush1.msra.mxu0 0.0
    %2913 = vmatprep.subr.mxu0 0.0
    %2914 = vmatpush1.msra.mxu0 0.0
    %2915 = vmatprep.subr.mxu0 0.0
    %2916 = vmatpush1.msra.mxu0 0.0
    %2917 = vmatprep.subr.mxu0 0.0
    %2918 = vmatpush1.msra.mxu0 0.0
    %2919 = vmatprep.subr.mxu0 0.0
    %2920 = vmatpush1.msra.mxu0 0.0
    %2921 = vmatprep.subr.mxu0 0.0
    %2922 = vmatpush1.msra.mxu0 0.0
    %2923 = vmatprep.subr.mxu0 0.0
    %2924 = vmatpush1.msra.mxu0 0.0
    %2925 = vmatprep.subr.mxu0 0.0
    %2926 = vmatpush1.msra.mxu0 0.0
    %2927 = vmatprep.subr.mxu0 0.0
    %2928 = vmatpush1.msra.mxu0 0.0
    %2929 = vmatprep.subr.mxu0 0.0
    %2930 = vmatpush1.msra.mxu0 0.0
    %2931 = vmatprep.subr.mxu0 0.0
    %2932 = vmatpush1.msra.mxu0 0.0
    %2933 = vmatprep.subr.mxu0 0.0
    %2934 = vmatpush1.msra.mxu0 0.0
    %2935 = vmatprep.subr.mxu0 0.0
    %2936 = vmatpush1.msra.mxu0 0.0
    %2937 = vmatprep.subr.mxu0 0.0
    %2938 = vmatpush1.msra.mxu0 0.0
    %2939 = vmatprep.mubr.f32.mxu0 0.0
    %2940 = vmatmul.mubr.f32.gmra.mrb[0].mxu0 %v2869
    %v2941 = vpop.f32.mrb[0].mxu0
    %v2942 = vadd.f32 0.0, %v2941
    %v2943 = vpop.f32.mrb[0].mxu0
    %v2944 = vadd.f32 0.0, %v2943
    %2945 = vdwg.mxu0
    %2946 = vmatprep.subr.mxu0 %v1993
    %2947 = vmatpush1.msra.mxu0 %v1992
    %2948 = vmatprep.subr.mxu0 %v1997
    %2949 = vmatpush1.msra.mxu0 %v1996
    %2950 = vmatprep.subr.mxu0 %v2001
    %2951 = vmatpush1.msra.mxu0 %v2000
    %2952 = vmatprep.subr.mxu0 %v2005
    %2953 = vmatpush1.msra.mxu0 %v2004
    %2954 = vmatprep.subr.mxu0 %v2009
    %2955 = vmatpush1.msra.mxu0 %v2008
    %2956 = vmatprep.subr.mxu0 %v2013
    %2957 = vmatpush1.msra.mxu0 %v2012
    %2958 = vmatprep.subr.mxu0 %v2017
    %2959 = vmatpush1.msra.mxu0 %v2016
    %2960 = vmatprep.subr.mxu0 %v2021
    %2961 = vmatpush1.msra.mxu0 %v2020
    %2962 = vmatprep.subr.mxu0 %v2025
    %2963 = vmatpush1.msra.mxu0 %v2024
    %2964 = vmatprep.subr.mxu0 %v2029
    %2965 = vmatpush1.msra.mxu0 %v2028
    %2966 = vmatprep.subr.mxu0 %v2033
    %2967 = vmatpush1.msra.mxu0 %v2032
    %2968 = vmatprep.subr.mxu0 %v2037
    %2969 = vmatpush1.msra.mxu0 %v2036
    %2970 = vmatprep.subr.mxu0 %v2041
    %2971 = vmatpush1.msra.mxu0 %v2040
    %2972 = vmatprep.subr.mxu0 %v2045
    %2973 = vmatpush1.msra.mxu0 %v2044
    %2974 = vmatprep.subr.mxu0 %v2049
    %2975 = vmatpush1.msra.mxu0 %v2048
    %2976 = vmatprep.subr.mxu0 %v2053
    %2977 = vmatpush1.msra.mxu0 %v2052
    %2978 = vmatprep.subr.mxu0 0.0
    %2979 = vmatpush1.msra.mxu0 0.0
    %2980 = vmatprep.subr.mxu0 0.0
    %2981 = vmatpush1.msra.mxu0 0.0
    %2982 = vmatprep.subr.mxu0 0.0
    %2983 = vmatpush1.msra.mxu0 0.0
    %2984 = vmatprep.subr.mxu0 0.0
    %2985 = vmatpush1.msra.mxu0 0.0
    %2986 = vmatprep.subr.mxu0 0.0
    %2987 = vmatpush1.msra.mxu0 0.0
    %2988 = vmatprep.subr.mxu0 0.0
    %2989 = vmatpush1.msra.mxu0 0.0
    %2990 = vmatprep.subr.mxu0 0.0
    %2991 = vmatpush1.msra.mxu0 0.0
    %2992 = vmatprep.subr.mxu0 0.0
    %2993 = vmatpush1.msra.mxu0 0.0
    %2994 = vmatprep.subr.mxu0 0.0
    %2995 = vmatpush1.msra.mxu0 0.0
    %2996 = vmatprep.subr.mxu0 0.0
    %2997 = vmatpush1.msra.mxu0 0.0
    %2998 = vmatprep.subr.mxu0 0.0
    %2999 = vmatpush1.msra.mxu0 0.0
    %3000 = vmatprep.subr.mxu0 0.0
    %3001 = vmatpush1.msra.mxu0 0.0
    %3002 = vmatprep.subr.mxu0 0.0
    %3003 = vmatpush1.msra.mxu0 0.0
    %3004 = vmatprep.subr.mxu0 0.0
    %3005 = vmatpush1.msra.mxu0 0.0
    %3006 = vmatprep.subr.mxu0 0.0
    %3007 = vmatpush1.msra.mxu0 0.0
    %3008 = vmatprep.subr.mxu0 0.0
    %3009 = vmatpush1.msra.mxu0 0.0
    %3010 = vmatprep.mubr.f32.mxu0 0.0
    %3011 = vmatmul.mubr.f32.gmra.mrb[0].mxu0 %v2869
    %v3012 = vpop.f32.mrb[0].mxu0
    %v3013 = vadd.f32 0.0, %v3012
    %v3014 = vpop.f32.mrb[0].mxu0
    %v3015 = vadd.f32 0.0, %v3014
    %3016 = vdwg.mxu0
    %v3017 = vadd.f32 %v2871, %v2942
    %v3018 = vadd.f32 %v2872, %v2944
    %v3019 = vadd.f32 %v2873, %v3013
    %v3020 = vadd.f32 %v2874, %v3015
    %v3021 = vxor.u32 %v3017, 2147483648
    %v3022 = vmul.f32 %v3021, 1.442695
    %v3023 = vpow.pop %v3022
    %v3024 = vadd.f32 %v3023, 1.0
    %v3025 = vrcp.pop %v3024
    %v3026 = vmul.f32 1.0, %v3025
    %v3027 = vxor.u32 %v3018, 2147483648
    %v3028 = vmul.f32 %v3027, 1.442695
    %v3029 = vpow.pop %v3028
    %v3030 = vadd.f32 %v3029, 1.0
    %v3031 = vrcp.pop %v3030
    %v3032 = vmul.f32 1.0, %v3031
    %v3033 = vtanh.pop %v3019
    %v3034 = vxor.u32 %v3020, 2147483648
    %v3035 = vmul.f32 %v3034, 1.442695
    %v3036 = vpow.pop %v3035
    %v3037 = vadd.f32 %v3036, 1.0
    %v3038 = vrcp.pop %v3037
    %v3039 = vmul.f32 1.0, %v3038
    %v3040 = vmul.f32 %v3032, %v2867
    %v3041 = vmul.f32 %v3026, %v3033
    %v3042 = vadd.f32 %v3040, %v3041
    %v3043 = vtanh.pop %v3042
    %v3044 = vmul.f32 %v3039, %v3043
    %3045 = vst [vmem:[%s1214] sm:$0xff] %v3044
    %v3046 = vld [vmem:[%s1216] sm:$0xff]
    %v3047 = vld [vmem:[%s1216 + $0x8] sm:$0xff]
    %v3048 = vld [vmem:[%s1216 + $0x10] sm:$0xff]
    %v3049 = vld [vmem:[%s1216 + $0x18] sm:$0xff]
    %3050 = vmatprep.subr.mxu0 %v1991
    %3051 = vmatpush1.msra.mxu0 %v1990
    %3052 = vmatprep.subr.mxu0 %v1995
    %3053 = vmatpush1.msra.mxu0 %v1994
    %3054 = vmatprep.subr.mxu0 %v1999
    %3055 = vmatpush1.msra.mxu0 %v1998
    %3056 = vmatprep.subr.mxu0 %v2003
    %3057 = vmatpush1.msra.mxu0 %v2002
    %3058 = vmatprep.subr.mxu0 %v2007
    %3059 = vmatpush1.msra.mxu0 %v2006
    %3060 = vmatprep.subr.mxu0 %v2011
    %3061 = vmatpush1.msra.mxu0 %v2010
    %3062 = vmatprep.subr.mxu0 %v2015
    %3063 = vmatpush1.msra.mxu0 %v2014
    %3064 = vmatprep.subr.mxu0 %v2019
    %3065 = vmatpush1.msra.mxu0 %v2018
    %3066 = vmatprep.subr.mxu0 %v2023
    %3067 = vmatpush1.msra.mxu0 %v2022
    %3068 = vmatprep.subr.mxu0 %v2027
    %3069 = vmatpush1.msra.mxu0 %v2026
    %3070 = vmatprep.subr.mxu0 %v2031
    %3071 = vmatpush1.msra.mxu0 %v2030
    %3072 = vmatprep.subr.mxu0 %v2035
    %3073 = vmatpush1.msra.mxu0 %v2034
    %3074 = vmatprep.subr.mxu0 %v2039
    %3075 = vmatpush1.msra.mxu0 %v2038
    %3076 = vmatprep.subr.mxu0 %v2043
    %3077 = vmatpush1.msra.mxu0 %v2042
    %3078 = vmatprep.subr.mxu0 %v2047
    %3079 = vmatpush1.msra.mxu0 %v2046
    %3080 = vmatprep.subr.mxu0 %v2051
    %3081 = vmatpush1.msra.mxu0 %v2050
    %3082 = vmatprep.subr.mxu0 0.0
    %3083 = vmatpush1.msra.mxu0 0.0
    %3084 = vmatprep.subr.mxu0 0.0
    %3085 = vmatpush1.msra.mxu0 0.0
    %3086 = vmatprep.subr.mxu0 0.0
    %3087 = vmatpush1.msra.mxu0 0.0
    %3088 = vmatprep.subr.mxu0 0.0
    %3089 = vmatpush1.msra.mxu0 0.0
    %3090 = vmatprep.subr.mxu0 0.0
    %3091 = vmatpush1.msra.mxu0 0.0
    %3092 = vmatprep.subr.mxu0 0.0
    %3093 = vmatpush1.msra.mxu0 0.0
    %3094 = vmatprep.subr.mxu0 0.0
    %3095 = vmatpush1.msra.mxu0 0.0
    %3096 = vmatprep.subr.mxu0 0.0
    %3097 = vmatpush1.msra.mxu0 0.0
    %3098 = vmatprep.subr.mxu0 0.0
    %3099 = vmatpush1.msra.mxu0 0.0
    %3100 = vmatprep.subr.mxu0 0.0
    %3101 = vmatpush1.msra.mxu0 0.0
    %3102 = vmatprep.subr.mxu0 0.0
    %3103 = vmatpush1.msra.mxu0 0.0
    %3104 = vmatprep.subr.mxu0 0.0
    %3105 = vmatpush1.msra.mxu0 0.0
    %3106 = vmatprep.subr.mxu0 0.0
    %3107 = vmatpush1.msra.mxu0 0.0
    %3108 = vmatprep.subr.mxu0 0.0
    %3109 = vmatpush1.msra.mxu0 0.0
    %3110 = vmatprep.subr.mxu0 0.0
    %3111 = vmatpush1.msra.mxu0 0.0
    %3112 = vmatprep.subr.mxu0 0.0
    %3113 = vmatpush1.msra.mxu0 0.0
    %3114 = vmatprep.mubr.f32.mxu0 0.0
    %3115 = vmatmul.mubr.f32.gmra.mrb[0].mxu0 %v3044
    %v3116 = vpop.f32.mrb[0].mxu0
    %v3117 = vadd.f32 0.0, %v3116
    %v3118 = vpop.f32.mrb[0].mxu0
    %v3119 = vadd.f32 0.0, %v3118
    %3120 = vdwg.mxu0
    %3121 = vmatprep.subr.mxu0 %v1993
    %3122 = vmatpush1.msra.mxu0 %v1992
    %3123 = vmatprep.subr.mxu0 %v1997
    %3124 = vmatpush1.msra.mxu0 %v1996
    %3125 = vmatprep.subr.mxu0 %v2001
    %3126 = vmatpush1.msra.mxu0 %v2000
    %3127 = vmatprep.subr.mxu0 %v2005
    %3128 = vmatpush1.msra.mxu0 %v2004
    %3129 = vmatprep.subr.mxu0 %v2009
    %3130 = vmatpush1.msra.mxu0 %v2008
    %3131 = vmatprep.subr.mxu0 %v2013
    %3132 = vmatpush1.msra.mxu0 %v2012
    %3133 = vmatprep.subr.mxu0 %v2017
    %3134 = vmatpush1.msra.mxu0 %v2016
    %3135 = vmatprep.subr.mxu0 %v2021
    %3136 = vmatpush1.msra.mxu0 %v2020
    %3137 = vmatprep.subr.mxu0 %v2025
    %3138 = vmatpush1.msra.mxu0 %v2024
    %3139 = vmatprep.subr.mxu0 %v2029
    %3140 = vmatpush1.msra.mxu0 %v2028
    %3141 = vmatprep.subr.mxu0 %v2033
    %3142 = vmatpush1.msra.mxu0 %v2032
    %3143 = vmatprep.subr.mxu0 %v2037
    %3144 = vmatpush1.msra.mxu0 %v2036
    %3145 = vmatprep.subr.mxu0 %v2041
    %3146 = vmatpush1.msra.mxu0 %v2040
    %3147 = vmatprep.subr.mxu0 %v2045
    %3148 = vmatpush1.msra.mxu0 %v2044
    %3149 = vmatprep.subr.mxu0 %v2049
    %3150 = vmatpush1.msra.mxu0 %v2048
    %3151 = vmatprep.subr.mxu0 %v2053
    %3152 = vmatpush1.msra.mxu0 %v2052
    %3153 = vmatprep.subr.mxu0 0.0
    %3154 = vmatpush1.msra.mxu0 0.0
    %3155 = vmatprep.subr.mxu0 0.0
    %3156 = vmatpush1.msra.mxu0 0.0
    %3157 = vmatprep.subr.mxu0 0.0
    %3158 = vmatpush1.msra.mxu0 0.0
    %3159 = vmatprep.subr.mxu0 0.0
    %3160 = vmatpush1.msra.mxu0 0.0
    %3161 = vmatprep.subr.mxu0 0.0
    %3162 = vmatpush1.msra.mxu0 0.0
    %3163 = vmatprep.subr.mxu0 0.0
    %3164 = vmatpush1.msra.mxu0 0.0
    %3165 = vmatprep.subr.mxu0 0.0
    %3166 = vmatpush1.msra.mxu0 0.0
    %3167 = vmatprep.subr.mxu0 0.0
    %3168 = vmatpush1.msra.mxu0 0.0
    %3169 = vmatprep.subr.mxu0 0.0
    %3170 = vmatpush1.msra.mxu0 0.0
    %3171 = vmatprep.subr.mxu0 0.0
    %3172 = vmatpush1.msra.mxu0 0.0
    %3173 = vmatprep.subr.mxu0 0.0
    %3174 = vmatpush1.msra.mxu0 0.0
    %3175 = vmatprep.subr.mxu0 0.0
    %3176 = vmatpush1.msra.mxu0 0.0
    %3177 = vmatprep.subr.mxu0 0.0
    %3178 = vmatpush1.msra.mxu0 0.0
    %3179 = vmatprep.subr.mxu0 0.0
    %3180 = vmatpush1.msra.mxu0 0.0
    %3181 = vmatprep.subr.mxu0 0.0
    %3182 = vmatpush1.msra.mxu0 0.0
    %3183 = vmatprep.subr.mxu0 0.0
    %3184 = vmatpush1.msra.mxu0 0.0
    %3185 = vmatprep.mubr.f32.mxu0 0.0
    %3186 = vmatmul.mubr.f32.gmra.mrb[0].mxu0 %v3044
    %v3187 = vpop.f32.mrb[0].mxu0
    %v3188 = vadd.f32 0.0, %v3187
    %v3189 = vpop.f32.mrb[0].mxu0
    %v3190 = vadd.f32 0.0, %v3189
    %3191 = vdwg.mxu0
    %v3192 = vadd.f32 %v3046, %v3117
    %v3193 = vadd.f32 %v3047, %v3119
    %v3194 = vadd.f32 %v3048, %v3188
    %v3195 = vadd.f32 %v3049, %v3190
    %v3196 = vxor.u32 %v3192, 2147483648
    %v3197 = vmul.f32 %v3196, 1.442695
    %v3198 = vpow.pop %v3197
    %v3199 = vadd.f32 %v3198, 1.0
    %v3200 = vrcp.pop %v3199
    %v3201 = vmul.f32 1.0, %v3200
    %v3202 = vxor.u32 %v3193, 2147483648
    %v3203 = vmul.f32 %v3202, 1.442695
    %v3204 = vpow.pop %v3203
    %v3205 = vadd.f32 %v3204, 1.0
    %v3206 = vrcp.pop %v3205
    %v3207 = vmul.f32 1.0, %v3206
    %v3208 = vtanh.pop %v3194
    %v3209 = vxor.u32 %v3195, 2147483648
    %v3210 = vmul.f32 %v3209, 1.442695
    %v3211 = vpow.pop %v3210
    %v3212 = vadd.f32 %v3211, 1.0
    %v3213 = vrcp.pop %v3212
    %v3214 = vmul.f32 1.0, %v3213
    %v3215 = vmul.f32 %v3207, %v3042
    %v3216 = vmul.f32 %v3201, %v3208
    %v3217 = vadd.f32 %v3215, %v3216
    %v3218 = vtanh.pop %v3217
    %v3219 = vmul.f32 %v3214, %v3218
    %3220 = vst [vmem:[%s1391] sm:$0xff] %v3219
    %v3221 = vld [vmem:[%s1393] sm:$0xff]
    %v3222 = vld [vmem:[%s1393 + $0x8] sm:$0xff]
    %v3223 = vld [vmem:[%s1393 + $0x10] sm:$0xff]
    %v3224 = vld [vmem:[%s1393 + $0x18] sm:$0xff]
    %3225 = vmatprep.subr.mxu0 %v1991
    %3226 = vmatpush1.msra.mxu0 %v1990
    %3227 = vmatprep.subr.mxu0 %v1995
    %3228 = vmatpush1.msra.mxu0 %v1994
    %3229 = vmatprep.subr.mxu0 %v1999
    %3230 = vmatpush1.msra.mxu0 %v1998
    %3231 = vmatprep.subr.mxu0 %v2003
    %3232 = vmatpush1.msra.mxu0 %v2002
    %3233 = vmatprep.subr.mxu0 %v2007
    %3234 = vmatpush1.msra.mxu0 %v2006
    %3235 = vmatprep.subr.mxu0 %v2011
    %3236 = vmatpush1.msra.mxu0 %v2010
    %3237 = vmatprep.subr.mxu0 %v2015
    %3238 = vmatpush1.msra.mxu0 %v2014
    %3239 = vmatprep.subr.mxu0 %v2019
    %3240 = vmatpush1.msra.mxu0 %v2018
    %3241 = vmatprep.subr.mxu0 %v2023
    %3242 = vmatpush1.msra.mxu0 %v2022
    %3243 = vmatprep.subr.mxu0 %v2027
    %3244 = vmatpush1.msra.mxu0 %v2026
    %3245 = vmatprep.subr.mxu0 %v2031
    %3246 = vmatpush1.msra.mxu0 %v2030
    %3247 = vmatprep.subr.mxu0 %v2035
    %3248 = vmatpush1.msra.mxu0 %v2034
    %3249 = vmatprep.subr.mxu0 %v2039
    %3250 = vmatpush1.msra.mxu0 %v2038
    %3251 = vmatprep.subr.mxu0 %v2043
    %3252 = vmatpush1.msra.mxu0 %v2042
    %3253 = vmatprep.subr.mxu0 %v2047
    %3254 = vmatpush1.msra.mxu0 %v2046
    %3255 = vmatprep.subr.mxu0 %v2051
    %3256 = vmatpush1.msra.mxu0 %v2050
    %3257 = vmatprep.subr.mxu0 0.0
    %3258 = vmatpush1.msra.mxu0 0.0
    %3259 = vmatprep.subr.mxu0 0.0
    %3260 = vmatpush1.msra.mxu0 0.0
    %3261 = vmatprep.subr.mxu0 0.0
    %3262 = vmatpush1.msra.mxu0 0.0
    %3263 = vmatprep.subr.mxu0 0.0
    %3264 = vmatpush1.msra.mxu0 0.0
    %3265 = vmatprep.subr.mxu0 0.0
    %3266 = vmatpush1.msra.mxu0 0.0
    %3267 = vmatprep.subr.mxu0 0.0
    %3268 = vmatpush1.msra.mxu0 0.0
    %3269 = vmatprep.subr.mxu0 0.0
    %3270 = vmatpush1.msra.mxu0 0.0
    %3271 = vmatprep.subr.mxu0 0.0
    %3272 = vmatpush1.msra.mxu0 0.0
    %3273 = vmatprep.subr.mxu0 0.0
    %3274 = vmatpush1.msra.mxu0 0.0
    %3275 = vmatprep.subr.mxu0 0.0
    %3276 = vmatpush1.msra.mxu0 0.0
    %3277 = vmatprep.subr.mxu0 0.0
    %3278 = vmatpush1.msra.mxu0 0.0
    %3279 = vmatprep.subr.mxu0 0.0
    %3280 = vmatpush1.msra.mxu0 0.0
    %3281 = vmatprep.subr.mxu0 0.0
    %3282 = vmatpush1.msra.mxu0 0.0
    %3283 = vmatprep.subr.mxu0 0.0
    %3284 = vmatpush1.msra.mxu0 0.0
    %3285 = vmatprep.subr.mxu0 0.0
    %3286 = vmatpush1.msra.mxu0 0.0
    %3287 = vmatprep.subr.mxu0 0.0
    %3288 = vmatpush1.msra.mxu0 0.0
    %3289 = vmatprep.mubr.f32.mxu0 0.0
    %3290 = vmatmul.mubr.f32.gmra.mrb[0].mxu0 %v3219
    %v3291 = vpop.f32.mrb[0].mxu0
    %v3292 = vadd.f32 0.0, %v3291
    %v3293 = vpop.f32.mrb[0].mxu0
    %v3294 = vadd.f32 0.0, %v3293
    %3295 = vdwg.mxu0
    %3296 = vmatprep.subr.mxu0 %v1993
    %3297 = vmatpush1.msra.mxu0 %v1992
    %3298 = vmatprep.subr.mxu0 %v1997
    %3299 = vmatpush1.msra.mxu0 %v1996
    %3300 = vmatprep.subr.mxu0 %v2001
    %3301 = vmatpush1.msra.mxu0 %v2000
    %3302 = vmatprep.subr.mxu0 %v2005
    %3303 = vmatpush1.msra.mxu0 %v2004
    %3304 = vmatprep.subr.mxu0 %v2009
    %3305 = vmatpush1.msra.mxu0 %v2008
    %3306 = vmatprep.subr.mxu0 %v2013
    %3307 = vmatpush1.msra.mxu0 %v2012
    %3308 = vmatprep.subr.mxu0 %v2017
    %3309 = vmatpush1.msra.mxu0 %v2016
    %3310 = vmatprep.subr.mxu0 %v2021
    %3311 = vmatpush1.msra.mxu0 %v2020
    %3312 = vmatprep.subr.mxu0 %v2025
    %3313 = vmatpush1.msra.mxu0 %v2024
    %3314 = vmatprep.subr.mxu0 %v2029
    %3315 = vmatpush1.msra.mxu0 %v2028
    %3316 = vmatprep.subr.mxu0 %v2033
    %3317 = vmatpush1.msra.mxu0 %v2032
    %3318 = vmatprep.subr.mxu0 %v2037
    %3319 = vmatpush1.msra.mxu0 %v2036
    %3320 = vmatprep.subr.mxu0 %v2041
    %3321 = vmatpush1.msra.mxu0 %v2040
    %3322 = vmatprep.subr.mxu0 %v2045
    %3323 = vmatpush1.msra.mxu0 %v2044
    %3324 = vmatprep.subr.mxu0 %v2049
    %3325 = vmatpush1.msra.mxu0 %v2048
    %3326 = vmatprep.subr.mxu0 %v2053
    %3327 = vmatpush1.msra.mxu0 %v2052
    %3328 = vmatprep.subr.mxu0 0.0
    %3329 = vmatpush1.msra.mxu0 0.0
    %3330 = vmatprep.subr.mxu0 0.0
    %3331 = vmatpush1.msra.mxu0 0.0
    %3332 = vmatprep.subr.mxu0 0.0
    %3333 = vmatpush1.msra.mxu0 0.0
    %3334 = vmatprep.subr.mxu0 0.0
    %3335 = vmatpush1.msra.mxu0 0.0
    %3336 = vmatprep.subr.mxu0 0.0
    %3337 = vmatpush1.msra.mxu0 0.0
    %3338 = vmatprep.subr.mxu0 0.0
    %3339 = vmatpush1.msra.mxu0 0.0
    %3340 = vmatprep.subr.mxu0 0.0
    %3341 = vmatpush1.msra.mxu0 0.0
    %3342 = vmatprep.subr.mxu0 0.0
    %3343 = vmatpush1.msra.mxu0 0.0
    %3344 = vmatprep.subr.mxu0 0.0
    %3345 = vmatpush1.msra.mxu0 0.0
    %3346 = vmatprep.subr.mxu0 0.0
    %3347 = vmatpush1.msra.mxu0 0.0
    %3348 = vmatprep.subr.mxu0 0.0
    %3349 = vmatpush1.msra.mxu0 0.0
    %3350 = vmatprep.subr.mxu0 0.0
    %3351 = vmatpush1.msra.mxu0 0.0
    %3352 = vmatprep.subr.mxu0 0.0
    %3353 = vmatpush1.msra.mxu0 0.0
    %3354 = vmatprep.subr.mxu0 0.0
    %3355 = vmatpush1.msra.mxu0 0.0
    %3356 = vmatprep.subr.mxu0 0.0
    %3357 = vmatpush1.msra.mxu0 0.0
    %3358 = vmatprep.subr.mxu0 0.0
    %3359 = vmatpush1.msra.mxu0 0.0
    %3360 = vmatprep.mubr.f32.mxu0 0.0
    %3361 = vmatmul.mubr.f32.gmra.mrb[0].mxu0 %v3219
    %v3362 = vpop.f32.mrb[0].mxu0
    %v3363 = vadd.f32 0.0, %v3362
    %v3364 = vpop.f32.mrb[0].mxu0
    %v3365 = vadd.f32 0.0, %v3364
    %3366 = vdwg.mxu0
    %v3367 = vadd.f32 %v3221, %v3292
    %v3368 = vadd.f32 %v3222, %v3294
    %v3369 = vadd.f32 %v3223, %v3363
    %v3370 = vadd.f32 %v3224, %v3365
    %v3371 = vxor.u32 %v3367, 2147483648
    %v3372 = vmul.f32 %v3371, 1.442695
    %v3373 = vpow.pop %v3372
    %v3374 = vadd.f32 %v3373, 1.0
    %v3375 = vrcp.pop %v3374
    %v3376 = vmul.f32 1.0, %v3375
    %v3377 = vxor.u32 %v3368, 2147483648
    %v3378 = vmul.f32 %v3377, 1.442695
    %v3379 = vpow.pop %v3378
    %v3380 = vadd.f32 %v3379, 1.0
    %v3381 = vrcp.pop %v3380
    %v3382 = vmul.f32 1.0, %v3381
    %v3383 = vtanh.pop %v3369
    %v3384 = vxor.u32 %v3370, 2147483648
    %v3385 = vmul.f32 %v3384, 1.442695
    %v3386 = vpow.pop %v3385
    %v3387 = vadd.f32 %v3386, 1.0
    %v3388 = vrcp.pop %v3387
    %v3389 = vmul.f32 1.0, %v3388
    %v3390 = vmul.f32 %v3382, %v3217
    %v3391 = vmul.f32 %v3376, %v3383
    %v3392 = vadd.f32 %v3390, %v3391
    %v3393 = vtanh.pop %v3392
    %v3394 = vmul.f32 %v3389, %v3393
    %3395 = vst [vmem:[%s1568] sm:$0xff] %v3394
    %v3396 = vld [vmem:[%s1570] sm:$0xff]
    %v3397 = vld [vmem:[%s1570 + $0x8] sm:$0xff]
    %v3398 = vld [vmem:[%s1570 + $0x10] sm:$0xff]
    %v3399 = vld [vmem:[%s1570 + $0x18] sm:$0xff]
    %3400 = vmatprep.subr.mxu0 %v1991
    %3401 = vmatpush1.msra.mxu0 %v1990
    %3402 = vmatprep.subr.mxu0 %v1995
    %3403 = vmatpush1.msra.mxu0 %v1994
    %3404 = vmatprep.subr.mxu0 %v1999
    %3405 = vmatpush1.msra.mxu0 %v1998
    %3406 = vmatprep.subr.mxu0 %v2003
    %3407 = vmatpush1.msra.mxu0 %v2002
    %3408 = vmatprep.subr.mxu0 %v2007
    %3409 = vmatpush1.msra.mxu0 %v2006
    %3410 = vmatprep.subr.mxu0 %v2011
    %3411 = vmatpush1.msra.mxu0 %v2010
    %3412 = vmatprep.subr.mxu0 %v2015
    %3413 = vmatpush1.msra.mxu0 %v2014
    %3414 = vmatprep.subr.mxu0 %v2019
    %3415 = vmatpush1.msra.mxu0 %v2018
    %3416 = vmatprep.subr.mxu0 %v2023
    %3417 = vmatpush1.msra.mxu0 %v2022
    %3418 = vmatprep.subr.mxu0 %v2027
    %3419 = vmatpush1.msra.mxu0 %v2026
    %3420 = vmatprep.subr.mxu0 %v2031
    %3421 = vmatpush1.msra.mxu0 %v2030
    %3422 = vmatprep.subr.mxu0 %v2035
    %3423 = vmatpush1.msra.mxu0 %v2034
    %3424 = vmatprep.subr.mxu0 %v2039
    %3425 = vmatpush1.msra.mxu0 %v2038
    %3426 = vmatprep.subr.mxu0 %v2043
    %3427 = vmatpush1.msra.mxu0 %v2042
    %3428 = vmatprep.subr.mxu0 %v2047
    %3429 = vmatpush1.msra.mxu0 %v2046
    %3430 = vmatprep.subr.mxu0 %v2051
    %3431 = vmatpush1.msra.mxu0 %v2050
    %3432 = vmatprep.subr.mxu0 0.0
    %3433 = vmatpush1.msra.mxu0 0.0
    %3434 = vmatprep.subr.mxu0 0.0
    %3435 = vmatpush1.msra.mxu0 0.0
    %3436 = vmatprep.subr.mxu0 0.0
    %3437 = vmatpush1.msra.mxu0 0.0
    %3438 = vmatprep.subr.mxu0 0.0
    %3439 = vmatpush1.msra.mxu0 0.0
    %3440 = vmatprep.subr.mxu0 0.0
    %3441 = vmatpush1.msra.mxu0 0.0
    %3442 = vmatprep.subr.mxu0 0.0
    %3443 = vmatpush1.msra.mxu0 0.0
    %3444 = vmatprep.subr.mxu0 0.0
    %3445 = vmatpush1.msra.mxu0 0.0
    %3446 = vmatprep.subr.mxu0 0.0
    %3447 = vmatpush1.msra.mxu0 0.0
    %3448 = vmatprep.subr.mxu0 0.0
    %3449 = vmatpush1.msra.mxu0 0.0
    %3450 = vmatprep.subr.mxu0 0.0
    %3451 = vmatpush1.msra.mxu0 0.0
    %3452 = vmatprep.subr.mxu0 0.0
    %3453 = vmatpush1.msra.mxu0 0.0
    %3454 = vmatprep.subr.mxu0 0.0
    %3455 = vmatpush1.msra.mxu0 0.0
    %3456 = vmatprep.subr.mxu0 0.0
    %3457 = vmatpush1.msra.mxu0 0.0
    %3458 = vmatprep.subr.mxu0 0.0
    %3459 = vmatpush1.msra.mxu0 0.0
    %3460 = vmatprep.subr.mxu0 0.0
    %3461 = vmatpush1.msra.mxu0 0.0
    %3462 = vmatprep.subr.mxu0 0.0
    %3463 = vmatpush1.msra.mxu0 0.0
    %3464 = vmatprep.mubr.f32.mxu0 0.0
    %3465 = vmatmul.mubr.f32.gmra.mrb[0].mxu0 %v3394
    %v3466 = vpop.f32.mrb[0].mxu0
    %v3467 = vadd.f32 0.0, %v3466
    %v3468 = vpop.f32.mrb[0].mxu0
    %v3469 = vadd.f32 0.0, %v3468
    %3470 = vdwg.mxu0
    %3471 = vmatprep.subr.mxu0 %v1993
    %3472 = vmatpush1.msra.mxu0 %v1992
    %3473 = vmatprep.subr.mxu0 %v1997
    %3474 = vmatpush1.msra.mxu0 %v1996
    %3475 = vmatprep.subr.mxu0 %v2001
    %3476 = vmatpush1.msra.mxu0 %v2000
    %3477 = vmatprep.subr.mxu0 %v2005
    %3478 = vmatpush1.msra.mxu0 %v2004
    %3479 = vmatprep.subr.mxu0 %v2009
    %3480 = vmatpush1.msra.mxu0 %v2008
    %3481 = vmatprep.subr.mxu0 %v2013
    %3482 = vmatpush1.msra.mxu0 %v2012
    %3483 = vmatprep.subr.mxu0 %v2017
    %3484 = vmatpush1.msra.mxu0 %v2016
    %3485 = vmatprep.subr.mxu0 %v2021
    %3486 = vmatpush1.msra.mxu0 %v2020
    %3487 = vmatprep.subr.mxu0 %v2025
    %3488 = vmatpush1.msra.mxu0 %v2024
    %3489 = vmatprep.subr.mxu0 %v2029
    %3490 = vmatpush1.msra.mxu0 %v2028
    %3491 = vmatprep.subr.mxu0 %v2033
    %3492 = vmatpush1.msra.mxu0 %v2032
    %3493 = vmatprep.subr.mxu0 %v2037
    %3494 = vmatpush1.msra.mxu0 %v2036
    %3495 = vmatprep.subr.mxu0 %v2041
    %3496 = vmatpush1.msra.mxu0 %v2040
    %3497 = vmatprep.subr.mxu0 %v2045
    %3498 = vmatpush1.msra.mxu0 %v2044
    %3499 = vmatprep.subr.mxu0 %v2049
    %3500 = vmatpush1.msra.mxu0 %v2048
    %3501 = vmatprep.subr.mxu0 %v2053
    %3502 = vmatpush1.msra.mxu0 %v2052
    %3503 = vmatprep.subr.mxu0 0.0
    %3504 = vmatpush1.msra.mxu0 0.0
    %3505 = vmatprep.subr.mxu0 0.0
    %3506 = vmatpush1.msra.mxu0 0.0
    %3507 = vmatprep.subr.mxu0 0.0
    %3508 = vmatpush1.msra.mxu0 0.0
    %3509 = vmatprep.subr.mxu0 0.0
    %3510 = vmatpush1.msra.mxu0 0.0
    %3511 = vmatprep.subr.mxu0 0.0
    %3512 = vmatpush1.msra.mxu0 0.0
    %3513 = vmatprep.subr.mxu0 0.0
    %3514 = vmatpush1.msra.mxu0 0.0
    %3515 = vmatprep.subr.mxu0 0.0
    %3516 = vmatpush1.msra.mxu0 0.0
    %3517 = vmatprep.subr.mxu0 0.0
    %3518 = vmatpush1.msra.mxu0 0.0
    %3519 = vmatprep.subr.mxu0 0.0
    %3520 = vmatpush1.msra.mxu0 0.0
    %3521 = vmatprep.subr.mxu0 0.0
    %3522 = vmatpush1.msra.mxu0 0.0
    %3523 = vmatprep.subr.mxu0 0.0
    %3524 = vmatpush1.msra.mxu0 0.0
    %3525 = vmatprep.subr.mxu0 0.0
    %3526 = vmatpush1.msra.mxu0 0.0
    %3527 = vmatprep.subr.mxu0 0.0
    %3528 = vmatpush1.msra.mxu0 0.0
    %3529 = vmatprep.subr.mxu0 0.0
    %3530 = vmatpush1.msra.mxu0 0.0
    %3531 = vmatprep.subr.mxu0 0.0
    %3532 = vmatpush1.msra.mxu0 0.0
    %3533 = vmatprep.subr.mxu0 0.0
    %3534 = vmatpush1.msra.mxu0 0.0
    %3535 = vmatprep.mubr.f32.mxu0 0.0
    %3536 = vmatmul.mubr.f32.gmra.mrb[0].mxu0 %v3394
    %v3537 = vpop.f32.mrb[0].mxu0
    %v3538 = vadd.f32 0.0, %v3537
    %v3539 = vpop.f32.mrb[0].mxu0
    %v3540 = vadd.f32 0.0, %v3539
    %3541 = vdwg.mxu0
    %v3542 = vadd.f32 %v3396, %v3467
    %v3543 = vadd.f32 %v3397, %v3469
    %v3544 = vadd.f32 %v3398, %v3538
    %v3545 = vadd.f32 %v3399, %v3540
    %v3546 = vxor.u32 %v3542, 2147483648
    %v3547 = vmul.f32 %v3546, 1.442695
    %v3548 = vpow.pop %v3547
    %v3549 = vadd.f32 %v3548, 1.0
    %v3550 = vrcp.pop %v3549
    %v3551 = vmul.f32 1.0, %v3550
    %v3552 = vxor.u32 %v3543, 2147483648
    %v3553 = vmul.f32 %v3552, 1.442695
    %v3554 = vpow.pop %v3553
    %v3555 = vadd.f32 %v3554, 1.0
    %v3556 = vrcp.pop %v3555
    %v3557 = vmul.f32 1.0, %v3556
    %v3558 = vtanh.pop %v3544
    %v3559 = vxor.u32 %v3545, 2147483648
    %v3560 = vmul.f32 %v3559, 1.442695
    %v3561 = vpow.pop %v3560
    %v3562 = vadd.f32 %v3561, 1.0
    %v3563 = vrcp.pop %v3562
    %v3564 = vmul.f32 1.0, %v3563
    %v3565 = vmul.f32 %v3557, %v3392
    %v3566 = vmul.f32 %v3551, %v3558
    %v3567 = vadd.f32 %v3565, %v3566
    %v3568 = vtanh.pop %v3567
    %v3569 = vmul.f32 %v3564, %v3568
    %3570 = vst [vmem:[%s1745] sm:$0xff] %v3569
    %v3571 = vld [vmem:[%s1747] sm:$0xff]
    %v3572 = vld [vmem:[%s1747 + $0x8] sm:$0xff]
    %v3573 = vld [vmem:[%s1747 + $0x10] sm:$0xff]
    %v3574 = vld [vmem:[%s1747 + $0x18] sm:$0xff]
    %3575 = vmatprep.subr.mxu0 %v1991
    %3576 = vmatpush1.msra.mxu0 %v1990
    %3577 = vmatprep.subr.mxu0 %v1995
    %3578 = vmatpush1.msra.mxu0 %v1994
    %3579 = vmatprep.subr.mxu0 %v1999
    %3580 = vmatpush1.msra.mxu0 %v1998
    %3581 = vmatprep.subr.mxu0 %v2003
    %3582 = vmatpush1.msra.mxu0 %v2002
    %3583 = vmatprep.subr.mxu0 %v2007
    %3584 = vmatpush1.msra.mxu0 %v2006
    %3585 = vmatprep.subr.mxu0 %v2011
    %3586 = vmatpush1.msra.mxu0 %v2010
    %3587 = vmatprep.subr.mxu0 %v2015
    %3588 = vmatpush1.msra.mxu0 %v2014
    %3589 = vmatprep.subr.mxu0 %v2019
    %3590 = vmatpush1.msra.mxu0 %v2018
    %3591 = vmatprep.subr.mxu0 %v2023
    %3592 = vmatpush1.msra.mxu0 %v2022
    %3593 = vmatprep.subr.mxu0 %v2027
    %3594 = vmatpush1.msra.mxu0 %v2026
    %3595 = vmatprep.subr.mxu0 %v2031
    %3596 = vmatpush1.msra.mxu0 %v2030
    %3597 = vmatprep.subr.mxu0 %v2035
    %3598 = vmatpush1.msra.mxu0 %v2034
    %3599 = vmatprep.subr.mxu0 %v2039
    %3600 = vmatpush1.msra.mxu0 %v2038
    %3601 = vmatprep.subr.mxu0 %v2043
    %3602 = vmatpush1.msra.mxu0 %v2042
    %3603 = vmatprep.subr.mxu0 %v2047
    %3604 = vmatpush1.msra.mxu0 %v2046
    %3605 = vmatprep.subr.mxu0 %v2051
    %3606 = vmatpush1.msra.mxu0 %v2050
    %3607 = vmatprep.subr.mxu0 0.0
    %3608 = vmatpush1.msra.mxu0 0.0
    %3609 = vmatprep.subr.mxu0 0.0
    %3610 = vmatpush1.msra.mxu0 0.0
    %3611 = vmatprep.subr.mxu0 0.0
    %3612 = vmatpush1.msra.mxu0 0.0
    %3613 = vmatprep.subr.mxu0 0.0
    %3614 = vmatpush1.msra.mxu0 0.0
    %3615 = vmatprep.subr.mxu0 0.0
    %3616 = vmatpush1.msra.mxu0 0.0
    %3617 = vmatprep.subr.mxu0 0.0
    %3618 = vmatpush1.msra.mxu0 0.0
    %3619 = vmatprep.subr.mxu0 0.0
    %3620 = vmatpush1.msra.mxu0 0.0
    %3621 = vmatprep.subr.mxu0 0.0
    %3622 = vmatpush1.msra.mxu0 0.0
    %3623 = vmatprep.subr.mxu0 0.0
    %3624 = vmatpush1.msra.mxu0 0.0
    %3625 = vmatprep.subr.mxu0 0.0
    %3626 = vmatpush1.msra.mxu0 0.0
    %3627 = vmatprep.subr.mxu0 0.0
    %3628 = vmatpush1.msra.mxu0 0.0
    %3629 = vmatprep.subr.mxu0 0.0
    %3630 = vmatpush1.msra.mxu0 0.0
    %3631 = vmatprep.subr.mxu0 0.0
    %3632 = vmatpush1.msra.mxu0 0.0
    %3633 = vmatprep.subr.mxu0 0.0
    %3634 = vmatpush1.msra.mxu0 0.0
    %3635 = vmatprep.subr.mxu0 0.0
    %3636 = vmatpush1.msra.mxu0 0.0
    %3637 = vmatprep.subr.mxu0 0.0
    %3638 = vmatpush1.msra.mxu0 0.0
    %3639 = vmatprep.mubr.f32.mxu0 0.0
    %3640 = vmatmul.mubr.f32.gmra.mrb[0].mxu0 %v3569
    %v3641 = vpop.f32.mrb[0].mxu0
    %v3642 = vadd.f32 0.0, %v3641
    %v3643 = vpop.f32.mrb[0].mxu0
    %v3644 = vadd.f32 0.0, %v3643
    %3645 = vdwg.mxu0
    %3646 = vmatprep.subr.mxu0 %v1993
    %3647 = vmatpush1.msra.mxu0 %v1992
    %3648 = vmatprep.subr.mxu0 %v1997
    %3649 = vmatpush1.msra.mxu0 %v1996
    %3650 = vmatprep.subr.mxu0 %v2001
    %3651 = vmatpush1.msra.mxu0 %v2000
    %3652 = vmatprep.subr.mxu0 %v2005
    %3653 = vmatpush1.msra.mxu0 %v2004
    %3654 = vmatprep.subr.mxu0 %v2009
    %3655 = vmatpush1.msra.mxu0 %v2008
    %3656 = vmatprep.subr.mxu0 %v2013
    %3657 = vmatpush1.msra.mxu0 %v2012
    %3658 = vmatprep.subr.mxu0 %v2017
    %3659 = vmatpush1.msra.mxu0 %v2016
    %3660 = vmatprep.subr.mxu0 %v2021
    %3661 = vmatpush1.msra.mxu0 %v2020
    %3662 = vmatprep.subr.mxu0 %v2025
    %3663 = vmatpush1.msra.mxu0 %v2024
    %3664 = vmatprep.subr.mxu0 %v2029
    %3665 = vmatpush1.msra.mxu0 %v2028
    %3666 = vmatprep.subr.mxu0 %v2033
    %3667 = vmatpush1.msra.mxu0 %v2032
    %3668 = vmatprep.subr.mxu0 %v2037
    %3669 = vmatpush1.msra.mxu0 %v2036
    %3670 = vmatprep.subr.mxu0 %v2041
    %3671 = vmatpush1.msra.mxu0 %v2040
    %3672 = vmatprep.subr.mxu0 %v2045
    %3673 = vmatpush1.msra.mxu0 %v2044
    %3674 = vmatprep.subr.mxu0 %v2049
    %3675 = vmatpush1.msra.mxu0 %v2048
    %3676 = vmatprep.subr.mxu0 %v2053
    %3677 = vmatpush1.msra.mxu0 %v2052
    %3678 = vmatprep.subr.mxu0 0.0
    %3679 = vmatpush1.msra.mxu0 0.0
    %3680 = vmatprep.subr.mxu0 0.0
    %3681 = vmatpush1.msra.mxu0 0.0
    %3682 = vmatprep.subr.mxu0 0.0
    %3683 = vmatpush1.msra.mxu0 0.0
    %3684 = vmatprep.subr.mxu0 0.0
    %3685 = vmatpush1.msra.mxu0 0.0
    %3686 = vmatprep.subr.mxu0 0.0
    %3687 = vmatpush1.msra.mxu0 0.0
    %3688 = vmatprep.subr.mxu0 0.0
    %3689 = vmatpush1.msra.mxu0 0.0
    %3690 = vmatprep.subr.mxu0 0.0
    %3691 = vmatpush1.msra.mxu0 0.0
    %3692 = vmatprep.subr.mxu0 0.0
    %3693 = vmatpush1.msra.mxu0 0.0
    %3694 = vmatprep.subr.mxu0 0.0
    %3695 = vmatpush1.msra.mxu0 0.0
    %3696 = vmatprep.subr.mxu0 0.0
    %3697 = vmatpush1.msra.mxu0 0.0
    %3698 = vmatprep.subr.mxu0 0.0
    %3699 = vmatpush1.msra.mxu0 0.0
    %3700 = vmatprep.subr.mxu0 0.0
    %3701 = vmatpush1.msra.mxu0 0.0
    %3702 = vmatprep.subr.mxu0 0.0
    %3703 = vmatpush1.msra.mxu0 0.0
    %3704 = vmatprep.subr.mxu0 0.0
    %3705 = vmatpush1.msra.mxu0 0.0
    %3706 = vmatprep.subr.mxu0 0.0
    %3707 = vmatpush1.msra.mxu0 0.0
    %3708 = vmatprep.subr.mxu0 0.0
    %3709 = vmatpush1.msra.mxu0 0.0
    %3710 = vmatprep.mubr.f32.mxu0 0.0
    %3711 = vmatmul.mubr.f32.gmra.mrb[0].mxu0 %v3569
    %v3712 = vpop.f32.mrb[0].mxu0
    %v3713 = vadd.f32 0.0, %v3712
    %v3714 = vpop.f32.mrb[0].mxu0
    %v3715 = vadd.f32 0.0, %v3714
    %3716 = vdwg.mxu0
    %v3717 = vadd.f32 %v3571, %v3642
    %v3718 = vadd.f32 %v3572, %v3644
    %v3719 = vadd.f32 %v3573, %v3713
    %v3720 = vadd.f32 %v3574, %v3715
    %v3721 = vxor.u32 %v3717, 2147483648
    %v3722 = vmul.f32 %v3721, 1.442695
    %v3723 = vpow.pop %v3722
    %v3724 = vadd.f32 %v3723, 1.0
    %v3725 = vrcp.pop %v3724
    %v3726 = vmul.f32 1.0, %v3725
    %v3727 = vxor.u32 %v3718, 2147483648
    %v3728 = vmul.f32 %v3727, 1.442695
    %v3729 = vpow.pop %v3728
    %v3730 = vadd.f32 %v3729, 1.0
    %v3731 = vrcp.pop %v3730
    %v3732 = vmul.f32 1.0, %v3731
    %v3733 = vtanh.pop %v3719
    %v3734 = vxor.u32 %v3720, 2147483648
    %v3735 = vmul.f32 %v3734, 1.442695
    %v3736 = vpow.pop %v3735
    %v3737 = vadd.f32 %v3736, 1.0
    %v3738 = vrcp.pop %v3737
    %v3739 = vmul.f32 1.0, %v3738
    %v3740 = vmul.f32 %v3732, %v3567
    %v3741 = vmul.f32 %v3726, %v3733
    %v3742 = vadd.f32 %v3740, %v3741
    %v3743 = vtanh.pop %v3742
    %v3744 = vmul.f32 %v3739, %v3743
    %3745 = vst [vmem:[%s1922] sm:$0xff] %v3744
    %3746 = vst [vmem:[%s2342] sm:$0xff] %v3744
    %3747 = vst [vmem:[%s2344] sm:$0xff] %v3742
    %v3748 = vld [vmem:[#allocation15] sm:$0xff]
    %v3749 = vld [vmem:[#allocation15 + $0x8] sm:$0xff]
    %v3750 = vld [vmem:[#allocation15 + $0x10] sm:$0xff]
    %v3751 = vld [vmem:[#allocation15 + $0x18] sm:$0xff]
    %v3752 = vld [vmem:[#allocation15 + $0x20] sm:$0xff]
    %v3753 = vld [vmem:[#allocation15 + $0x28] sm:$0xff]
    %v3754 = vld [vmem:[#allocation15 + $0x30] sm:$0xff]
    %v3755 = vld [vmem:[#allocation15 + $0x38] sm:$0xff]
    %v3756 = vld [vmem:[#allocation15 + $0x40] sm:$0xff]
    %v3757 = vld [vmem:[#allocation15 + $0x48] sm:$0xff]
    %v3758 = vld [vmem:[#allocation15 + $0x50] sm:$0xff]
    %v3759 = vld [vmem:[#allocation15 + $0x58] sm:$0xff]
    %v3760 = vld [vmem:[#allocation15 + $0x60] sm:$0xff]
    %v3761 = vld [vmem:[#allocation15 + $0x68] sm:$0xff]
    %v3762 = vld [vmem:[#allocation15 + $0x70] sm:$0xff]
    %v3763 = vld [vmem:[#allocation15 + $0x78] sm:$0xff]
    %v3764 = vld [vmem:[#allocation4] sm:$0xff]
    %v3765 = vld [vmem:[#allocation4 + $0x8] sm:$0xff]
    %v3766 = vld [vmem:[#allocation4 + $0x10] sm:$0xff]
    %v3767 = vld [vmem:[#allocation4 + $0x18] sm:$0xff]
    %v3768 = vld [vmem:[#allocation4 + $0x20] sm:$0xff]
    %v3769 = vld [vmem:[#allocation4 + $0x28] sm:$0xff]
    %v3770 = vld [vmem:[#allocation4 + $0x30] sm:$0xff]
    %v3771 = vld [vmem:[#allocation4 + $0x38] sm:$0xff]
    %v3772 = vld [vmem:[%s8] sm:$0x1]
    %v3774 = vlaneseq
    %v3775 = vshrl.u32 %v3774, 7
    %v3776 = vsub.s32 0, %v3775
    %v3777 = vrot.slane %v3772, %v3776
    %3779 = vmatprep.subr.mxu0 0.0
    %3780 = vmatpush1.msra.mxu0 %v3748
    %3781 = vmatprep.subr.mxu0 0.0
    %3782 = vmatpush1.msra.mxu0 %v3749
    %3783 = vmatprep.subr.mxu0 0.0
    %3784 = vmatpush1.msra.mxu0 %v3750
    %3785 = vmatprep.subr.mxu0 0.0
    %3786 = vmatpush1.msra.mxu0 %v3751
    %3787 = vmatprep.subr.mxu0 0.0
    %3788 = vmatpush1.msra.mxu0 %v3752
    %3789 = vmatprep.subr.mxu0 0.0
    %3790 = vmatpush1.msra.mxu0 %v3753
    %3791 = vmatprep.subr.mxu0 0.0
    %3792 = vmatpush1.msra.mxu0 %v3754
    %3793 = vmatprep.subr.mxu0 0.0
    %3794 = vmatpush1.msra.mxu0 %v3755
    %3795 = vmatprep.subr.mxu0 0.0
    %3796 = vmatpush1.msra.mxu0 %v3756
    %3797 = vmatprep.subr.mxu0 0.0
    %3798 = vmatpush1.msra.mxu0 %v3757
    %3799 = vmatprep.subr.mxu0 0.0
    %3800 = vmatpush1.msra.mxu0 %v3758
    %3801 = vmatprep.subr.mxu0 0.0
    %3802 = vmatpush1.msra.mxu0 %v3759
    %3803 = vmatprep.subr.mxu0 0.0
    %3804 = vmatpush1.msra.mxu0 %v3760
    %3805 = vmatprep.subr.mxu0 0.0
    %3806 = vmatpush1.msra.mxu0 %v3761
    %3807 = vmatprep.subr.mxu0 0.0
    %3808 = vmatpush1.msra.mxu0 %v3762
    %3809 = vmatprep.subr.mxu0 0.0
    %3810 = vmatpush1.msra.mxu0 %v3763
    %3811 = vmatprep.subr.mxu0 0.0
    %3812 = vmatpush1.msra.mxu0 0.0
    %3813 = vmatprep.subr.mxu0 0.0
    %3814 = vmatpush1.msra.mxu0 0.0
    %3815 = vmatprep.subr.mxu0 0.0
    %3816 = vmatpush1.msra.mxu0 0.0
    %3817 = vmatprep.subr.mxu0 0.0
    %3818 = vmatpush1.msra.mxu0 0.0
    %3819 = vmatprep.subr.mxu0 0.0
    %3820 = vmatpush1.msra.mxu0 0.0
    %3821 = vmatprep.subr.mxu0 0.0
    %3822 = vmatpush1.msra.mxu0 0.0
    %3823 = vmatprep.subr.mxu0 0.0
    %3824 = vmatpush1.msra.mxu0 0.0
    %3825 = vmatprep.subr.mxu0 0.0
    %3826 = vmatpush1.msra.mxu0 0.0
    %3827 = vmatprep.subr.mxu0 0.0
    %3828 = vmatpush1.msra.mxu0 0.0
    %3829 = vmatprep.subr.mxu0 0.0
    %3830 = vmatpush1.msra.mxu0 0.0
    %3831 = vmatprep.subr.mxu0 0.0
    %3832 = vmatpush1.msra.mxu0 0.0
    %3833 = vmatprep.subr.mxu0 0.0
    %3834 = vmatpush1.msra.mxu0 0.0
    %3835 = vmatprep.subr.mxu0 0.0
    %3836 = vmatpush1.msra.mxu0 0.0
    %3837 = vmatprep.subr.mxu0 0.0
    %3838 = vmatpush1.msra.mxu0 0.0
    %3839 = vmatprep.subr.mxu0 0.0
    %3840 = vmatpush1.msra.mxu0 0.0
    %3841 = vmatprep.subr.mxu0 0.0
    %3842 = vmatpush1.msra.mxu0 0.0
    %3843 = vmatprep.mubr.f32.mxu0 0.0
    %3844 = vmatmul.mubr.f32.gmra.mrb[0].mxu0 %v3764
    %v3845 = vpop.f32.mrb[0].mxu0
    %v3846 = vadd.f32 %v3777, %v3845
    %v3847 = vpop.f32.mrb[0].mxu0
    %3848 = vmatprep.mubr.f32.mxu0 0.0
    %3849 = vmatmul.mubr.f32.gmra.mrb[0].mxu0 %v3765
    %v3850 = vpop.f32.mrb[0].mxu0
    %v3851 = vadd.f32 %v3777, %v3850
    %v3852 = vpop.f32.mrb[0].mxu0
    %3853 = vmatprep.mubr.f32.mxu0 0.0
    %3854 = vmatmul.mubr.f32.gmra.mrb[0].mxu0 %v3766
    %v3855 = vpop.f32.mrb[0].mxu0
    %v3856 = vadd.f32 %v3777, %v3855
    %v3857 = vpop.f32.mrb[0].mxu0
    %3858 = vmatprep.mubr.f32.mxu0 0.0
    %3859 = vmatmul.mubr.f32.gmra.mrb[0].mxu0 %v3767
    %v3860 = vpop.f32.mrb[0].mxu0
    %v3861 = vadd.f32 %v3777, %v3860
    %v3862 = vpop.f32.mrb[0].mxu0
    %3863 = vmatprep.mubr.f32.mxu0 0.0
    %3864 = vmatmul.mubr.f32.gmra.mrb[0].mxu0 %v3768
    %v3865 = vpop.f32.mrb[0].mxu0
    %v3866 = vadd.f32 %v3777, %v3865
    %v3867 = vpop.f32.mrb[0].mxu0
    %3868 = vmatprep.mubr.f32.mxu0 0.0
    %3869 = vmatmul.mubr.f32.gmra.mrb[0].mxu0 %v3769
    %v3870 = vpop.f32.mrb[0].mxu0
    %v3871 = vadd.f32 %v3777, %v3870
    %v3872 = vpop.f32.mrb[0].mxu0
    %3873 = vmatprep.mubr.f32.mxu0 0.0
    %3874 = vmatmul.mubr.f32.gmra.mrb[0].mxu0 %v3770
    %v3875 = vpop.f32.mrb[0].mxu0
    %v3876 = vadd.f32 %v3777, %v3875
    %v3877 = vpop.f32.mrb[0].mxu0
    %3878 = vmatprep.mubr.f32.mxu0 0.0
    %3879 = vmatmul.mubr.f32.gmra.mrb[0].mxu0 %v3771
    %v3880 = vpop.f32.mrb[0].mxu0
    %v3881 = vadd.f32 %v3777, %v3880
    %v3882 = vpop.f32.mrb[0].mxu0
    %3883 = vdwg.mxu0
    %3884 = vst [vmem:[#allocation17] sm:$0xff] %v3846
    %3885 = vst [vmem:[#allocation17 + $0x8] sm:$0xff] %v3851
    %3886 = vst [vmem:[#allocation17 + $0x10] sm:$0xff] %v3856
    %3887 = vst [vmem:[#allocation17 + $0x18] sm:$0xff] %v3861
    %3888 = vst [vmem:[#allocation17 + $0x20] sm:$0xff] %v3866
    %3889 = vst [vmem:[#allocation17 + $0x28] sm:$0xff] %v3871
    %3890 = vst [vmem:[#allocation17 + $0x30] sm:$0xff] %v3876
    %3891 = vst [vmem:[#allocation17 + $0x38] sm:$0xff] %v3881
    // Predicated region
    $region66: #{tpu_custom_call.1} parent=1 // pred_check
      _
    $region67: #{tpu_custom_call.1} parent=1 // pred_check_branch
      %3893 = sbr.rel (0) target = $region69
    $region68: #{tpu_custom_call.1} parent=1 // pred_region
      %s3895 = ssub.s32 1024, 1024
      %3896 = vsyncadd [#allocation8], %s3895
      %s3897 = sshll.u32 [#allocation17], 4
      %s3898 = int_to_ptr.vmem [resolvable:$true] %s3897
      %3903 = dma.vmem_to_hbm [thread:$0]  %s3898, 1024, %s9, [#allocation8], 128, 128, 8
    $region69: #{tpu_custom_call.1} parent=1 // pred_fallthru
      _
    // Predicated region
    $region70: #{tpu_custom_call.1} parent=1 // pred_check
      _
    $region71: #{tpu_custom_call.1} parent=1 // pred_check_branch
      %3905 = sbr.rel (0) target = $region73
    $region72: #{tpu_custom_call.1} parent=1 // pred_region
      %3906 = dma.done [#allocation8], 1024
    $region73: #{tpu_custom_call.1} parent=1 // pred_fallthru
      _
    %3907 = vsyncpa [#allocation7], 1
    %3908 = vsyncpa [#allocation10], 1
    %3909 = vsyncpa [#allocation13], 1
    %3910 = vsyncpa [#allocation16], 1
    %3911 = vsyncpa [#allocation8], 1

// kernel: tpu_custom_call.1
$region0: #{tpu_custom_call.1}
  #allocation0 [shape = 'u32[]', space=smem, size = 0x4, offset = 0x4, fixed_abs, tag = 'smem constant byte address 0x4 - core index']
  #allocation1 [shape = 'u32[144,128]{1,0:T(1,128)}', space=vmem, size = 0x12000, scoped, tag = 'internal scratch']
  #allocation2 [shape = 'f32[2,8,128]{2,1,0:T(8,128)}', space=vmem, size = 0x2000, scoped, tag = 'scratch operand']
  #allocation3 [shape = 'f32[2,8,128]{2,1,0:T(8,128)}', space=vmem, size = 0x2000, scoped, tag = 'scratch operand']
  #allocation4 [shape = 'f32[8,8,128]{2,1,0:T(8,128)}', space=vmem, size = 0x8000, scoped, tag = 'scratch operand']
  #allocation5 [shape = 'f32[8,8,512]{2,1,0:T(8,128)}', space=vmem, size = 0x20000, scoped, tag = 'scratch operand']
  %s0 = inlined_call_operand.hbm [shape: f32[8,8,16], index: 0, kind: input, shape index: {}]
  %s1 = inlined_call_operand.hbm [shape: f32[16,512], index: 1, kind: input, shape index: {}]
  %s2 = inlined_call_operand.hbm [shape: f32[128,512], index: 2, kind: input, shape index: {}]
  %s3 = inlined_call_operand.vmem [shape: f32[1,512], index: 3, kind: input, shape index: {}]
  %s4 = inlined_call_operand.hbm [shape: f32[128,512], index: 4, kind: input, shape index: {}]
  %s5 = inlined_call_operand.hbm [shape: f32[128,512], index: 5, kind: input, shape index: {}]
  %s6 = inlined_call_operand.vmem [shape: f32[1,512], index: 6, kind: input, shape index: {}]
  %s7 = inlined_call_operand.hbm [shape: f32[128,128], index: 7, kind: input, shape index: {}]
  %s8 = inlined_call_operand.vmem [shape: f32[1,128], index: 8, kind: input, shape index: {}]
  %s9 = inlined_call_operand.hbm [shape: f32[8,8,128], index: 9, kind: output, shape index: {}]
  %s10 = sld [smem:[#allocation0]]
  $region74: #{tpu_custom_call.1} parent=0
    _
  %s12 = ssub.s32 1, %s10
  %s13 = scalar_select 0, %s12, %s10
  $region1: #{tpu_custom_call.1} parent=0
    #allocation6 [shape = 'u8[32768]{0}', space=vmem, size = 0x8000, scoped, tag = 'input window, operand 0, single buffered']
    #allocation7 [shape = 's32[1]{0}', space=sflag, size = 0x4, scoped, tag = 'scoped memory for tpu_custom_call.1']
    #allocation8 [shape = 's32[1]{0}', space=sflag, size = 0x4, scoped, tag = 'scoped memory for tpu_custom_call.1']
    #allocation9 [shape = 'u8[32768]{0}', space=vmem, size = 0x8000, scoped, tag = 'input window, operand 1, single buffered']
    #allocation10 [shape = 's32[1]{0}', space=sflag, size = 0x4, scoped, tag = 'scoped memory for tpu_custom_call.1']
    #allocation11 [shape = 'u8[262144]{0}', space=vmem, size = 0x40000, scoped, tag = 'input window, operand 2, single buffered']
    #allocation12 [shape = 'u8[262144]{0}', space=vmem, size = 0x40000, scoped, tag = 'input window, operand 4, single buffered']
    #allocation13 [shape = 's32[1]{0}', space=sflag, size = 0x4, scoped, tag = 'scoped memory for tpu_custom_call.1']
    #allocation14 [shape = 'u8[262144]{0}', space=vmem, size = 0x40000, scoped, tag = 'input window, operand 5, single buffered']
    #allocation15 [shape = 'u8[65536]{0}', space=vmem, size = 0x10000, scoped, tag = 'input window, operand 7, single buffered']
    #allocation16 [shape = 's32[1]{0}', space=sflag, size = 0x4, scoped, tag = 'scoped memory for tpu_custom_call.1']
    #allocation17 [shape = 'u8[32768]{0}', space=vmem, size = 0x8000, scoped, tag = 'output window, operand 0, single buffered']
    %14 = vsyncpa [#allocation7], 0
    %15 = vsyncpa [#allocation10], 0
    %16 = vsyncpa [#allocation13], 0
    %17 = vsyncpa [#allocation16], 0
    %18 = vsyncpa [#allocation8], 0
    // Predicated region
    $region2: #{tpu_custom_call.1} parent=1 // pred_check
      _
    $region3: #{tpu_custom_call.1} parent=1 // pred_check_branch
      %20 = sbr.rel (0) target = $region5
    $region4: #{tpu_custom_call.1} parent=1 // pred_region
      %s22 = ssub.s32 1024, 1024
      %23 = vsyncadd [#allocation7], %s22
      %s24 = sshll.u32 [#allocation6], 4
      %s25 = int_to_ptr.vmem [resolvable:$true] %s24
      %30 = dma.hbm_to_vmem [thread:$0]  %s0, 1024, %s25, [#allocation7], 128, 128, 8
    $region5: #{tpu_custom_call.1} parent=1 // pred_fallthru
      _
    // Predicated region
    $region6: #{tpu_custom_call.1} parent=1 // pred_check
      _
    $region7: #{tpu_custom_call.1} parent=1 // pred_check_branch
      %32 = sbr.rel (0) target = $region9
    $region8: #{tpu_custom_call.1} parent=1 // pred_region
      %s34 = ssub.s32 1024, 1024
      %35 = vsyncadd [#allocation10], %s34
      %s36 = sshll.u32 [#allocation9], 4
      %s37 = int_to_ptr.vmem [resolvable:$true] %s36
      %42 = dma.hbm_to_vmem [thread:$0]  %s1, 1024, %s37, [#allocation10], 512, 512, 32
    $region9: #{tpu_custom_call.1} parent=1 // pred_fallthru
      _
    // Predicated region
    $region10: #{tpu_custom_call.1} parent=1 // pred_check
      _
    $region11: #{tpu_custom_call.1} parent=1 // pred_check_branch
      %44 = sbr.rel (0) target = $region13
    $region12: #{tpu_custom_call.1} parent=1 // pred_region
      %s46 = ssub.s32 8192, 8192
      %47 = vsyncadd [#allocation10], %s46
      %s48 = sshll.u32 [#allocation11], 4
      %s49 = int_to_ptr.vmem [resolvable:$true] %s48
      %54 = dma.hbm_to_vmem [thread:$0]  %s2, 8192, %s49, [#allocation10], 512, 512, 32
    $region13: #{tpu_custom_call.1} parent=1 // pred_fallthru
      _
    // Predicated region
    $region14: #{tpu_custom_call.1} parent=1 // pred_check
      _
    $region15: #{tpu_custom_call.1} parent=1 // pred_check_branch
      %56 = sbr.rel (0) target = $region17
    $region16: #{tpu_custom_call.1} parent=1 // pred_region
      _
    $region17: #{tpu_custom_call.1} parent=1 // pred_fallthru
      _
    // Predicated region
    $region18: #{tpu_custom_call.1} parent=1 // pred_check
      _
    $region19: #{tpu_custom_call.1} parent=1 // pred_check_branch
      %58 = sbr.rel (0) target = $region21
    $region20: #{tpu_custom_call.1} parent=1 // pred_region
      %s60 = ssub.s32 8192, 8192
      %61 = vsyncadd [#allocation13], %s60
      %s62 = sshll.u32 [#allocation12], 4
      %s63 = int_to_ptr.vmem [resolvable:$true] %s62
      %68 = dma.hbm_to_vmem [thread:$0]  %s4, 8192, %s63, [#allocation13], 512, 512, 32
    $region21: #{tpu_custom_call.1} parent=1 // pred_fallthru
      _
    // Predicated region
    $region22: #{tpu_custom_call.1} parent=1 // pred_check
      _
    $region23: #{tpu_custom_call.1} parent=1 // pred_check_branch
      %70 = sbr.rel (0) target = $region25
    $region24: #{tpu_custom_call.1} parent=1 // pred_region
      %s72 = ssub.s32 8192, 8192
      %73 = vsyncadd [#allocation13], %s72
      %s74 = sshll.u32 [#allocation14], 4
      %s75 = int_to_ptr.vmem [resolvable:$true] %s74
      %80 = dma.hbm_to_vmem [thread:$0]  %s5, 8192, %s75, [#allocation13], 512, 512, 32
    $region25: #{tpu_custom_call.1} parent=1 // pred_fallthru
      _
    // Predicated region
    $region26: #{tpu_custom_call.1} parent=1 // pred_check
      _
    $region27: #{tpu_custom_call.1} parent=1 // pred_check_branch
      %82 = sbr.rel (0) target = $region29
    $region28: #{tpu_custom_call.1} parent=1 // pred_region
      _
    $region29: #{tpu_custom_call.1} parent=1 // pred_fallthru
      _
    // Predicated region
    $region30: #{tpu_custom_call.1} parent=1 // pred_check
      _
    $region31: #{tpu_custom_call.1} parent=1 // pred_check_branch
      %84 = sbr.rel (0) target = $region33
    $region32: #{tpu_custom_call.1} parent=1 // pred_region
      %s86 = ssub.s32 2048, 2048
      %87 = vsyncadd [#allocation16], %s86
      %s88 = sshll.u32 [#allocation15], 4
      %s89 = int_to_ptr.vmem [resolvable:$true] %s88
      %94 = dma.hbm_to_vmem [thread:$0]  %s7, 2048, %s89, [#allocation16], 128, 128, 8
    $region33: #{tpu_custom_call.1} parent=1 // pred_fallthru
      _
    // Predicated region
    $region34: #{tpu_custom_call.1} parent=1 // pred_check
      _
    $region35: #{tpu_custom_call.1} parent=1 // pred_check_branch
      %96 = sbr.rel (0) target = $region37
    $region36: #{tpu_custom_call.1} parent=1 // pred_region
      _
    $region37: #{tpu_custom_call.1} parent=1 // pred_fallthru
      _
    // Predicated region
    $region38: #{tpu_custom_call.1} parent=1 // pred_check
      _
    $region39: #{tpu_custom_call.1} parent=1 // pred_check_branch
      %98 = sbr.rel (0) target = $region41
    $region40: #{tpu_custom_call.1} parent=1 // pred_region
      %99 = dma.done [#allocation7], 1024
    $region41: #{tpu_custom_call.1} parent=1 // pred_fallthru
      _
    // Predicated region
    $region42: #{tpu_custom_call.1} parent=1 // pred_check
      _
    $region43: #{tpu_custom_call.1} parent=1 // pred_check_branch
      %101 = sbr.rel (0) target = $region45
    $region44: #{tpu_custom_call.1} parent=1 // pred_region
      %102 = dma.done [#allocation10], 1024
    $region45: #{tpu_custom_call.1} parent=1 // pred_fallthru
      _
    // Predicated region
    $region46: #{tpu_custom_call.1} parent=1 // pred_check
      _
    $region47: #{tpu_custom_call.1} parent=1 // pred_check_branch
      %104 = sbr.rel (0) target = $region49
    $region48: #{tpu_custom_call.1} parent=1 // pred_region
      %105 = dma.done [#allocation10], 8192
    $region49: #{tpu_custom_call.1} parent=1 // pred_fallthru
      _
    // Predicated region
    $region50: #{tpu_custom_call.1} parent=1 // pred_check
      _
    $region51: #{tpu_custom_call.1} parent=1 // pred_check_branch
      %107 = sbr.rel (0) target = $region53
    $region52: #{tpu_custom_call.1} parent=1 // pred_region
      %108 = dma.done [#allocation13], 8192
    $region53: #{tpu_custom_call.1} parent=1 // pred_fallthru
      _
    // Predicated region
    $region54: #{tpu_custom_call.1} parent=1 // pred_check
      _
    $region55: #{tpu_custom_call.1} parent=1 // pred_check_branch
      %110 = sbr.rel (0) target = $region57
    $region56: #{tpu_custom_call.1} parent=1 // pred_region
      %111 = dma.done [#allocation13], 8192
    $region57: #{tpu_custom_call.1} parent=1 // pred_fallthru
      _
    // Predicated region
    $region58: #{tpu_custom_call.1} parent=1 // pred_check
      _
    $region59: #{tpu_custom_call.1} parent=1 // pred_check_branch
      %113 = sbr.rel (0) target = $region61
    $region60: #{tpu_custom_call.1} parent=1 // pred_region
      %114 = dma.done [#allocation16], 2048
    $region61: #{tpu_custom_call.1} parent=1 // pred_fallthru
      _
    %p115 = scmp.eq.s32.totalorder 0, 0
    // Predicated region
    $region62: #{tpu_custom_call.1} parent=1 // pred_check
      %p116 = pneg %p115
    $region63: #{tpu_custom_call.1} parent=1 // pred_check_branch
      %118 = sbr.rel (%p116) target = $region65
    $region64: #{tpu_custom_call.1} parent=1 // pred_region
      %119 = vst [vmem:[#allocation2] sm:$0xff] 0.0
      %120 = vst [vmem:[#allocation2 + $0x8] sm:$0xff] 0.0
      %121 = vst [vmem:[#allocation3] sm:$0xff] 0.0
      %122 = vst [vmem:[#allocation3 + $0x8] sm:$0xff] 0.0
    $region65: #{tpu_custom_call.1} parent=1 // pred_fallthru
      _
    %v123 = vld [vmem:[#allocation9] sm:$0xff]
    %v124 = vld [vmem:[#allocation9 + $0x8] sm:$0xff]
    %v125 = vld [vmem:[#allocation9 + $0x10] sm:$0xff]
    %v126 = vld [vmem:[#allocation9 + $0x18] sm:$0xff]
    %v127 = vld [vmem:[#allocation9 + $0x20] sm:$0xff]
    %v128 = vld [vmem:[#allocation9 + $0x28] sm:$0xff]
    %v129 = vld [vmem:[#allocation9 + $0x30] sm:$0xff]
    %v130 = vld [vmem:[#allocation9 + $0x38] sm:$0xff]
    %v131 = vld [vmem:[#allocation11] sm:$0xff]
    %v132 = vld [vmem:[#allocation11 + $0x8] sm:$0xff]
    %v133 = vld [vmem:[#allocation11 + $0x10] sm:$0xff]
    %v134 = vld [vmem:[#allocation11 + $0x18] sm:$0xff]
    %v135 = vld [vmem:[#allocation11 + $0x20] sm:$0xff]
    %v136 = vld [vmem:[#allocation11 + $0x28] sm:$0xff]
    %v137 = vld [vmem:[#allocation11 + $0x30] sm:$0xff]
    %v138 = vld [vmem:[#allocation11 + $0x38] sm:$0xff]
    %v139 = vld [vmem:[#allocation11 + $0x40] sm:$0xff]
    %v140 = vld [vmem:[#allocation11 + $0x48] sm:$0xff]
    %v141 = vld [vmem:[#allocation11 + $0x50] sm:$0xff]
    %v142 = vld [vmem:[#allocation11 + $0x58] sm:$0xff]
    %v143 = vld [vmem:[#allocation11 + $0x60] sm:$0xff]
    %v144 = vld [vmem:[#allocation11 + $0x68] sm:$0xff]
    %v145 = vld [vmem:[#allocation11 + $0x70] sm:$0xff]
    %v146 = vld [vmem:[#allocation11 + $0x78] sm:$0xff]
    %v147 = vld [vmem:[#allocation11 + $0x80] sm:$0xff]
    %v148 = vld [vmem:[#allocation11 + $0x88] sm:$0xff]
    %v149 = vld [vmem:[#allocation11 + $0x90] sm:$0xff]
    %v150 = vld [vmem:[#allocation11 + $0x98] sm:$0xff]
    %v151 = vld [vmem:[#allocation11 + $0xa0] sm:$0xff]
    %v152 = vld [vmem:[#allocation11 + $0xa8] sm:$0xff]
    %v153 = vld [vmem:[#allocation11 + $0xb0] sm:$0xff]
    %v154 = vld [vmem:[#allocation11 + $0xb8] sm:$0xff]
    %v155 = vld [vmem:[#allocation11 + $0xc0] sm:$0xff]
    %v156 = vld [vmem:[#allocation11 + $0xc8] sm:$0xff]
    %v157 = vld [vmem:[#allocation11 + $0xd0] sm:$0xff]
    %v158 = vld [vmem:[#allocation11 + $0xd8] sm:$0xff]
    %v159 = vld [vmem:[#allocation11 + $0xe0] sm:$0xff]
    %v160 = vld [vmem:[#allocation11 + $0xe8] sm:$0xff]
    %v161 = vld [vmem:[#allocation11 + $0xf0] sm:$0xff]
    %v162 = vld [vmem:[#allocation11 + $0xf8] sm:$0xff]
    %v163 = vld [vmem:[#allocation11 + $0x100] sm:$0xff]
    %v164 = vld [vmem:[#allocation11 + $0x108] sm:$0xff]
    %v165 = vld [vmem:[#allocation11 + $0x110] sm:$0xff]
    %v166 = vld [vmem:[#allocation11 + $0x118] sm:$0xff]
    %v167 = vld [vmem:[#allocation11 + $0x120] sm:$0xff]
    %v168 = vld [vmem:[#allocation11 + $0x128] sm:$0xff]
    %v169 = vld [vmem:[#allocation11 + $0x130] sm:$0xff]
    %v170 = vld [vmem:[#allocation11 + $0x138] sm:$0xff]
    %v171 = vld [vmem:[#allocation11 + $0x140] sm:$0xff]
    %v172 = vld [vmem:[#allocation11 + $0x148] sm:$0xff]
    %v173 = vld [vmem:[#allocation11 + $0x150] sm:$0xff]
    %v174 = vld [vmem:[#allocation11 + $0x158] sm:$0xff]
    %v175 = vld [vmem:[#allocation11 + $0x160] sm:$0xff]
    %v176 = vld [vmem:[#allocation11 + $0x168] sm:$0xff]
    %v177 = vld [vmem:[#allocation11 + $0x170] sm:$0xff]
    %v178 = vld [vmem:[#allocation11 + $0x178] sm:$0xff]
    %v179 = vld [vmem:[#allocation11 + $0x180] sm:$0xff]
    %v180 = vld [vmem:[#allocation11 + $0x188] sm:$0xff]
    %v181 = vld [vmem:[#allocation11 + $0x190] sm:$0xff]
    %v182 = vld [vmem:[#allocation11 + $0x198] sm:$0xff]
    %v183 = vld [vmem:[#allocation11 + $0x1a0] sm:$0xff]
    %v184 = vld [vmem:[#allocation11 + $0x1a8] sm:$0xff]
    %v185 = vld [vmem:[#allocation11 + $0x1b0] sm:$0xff]
    %v186 = vld [vmem:[#allocation11 + $0x1b8] sm:$0xff]
    %v187 = vld [vmem:[#allocation11 + $0x1c0] sm:$0xff]
    %v188 = vld [vmem:[#allocation11 + $0x1c8] sm:$0xff]
    %v189 = vld [vmem:[#allocation11 + $0x1d0] sm:$0xff]
    %v190 = vld [vmem:[#allocation11 + $0x1d8] sm:$0xff]
    %v191 = vld [vmem:[#allocation11 + $0x1e0] sm:$0xff]
    %v192 = vld [vmem:[#allocation11 + $0x1e8] sm:$0xff]
    %v193 = vld [vmem:[#allocation11 + $0x1f0] sm:$0xff]
    %v194 = vld [vmem:[#allocation11 + $0x1f8] sm:$0xff]
    %v195 = vld [vmem:[%s3] sm:$0xf]
    %v196 = vld [vmem:[#allocation6] sm:$0xff]
    %v197 = vld [vmem:[#allocation6 + $0x8] sm:$0xff]
    %v198 = vld [vmem:[#allocation6 + $0x10] sm:$0xff]
    %v199 = vld [vmem:[#allocation6 + $0x18] sm:$0xff]
    %v200 = vld [vmem:[#allocation6 + $0x20] sm:$0xff]
    %v201 = vld [vmem:[#allocation6 + $0x28] sm:$0xff]
    %v202 = vld [vmem:[#allocation6 + $0x30] sm:$0xff]
    %v203 = vld [vmem:[#allocation6 + $0x38] sm:$0xff]
    %v205 = vlaneseq
    %v206 = vshrl.u32 %v205, 7
    %v207 = vsub.s32 0, %v206
    %v208 = vrot.slane %v195, %v207
    %v209 = vlaneseq
    %v210 = vshrl.u32 %v209, 7
    %v211 = vsub.s32 1, %v210
    %v212 = vrot.slane %v195, %v211
    %v213 = vlaneseq
    %v214 = vshrl.u32 %v213, 7
    %v215 = vsub.s32 2, %v214
    %v216 = vrot.slane %v195, %v215
    %v217 = vlaneseq
    %v218 = vshrl.u32 %v217, 7
    %v219 = vsub.s32 3, %v218
    %v220 = vrot.slane %v195, %v219
    %vm225 = vcmask 130048
    %v227 = vsel %vm225, %v196, 0
    %v230 = vsel %vm225, %v197, 0
    %v233 = vsel %vm225, %v198, 0
    %v236 = vsel %vm225, %v199, 0
    %v239 = vsel %vm225, %v200, 0
    %v242 = vsel %vm225, %v201, 0
    %v245 = vsel %vm225, %v202, 0
    %v248 = vsel %vm225, %v203, 0
    %250 = vmatprep.subr.mxu0 %v124
    %251 = vmatpush1.msra.mxu0 %v123
    %252 = vmatprep.subr.mxu0 %v128
    %253 = vmatpush1.msra.mxu0 %v127
    %254 = vmatprep.subr.mxu0 0.0
    %255 = vmatpush1.msra.mxu0 0.0
    %256 = vmatprep.subr.mxu0 0.0
    %257 = vmatpush1.msra.mxu0 0.0
    %258 = vmatprep.subr.mxu0 0.0
    %259 = vmatpush1.msra.mxu0 0.0
    %260 = vmatprep.subr.mxu0 0.0
    %261 = vmatpush1.msra.mxu0 0.0
    %262 = vmatprep.subr.mxu0 0.0
    %263 = vmatpush1.msra.mxu0 0.0
    %264 = vmatprep.subr.mxu0 0.0
    %265 = vmatpush1.msra.mxu0 0.0
    %266 = vmatprep.subr.mxu0 0.0
    %267 = vmatpush1.msra.mxu0 0.0
    %268 = vmatprep.subr.mxu0 0.0
    %269 = vmatpush1.msra.mxu0 0.0
    %270 = vmatprep.subr.mxu0 0.0
    %271 = vmatpush1.msra.mxu0 0.0
    %272 = vmatprep.subr.mxu0 0.0
    %273 = vmatpush1.msra.mxu0 0.0
    %274 = vmatprep.subr.mxu0 0.0
    %275 = vmatpush1.msra.mxu0 0.0
    %276 = vmatprep.subr.mxu0 0.0
    %277 = vmatpush1.msra.mxu0 0.0
    %278 = vmatprep.subr.mxu0 0.0
    %279 = vmatpush1.msra.mxu0 0.0
    %280 = vmatprep.subr.mxu0 0.0
    %281 = vmatpush1.msra.mxu0 0.0
    %282 = vmatprep.subr.mxu0 0.0
    %283 = vmatpush1.msra.mxu0 0.0
    %284 = vmatprep.subr.mxu0 0.0
    %285 = vmatpush1.msra.mxu0 0.0
    %286 = vmatprep.subr.mxu0 0.0
    %287 = vmatpush1.msra.mxu0 0.0
    %288 = vmatprep.subr.mxu0 0.0
    %289 = vmatpush1.msra.mxu0 0.0
    %290 = vmatprep.subr.mxu0 0.0
    %291 = vmatpush1.msra.mxu0 0.0
    %292 = vmatprep.subr.mxu0 0.0
    %293 = vmatpush1.msra.mxu0 0.0
    %294 = vmatprep.subr.mxu0 0.0
    %295 = vmatpush1.msra.mxu0 0.0
    %296 = vmatprep.subr.mxu0 0.0
    %297 = vmatpush1.msra.mxu0 0.0
    %298 = vmatprep.subr.mxu0 0.0
    %299 = vmatpush1.msra.mxu0 0.0
    %300 = vmatprep.subr.mxu0 0.0
    %301 = vmatpush1.msra.mxu0 0.0
    %302 = vmatprep.subr.mxu0 0.0
    %303 = vmatpush1.msra.mxu0 0.0
    %304 = vmatprep.subr.mxu0 0.0
    %305 = vmatpush1.msra.mxu0 0.0
    %306 = vmatprep.subr.mxu0 0.0
    %307 = vmatpush1.msra.mxu0 0.0
    %308 = vmatprep.subr.mxu0 0.0
    %309 = vmatpush1.msra.mxu0 0.0
    %310 = vmatprep.subr.mxu0 0.0
    %311 = vmatpush1.msra.mxu0 0.0
    %312 = vmatprep.subr.mxu0 0.0
    %313 = vmatpush1.msra.mxu0 0.0
    %314 = vmatprep.mubr.f32.mxu0 0.0
    %315 = vmatmul.mubr.f32.gmra.mrb[0].mxu0 %v227
    %v316 = vpop.f32.mrb[0].mxu0
    %v317 = vadd.f32 %v208, %v316
    %v318 = vpop.f32.mrb[0].mxu0
    %v319 = vadd.f32 %v212, %v318
    %320 = vmatprep.mubr.f32.mxu0 0.0
    %321 = vmatmul.mubr.f32.gmra.mrb[0].mxu0 %v230
    %v322 = vpop.f32.mrb[0].mxu0
    %v323 = vadd.f32 %v208, %v322
    %v324 = vpop.f32.mrb[0].mxu0
    %v325 = vadd.f32 %v212, %v324
    %326 = vmatprep.mubr.f32.mxu0 0.0
    %327 = vmatmul.mubr.f32.gmra.mrb[0].mxu0 %v233
    %v328 = vpop.f32.mrb[0].mxu0
    %v329 = vadd.f32 %v208, %v328
    %v330 = vpop.f32.mrb[0].mxu0
    %v331 = vadd.f32 %v212, %v330
    %332 = vmatprep.mubr.f32.mxu0 0.0
    %333 = vmatmul.mubr.f32.gmra.mrb[0].mxu0 %v236
    %v334 = vpop.f32.mrb[0].mxu0
    %v335 = vadd.f32 %v208, %v334
    %v336 = vpop.f32.mrb[0].mxu0
    %v337 = vadd.f32 %v212, %v336
    %338 = vmatprep.mubr.f32.mxu0 0.0
    %339 = vmatmul.mubr.f32.gmra.mrb[0].mxu0 %v239
    %v340 = vpop.f32.mrb[0].mxu0
    %v341 = vadd.f32 %v208, %v340
    %v342 = vpop.f32.mrb[0].mxu0
    %v343 = vadd.f32 %v212, %v342
    %344 = vmatprep.mubr.f32.mxu0 0.0
    %345 = vmatmul.mubr.f32.gmra.mrb[0].mxu0 %v242
    %v346 = vpop.f32.mrb[0].mxu0
    %v347 = vadd.f32 %v208, %v346
    %v348 = vpop.f32.mrb[0].mxu0
    %v349 = vadd.f32 %v212, %v348
    %350 = vmatprep.mubr.f32.mxu0 0.0
    %351 = vmatmul.mubr.f32.gmra.mrb[0].mxu0 %v245
    %v352 = vpop.f32.mrb[0].mxu0
    %v353 = vadd.f32 %v208, %v352
    %v354 = vpop.f32.mrb[0].mxu0
    %v355 = vadd.f32 %v212, %v354
    %356 = vmatprep.mubr.f32.mxu0 0.0
    %357 = vmatmul.mubr.f32.gmra.mrb[0].mxu0 %v248
    %v358 = vpop.f32.mrb[0].mxu0
    %v359 = vadd.f32 %v208, %v358
    %v360 = vpop.f32.mrb[0].mxu0
    %v361 = vadd.f32 %v212, %v360
    %362 = vdwg.mxu0
    %363 = vmatprep.subr.mxu0 %v126
    %364 = vmatpush1.msra.mxu0 %v125
    %365 = vmatprep.subr.mxu0 %v130
    %366 = vmatpush1.msra.mxu0 %v129
    %367 = vmatprep.subr.mxu0 0.0
    %368 = vmatpush1.msra.mxu0 0.0
    %369 = vmatprep.subr.mxu0 0.0
    %370 = vmatpush1.msra.mxu0 0.0
    %371 = vmatprep.subr.mxu0 0.0
    %372 = vmatpush1.msra.mxu0 0.0
    %373 = vmatprep.subr.mxu0 0.0
    %374 = vmatpush1.msra.mxu0 0.0
    %375 = vmatprep.subr.mxu0 0.0
    %376 = vmatpush1.msra.mxu0 0.0
    %377 = vmatprep.subr.mxu0 0.0
    %378 = vmatpush1.msra.mxu0 0.0
    %379 = vmatprep.subr.mxu0 0.0
    %380 = vmatpush1.msra.mxu0 0.0
    %381 = vmatprep.subr.mxu0 0.0
    %382 = vmatpush1.msra.mxu0 0.0
    %383 = vmatprep.subr.mxu0 0.0
    %384 = vmatpush1.msra.mxu0 0.0
    %385 = vmatprep.subr.mxu0 0.0
    %386 = vmatpush1.msra.mxu0 0.0
    %387 = vmatprep.subr.mxu0 0.0
    %388 = vmatpush1.msra.mxu0 0.0
    %389 = vmatprep.subr.mxu0 0.0
    %390 = vmatpush1.msra.mxu0 0.0
    %391 = vmatprep.subr.mxu0 0.0
    %392 = vmatpush1.msra.mxu0 0.0
    %393 = vmatprep.subr.mxu0 0.0
    %394 = vmatpush1.msra.mxu0 0.0
    %395 = vmatprep.subr.mxu0 0.0
    %396 = vmatpush1.msra.mxu0 0.0
    %397 = vmatprep.subr.mxu0 0.0
    %398 = vmatpush1.msra.mxu0 0.0
    %399 = vmatprep.subr.mxu0 0.0
    %400 = vmatpush1.msra.mxu0 0.0
    %401 = vmatprep.subr.mxu0 0.0
    %402 = vmatpush1.msra.mxu0 0.0
    %403 = vmatprep.subr.mxu0 0.0
    %404 = vmatpush1.msra.mxu0 0.0
    %405 = vmatprep.subr.mxu0 0.0
    %406 = vmatpush1.msra.mxu0 0.0
    %407 = vmatprep.subr.mxu0 0.0
    %408 = vmatpush1.msra.mxu0 0.0
    %409 = vmatprep.subr.mxu0 0.0
    %410 = vmatpush1.msra.mxu0 0.0
    %411 = vmatprep.subr.mxu0 0.0
    %412 = vmatpush1.msra.mxu0 0.0
    %413 = vmatprep.subr.mxu0 0.0
    %414 = vmatpush1.msra.mxu0 0.0
    %415 = vmatprep.subr.mxu0 0.0
    %416 = vmatpush1.msra.mxu0 0.0
    %417 = vmatprep.subr.mxu0 0.0
    %418 = vmatpush1.msra.mxu0 0.0
    %419 = vmatprep.subr.mxu0 0.0
    %420 = vmatpush1.msra.mxu0 0.0
    %421 = vmatprep.subr.mxu0 0.0
    %422 = vmatpush1.msra.mxu0 0.0
    %423 = vmatprep.subr.mxu0 0.0
    %424 = vmatpush1.msra.mxu0 0.0
    %425 = vmatprep.subr.mxu0 0.0
    %426 = vmatpush1.msra.mxu0 0.0
    %427 = vmatprep.mubr.f32.mxu0 0.0
    %428 = vmatmul.mubr.f32.gmra.mrb[0].mxu0 %v227
    %v429 = vpop.f32.mrb[0].mxu0
    %v430 = vadd.f32 %v216, %v429
    %v431 = vpop.f32.mrb[0].mxu0
    %v432 = vadd.f32 %v220, %v431
    %433 = vmatprep.mubr.f32.mxu0 0.0
    %434 = vmatmul.mubr.f32.gmra.mrb[0].mxu0 %v230
    %v435 = vpop.f32.mrb[0].mxu0
    %v436 = vadd.f32 %v216, %v435
    %v437 = vpop.f32.mrb[0].mxu0
    %v438 = vadd.f32 %v220, %v437
    %439 = vmatprep.mubr.f32.mxu0 0.0
    %440 = vmatmul.mubr.f32.gmra.mrb[0].mxu0 %v233
    %v441 = vpop.f32.mrb[0].mxu0
    %v442 = vadd.f32 %v216, %v441
    %v443 = vpop.f32.mrb[0].mxu0
    %v444 = vadd.f32 %v220, %v443
    %445 = vmatprep.mubr.f32.mxu0 0.0
    %446 = vmatmul.mubr.f32.gmra.mrb[0].mxu0 %v236
    %v447 = vpop.f32.mrb[0].mxu0
    %v448 = vadd.f32 %v216, %v447
    %v449 = vpop.f32.mrb[0].mxu0
    %v450 = vadd.f32 %v220, %v449
    %451 = vmatprep.mubr.f32.mxu0 0.0
    %452 = vmatmul.mubr.f32.gmra.mrb[0].mxu0 %v239
    %v453 = vpop.f32.mrb[0].mxu0
    %v454 = vadd.f32 %v216, %v453
    %v455 = vpop.f32.mrb[0].mxu0
    %v456 = vadd.f32 %v220, %v455
    %457 = vmatprep.mubr.f32.mxu0 0.0
    %458 = vmatmul.mubr.f32.gmra.mrb[0].mxu0 %v242
    %v459 = vpop.f32.mrb[0].mxu0
    %v460 = vadd.f32 %v216, %v459
    %v461 = vpop.f32.mrb[0].mxu0
    %v462 = vadd.f32 %v220, %v461
    %463 = vmatprep.mubr.f32.mxu0 0.0
    %464 = vmatmul.mubr.f32.gmra.mrb[0].mxu0 %v245
    %v465 = vpop.f32.mrb[0].mxu0
    %v466 = vadd.f32 %v216, %v465
    %v467 = vpop.f32.mrb[0].mxu0
    %v468 = vadd.f32 %v220, %v467
    %469 = vmatprep.mubr.f32.mxu0 0.0
    %470 = vmatmul.mubr.f32.gmra.mrb[0].mxu0 %v248
    %v471 = vpop.f32.mrb[0].mxu0
    %v472 = vadd.f32 %v216, %v471
    %v473 = vpop.f32.mrb[0].mxu0
    %v474 = vadd.f32 %v220, %v473
    %475 = vdwg.mxu0
    %476 = vst [vmem:[#allocation5] sm:$0xff] %v317
    %477 = vst [vmem:[#allocation5 + $0x8] sm:$0xff] %v319
    %478 = vst [vmem:[#allocation5 + $0x10] sm:$0xff] %v430
    %479 = vst [vmem:[#allocation5 + $0x18] sm:$0xff] %v432
    %480 = vst [vmem:[#allocation5 + $0x20] sm:$0xff] %v323
    %481 = vst [vmem:[#allocation5 + $0x28] sm:$0xff] %v325
    %482 = vst [vmem:[#allocation5 + $0x30] sm:$0xff] %v436
    %483 = vst [vmem:[#allocation5 + $0x38] sm:$0xff] %v438
    %484 = vst [vmem:[#allocation5 + $0x40] sm:$0xff] %v329
    %485 = vst [vmem:[#allocation5 + $0x48] sm:$0xff] %v331
    %486 = vst [vmem:[#allocation5 + $0x50] sm:$0xff] %v442
    %487 = vst [vmem:[#allocation5 + $0x58] sm:$0xff] %v444
    %488 = vst [vmem:[#allocation5 + $0x60] sm:$0xff] %v335
    %489 = vst [vmem:[#allocation5 + $0x68] sm:$0xff] %v337
    %490 = vst [vmem:[#allocation5 + $0x70] sm:$0xff] %v448
    %491 = vst [vmem:[#allocation5 + $0x78] sm:$0xff] %v450
    %492 = vst [vmem:[#allocation5 + $0x80] sm:$0xff] %v341
    %493 = vst [vmem:[#allocation5 + $0x88] sm:$0xff] %v343
    %494 = vst [vmem:[#allocation5 + $0x90] sm:$0xff] %v454
    %495 = vst [vmem:[#allocation5 + $0x98] sm:$0xff] %v456
    %496 = vst [vmem:[#allocation5 + $0xa0] sm:$0xff] %v347
    %497 = vst [vmem:[#allocation5 + $0xa8] sm:$0xff] %v349
    %498 = vst [vmem:[#allocation5 + $0xb0] sm:$0xff] %v460
    %499 = vst [vmem:[#allocation5 + $0xb8] sm:$0xff] %v462
    %500 = vst [vmem:[#allocation5 + $0xc0] sm:$0xff] %v353
    %501 = vst [vmem:[#allocation5 + $0xc8] sm:$0xff] %v355
    %502 = vst [vmem:[#allocation5 + $0xd0] sm:$0xff] %v466
    %503 = vst [vmem:[#allocation5 + $0xd8] sm:$0xff] %v468
    %504 = vst [vmem:[#allocation5 + $0xe0] sm:$0xff] %v359
    %505 = vst [vmem:[#allocation5 + $0xe8] sm:$0xff] %v361
    %506 = vst [vmem:[#allocation5 + $0xf0] sm:$0xff] %v472
    %507 = vst [vmem:[#allocation5 + $0xf8] sm:$0xff] %v474
    %v508 = vld [vmem:[#allocation2] sm:$0xff]
    %v509 = vld [vmem:[#allocation3] sm:$0xff]
    %v510 = vld [vmem:[#allocation5] sm:$0xff]
    %v511 = vld [vmem:[#allocation5 + $0x8] sm:$0xff]
    %v512 = vld [vmem:[#allocation5 + $0x10] sm:$0xff]
    %v513 = vld [vmem:[#allocation5 + $0x18] sm:$0xff]
    %514 = vmatprep.subr.mxu0 %v132
    %515 = vmatpush1.msra.mxu0 %v131
    %516 = vmatprep.subr.mxu0 %v136
    %517 = vmatpush1.msra.mxu0 %v135
    %518 = vmatprep.subr.mxu0 %v140
    %519 = vmatpush1.msra.mxu0 %v139
    %520 = vmatprep.subr.mxu0 %v144
    %521 = vmatpush1.msra.mxu0 %v143
    %522 = vmatprep.subr.mxu0 %v148
    %523 = vmatpush1.msra.mxu0 %v147
    %524 = vmatprep.subr.mxu0 %v152
    %525 = vmatpush1.msra.mxu0 %v151
    %526 = vmatprep.subr.mxu0 %v156
    %527 = vmatpush1.msra.mxu0 %v155
    %528 = vmatprep.subr.mxu0 %v160
    %529 = vmatpush1.msra.mxu0 %v159
    %530 = vmatprep.subr.mxu0 %v164
    %531 = vmatpush1.msra.mxu0 %v163
    %532 = vmatprep.subr.mxu0 %v168
    %533 = vmatpush1.msra.mxu0 %v167
    %534 = vmatprep.subr.mxu0 %v172
    %535 = vmatpush1.msra.mxu0 %v171
    %536 = vmatprep.subr.mxu0 %v176
    %537 = vmatpush1.msra.mxu0 %v175
    %538 = vmatprep.subr.mxu0 %v180
    %539 = vmatpush1.msra.mxu0 %v179
    %540 = vmatprep.subr.mxu0 %v184
    %541 = vmatpush1.msra.mxu0 %v183
    %542 = vmatprep.subr.mxu0 %v188
    %543 = vmatpush1.msra.mxu0 %v187
    %544 = vmatprep.subr.mxu0 %v192
    %545 = vmatpush1.msra.mxu0 %v191
    %546 = vmatprep.subr.mxu0 0.0
    %547 = vmatpush1.msra.mxu0 0.0
    %548 = vmatprep.subr.mxu0 0.0
    %549 = vmatpush1.msra.mxu0 0.0
    %550 = vmatprep.subr.mxu0 0.0
    %551 = vmatpush1.msra.mxu0 0.0
    %552 = vmatprep.subr.mxu0 0.0
    %553 = vmatpush1.msra.mxu0 0.0
    %554 = vmatprep.subr.mxu0 0.0
    %555 = vmatpush1.msra.mxu0 0.0
    %556 = vmatprep.subr.mxu0 0.0
    %557 = vmatpush1.msra.mxu0 0.0
    %558 = vmatprep.subr.mxu0 0.0
    %559 = vmatpush1.msra.mxu0 0.0
    %560 = vmatprep.subr.mxu0 0.0
    %561 = vmatpush1.msra.mxu0 0.0
    %562 = vmatprep.subr.mxu0 0.0
    %563 = vmatpush1.msra.mxu0 0.0
    %564 = vmatprep.subr.mxu0 0.0
    %565 = vmatpush1.msra.mxu0 0.0
    %566 = vmatprep.subr.mxu0 0.0
    %567 = vmatpush1.msra.mxu0 0.0
    %568 = vmatprep.subr.mxu0 0.0
    %569 = vmatpush1.msra.mxu0 0.0
    %570 = vmatprep.subr.mxu0 0.0
    %571 = vmatpush1.msra.mxu0 0.0
    %572 = vmatprep.subr.mxu0 0.0
    %573 = vmatpush1.msra.mxu0 0.0
    %574 = vmatprep.subr.mxu0 0.0
    %575 = vmatpush1.msra.mxu0 0.0
    %576 = vmatprep.subr.mxu0 0.0
    %577 = vmatpush1.msra.mxu0 0.0
    %578 = vmatprep.mubr.f32.mxu0 0.0
    %579 = vmatmul.mubr.f32.gmra.mrb[0].mxu0 %v508
    %v580 = vpop.f32.mrb[0].mxu0
    %v581 = vadd.f32 0.0, %v580
    %v582 = vpop.f32.mrb[0].mxu0
    %v583 = vadd.f32 0.0, %v582
    %584 = vdwg.mxu0
    %585 = vmatprep.subr.mxu0 %v134
    %586 = vmatpush1.msra.mxu0 %v133
    %587 = vmatprep.subr.mxu0 %v138
    %588 = vmatpush1.msra.mxu0 %v137
    %589 = vmatprep.subr.mxu0 %v142
    %590 = vmatpush1.msra.mxu0 %v141
    %591 = vmatprep.subr.mxu0 %v146
    %592 = vmatpush1.msra.mxu0 %v145
    %593 = vmatprep.subr.mxu0 %v150
    %594 = vmatpush1.msra.mxu0 %v149
    %595 = vmatprep.subr.mxu0 %v154
    %596 = vmatpush1.msra.mxu0 %v153
    %597 = vmatprep.subr.mxu0 %v158
    %598 = vmatpush1.msra.mxu0 %v157
    %599 = vmatprep.subr.mxu0 %v162
    %600 = vmatpush1.msra.mxu0 %v161
    %601 = vmatprep.subr.mxu0 %v166
    %602 = vmatpush1.msra.mxu0 %v165
    %603 = vmatprep.subr.mxu0 %v170
    %604 = vmatpush1.msra.mxu0 %v169
    %605 = vmatprep.subr.mxu0 %v174
    %606 = vmatpush1.msra.mxu0 %v173
    %607 = vmatprep.subr.mxu0 %v178
    %608 = vmatpush1.msra.mxu0 %v177
    %609 = vmatprep.subr.mxu0 %v182
    %610 = vmatpush1.msra.mxu0 %v181
    %611 = vmatprep.subr.mxu0 %v186
    %612 = vmatpush1.msra.mxu0 %v185
    %613 = vmatprep.subr.mxu0 %v190
    %614 = vmatpush1.msra.mxu0 %v189
    %615 = vmatprep.subr.mxu0 %v194
    %616 = vmatpush1.msra.mxu0 %v193
    %617 = vmatprep.subr.mxu0 0.0
    %618 = vmatpush1.msra.mxu0 0.0
    %619 = vmatprep.subr.mxu0 0.0
    %620 = vmatpush1.msra.mxu0 0.0
    %621 = vmatprep.subr.mxu0 0.0
    %622 = vmatpush1.msra.mxu0 0.0
    %623 = vmatprep.subr.mxu0 0.0
    %624 = vmatpush1.msra.mxu0 0.0
    %625 = vmatprep.subr.mxu0 0.0
    %626 = vmatpush1.msra.mxu0 0.0
    %627 = vmatprep.subr.mxu0 0.0
    %628 = vmatpush1.msra.mxu0 0.0
    %629 = vmatprep.subr.mxu0 0.0
    %630 = vmatpush1.msra.mxu0 0.0
    %631 = vmatprep.subr.mxu0 0.0
    %632 = vmatpush1.msra.mxu0 0.0
    %633 = vmatprep.subr.mxu0 0.0
    %634 = vmatpush1.msra.mxu0 0.0
    %635 = vmatprep.subr.mxu0 0.0
    %636 = vmatpush1.msra.mxu0 0.0
    %637 = vmatprep.subr.mxu0 0.0
    %638 = vmatpush1.msra.mxu0 0.0
    %639 = vmatprep.subr.mxu0 0.0
    %640 = vmatpush1.msra.mxu0 0.0
    %641 = vmatprep.subr.mxu0 0.0
    %642 = vmatpush1.msra.mxu0 0.0
    %643 = vmatprep.subr.mxu0 0.0
    %644 = vmatpush1.msra.mxu0 0.0
    %645 = vmatprep.subr.mxu0 0.0
    %646 = vmatpush1.msra.mxu0 0.0
    %647 = vmatprep.subr.mxu0 0.0
    %648 = vmatpush1.msra.mxu0 0.0
    %649 = vmatprep.mubr.f32.mxu0 0.0
    %650 = vmatmul.mubr.f32.gmra.mrb[0].mxu0 %v508
    %v651 = vpop.f32.mrb[0].mxu0
    %v652 = vadd.f32 0.0, %v651
    %v653 = vpop.f32.mrb[0].mxu0
    %v654 = vadd.f32 0.0, %v653
    %655 = vdwg.mxu0
    %v656 = vadd.f32 %v510, %v581
    %v657 = vadd.f32 %v511, %v583
    %v658 = vadd.f32 %v512, %v652
    %v659 = vadd.f32 %v513, %v654
    %v660 = vxor.u32 %v656, 2147483648
    %v661 = vmul.f32 %v660, 1.442695
    %v662 = vpow.pop %v661
    %v663 = vadd.f32 %v662, 1.0
    %v664 = vrcp.pop %v663
    %v665 = vmul.f32 1.0, %v664
    %v666 = vxor.u32 %v657, 2147483648
    %v667 = vmul.f32 %v666, 1.442695
    %v668 = vpow.pop %v667
    %v669 = vadd.f32 %v668, 1.0
    %v670 = vrcp.pop %v669
    %v671 = vmul.f32 1.0, %v670
    %v672 = vtanh.pop %v658
    %v673 = vxor.u32 %v659, 2147483648
    %v674 = vmul.f32 %v673, 1.442695
    %v675 = vpow.pop %v674
    %v676 = vadd.f32 %v675, 1.0
    %v677 = vrcp.pop %v676
    %v678 = vmul.f32 1.0, %v677
    %v679 = vmul.f32 %v671, %v509
    %v680 = vmul.f32 %v665, %v672
    %v681 = vadd.f32 %v679, %v680
    %v682 = vtanh.pop %v681
    %v683 = vmul.f32 %v678, %v682
    %684 = vst [vmem:[#allocation4] sm:$0xff] %v683
    %s685 = scalar_lea.vmem [#allocation5], 32
    %v686 = vld [vmem:[%s685] sm:$0xff]
    %v687 = vld [vmem:[%s685 + $0x8] sm:$0xff]
    %v688 = vld [vmem:[%s685 + $0x10] sm:$0xff]
    %v689 = vld [vmem:[%s685 + $0x18] sm:$0xff]
    %690 = vmatprep.subr.mxu0 %v132
    %691 = vmatpush1.msra.mxu0 %v131
    %692 = vmatprep.subr.mxu0 %v136
    %693 = vmatpush1.msra.mxu0 %v135
    %694 = vmatprep.subr.mxu0 %v140
    %695 = vmatpush1.msra.mxu0 %v139
    %696 = vmatprep.subr.mxu0 %v144
    %697 = vmatpush1.msra.mxu0 %v143
    %698 = vmatprep.subr.mxu0 %v148
    %699 = vmatpush1.msra.mxu0 %v147
    %700 = vmatprep.subr.mxu0 %v152
    %701 = vmatpush1.msra.mxu0 %v151
    %702 = vmatprep.subr.mxu0 %v156
    %703 = vmatpush1.msra.mxu0 %v155
    %704 = vmatprep.subr.mxu0 %v160
    %705 = vmatpush1.msra.mxu0 %v159
    %706 = vmatprep.subr.mxu0 %v164
    %707 = vmatpush1.msra.mxu0 %v163
    %708 = vmatprep.subr.mxu0 %v168
    %709 = vmatpush1.msra.mxu0 %v167
    %710 = vmatprep.subr.mxu0 %v172
    %711 = vmatpush1.msra.mxu0 %v171
    %712 = vmatprep.subr.mxu0 %v176
    %713 = vmatpush1.msra.mxu0 %v175
    %714 = vmatprep.subr.mxu0 %v180
    %715 = vmatpush1.msra.mxu0 %v179
    %716 = vmatprep.subr.mxu0 %v184
    %717 = vmatpush1.msra.mxu0 %v183
    %718 = vmatprep.subr.mxu0 %v188
    %719 = vmatpush1.msra.mxu0 %v187
    %720 = vmatprep.subr.mxu0 %v192
    %721 = vmatpush1.msra.mxu0 %v191
    %722 = vmatprep.subr.mxu0 0.0
    %723 = vmatpush1.msra.mxu0 0.0
    %724 = vmatprep.subr.mxu0 0.0
    %725 = vmatpush1.msra.mxu0 0.0
    %726 = vmatprep.subr.mxu0 0.0
    %727 = vmatpush1.msra.mxu0 0.0
    %728 = vmatprep.subr.mxu0 0.0
    %729 = vmatpush1.msra.mxu0 0.0
    %730 = vmatprep.subr.mxu0 0.0
    %731 = vmatpush1.msra.mxu0 0.0
    %732 = vmatprep.subr.mxu0 0.0
    %733 = vmatpush1.msra.mxu0 0.0
    %734 = vmatprep.subr.mxu0 0.0
    %735 = vmatpush1.msra.mxu0 0.0
    %736 = vmatprep.subr.mxu0 0.0
    %737 = vmatpush1.msra.mxu0 0.0
    %738 = vmatprep.subr.mxu0 0.0
    %739 = vmatpush1.msra.mxu0 0.0
    %740 = vmatprep.subr.mxu0 0.0
    %741 = vmatpush1.msra.mxu0 0.0
    %742 = vmatprep.subr.mxu0 0.0
    %743 = vmatpush1.msra.mxu0 0.0
    %744 = vmatprep.subr.mxu0 0.0
    %745 = vmatpush1.msra.mxu0 0.0
    %746 = vmatprep.subr.mxu0 0.0
    %747 = vmatpush1.msra.mxu0 0.0
    %748 = vmatprep.subr.mxu0 0.0
    %749 = vmatpush1.msra.mxu0 0.0
    %750 = vmatprep.subr.mxu0 0.0
    %751 = vmatpush1.msra.mxu0 0.0
    %752 = vmatprep.subr.mxu0 0.0
    %753 = vmatpush1.msra.mxu0 0.0
    %754 = vmatprep.mubr.f32.mxu0 0.0
    %755 = vmatmul.mubr.f32.gmra.mrb[0].mxu0 %v683
    %v756 = vpop.f32.mrb[0].mxu0
    %v757 = vadd.f32 0.0, %v756
    %v758 = vpop.f32.mrb[0].mxu0
    %v759 = vadd.f32 0.0, %v758
    %760 = vdwg.mxu0
    %761 = vmatprep.subr.mxu0 %v134
    %762 = vmatpush1.msra.mxu0 %v133
    %763 = vmatprep.subr.mxu0 %v138
    %764 = vmatpush1.msra.mxu0 %v137
    %765 = vmatprep.subr.mxu0 %v142
    %766 = vmatpush1.msra.mxu0 %v141
    %767 = vmatprep.subr.mxu0 %v146
    %768 = vmatpush1.msra.mxu0 %v145
    %769 = vmatprep.subr.mxu0 %v150
    %770 = vmatpush1.msra.mxu0 %v149
    %771 = vmatprep.subr.mxu0 %v154
    %772 = vmatpush1.msra.mxu0 %v153
    %773 = vmatprep.subr.mxu0 %v158
    %774 = vmatpush1.msra.mxu0 %v157
    %775 = vmatprep.subr.mxu0 %v162
    %776 = vmatpush1.msra.mxu0 %v161
    %777 = vmatprep.subr.mxu0 %v166
    %778 = vmatpush1.msra.mxu0 %v165
    %779 = vmatprep.subr.mxu0 %v170
    %780 = vmatpush1.msra.mxu0 %v169
    %781 = vmatprep.subr.mxu0 %v174
    %782 = vmatpush1.msra.mxu0 %v173
    %783 = vmatprep.subr.mxu0 %v178
    %784 = vmatpush1.msra.mxu0 %v177
    %785 = vmatprep.subr.mxu0 %v182
    %786 = vmatpush1.msra.mxu0 %v181
    %787 = vmatprep.subr.mxu0 %v186
    %788 = vmatpush1.msra.mxu0 %v185
    %789 = vmatprep.subr.mxu0 %v190
    %790 = vmatpush1.msra.mxu0 %v189
    %791 = vmatprep.subr.mxu0 %v194
    %792 = vmatpush1.msra.mxu0 %v193
    %793 = vmatprep.subr.mxu0 0.0
    %794 = vmatpush1.msra.mxu0 0.0
    %795 = vmatprep.subr.mxu0 0.0
    %796 = vmatpush1.msra.mxu0 0.0
    %797 = vmatprep.subr.mxu0 0.0
    %798 = vmatpush1.msra.mxu0 0.0
    %799 = vmatprep.subr.mxu0 0.0
    %800 = vmatpush1.msra.mxu0 0.0
    %801 = vmatprep.subr.mxu0 0.0
    %802 = vmatpush1.msra.mxu0 0.0
    %803 = vmatprep.subr.mxu0 0.0
    %804 = vmatpush1.msra.mxu0 0.0
    %805 = vmatprep.subr.mxu0 0.0
    %806 = vmatpush1.msra.mxu0 0.0
    %807 = vmatprep.subr.mxu0 0.0
    %808 = vmatpush1.msra.mxu0 0.0
    %809 = vmatprep.subr.mxu0 0.0
    %810 = vmatpush1.msra.mxu0 0.0
    %811 = vmatprep.subr.mxu0 0.0
    %812 = vmatpush1.msra.mxu0 0.0
    %813 = vmatprep.subr.mxu0 0.0
    %814 = vmatpush1.msra.mxu0 0.0
    %815 = vmatprep.subr.mxu0 0.0
    %816 = vmatpush1.msra.mxu0 0.0
    %817 = vmatprep.subr.mxu0 0.0
    %818 = vmatpush1.msra.mxu0 0.0
    %819 = vmatprep.subr.mxu0 0.0
    %820 = vmatpush1.msra.mxu0 0.0
    %821 = vmatprep.subr.mxu0 0.0
    %822 = vmatpush1.msra.mxu0 0.0
    %823 = vmatprep.subr.mxu0 0.0
    %824 = vmatpush1.msra.mxu0 0.0
    %825 = vmatprep.mubr.f32.mxu0 0.0
    %826 = vmatmul.mubr.f32.gmra.mrb[0].mxu0 %v683
    %v827 = vpop.f32.mrb[0].mxu0
    %v828 = vadd.f32 0.0, %v827
    %v829 = vpop.f32.mrb[0].mxu0
    %v830 = vadd.f32 0.0, %v829
    %831 = vdwg.mxu0
    %v832 = vadd.f32 %v686, %v757
    %v833 = vadd.f32 %v687, %v759
    %v834 = vadd.f32 %v688, %v828
    %v835 = vadd.f32 %v689, %v830
    %v836 = vxor.u32 %v832, 2147483648
    %v837 = vmul.f32 %v836, 1.442695
    %v838 = vpow.pop %v837
    %v839 = vadd.f32 %v838, 1.0
    %v840 = vrcp.pop %v839
    %v841 = vmul.f32 1.0, %v840
    %v842 = vxor.u32 %v833, 2147483648
    %v843 = vmul.f32 %v842, 1.442695
    %v844 = vpow.pop %v843
    %v845 = vadd.f32 %v844, 1.0
    %v846 = vrcp.pop %v845
    %v847 = vmul.f32 1.0, %v846
    %v848 = vtanh.pop %v834
    %v849 = vxor.u32 %v835, 2147483648
    %v850 = vmul.f32 %v849, 1.442695
    %v851 = vpow.pop %v850
    %v852 = vadd.f32 %v851, 1.0
    %v853 = vrcp.pop %v852
    %v854 = vmul.f32 1.0, %v853
    %v855 = vmul.f32 %v847, %v681
    %v856 = vmul.f32 %v841, %v848
    %v857 = vadd.f32 %v855, %v856
    %v858 = vtanh.pop %v857
    %v859 = vmul.f32 %v854, %v858
    %s860 = scalar_lea.vmem [#allocation4], 8
    %861 = vst [vmem:[%s860] sm:$0xff] %v859
    %s862 = scalar_lea.vmem [#allocation5], 64
    %v863 = vld [vmem:[%s862] sm:$0xff]
    %v864 = vld [vmem:[%s862 + $0x8] sm:$0xff]
    %v865 = vld [vmem:[%s862 + $0x10] sm:$0xff]
    %v866 = vld [vmem:[%s862 + $0x18] sm:$0xff]
    %867 = vmatprep.subr.mxu0 %v132
    %868 = vmatpush1.msra.mxu0 %v131
    %869 = vmatprep.subr.mxu0 %v136
    %870 = vmatpush1.msra.mxu0 %v135
    %871 = vmatprep.subr.mxu0 %v140
    %872 = vmatpush1.msra.mxu0 %v139
    %873 = vmatprep.subr.mxu0 %v144
    %874 = vmatpush1.msra.mxu0 %v143
    %875 = vmatprep.subr.mxu0 %v148
    %876 = vmatpush1.msra.mxu0 %v147
    %877 = vmatprep.subr.mxu0 %v152
    %878 = vmatpush1.msra.mxu0 %v151
    %879 = vmatprep.subr.mxu0 %v156
    %880 = vmatpush1.msra.mxu0 %v155
    %881 = vmatprep.subr.mxu0 %v160
    %882 = vmatpush1.msra.mxu0 %v159
    %883 = vmatprep.subr.mxu0 %v164
    %884 = vmatpush1.msra.mxu0 %v163
    %885 = vmatprep.subr.mxu0 %v168
    %886 = vmatpush1.msra.mxu0 %v167
    %887 = vmatprep.subr.mxu0 %v172
    %888 = vmatpush1.msra.mxu0 %v171
    %889 = vmatprep.subr.mxu0 %v176
    %890 = vmatpush1.msra.mxu0 %v175
    %891 = vmatprep.subr.mxu0 %v180
    %892 = vmatpush1.msra.mxu0 %v179
    %893 = vmatprep.subr.mxu0 %v184
    %894 = vmatpush1.msra.mxu0 %v183
    %895 = vmatprep.subr.mxu0 %v188
    %896 = vmatpush1.msra.mxu0 %v187
    %897 = vmatprep.subr.mxu0 %v192
    %898 = vmatpush1.msra.mxu0 %v191
    %899 = vmatprep.subr.mxu0 0.0
    %900 = vmatpush1.msra.mxu0 0.0
    %901 = vmatprep.subr.mxu0 0.0
    %902 = vmatpush1.msra.mxu0 0.0
    %903 = vmatprep.subr.mxu0 0.0
    %904 = vmatpush1.msra.mxu0 0.0
    %905 = vmatprep.subr.mxu0 0.0
    %906 = vmatpush1.msra.mxu0 0.0
    %907 = vmatprep.subr.mxu0 0.0
    %908 = vmatpush1.msra.mxu0 0.0
    %909 = vmatprep.subr.mxu0 0.0
    %910 = vmatpush1.msra.mxu0 0.0
    %911 = vmatprep.subr.mxu0 0.0
    %912 = vmatpush1.msra.mxu0 0.0
    %913 = vmatprep.subr.mxu0 0.0
    %914 = vmatpush1.msra.mxu0 0.0
    %915 = vmatprep.subr.mxu0 0.0
    %916 = vmatpush1.msra.mxu0 0.0
    %917 = vmatprep.subr.mxu0 0.0
    %918 = vmatpush1.msra.mxu0 0.0
    %919 = vmatprep.subr.mxu0 0.0
    %920 = vmatpush1.msra.mxu0 0.0
    %921 = vmatprep.subr.mxu0 0.0
    %922 = vmatpush1.msra.mxu0 0.0
    %923 = vmatprep.subr.mxu0 0.0
    %924 = vmatpush1.msra.mxu0 0.0
    %925 = vmatprep.subr.mxu0 0.0
    %926 = vmatpush1.msra.mxu0 0.0
    %927 = vmatprep.subr.mxu0 0.0
    %928 = vmatpush1.msra.mxu0 0.0
    %929 = vmatprep.subr.mxu0 0.0
    %930 = vmatpush1.msra.mxu0 0.0
    %931 = vmatprep.mubr.f32.mxu0 0.0
    %932 = vmatmul.mubr.f32.gmra.mrb[0].mxu0 %v859
    %v933 = vpop.f32.mrb[0].mxu0
    %v934 = vadd.f32 0.0, %v933
    %v935 = vpop.f32.mrb[0].mxu0
    %v936 = vadd.f32 0.0, %v935
    %937 = vdwg.mxu0
    %938 = vmatprep.subr.mxu0 %v134
    %939 = vmatpush1.msra.mxu0 %v133
    %940 = vmatprep.subr.mxu0 %v138
    %941 = vmatpush1.msra.mxu0 %v137
    %942 = vmatprep.subr.mxu0 %v142
    %943 = vmatpush1.msra.mxu0 %v141
    %944 = vmatprep.subr.mxu0 %v146
    %945 = vmatpush1.msra.mxu0 %v145
    %946 = vmatprep.subr.mxu0 %v150
    %947 = vmatpush1.msra.mxu0 %v149
    %948 = vmatprep.subr.mxu0 %v154
    %949 = vmatpush1.msra.mxu0 %v153
    %950 = vmatprep.subr.mxu0 %v158
    %951 = vmatpush1.msra.mxu0 %v157
    %952 = vmatprep.subr.mxu0 %v162
    %953 = vmatpush1.msra.mxu0 %v161
    %954 = vmatprep.subr.mxu0 %v166
    %955 = vmatpush1.msra.mxu0 %v165
    %956 = vmatprep.subr.mxu0 %v170
    %957 = vmatpush1.msra.mxu0 %v169
    %958 = vmatprep.subr.mxu0 %v174
    %959 = vmatpush1.msra.mxu0 %v173
    %960 = vmatprep.subr.mxu0 %v178
    %961 = vmatpush1.msra.mxu0 %v177
    %962 = vmatprep.subr.mxu0 %v182
    %963 = vmatpush1.msra.mxu0 %v181
    %964 = vmatprep.subr.mxu0 %v186
    %965 = vmatpush1.msra.mxu0 %v185
    %966 = vmatprep.subr.mxu0 %v190
    %967 = vmatpush1.msra.mxu0 %v189
    %968 = vmatprep.subr.mxu0 %v194
    %969 = vmatpush1.msra.mxu0 %v193
    %970 = vmatprep.subr.mxu0 0.0
    %971 = vmatpush1.msra.mxu0 0.0
    %972 = vmatprep.subr.mxu0 0.0
    %973 = vmatpush1.msra.mxu0 0.0
    %974 = vmatprep.subr.mxu0 0.0
    %975 = vmatpush1.msra.mxu0 0.0
    %976 = vmatprep.subr.mxu0 0.0
    %977 = vmatpush1.msra.mxu0 0.0
    %978 = vmatprep.subr.mxu0 0.0
    %979 = vmatpush1.msra.mxu0 0.0
    %980 = vmatprep.subr.mxu0 0.0
    %981 = vmatpush1.msra.mxu0 0.0
    %982 = vmatprep.subr.mxu0 0.0
    %983 = vmatpush1.msra.mxu0 0.0
    %984 = vmatprep.subr.mxu0 0.0
    %985 = vmatpush1.msra.mxu0 0.0
    %986 = vmatprep.subr.mxu0 0.0
    %987 = vmatpush1.msra.mxu0 0.0
    %988 = vmatprep.subr.mxu0 0.0
    %989 = vmatpush1.msra.mxu0 0.0
    %990 = vmatprep.subr.mxu0 0.0
    %991 = vmatpush1.msra.mxu0 0.0
    %992 = vmatprep.subr.mxu0 0.0
    %993 = vmatpush1.msra.mxu0 0.0
    %994 = vmatprep.subr.mxu0 0.0
    %995 = vmatpush1.msra.mxu0 0.0
    %996 = vmatprep.subr.mxu0 0.0
    %997 = vmatpush1.msra.mxu0 0.0
    %998 = vmatprep.subr.mxu0 0.0
    %999 = vmatpush1.msra.mxu0 0.0
    %1000 = vmatprep.subr.mxu0 0.0
    %1001 = vmatpush1.msra.mxu0 0.0
    %1002 = vmatprep.mubr.f32.mxu0 0.0
    %1003 = vmatmul.mubr.f32.gmra.mrb[0].mxu0 %v859
    %v1004 = vpop.f32.mrb[0].mxu0
    %v1005 = vadd.f32 0.0, %v1004
    %v1006 = vpop.f32.mrb[0].mxu0
    %v1007 = vadd.f32 0.0, %v1006
    %1008 = vdwg.mxu0
    %v1009 = vadd.f32 %v863, %v934
    %v1010 = vadd.f32 %v864, %v936
    %v1011 = vadd.f32 %v865, %v1005
    %v1012 = vadd.f32 %v866, %v1007
    %v1013 = vxor.u32 %v1009, 2147483648
    %v1014 = vmul.f32 %v1013, 1.442695
    %v1015 = vpow.pop %v1014
    %v1016 = vadd.f32 %v1015, 1.0
    %v1017 = vrcp.pop %v1016
    %v1018 = vmul.f32 1.0, %v1017
    %v1019 = vxor.u32 %v1010, 2147483648
    %v1020 = vmul.f32 %v1019, 1.442695
    %v1021 = vpow.pop %v1020
    %v1022 = vadd.f32 %v1021, 1.0
    %v1023 = vrcp.pop %v1022
    %v1024 = vmul.f32 1.0, %v1023
    %v1025 = vtanh.pop %v1011
    %v1026 = vxor.u32 %v1012, 2147483648
    %v1027 = vmul.f32 %v1026, 1.442695
    %v1028 = vpow.pop %v1027
    %v1029 = vadd.f32 %v1028, 1.0
    %v1030 = vrcp.pop %v1029
    %v1031 = vmul.f32 1.0, %v1030
    %v1032 = vmul.f32 %v1024, %v857
    %v1033 = vmul.f32 %v1018, %v1025
    %v1034 = vadd.f32 %v1032, %v1033
    %v1035 = vtanh.pop %v1034
    %v1036 = vmul.f32 %v1031, %v1035
    %s1037 = scalar_lea.vmem [#allocation4], 16
    %1038 = vst [vmem:[%s1037] sm:$0xff] %v1036
    %s1039 = scalar_lea.vmem [#allocation5], 96
    %v1040 = vld [vmem:[%s1039] sm:$0xff]
    %v1041 = vld [vmem:[%s1039 + $0x8] sm:$0xff]
    %v1042 = vld [vmem:[%s1039 + $0x10] sm:$0xff]
    %v1043 = vld [vmem:[%s1039 + $0x18] sm:$0xff]
    %1044 = vmatprep.subr.mxu0 %v132
    %1045 = vmatpush1.msra.mxu0 %v131
    %1046 = vmatprep.subr.mxu0 %v136
    %1047 = vmatpush1.msra.mxu0 %v135
    %1048 = vmatprep.subr.mxu0 %v140
    %1049 = vmatpush1.msra.mxu0 %v139
    %1050 = vmatprep.subr.mxu0 %v144
    %1051 = vmatpush1.msra.mxu0 %v143
    %1052 = vmatprep.subr.mxu0 %v148
    %1053 = vmatpush1.msra.mxu0 %v147
    %1054 = vmatprep.subr.mxu0 %v152
    %1055 = vmatpush1.msra.mxu0 %v151
    %1056 = vmatprep.subr.mxu0 %v156
    %1057 = vmatpush1.msra.mxu0 %v155
    %1058 = vmatprep.subr.mxu0 %v160
    %1059 = vmatpush1.msra.mxu0 %v159
    %1060 = vmatprep.subr.mxu0 %v164
    %1061 = vmatpush1.msra.mxu0 %v163
    %1062 = vmatprep.subr.mxu0 %v168
    %1063 = vmatpush1.msra.mxu0 %v167
    %1064 = vmatprep.subr.mxu0 %v172
    %1065 = vmatpush1.msra.mxu0 %v171
    %1066 = vmatprep.subr.mxu0 %v176
    %1067 = vmatpush1.msra.mxu0 %v175
    %1068 = vmatprep.subr.mxu0 %v180
    %1069 = vmatpush1.msra.mxu0 %v179
    %1070 = vmatprep.subr.mxu0 %v184
    %1071 = vmatpush1.msra.mxu0 %v183
    %1072 = vmatprep.subr.mxu0 %v188
    %1073 = vmatpush1.msra.mxu0 %v187
    %1074 = vmatprep.subr.mxu0 %v192
    %1075 = vmatpush1.msra.mxu0 %v191
    %1076 = vmatprep.subr.mxu0 0.0
    %1077 = vmatpush1.msra.mxu0 0.0
    %1078 = vmatprep.subr.mxu0 0.0
    %1079 = vmatpush1.msra.mxu0 0.0
    %1080 = vmatprep.subr.mxu0 0.0
    %1081 = vmatpush1.msra.mxu0 0.0
    %1082 = vmatprep.subr.mxu0 0.0
    %1083 = vmatpush1.msra.mxu0 0.0
    %1084 = vmatprep.subr.mxu0 0.0
    %1085 = vmatpush1.msra.mxu0 0.0
    %1086 = vmatprep.subr.mxu0 0.0
    %1087 = vmatpush1.msra.mxu0 0.0
    %1088 = vmatprep.subr.mxu0 0.0
    %1089 = vmatpush1.msra.mxu0 0.0
    %1090 = vmatprep.subr.mxu0 0.0
    %1091 = vmatpush1.msra.mxu0 0.0
    %1092 = vmatprep.subr.mxu0 0.0
    %1093 = vmatpush1.msra.mxu0 0.0
    %1094 = vmatprep.subr.mxu0 0.0
    %1095 = vmatpush1.msra.mxu0 0.0
    %1096 = vmatprep.subr.mxu0 0.0
    %1097 = vmatpush1.msra.mxu0 0.0
    %1098 = vmatprep.subr.mxu0 0.0
    %1099 = vmatpush1.msra.mxu0 0.0
    %1100 = vmatprep.subr.mxu0 0.0
    %1101 = vmatpush1.msra.mxu0 0.0
    %1102 = vmatprep.subr.mxu0 0.0
    %1103 = vmatpush1.msra.mxu0 0.0
    %1104 = vmatprep.subr.mxu0 0.0
    %1105 = vmatpush1.msra.mxu0 0.0
    %1106 = vmatprep.subr.mxu0 0.0
    %1107 = vmatpush1.msra.mxu0 0.0
    %1108 = vmatprep.mubr.f32.mxu0 0.0
    %1109 = vmatmul.mubr.f32.gmra.mrb[0].mxu0 %v1036
    %v1110 = vpop.f32.mrb[0].mxu0
    %v1111 = vadd.f32 0.0, %v1110
    %v1112 = vpop.f32.mrb[0].mxu0
    %v1113 = vadd.f32 0.0, %v1112
    %1114 = vdwg.mxu0
    %1115 = vmatprep.subr.mxu0 %v134
    %1116 = vmatpush1.msra.mxu0 %v133
    %1117 = vmatprep.subr.mxu0 %v138
    %1118 = vmatpush1.msra.mxu0 %v137
    %1119 = vmatprep.subr.mxu0 %v142
    %1120 = vmatpush1.msra.mxu0 %v141
    %1121 = vmatprep.subr.mxu0 %v146
    %1122 = vmatpush1.msra.mxu0 %v145
    %1123 = vmatprep.subr.mxu0 %v150
    %1124 = vmatpush1.msra.mxu0 %v149
    %1125 = vmatprep.subr.mxu0 %v154
    %1126 = vmatpush1.msra.mxu0 %v153
    %1127 = vmatprep.subr.mxu0 %v158
    %1128 = vmatpush1.msra.mxu0 %v157
    %1129 = vmatprep.subr.mxu0 %v162
    %1130 = vmatpush1.msra.mxu0 %v161
    %1131 = vmatprep.subr.mxu0 %v166
    %1132 = vmatpush1.msra.mxu0 %v165
    %1133 = vmatprep.subr.mxu0 %v170
    %1134 = vmatpush1.msra.mxu0 %v169
    %1135 = vmatprep.subr.mxu0 %v174
    %1136 = vmatpush1.msra.mxu0 %v173
    %1137 = vmatprep.subr.mxu0 %v178
    %1138 = vmatpush1.msra.mxu0 %v177
    %1139 = vmatprep.subr.mxu0 %v182
    %1140 = vmatpush1.msra.mxu0 %v181
    %1141 = vmatprep.subr.mxu0 %v186
    %1142 = vmatpush1.msra.mxu0 %v185
    %1143 = vmatprep.subr.mxu0 %v190
    %1144 = vmatpush1.msra.mxu0 %v189
    %1145 = vmatprep.subr.mxu0 %v194
    %1146 = vmatpush1.msra.mxu0 %v193
    %1147 = vmatprep.subr.mxu0 0.0
    %1148 = vmatpush1.msra.mxu0 0.0
    %1149 = vmatprep.subr.mxu0 0.0
    %1150 = vmatpush1.msra.mxu0 0.0
    %1151 = vmatprep.subr.mxu0 0.0
    %1152 = vmatpush1.msra.mxu0 0.0
    %1153 = vmatprep.subr.mxu0 0.0
    %1154 = vmatpush1.msra.mxu0 0.0
    %1155 = vmatprep.subr.mxu0 0.0
    %1156 = vmatpush1.msra.mxu0 0.0
    %1157 = vmatprep.subr.mxu0 0.0
    %1158 = vmatpush1.msra.mxu0 0.0
    %1159 = vmatprep.subr.mxu0 0.0
    %1160 = vmatpush1.msra.mxu0 0.0
    %1161 = vmatprep.subr.mxu0 0.0
    %1162 = vmatpush1.msra.mxu0 0.0
    %1163 = vmatprep.subr.mxu0 0.0
    %1164 = vmatpush1.msra.mxu0 0.0
    %1165 = vmatprep.subr.mxu0 0.0
    %1166 = vmatpush1.msra.mxu0 0.0
    %1167 = vmatprep.subr.mxu0 0.0
    %1168 = vmatpush1.msra.mxu0 0.0
    %1169 = vmatprep.subr.mxu0 0.0
    %1170 = vmatpush1.msra.mxu0 0.0
    %1171 = vmatprep.subr.mxu0 0.0
    %1172 = vmatpush1.msra.mxu0 0.0
    %1173 = vmatprep.subr.mxu0 0.0
    %1174 = vmatpush1.msra.mxu0 0.0
    %1175 = vmatprep.subr.mxu0 0.0
    %1176 = vmatpush1.msra.mxu0 0.0
    %1177 = vmatprep.subr.mxu0 0.0
    %1178 = vmatpush1.msra.mxu0 0.0
    %1179 = vmatprep.mubr.f32.mxu0 0.0
    %1180 = vmatmul.mubr.f32.gmra.mrb[0].mxu0 %v1036
    %v1181 = vpop.f32.mrb[0].mxu0
    %v1182 = vadd.f32 0.0, %v1181
    %v1183 = vpop.f32.mrb[0].mxu0
    %v1184 = vadd.f32 0.0, %v1183
    %1185 = vdwg.mxu0
    %v1186 = vadd.f32 %v1040, %v1111
    %v1187 = vadd.f32 %v1041, %v1113
    %v1188 = vadd.f32 %v1042, %v1182
    %v1189 = vadd.f32 %v1043, %v1184
    %v1190 = vxor.u32 %v1186, 2147483648
    %v1191 = vmul.f32 %v1190, 1.442695
    %v1192 = vpow.pop %v1191
    %v1193 = vadd.f32 %v1192, 1.0
    %v1194 = vrcp.pop %v1193
    %v1195 = vmul.f32 1.0, %v1194
    %v1196 = vxor.u32 %v1187, 2147483648
    %v1197 = vmul.f32 %v1196, 1.442695
    %v1198 = vpow.pop %v1197
    %v1199 = vadd.f32 %v1198, 1.0
    %v1200 = vrcp.pop %v1199
    %v1201 = vmul.f32 1.0, %v1200
    %v1202 = vtanh.pop %v1188
    %v1203 = vxor.u32 %v1189, 2147483648
    %v1204 = vmul.f32 %v1203, 1.442695
    %v1205 = vpow.pop %v1204
    %v1206 = vadd.f32 %v1205, 1.0
    %v1207 = vrcp.pop %v1206
    %v1208 = vmul.f32 1.0, %v1207
    %v1209 = vmul.f32 %v1201, %v1034
    %v1210 = vmul.f32 %v1195, %v1202
    %v1211 = vadd.f32 %v1209, %v1210
    %v1212 = vtanh.pop %v1211
    %v1213 = vmul.f32 %v1208, %v1212
    %s1214 = scalar_lea.vmem [#allocation4], 24
    %1215 = vst [vmem:[%s1214] sm:$0xff] %v1213
    %s1216 = scalar_lea.vmem [#allocation5], 128
    %v1217 = vld [vmem:[%s1216] sm:$0xff]
    %v1218 = vld [vmem:[%s1216 + $0x8] sm:$0xff]
    %v1219 = vld [vmem:[%s1216 + $0x10] sm:$0xff]
    %v1220 = vld [vmem:[%s1216 + $0x18] sm:$0xff]
    %1221 = vmatprep.subr.mxu0 %v132
    %1222 = vmatpush1.msra.mxu0 %v131
    %1223 = vmatprep.subr.mxu0 %v136
    %1224 = vmatpush1.msra.mxu0 %v135
    %1225 = vmatprep.subr.mxu0 %v140
    %1226 = vmatpush1.msra.mxu0 %v139
    %1227 = vmatprep.subr.mxu0 %v144
    %1228 = vmatpush1.msra.mxu0 %v143
    %1229 = vmatprep.subr.mxu0 %v148
    %1230 = vmatpush1.msra.mxu0 %v147
    %1231 = vmatprep.subr.mxu0 %v152
    %1232 = vmatpush1.msra.mxu0 %v151
    %1233 = vmatprep.subr.mxu0 %v156
    %1234 = vmatpush1.msra.mxu0 %v155
    %1235 = vmatprep.subr.mxu0 %v160
    %1236 = vmatpush1.msra.mxu0 %v159
    %1237 = vmatprep.subr.mxu0 %v164
    %1238 = vmatpush1.msra.mxu0 %v163
    %1239 = vmatprep.subr.mxu0 %v168
    %1240 = vmatpush1.msra.mxu0 %v167
    %1241 = vmatprep.subr.mxu0 %v172
    %1242 = vmatpush1.msra.mxu0 %v171
    %1243 = vmatprep.subr.mxu0 %v176
    %1244 = vmatpush1.msra.mxu0 %v175
    %1245 = vmatprep.subr.mxu0 %v180
    %1246 = vmatpush1.msra.mxu0 %v179
    %1247 = vmatprep.subr.mxu0 %v184
    %1248 = vmatpush1.msra.mxu0 %v183
    %1249 = vmatprep.subr.mxu0 %v188
    %1250 = vmatpush1.msra.mxu0 %v187
    %1251 = vmatprep.subr.mxu0 %v192
    %1252 = vmatpush1.msra.mxu0 %v191
    %1253 = vmatprep.subr.mxu0 0.0
    %1254 = vmatpush1.msra.mxu0 0.0
    %1255 = vmatprep.subr.mxu0 0.0
    %1256 = vmatpush1.msra.mxu0 0.0
    %1257 = vmatprep.subr.mxu0 0.0
    %1258 = vmatpush1.msra.mxu0 0.0
    %1259 = vmatprep.subr.mxu0 0.0
    %1260 = vmatpush1.msra.mxu0 0.0
    %1261 = vmatprep.subr.mxu0 0.0
    %1262 = vmatpush1.msra.mxu0 0.0
    %1263 = vmatprep.subr.mxu0 0.0
    %1264 = vmatpush1.msra.mxu0 0.0
    %1265 = vmatprep.subr.mxu0 0.0
    %1266 = vmatpush1.msra.mxu0 0.0
    %1267 = vmatprep.subr.mxu0 0.0
    %1268 = vmatpush1.msra.mxu0 0.0
    %1269 = vmatprep.subr.mxu0 0.0
    %1270 = vmatpush1.msra.mxu0 0.0
    %1271 = vmatprep.subr.mxu0 0.0
    %1272 = vmatpush1.msra.mxu0 0.0
    %1273 = vmatprep.subr.mxu0 0.0
    %1274 = vmatpush1.msra.mxu0 0.0
    %1275 = vmatprep.subr.mxu0 0.0
    %1276 = vmatpush1.msra.mxu0 0.0
    %1277 = vmatprep.subr.mxu0 0.0
    %1278 = vmatpush1.msra.mxu0 0.0
    %1279 = vmatprep.subr.mxu0 0.0
    %1280 = vmatpush1.msra.mxu0 0.0
    %1281 = vmatprep.subr.mxu0 0.0
    %1282 = vmatpush1.msra.mxu0 0.0
    %1283 = vmatprep.subr.mxu0 0.0
    %1284 = vmatpush1.msra.mxu0 0.0
    %1285 = vmatprep.mubr.f32.mxu0 0.0
    %1286 = vmatmul.mubr.f32.gmra.mrb[0].mxu0 %v1213
    %v1287 = vpop.f32.mrb[0].mxu0
    %v1288 = vadd.f32 0.0, %v1287
    %v1289 = vpop.f32.mrb[0].mxu0
    %v1290 = vadd.f32 0.0, %v1289
    %1291 = vdwg.mxu0
    %1292 = vmatprep.subr.mxu0 %v134
    %1293 = vmatpush1.msra.mxu0 %v133
    %1294 = vmatprep.subr.mxu0 %v138
    %1295 = vmatpush1.msra.mxu0 %v137
    %1296 = vmatprep.subr.mxu0 %v142
    %1297 = vmatpush1.msra.mxu0 %v141
    %1298 = vmatprep.subr.mxu0 %v146
    %1299 = vmatpush1.msra.mxu0 %v145
    %1300 = vmatprep.subr.mxu0 %v150
    %1301 = vmatpush1.msra.mxu0 %v149
    %1302 = vmatprep.subr.mxu0 %v154
    %1303 = vmatpush1.msra.mxu0 %v153
    %1304 = vmatprep.subr.mxu0 %v158
    %1305 = vmatpush1.msra.mxu0 %v157
    %1306 = vmatprep.subr.mxu0 %v162
    %1307 = vmatpush1.msra.mxu0 %v161
    %1308 = vmatprep.subr.mxu0 %v166
    %1309 = vmatpush1.msra.mxu0 %v165
    %1310 = vmatprep.subr.mxu0 %v170
    %1311 = vmatpush1.msra.mxu0 %v169
    %1312 = vmatprep.subr.mxu0 %v174
    %1313 = vmatpush1.msra.mxu0 %v173
    %1314 = vmatprep.subr.mxu0 %v178
    %1315 = vmatpush1.msra.mxu0 %v177
    %1316 = vmatprep.subr.mxu0 %v182
    %1317 = vmatpush1.msra.mxu0 %v181
    %1318 = vmatprep.subr.mxu0 %v186
    %1319 = vmatpush1.msra.mxu0 %v185
    %1320 = vmatprep.subr.mxu0 %v190
    %1321 = vmatpush1.msra.mxu0 %v189
    %1322 = vmatprep.subr.mxu0 %v194
    %1323 = vmatpush1.msra.mxu0 %v193
    %1324 = vmatprep.subr.mxu0 0.0
    %1325 = vmatpush1.msra.mxu0 0.0
    %1326 = vmatprep.subr.mxu0 0.0
    %1327 = vmatpush1.msra.mxu0 0.0
    %1328 = vmatprep.subr.mxu0 0.0
    %1329 = vmatpush1.msra.mxu0 0.0
    %1330 = vmatprep.subr.mxu0 0.0
    %1331 = vmatpush1.msra.mxu0 0.0
    %1332 = vmatprep.subr.mxu0 0.0
    %1333 = vmatpush1.msra.mxu0 0.0
    %1334 = vmatprep.subr.mxu0 0.0
    %1335 = vmatpush1.msra.mxu0 0.0
    %1336 = vmatprep.subr.mxu0 0.0
    %1337 = vmatpush1.msra.mxu0 0.0
    %1338 = vmatprep.subr.mxu0 0.0
    %1339 = vmatpush1.msra.mxu0 0.0
    %1340 = vmatprep.subr.mxu0 0.0
    %1341 = vmatpush1.msra.mxu0 0.0
    %1342 = vmatprep.subr.mxu0 0.0
    %1343 = vmatpush1.msra.mxu0 0.0
    %1344 = vmatprep.subr.mxu0 0.0
    %1345 = vmatpush1.msra.mxu0 0.0
    %1346 = vmatprep.subr.mxu0 0.0
    %1347 = vmatpush1.msra.mxu0 0.0
    %1348 = vmatprep.subr.mxu0 0.0
    %1349 = vmatpush1.msra.mxu0 0.0
    %1350 = vmatprep.subr.mxu0 0.0
    %1351 = vmatpush1.msra.mxu0 0.0
    %1352 = vmatprep.subr.mxu0 0.0
    %1353 = vmatpush1.msra.mxu0 0.0
    %1354 = vmatprep.subr.mxu0 0.0
    %1355 = vmatpush1.msra.mxu0 0.0
    %1356 = vmatprep.mubr.f32.mxu0 0.0
    %1357 = vmatmul.mubr.f32.gmra.mrb[0].mxu0 %v1213
    %v1358 = vpop.f32.mrb[0].mxu0
    %v1359 = vadd.f32 0.0, %v1358
    %v1360 = vpop.f32.mrb[0].mxu0
    %v1361 = vadd.f32 0.0, %v1360
    %1362 = vdwg.mxu0
    %v1363 = vadd.f32 %v1217, %v1288
    %v1364 = vadd.f32 %v1218, %v1290
    %v1365 = vadd.f32 %v1219, %v1359
    %v1366 = vadd.f32 %v1220, %v1361
    %v1367 = vxor.u32 %v1363, 2147483648
    %v1368 = vmul.f32 %v1367, 1.442695
    %v1369 = vpow.pop %v1368
    %v1370 = vadd.f32 %v1369, 1.0
    %v1371 = vrcp.pop %v1370
    %v1372 = vmul.f32 1.0, %v1371
    %v1373 = vxor.u32 %v1364, 2147483648
    %v1374 = vmul.f32 %v1373, 1.442695
    %v1375 = vpow.pop %v1374
    %v1376 = vadd.f32 %v1375, 1.0
    %v1377 = vrcp.pop %v1376
    %v1378 = vmul.f32 1.0, %v1377
    %v1379 = vtanh.pop %v1365
    %v1380 = vxor.u32 %v1366, 2147483648
    %v1381 = vmul.f32 %v1380, 1.442695
    %v1382 = vpow.pop %v1381
    %v1383 = vadd.f32 %v1382, 1.0
    %v1384 = vrcp.pop %v1383
    %v1385 = vmul.f32 1.0, %v1384
    %v1386 = vmul.f32 %v1378, %v1211
    %v1387 = vmul.f32 %v1372, %v1379
    %v1388 = vadd.f32 %v1386, %v1387
    %v1389 = vtanh.pop %v1388
    %v1390 = vmul.f32 %v1385, %v1389
    %s1391 = scalar_lea.vmem [#allocation4], 32
    %1392 = vst [vmem:[%s1391] sm:$0xff] %v1390
    %s1393 = scalar_lea.vmem [#allocation5], 160
    %v1394 = vld [vmem:[%s1393] sm:$0xff]
    %v1395 = vld [vmem:[%s1393 + $0x8] sm:$0xff]
    %v1396 = vld [vmem:[%s1393 + $0x10] sm:$0xff]
    %v1397 = vld [vmem:[%s1393 + $0x18] sm:$0xff]
    %1398 = vmatprep.subr.mxu0 %v132
    %1399 = vmatpush1.msra.mxu0 %v131
    %1400 = vmatprep.subr.mxu0 %v136
    %1401 = vmatpush1.msra.mxu0 %v135
    %1402 = vmatprep.subr.mxu0 %v140
    %1403 = vmatpush1.msra.mxu0 %v139
    %1404 = vmatprep.subr.mxu0 %v144
    %1405 = vmatpush1.msra.mxu0 %v143
    %1406 = vmatprep.subr.mxu0 %v148
    %1407 = vmatpush1.msra.mxu0 %v147
    %1408 = vmatprep.subr.mxu0 %v152
    %1409 = vmatpush1.msra.mxu0 %v151
    %1410 = vmatprep.subr.mxu0 %v156
    %1411 = vmatpush1.msra.mxu0 %v155
    %1412 = vmatprep.subr.mxu0 %v160
    %1413 = vmatpush1.msra.mxu0 %v159
    %1414 = vmatprep.subr.mxu0 %v164
    %1415 = vmatpush1.msra.mxu0 %v163
    %1416 = vmatprep.subr.mxu0 %v168
    %1417 = vmatpush1.msra.mxu0 %v167
    %1418 = vmatprep.subr.mxu0 %v172
    %1419 = vmatpush1.msra.mxu0 %v171
    %1420 = vmatprep.subr.mxu0 %v176
    %1421 = vmatpush1.msra.mxu0 %v175
    %1422 = vmatprep.subr.mxu0 %v180
    %1423 = vmatpush1.msra.mxu0 %v179
    %1424 = vmatprep.subr.mxu0 %v184
    %1425 = vmatpush1.msra.mxu0 %v183
    %1426 = vmatprep.subr.mxu0 %v188
    %1427 = vmatpush1.msra.mxu0 %v187
    %1428 = vmatprep.subr.mxu0 %v192
    %1429 = vmatpush1.msra.mxu0 %v191
    %1430 = vmatprep.subr.mxu0 0.0
    %1431 = vmatpush1.msra.mxu0 0.0
    %1432 = vmatprep.subr.mxu0 0.0
    %1433 = vmatpush1.msra.mxu0 0.0
    %1434 = vmatprep.subr.mxu0 0.0
    %1435 = vmatpush1.msra.mxu0 0.0
    %1436 = vmatprep.subr.mxu0 0.0
    %1437 = vmatpush1.msra.mxu0 0.0
    %1438 = vmatprep.subr.mxu0 0.0
    %1439 = vmatpush1.msra.mxu0 0.0
    %1440 = vmatprep.subr.mxu0 0.0
    %1441 = vmatpush1.msra.mxu0 0.0
    %1442 = vmatprep.subr.mxu0 0.0
    %1443 = vmatpush1.msra.mxu0 0.0
    %1444 = vmatprep.subr.mxu0 0.0
    %1445 = vmatpush1.msra.mxu0 0.0
    %1446 = vmatprep.subr.mxu0 0.0
    %1447 = vmatpush1.msra.mxu0 0.0
    %1448 = vmatprep.subr.mxu0 0.0
    %1449 = vmatpush1.msra.mxu0 0.0
    %1450 = vmatprep.subr.mxu0 0.0
    %1451 = vmatpush1.msra.mxu0 0.0
    %1452 = vmatprep.subr.mxu0 0.0
    %1453 = vmatpush1.msra.mxu0 0.0
    %1454 = vmatprep.subr.mxu0 0.0
    %1455 = vmatpush1.msra.mxu0 0.0
    %1456 = vmatprep.subr.mxu0 0.0
    %1457 = vmatpush1.msra.mxu0 0.0
    %1458 = vmatprep.subr.mxu0 0.0
    %1459 = vmatpush1.msra.mxu0 0.0
    %1460 = vmatprep.subr.mxu0 0.0
    %1461 = vmatpush1.msra.mxu0 0.0
    %1462 = vmatprep.mubr.f32.mxu0 0.0
    %1463 = vmatmul.mubr.f32.gmra.mrb[0].mxu0 %v1390
    %v1464 = vpop.f32.mrb[0].mxu0
    %v1465 = vadd.f32 0.0, %v1464
    %v1466 = vpop.f32.mrb[0].mxu0
    %v1467 = vadd.f32 0.0, %v1466
    %1468 = vdwg.mxu0
    %1469 = vmatprep.subr.mxu0 %v134
    %1470 = vmatpush1.msra.mxu0 %v133
    %1471 = vmatprep.subr.mxu0 %v138
    %1472 = vmatpush1.msra.mxu0 %v137
    %1473 = vmatprep.subr.mxu0 %v142
    %1474 = vmatpush1.msra.mxu0 %v141
    %1475 = vmatprep.subr.mxu0 %v146
    %1476 = vmatpush1.msra.mxu0 %v145
    %1477 = vmatprep.subr.mxu0 %v150
    %1478 = vmatpush1.msra.mxu0 %v149
    %1479 = vmatprep.subr.mxu0 %v154
    %1480 = vmatpush1.msra.mxu0 %v153
    %1481 = vmatprep.subr.mxu0 %v158
    %1482 = vmatpush1.msra.mxu0 %v157
    %1483 = vmatprep.subr.mxu0 %v162
    %1484 = vmatpush1.msra.mxu0 %v161
    %1485 = vmatprep.subr.mxu0 %v166
    %1486 = vmatpush1.msra.mxu0 %v165
    %1487 = vmatprep.subr.mxu0 %v170
    %1488 = vmatpush1.msra.mxu0 %v169
    %1489 = vmatprep.subr.mxu0 %v174
    %1490 = vmatpush1.msra.mxu0 %v173
    %1491 = vmatprep.subr.mxu0 %v178
    %1492 = vmatpush1.msra.mxu0 %v177
    %1493 = vmatprep.subr.mxu0 %v182
    %1494 = vmatpush1.msra.mxu0 %v181
    %1495 = vmatprep.subr.mxu0 %v186
    %1496 = vmatpush1.msra.mxu0 %v185
    %1497 = vmatprep.subr.mxu0 %v190
    %1498 = vmatpush1.msra.mxu0 %v189
    %1499 = vmatprep.subr.mxu0 %v194
    %1500 = vmatpush1.msra.mxu0 %v193
    %1501 = vmatprep.subr.mxu0 0.0
    %1502 = vmatpush1.msra.mxu0 0.0
    %1503 = vmatprep.subr.mxu0 0.0
    %1504 = vmatpush1.msra.mxu0 0.0
    %1505 = vmatprep.subr.mxu0 0.0
    %1506 = vmatpush1.msra.mxu0 0.0
    %1507 = vmatprep.subr.mxu0 0.0
    %1508 = vmatpush1.msra.mxu0 0.0
    %1509 = vmatprep.subr.mxu0 0.0
    %1510 = vmatpush1.msra.mxu0 0.0
    %1511 = vmatprep.subr.mxu0 0.0
    %1512 = vmatpush1.msra.mxu0 0.0
    %1513 = vmatprep.subr.mxu0 0.0
    %1514 = vmatpush1.msra.mxu0 0.0
    %1515 = vmatprep.subr.mxu0 0.0
    %1516 = vmatpush1.msra.mxu0 0.0
    %1517 = vmatprep.subr.mxu0 0.0
    %1518 = vmatpush1.msra.mxu0 0.0
    %1519 = vmatprep.subr.mxu0 0.0
    %1520 = vmatpush1.msra.mxu0 0.0
    %1521 = vmatprep.subr.mxu0 0.0
    %1522 = vmatpush1.msra.mxu0 0.0
    %1523 = vmatprep.subr.mxu0 0.0
    %1524 = vmatpush1.msra.mxu0 0.0
    %1525 = vmatprep.subr.mxu0 0.0
    %1526 = vmatpush1.msra.mxu0 0.0
    %1527 = vmatprep.subr.mxu0 0.0
    %1528 = vmatpush1.msra.mxu0 0.0
    %1529 = vmatprep.subr.mxu0 0.0
    %1530 = vmatpush1.msra.mxu0 0.0
    %1531 = vmatprep.subr.mxu0 0.0
    %1532 = vmatpush1.msra.mxu0 0.0
    %1533 = vmatprep.mubr.f32.mxu0 0.0
    %1534 = vmatmul.mubr.f32.gmra.mrb[0].mxu0 %v1390
    %v1535 = vpop.f32.mrb[0].mxu0
    %v1536 = vadd.f32 0.0, %v1535
    %v1537 = vpop.f32.mrb[0].mxu0
    %v1538 = vadd.f32 0.0, %v1537
    %1539 = vdwg.mxu0
    %v1540 = vadd.f32 %v1394, %v1465
    %v1541 = vadd.f32 %v1395, %v1467
    %v1542 = vadd.f32 %v1396, %v1536
    %v1543 = vadd.f32 %v1397, %v1538
    %v1544 = vxor.u32 %v1540, 2147483648
    %v1545 = vmul.f32 %v1544, 1.442695
    %v1546 = vpow.pop %v1545
    %v1547 = vadd.f32 %v1546, 1.0
    %v1548 = vrcp.pop %v1547
    %v1549 = vmul.f32 1.0, %v1548
    %v1550 = vxor.u32 %v1541, 2147483648
    %v1551 = vmul.f32 %v1550, 1.442695
    %v1552 = vpow.pop %v1551
    %v1553 = vadd.f32 %v1552, 1.0
    %v1554 = vrcp.pop %v1553
    %v1555 = vmul.f32 1.0, %v1554
    %v1556 = vtanh.pop %v1542
    %v1557 = vxor.u32 %v1543, 2147483648
    %v1558 = vmul.f32 %v1557, 1.442695
    %v1559 = vpow.pop %v1558
    %v1560 = vadd.f32 %v1559, 1.0
    %v1561 = vrcp.pop %v1560
    %v1562 = vmul.f32 1.0, %v1561
    %v1563 = vmul.f32 %v1555, %v1388
    %v1564 = vmul.f32 %v1549, %v1556
    %v1565 = vadd.f32 %v1563, %v1564
    %v1566 = vtanh.pop %v1565
    %v1567 = vmul.f32 %v1562, %v1566
    %s1568 = scalar_lea.vmem [#allocation4], 40
    %1569 = vst [vmem:[%s1568] sm:$0xff] %v1567
    %s1570 = scalar_lea.vmem [#allocation5], 192
    %v1571 = vld [vmem:[%s1570] sm:$0xff]
    %v1572 = vld [vmem:[%s1570 + $0x8] sm:$0xff]
    %v1573 = vld [vmem:[%s1570 + $0x10] sm:$0xff]
    %v1574 = vld [vmem:[%s1570 + $0x18] sm:$0xff]
    %1575 = vmatprep.subr.mxu0 %v132
    %1576 = vmatpush1.msra.mxu0 %v131
    %1577 = vmatprep.subr.mxu0 %v136
    %1578 = vmatpush1.msra.mxu0 %v135
    %1579 = vmatprep.subr.mxu0 %v140
    %1580 = vmatpush1.msra.mxu0 %v139
    %1581 = vmatprep.subr.mxu0 %v144
    %1582 = vmatpush1.msra.mxu0 %v143
    %1583 = vmatprep.subr.mxu0 %v148
    %1584 = vmatpush1.msra.mxu0 %v147
    %1585 = vmatprep.subr.mxu0 %v152
    %1586 = vmatpush1.msra.mxu0 %v151
    %1587 = vmatprep.subr.mxu0 %v156
    %1588 = vmatpush1.msra.mxu0 %v155
    %1589 = vmatprep.subr.mxu0 %v160
    %1590 = vmatpush1.msra.mxu0 %v159
    %1591 = vmatprep.subr.mxu0 %v164
    %1592 = vmatpush1.msra.mxu0 %v163
    %1593 = vmatprep.subr.mxu0 %v168
    %1594 = vmatpush1.msra.mxu0 %v167
    %1595 = vmatprep.subr.mxu0 %v172
    %1596 = vmatpush1.msra.mxu0 %v171
    %1597 = vmatprep.subr.mxu0 %v176
    %1598 = vmatpush1.msra.mxu0 %v175
    %1599 = vmatprep.subr.mxu0 %v180
    %1600 = vmatpush1.msra.mxu0 %v179
    %1601 = vmatprep.subr.mxu0 %v184
    %1602 = vmatpush1.msra.mxu0 %v183
    %1603 = vmatprep.subr.mxu0 %v188
    %1604 = vmatpush1.msra.mxu0 %v187
    %1605 = vmatprep.subr.mxu0 %v192
    %1606 = vmatpush1.msra.mxu0 %v191
    %1607 = vmatprep.subr.mxu0 0.0
    %1608 = vmatpush1.msra.mxu0 0.0
    %1609 = vmatprep.subr.mxu0 0.0
    %1610 = vmatpush1.msra.mxu0 0.0
    %1611 = vmatprep.subr.mxu0 0.0
    %1612 = vmatpush1.msra.mxu0 0.0
    %1613 = vmatprep.subr.mxu0 0.0
    %1614 = vmatpush1.msra.mxu0 0.0
    %1615 = vmatprep.subr.mxu0 0.0
    %1616 = vmatpush1.msra.mxu0 0.0
    %1617 = vmatprep.subr.mxu0 0.0
    %1618 = vmatpush1.msra.mxu0 0.0
    %1619 = vmatprep.subr.mxu0 0.0
    %1620 = vmatpush1.msra.mxu0 0.0
    %1621 = vmatprep.subr.mxu0 0.0
    %1622 = vmatpush1.msra.mxu0 0.0
    %1623 = vmatprep.subr.mxu0 0.0
    %1624 = vmatpush1.msra.mxu0 0.0
    %1625 = vmatprep.subr.mxu0 0.0
    %1626 = vmatpush1.msra.mxu0 0.0
    %1627 = vmatprep.subr.mxu0 0.0
    %1628 = vmatpush1.msra.mxu0 0.0
    %1629 = vmatprep.subr.mxu0 0.0
    %1630 = vmatpush1.msra.mxu0 0.0
    %1631 = vmatprep.subr.mxu0 0.0
    %1632 = vmatpush1.msra.mxu0 0.0
    %1633 = vmatprep.subr.mxu0 0.0
    %1634 = vmatpush1.msra.mxu0 0.0
    %1635 = vmatprep.subr.mxu0 0.0
    %1636 = vmatpush1.msra.mxu0 0.0
    %1637 = vmatprep.subr.mxu0 0.0
    %1638 = vmatpush1.msra.mxu0 0.0
    %1639 = vmatprep.mubr.f32.mxu0 0.0
    %1640 = vmatmul.mubr.f32.gmra.mrb[0].mxu0 %v1567
    %v1641 = vpop.f32.mrb[0].mxu0
    %v1642 = vadd.f32 0.0, %v1641
    %v1643 = vpop.f32.mrb[0].mxu0
    %v1644 = vadd.f32 0.0, %v1643
    %1645 = vdwg.mxu0
    %1646 = vmatprep.subr.mxu0 %v134
    %1647 = vmatpush1.msra.mxu0 %v133
    %1648 = vmatprep.subr.mxu0 %v138
    %1649 = vmatpush1.msra.mxu0 %v137
    %1650 = vmatprep.subr.mxu0 %v142
    %1651 = vmatpush1.msra.mxu0 %v141
    %1652 = vmatprep.subr.mxu0 %v146
    %1653 = vmatpush1.msra.mxu0 %v145
    %1654 = vmatprep.subr.mxu0 %v150
    %1655 = vmatpush1.msra.mxu0 %v149
    %1656 = vmatprep.subr.mxu0 %v154
    %1657 = vmatpush1.msra.mxu0 %v153
    %1658 = vmatprep.subr.mxu0 %v158
    %1659 = vmatpush1.msra.mxu0 %v157
    %1660 = vmatprep.subr.mxu0 %v162
    %1661 = vmatpush1.msra.mxu0 %v161
    %1662 = vmatprep.subr.mxu0 %v166
    %1663 = vmatpush1.msra.mxu0 %v165
    %1664 = vmatprep.subr.mxu0 %v170
    %1665 = vmatpush1.msra.mxu0 %v169
    %1666 = vmatprep.subr.mxu0 %v174
    %1667 = vmatpush1.msra.mxu0 %v173
    %1668 = vmatprep.subr.mxu0 %v178
    %1669 = vmatpush1.msra.mxu0 %v177
    %1670 = vmatprep.subr.mxu0 %v182
    %1671 = vmatpush1.msra.mxu0 %v181
    %1672 = vmatprep.subr.mxu0 %v186
    %1673 = vmatpush1.msra.mxu0 %v185
    %1674 = vmatprep.subr.mxu0 %v190
    %1675 = vmatpush1.msra.mxu0 %v189
    %1676 = vmatprep.subr.mxu0 %v194
    %1677 = vmatpush1.msra.mxu0 %v193
    %1678 = vmatprep.subr.mxu0 0.0
    %1679 = vmatpush1.msra.mxu0 0.0
    %1680 = vmatprep.subr.mxu0 0.0
    %1681 = vmatpush1.msra.mxu0 0.0
    %1682 = vmatprep.subr.mxu0 0.0
    %1683 = vmatpush1.msra.mxu0 0.0
    %1684 = vmatprep.subr.mxu0 0.0
    %1685 = vmatpush1.msra.mxu0 0.0
    %1686 = vmatprep.subr.mxu0 0.0
    %1687 = vmatpush1.msra.mxu0 0.0
    %1688 = vmatprep.subr.mxu0 0.0
    %1689 = vmatpush1.msra.mxu0 0.0
    %1690 = vmatprep.subr.mxu0 0.0
    %1691 = vmatpush1.msra.mxu0 0.0
    %1692 = vmatprep.subr.mxu0 0.0
    %1693 = vmatpush1.msra.mxu0 0.0
    %1694 = vmatprep.subr.mxu0 0.0
    %1695 = vmatpush1.msra.mxu0 0.0
    %1696 = vmatprep.subr.mxu0 0.0
    %1697 = vmatpush1.msra.mxu0 0.0
    %1698 = vmatprep.subr.mxu0 0.0
    %1699 = vmatpush1.msra.mxu0 0.0
    %1700 = vmatprep.subr.mxu0 0.0
    %1701 = vmatpush1.msra.mxu0 0.0
    %1702 = vmatprep.subr.mxu0 0.0
    %1703 = vmatpush1.msra.mxu0 0.0
    %1704 = vmatprep.subr.mxu0 0.0
    %1705 = vmatpush1.msra.mxu0 0.0
    %1706 = vmatprep.subr.mxu0 0.0
    %1707 = vmatpush1.msra.mxu0 0.0
    %1708 = vmatprep.subr.mxu0 0.0
    %1709 = vmatpush1.msra.mxu0 0.0
    %1710 = vmatprep.mubr.f32.mxu0 0.0
    %1711 = vmatmul.mubr.f32.gmra.mrb[0].mxu0 %v1567
    %v1712 = vpop.f32.mrb[0].mxu0
    %v1713 = vadd.f32 0.0, %v1712
    %v1714 = vpop.f32.mrb[0].mxu0
    %v1715 = vadd.f32 0.0, %v1714
    %1716 = vdwg.mxu0
    %v1717 = vadd.f32 %v1571, %v1642
    %v1718 = vadd.f32 %v1572, %v1644
    %v1719 = vadd.f32 %v1573, %v1713
    %v1720 = vadd.f32 %v1574, %v1715
    %v1721 = vxor.u32 %v1717, 2147483648
    %v1722 = vmul.f32 %v1721, 1.442695
    %v1723 = vpow.pop %v1722
    %v1724 = vadd.f32 %v1723, 1.0
    %v1725 = vrcp.pop %v1724
    %v1726 = vmul.f32 1.0, %v1725
    %v1727 = vxor.u32 %v1718, 2147483648
    %v1728 = vmul.f32 %v1727, 1.442695
    %v1729 = vpow.pop %v1728
    %v1730 = vadd.f32 %v1729, 1.0
    %v1731 = vrcp.pop %v1730
    %v1732 = vmul.f32 1.0, %v1731
    %v1733 = vtanh.pop %v1719
    %v1734 = vxor.u32 %v1720, 2147483648
    %v1735 = vmul.f32 %v1734, 1.442695
    %v1736 = vpow.pop %v1735
    %v1737 = vadd.f32 %v1736, 1.0
    %v1738 = vrcp.pop %v1737
    %v1739 = vmul.f32 1.0, %v1738
    %v1740 = vmul.f32 %v1732, %v1565
    %v1741 = vmul.f32 %v1726, %v1733
    %v1742 = vadd.f32 %v1740, %v1741
    %v1743 = vtanh.pop %v1742
    %v1744 = vmul.f32 %v1739, %v1743
    %s1745 = scalar_lea.vmem [#allocation4], 48
    %1746 = vst [vmem:[%s1745] sm:$0xff] %v1744
    %s1747 = scalar_lea.vmem [#allocation5], 224
    %v1748 = vld [vmem:[%s1747] sm:$0xff]
    %v1749 = vld [vmem:[%s1747 + $0x8] sm:$0xff]
    %v1750 = vld [vmem:[%s1747 + $0x10] sm:$0xff]
    %v1751 = vld [vmem:[%s1747 + $0x18] sm:$0xff]
    %1752 = vmatprep.subr.mxu0 %v132
    %1753 = vmatpush1.msra.mxu0 %v131
    %1754 = vmatprep.subr.mxu0 %v136
    %1755 = vmatpush1.msra.mxu0 %v135
    %1756 = vmatprep.subr.mxu0 %v140
    %1757 = vmatpush1.msra.mxu0 %v139
    %1758 = vmatprep.subr.mxu0 %v144
    %1759 = vmatpush1.msra.mxu0 %v143
    %1760 = vmatprep.subr.mxu0 %v148
    %1761 = vmatpush1.msra.mxu0 %v147
    %1762 = vmatprep.subr.mxu0 %v152
    %1763 = vmatpush1.msra.mxu0 %v151
    %1764 = vmatprep.subr.mxu0 %v156
    %1765 = vmatpush1.msra.mxu0 %v155
    %1766 = vmatprep.subr.mxu0 %v160
    %1767 = vmatpush1.msra.mxu0 %v159
    %1768 = vmatprep.subr.mxu0 %v164
    %1769 = vmatpush1.msra.mxu0 %v163
    %1770 = vmatprep.subr.mxu0 %v168
    %1771 = vmatpush1.msra.mxu0 %v167
    %1772 = vmatprep.subr.mxu0 %v172
    %1773 = vmatpush1.msra.mxu0 %v171
    %1774 = vmatprep.subr.mxu0 %v176
    %1775 = vmatpush1.msra.mxu0 %v175
    %1776 = vmatprep.subr.mxu0 %v180
    %1777 = vmatpush1.msra.mxu0 %v179
    %1778 = vmatprep.subr.mxu0 %v184
    %1779 = vmatpush1.msra.mxu0 %v183
    %1780 = vmatprep.subr.mxu0 %v188
    %1781 = vmatpush1.msra.mxu0 %v187
    %1782 = vmatprep.subr.mxu0 %v192
    %1783 = vmatpush1.msra.mxu0 %v191
    %1784 = vmatprep.subr.mxu0 0.0
    %1785 = vmatpush1.msra.mxu0 0.0
    %1786 = vmatprep.subr.mxu0 0.0
    %1787 = vmatpush1.msra.mxu0 0.0
    %1788 = vmatprep.subr.mxu0 0.0
    %1789 = vmatpush1.msra.mxu0 0.0
    %1790 = vmatprep.subr.mxu0 0.0
    %1791 = vmatpush1.msra.mxu0 0.0
    %1792 = vmatprep.subr.mxu0 0.0
    %1793 = vmatpush1.msra.mxu0 0.0
    %1794 = vmatprep.subr.mxu0 0.0
    %1795 = vmatpush1.msra.mxu0 0.0
    %1796 = vmatprep.subr.mxu0 0.0
    %1797 = vmatpush1.msra.mxu0 0.0
    %1798 = vmatprep.subr.mxu0 0.0
    %1799 = vmatpush1.msra.mxu0 0.0
    %1800 = vmatprep.subr.mxu0 0.0
    %1801 = vmatpush1.msra.mxu0 0.0
    %1802 = vmatprep.subr.mxu0 0.0
    %1803 = vmatpush1.msra.mxu0 0.0
    %1804 = vmatprep.subr.mxu0 0.0
    %1805 = vmatpush1.msra.mxu0 0.0
    %1806 = vmatprep.subr.mxu0 0.0
    %1807 = vmatpush1.msra.mxu0 0.0
    %1808 = vmatprep.subr.mxu0 0.0
    %1809 = vmatpush1.msra.mxu0 0.0
    %1810 = vmatprep.subr.mxu0 0.0
    %1811 = vmatpush1.msra.mxu0 0.0
    %1812 = vmatprep.subr.mxu0 0.0
    %1813 = vmatpush1.msra.mxu0 0.0
    %1814 = vmatprep.subr.mxu0 0.0
    %1815 = vmatpush1.msra.mxu0 0.0
    %1816 = vmatprep.mubr.f32.mxu0 0.0
    %1817 = vmatmul.mubr.f32.gmra.mrb[0].mxu0 %v1744
    %v1818 = vpop.f32.mrb[0].mxu0
    %v1819 = vadd.f32 0.0, %v1818
    %v1820 = vpop.f32.mrb[0].mxu0
    %v1821 = vadd.f32 0.0, %v1820
    %1822 = vdwg.mxu0
    %1823 = vmatprep.subr.mxu0 %v134
    %1824 = vmatpush1.msra.mxu0 %v133
    %1825 = vmatprep.subr.mxu0 %v138
    %1826 = vmatpush1.msra.mxu0 %v137
    %1827 = vmatprep.subr.mxu0 %v142
    %1828 = vmatpush1.msra.mxu0 %v141
    %1829 = vmatprep.subr.mxu0 %v146
    %1830 = vmatpush1.msra.mxu0 %v145
    %1831 = vmatprep.subr.mxu0 %v150
    %1832 = vmatpush1.msra.mxu0 %v149
    %1833 = vmatprep.subr.mxu0 %v154
    %1834 = vmatpush1.msra.mxu0 %v153
    %1835 = vmatprep.subr.mxu0 %v158
    %1836 = vmatpush1.msra.mxu0 %v157
    %1837 = vmatprep.subr.mxu0 %v162
    %1838 = vmatpush1.msra.mxu0 %v161
    %1839 = vmatprep.subr.mxu0 %v166
    %1840 = vmatpush1.msra.mxu0 %v165
    %1841 = vmatprep.subr.mxu0 %v170
    %1842 = vmatpush1.msra.mxu0 %v169
    %1843 = vmatprep.subr.mxu0 %v174
    %1844 = vmatpush1.msra.mxu0 %v173
    %1845 = vmatprep.subr.mxu0 %v178
    %1846 = vmatpush1.msra.mxu0 %v177
    %1847 = vmatprep.subr.mxu0 %v182
    %1848 = vmatpush1.msra.mxu0 %v181
    %1849 = vmatprep.subr.mxu0 %v186
    %1850 = vmatpush1.msra.mxu0 %v185
    %1851 = vmatprep.subr.mxu0 %v190
    %1852 = vmatpush1.msra.mxu0 %v189
    %1853 = vmatprep.subr.mxu0 %v194
    %1854 = vmatpush1.msra.mxu0 %v193
    %1855 = vmatprep.subr.mxu0 0.0
    %1856 = vmatpush1.msra.mxu0 0.0
    %1857 = vmatprep.subr.mxu0 0.0
    %1858 = vmatpush1.msra.mxu0 0.0
    %1859 = vmatprep.subr.mxu0 0.0
    %1860 = vmatpush1.msra.mxu0 0.0
    %1861 = vmatprep.subr.mxu0 0.0
    %1862 = vmatpush1.msra.mxu0 0.0
    %1863 = vmatprep.subr.mxu0 0.0
    %1864 = vmatpush1.msra.mxu0 0.0
    %1865 = vmatprep.subr.mxu0 0.0
    %1866 = vmatpush1.msra.mxu0 0.0
    %1867 = vmatprep.subr.mxu0 0.0
    %1868 = vmatpush1.msra.mxu0 0.0
    %1869 = vmatprep.subr.mxu0 0.0
    %1870 = vmatpush1.msra.mxu0 0.0
    %1871 = vmatprep.subr.mxu0 0.0
    %1872 = vmatpush1.msra.mxu0 0.0
    %1873 = vmatprep.subr.mxu0 0.0
    %1874 = vmatpush1.msra.mxu0 0.0
    %1875 = vmatprep.subr.mxu0 0.0
    %1876 = vmatpush1.msra.mxu0 0.0
    %1877 = vmatprep.subr.mxu0 0.0
    %1878 = vmatpush1.msra.mxu0 0.0
    %1879 = vmatprep.subr.mxu0 0.0
    %1880 = vmatpush1.msra.mxu0 0.0
    %1881 = vmatprep.subr.mxu0 0.0
    %1882 = vmatpush1.msra.mxu0 0.0
    %1883 = vmatprep.subr.mxu0 0.0
    %1884 = vmatpush1.msra.mxu0 0.0
    %1885 = vmatprep.subr.mxu0 0.0
    %1886 = vmatpush1.msra.mxu0 0.0
    %1887 = vmatprep.mubr.f32.mxu0 0.0
    %1888 = vmatmul.mubr.f32.gmra.mrb[0].mxu0 %v1744
    %v1889 = vpop.f32.mrb[0].mxu0
    %v1890 = vadd.f32 0.0, %v1889
    %v1891 = vpop.f32.mrb[0].mxu0
    %v1892 = vadd.f32 0.0, %v1891
    %1893 = vdwg.mxu0
    %v1894 = vadd.f32 %v1748, %v1819
    %v1895 = vadd.f32 %v1749, %v1821
    %v1896 = vadd.f32 %v1750, %v1890
    %v1897 = vadd.f32 %v1751, %v1892
    %v1898 = vxor.u32 %v1894, 2147483648
    %v1899 = vmul.f32 %v1898, 1.442695
    %v1900 = vpow.pop %v1899
    %v1901 = vadd.f32 %v1900, 1.0
    %v1902 = vrcp.pop %v1901
    %v1903 = vmul.f32 1.0, %v1902
    %v1904 = vxor.u32 %v1895, 2147483648
    %v1905 = vmul.f32 %v1904, 1.442695
    %v1906 = vpow.pop %v1905
    %v1907 = vadd.f32 %v1906, 1.0
    %v1908 = vrcp.pop %v1907
    %v1909 = vmul.f32 1.0, %v1908
    %v1910 = vtanh.pop %v1896
    %v1911 = vxor.u32 %v1897, 2147483648
    %v1912 = vmul.f32 %v1911, 1.442695
    %v1913 = vpow.pop %v1912
    %v1914 = vadd.f32 %v1913, 1.0
    %v1915 = vrcp.pop %v1914
    %v1916 = vmul.f32 1.0, %v1915
    %v1917 = vmul.f32 %v1909, %v1742
    %v1918 = vmul.f32 %v1903, %v1910
    %v1919 = vadd.f32 %v1917, %v1918
    %v1920 = vtanh.pop %v1919
    %v1921 = vmul.f32 %v1916, %v1920
    %s1922 = scalar_lea.vmem [#allocation4], 56
    %1923 = vst [vmem:[%s1922] sm:$0xff] %v1921
    %1924 = vst [vmem:[#allocation2] sm:$0xff] %v1921
    %1925 = vst [vmem:[#allocation3] sm:$0xff] %v1919
    %v1926 = vld [vmem:[#allocation12] sm:$0xff]
    %v1927 = vld [vmem:[#allocation12 + $0x8] sm:$0xff]
    %v1928 = vld [vmem:[#allocation12 + $0x10] sm:$0xff]
    %v1929 = vld [vmem:[#allocation12 + $0x18] sm:$0xff]
    %v1930 = vld [vmem:[#allocation12 + $0x20] sm:$0xff]
    %v1931 = vld [vmem:[#allocation12 + $0x28] sm:$0xff]
    %v1932 = vld [vmem:[#allocation12 + $0x30] sm:$0xff]
    %v1933 = vld [vmem:[#allocation12 + $0x38] sm:$0xff]
    %v1934 = vld [vmem:[#allocation12 + $0x40] sm:$0xff]
    %v1935 = vld [vmem:[#allocation12 + $0x48] sm:$0xff]
    %v1936 = vld [vmem:[#allocation12 + $0x50] sm:$0xff]
    %v1937 = vld [vmem:[#allocation12 + $0x58] sm:$0xff]
    %v1938 = vld [vmem:[#allocation12 + $0x60] sm:$0xff]
    %v1939 = vld [vmem:[#allocation12 + $0x68] sm:$0xff]
    %v1940 = vld [vmem:[#allocation12 + $0x70] sm:$0xff]
    %v1941 = vld [vmem:[#allocation12 + $0x78] sm:$0xff]
    %v1942 = vld [vmem:[#allocation12 + $0x80] sm:$0xff]
    %v1943 = vld [vmem:[#allocation12 + $0x88] sm:$0xff]
    %v1944 = vld [vmem:[#allocation12 + $0x90] sm:$0xff]
    %v1945 = vld [vmem:[#allocation12 + $0x98] sm:$0xff]
    %v1946 = vld [vmem:[#allocation12 + $0xa0] sm:$0xff]
    %v1947 = vld [vmem:[#allocation12 + $0xa8] sm:$0xff]
    %v1948 = vld [vmem:[#allocation12 + $0xb0] sm:$0xff]
    %v1949 = vld [vmem:[#allocation12 + $0xb8] sm:$0xff]
    %v1950 = vld [vmem:[#allocation12 + $0xc0] sm:$0xff]
    %v1951 = vld [vmem:[#allocation12 + $0xc8] sm:$0xff]
    %v1952 = vld [vmem:[#allocation12 + $0xd0] sm:$0xff]
    %v1953 = vld [vmem:[#allocation12 + $0xd8] sm:$0xff]
    %v1954 = vld [vmem:[#allocation12 + $0xe0] sm:$0xff]
    %v1955 = vld [vmem:[#allocation12 + $0xe8] sm:$0xff]
    %v1956 = vld [vmem:[#allocation12 + $0xf0] sm:$0xff]
    %v1957 = vld [vmem:[#allocation12 + $0xf8] sm:$0xff]
    %v1958 = vld [vmem:[#allocation12 + $0x100] sm:$0xff]
    %v1959 = vld [vmem:[#allocation12 + $0x108] sm:$0xff]
    %v1960 = vld [vmem:[#allocation12 + $0x110] sm:$0xff]
    %v1961 = vld [vmem:[#allocation12 + $0x118] sm:$0xff]
    %v1962 = vld [vmem:[#allocation12 + $0x120] sm:$0xff]
    %v1963 = vld [vmem:[#allocation12 + $0x128] sm:$0xff]
    %v1964 = vld [vmem:[#allocation12 + $0x130] sm:$0xff]
    %v1965 = vld [vmem:[#allocation12 + $0x138] sm:$0xff]
    %v1966 = vld [vmem:[#allocation12 + $0x140] sm:$0xff]
    %v1967 = vld [vmem:[#allocation12 + $0x148] sm:$0xff]
    %v1968 = vld [vmem:[#allocation12 + $0x150] sm:$0xff]
    %v1969 = vld [vmem:[#allocation12 + $0x158] sm:$0xff]
    %v1970 = vld [vmem:[#allocation12 + $0x160] sm:$0xff]
    %v1971 = vld [vmem:[#allocation12 + $0x168] sm:$0xff]
    %v1972 = vld [vmem:[#allocation12 + $0x170] sm:$0xff]
    %v1973 = vld [vmem:[#allocation12 + $0x178] sm:$0xff]
    %v1974 = vld [vmem:[#allocation12 + $0x180] sm:$0xff]
    %v1975 = vld [vmem:[#allocation12 + $0x188] sm:$0xff]
    %v1976 = vld [vmem:[#allocation12 + $0x190] sm:$0xff]
    %v1977 = vld [vmem:[#allocation12 + $0x198] sm:$0xff]
    %v1978 = vld [vmem:[#allocation12 + $0x1a0] sm:$0xff]
    %v1979 = vld [vmem:[#allocation12 + $0x1a8] sm:$0xff]
    %v1980 = vld [vmem:[#allocation12 + $0x1b0] sm:$0xff]
    %v1981 = vld [vmem:[#allocation12 + $0x1b8] sm:$0xff]
    %v1982 = vld [vmem:[#allocation12 + $0x1c0] sm:$0xff]
    %v1983 = vld [vmem:[#allocation12 + $0x1c8] sm:$0xff]
    %v1984 = vld [vmem:[#allocation12 + $0x1d0] sm:$0xff]
    %v1985 = vld [vmem:[#allocation12 + $0x1d8] sm:$0xff]
    %v1986 = vld [vmem:[#allocation12 + $0x1e0] sm:$0xff]
    %v1987 = vld [vmem:[#allocation12 + $0x1e8] sm:$0xff]
    %v1988 = vld [vmem:[#allocation12 + $0x1f0] sm:$0xff]
    %v1989 = vld [vmem:[#allocation12 + $0x1f8] sm:$0xff]
    %v1990 = vld [vmem:[#allocation14] sm:$0xff]
    %v1991 = vld [vmem:[#allocation14 + $0x8] sm:$0xff]
    %v1992 = vld [vmem:[#allocation14 + $0x10] sm:$0xff]
    %v1993 = vld [vmem:[#allocation14 + $0x18] sm:$0xff]
    %v1994 = vld [vmem:[#allocation14 + $0x20] sm:$0xff]
    %v1995 = vld [vmem:[#allocation14 + $0x28] sm:$0xff]
    %v1996 = vld [vmem:[#allocation14 + $0x30] sm:$0xff]
    %v1997 = vld [vmem:[#allocation14 + $0x38] sm:$0xff]
    %v1998 = vld [vmem:[#allocation14 + $0x40] sm:$0xff]
    %v1999 = vld [vmem:[#allocation14 + $0x48] sm:$0xff]
    %v2000 = vld [vmem:[#allocation14 + $0x50] sm:$0xff]
    %v2001 = vld [vmem:[#allocation14 + $0x58] sm:$0xff]
    %v2002 = vld [vmem:[#allocation14 + $0x60] sm:$0xff]
    %v2003 = vld [vmem:[#allocation14 + $0x68] sm:$0xff]
    %v2004 = vld [vmem:[#allocation14 + $0x70] sm:$0xff]
    %v2005 = vld [vmem:[#allocation14 + $0x78] sm:$0xff]
    %v2006 = vld [vmem:[#allocation14 + $0x80] sm:$0xff]
    %v2007 = vld [vmem:[#allocation14 + $0x88] sm:$0xff]
    %v2008 = vld [vmem:[#allocation14 + $0x90] sm:$0xff]
    %v2009 = vld [vmem:[#allocation14 + $0x98] sm:$0xff]
    %v2010 = vld [vmem:[#allocation14 + $0xa0] sm:$0xff]
    %v2011 = vld [vmem:[#allocation14 + $0xa8] sm:$0xff]
    %v2012 = vld [vmem:[#allocation14 + $0xb0] sm:$0xff]
    %v2013 = vld [vmem:[#allocation14 + $0xb8] sm:$0xff]
    %v2014 = vld [vmem:[#allocation14 + $0xc0] sm:$0xff]
    %v2015 = vld [vmem:[#allocation14 + $0xc8] sm:$0xff]
    %v2016 = vld [vmem:[#allocation14 + $0xd0] sm:$0xff]
    %v2017 = vld [vmem:[#allocation14 + $0xd8] sm:$0xff]
    %v2018 = vld [vmem:[#allocation14 + $0xe0] sm:$0xff]
    %v2019 = vld [vmem:[#allocation14 + $0xe8] sm:$0xff]
    %v2020 = vld [vmem:[#allocation14 + $0xf0] sm:$0xff]
    %v2021 = vld [vmem:[#allocation14 + $0xf8] sm:$0xff]
    %v2022 = vld [vmem:[#allocation14 + $0x100] sm:$0xff]
    %v2023 = vld [vmem:[#allocation14 + $0x108] sm:$0xff]
    %v2024 = vld [vmem:[#allocation14 + $0x110] sm:$0xff]
    %v2025 = vld [vmem:[#allocation14 + $0x118] sm:$0xff]
    %v2026 = vld [vmem:[#allocation14 + $0x120] sm:$0xff]
    %v2027 = vld [vmem:[#allocation14 + $0x128] sm:$0xff]
    %v2028 = vld [vmem:[#allocation14 + $0x130] sm:$0xff]
    %v2029 = vld [vmem:[#allocation14 + $0x138] sm:$0xff]
    %v2030 = vld [vmem:[#allocation14 + $0x140] sm:$0xff]
    %v2031 = vld [vmem:[#allocation14 + $0x148] sm:$0xff]
    %v2032 = vld [vmem:[#allocation14 + $0x150] sm:$0xff]
    %v2033 = vld [vmem:[#allocation14 + $0x158] sm:$0xff]
    %v2034 = vld [vmem:[#allocation14 + $0x160] sm:$0xff]
    %v2035 = vld [vmem:[#allocation14 + $0x168] sm:$0xff]
    %v2036 = vld [vmem:[#allocation14 + $0x170] sm:$0xff]
    %v2037 = vld [vmem:[#allocation14 + $0x178] sm:$0xff]
    %v2038 = vld [vmem:[#allocation14 + $0x180] sm:$0xff]
    %v2039 = vld [vmem:[#allocation14 + $0x188] sm:$0xff]
    %v2040 = vld [vmem:[#allocation14 + $0x190] sm:$0xff]
    %v2041 = vld [vmem:[#allocation14 + $0x198] sm:$0xff]
    %v2042 = vld [vmem:[#allocation14 + $0x1a0] sm:$0xff]
    %v2043 = vld [vmem:[#allocation14 + $0x1a8] sm:$0xff]
    %v2044 = vld [vmem:[#allocation14 + $0x1b0] sm:$0xff]
    %v2045 = vld [vmem:[#allocation14 + $0x1b8] sm:$0xff]
    %v2046 = vld [vmem:[#allocation14 + $0x1c0] sm:$0xff]
    %v2047 = vld [vmem:[#allocation14 + $0x1c8] sm:$0xff]
    %v2048 = vld [vmem:[#allocation14 + $0x1d0] sm:$0xff]
    %v2049 = vld [vmem:[#allocation14 + $0x1d8] sm:$0xff]
    %v2050 = vld [vmem:[#allocation14 + $0x1e0] sm:$0xff]
    %v2051 = vld [vmem:[#allocation14 + $0x1e8] sm:$0xff]
    %v2052 = vld [vmem:[#allocation14 + $0x1f0] sm:$0xff]
    %v2053 = vld [vmem:[#allocation14 + $0x1f8] sm:$0xff]
    %v2054 = vld [vmem:[%s6] sm:$0xf]
    %v2055 = vld [vmem:[#allocation4] sm:$0xff]
    %v2056 = vld [vmem:[#allocation4 + $0x8] sm:$0xff]
    %v2057 = vld [vmem:[#allocation4 + $0x10] sm:$0xff]
    %v2058 = vld [vmem:[#allocation4 + $0x18] sm:$0xff]
    %v2059 = vld [vmem:[#allocation4 + $0x20] sm:$0xff]
    %v2060 = vld [vmem:[#allocation4 + $0x28] sm:$0xff]
    %v2061 = vld [vmem:[#allocation4 + $0x30] sm:$0xff]
    %v2062 = vld [vmem:[#allocation4 + $0x38] sm:$0xff]
    %v2064 = vlaneseq
    %v2065 = vshrl.u32 %v2064, 7
    %v2066 = vsub.s32 0, %v2065
    %v2067 = vrot.slane %v2054, %v2066
    %v2068 = vlaneseq
    %v2069 = vshrl.u32 %v2068, 7
    %v2070 = vsub.s32 1, %v2069
    %v2071 = vrot.slane %v2054, %v2070
    %v2072 = vlaneseq
    %v2073 = vshrl.u32 %v2072, 7
    %v2074 = vsub.s32 2, %v2073
    %v2075 = vrot.slane %v2054, %v2074
    %v2076 = vlaneseq
    %v2077 = vshrl.u32 %v2076, 7
    %v2078 = vsub.s32 3, %v2077
    %v2079 = vrot.slane %v2054, %v2078
    %2084 = vmatprep.subr.mxu0 %v1927
    %2085 = vmatpush1.msra.mxu0 %v1926
    %2086 = vmatprep.subr.mxu0 %v1931
    %2087 = vmatpush1.msra.mxu0 %v1930
    %2088 = vmatprep.subr.mxu0 %v1935
    %2089 = vmatpush1.msra.mxu0 %v1934
    %2090 = vmatprep.subr.mxu0 %v1939
    %2091 = vmatpush1.msra.mxu0 %v1938
    %2092 = vmatprep.subr.mxu0 %v1943
    %2093 = vmatpush1.msra.mxu0 %v1942
    %2094 = vmatprep.subr.mxu0 %v1947
    %2095 = vmatpush1.msra.mxu0 %v1946
    %2096 = vmatprep.subr.mxu0 %v1951
    %2097 = vmatpush1.msra.mxu0 %v1950
    %2098 = vmatprep.subr.mxu0 %v1955
    %2099 = vmatpush1.msra.mxu0 %v1954
    %2100 = vmatprep.subr.mxu0 %v1959
    %2101 = vmatpush1.msra.mxu0 %v1958
    %2102 = vmatprep.subr.mxu0 %v1963
    %2103 = vmatpush1.msra.mxu0 %v1962
    %2104 = vmatprep.subr.mxu0 %v1967
    %2105 = vmatpush1.msra.mxu0 %v1966
    %2106 = vmatprep.subr.mxu0 %v1971
    %2107 = vmatpush1.msra.mxu0 %v1970
    %2108 = vmatprep.subr.mxu0 %v1975
    %2109 = vmatpush1.msra.mxu0 %v1974
    %2110 = vmatprep.subr.mxu0 %v1979
    %2111 = vmatpush1.msra.mxu0 %v1978
    %2112 = vmatprep.subr.mxu0 %v1983
    %2113 = vmatpush1.msra.mxu0 %v1982
    %2114 = vmatprep.subr.mxu0 %v1987
    %2115 = vmatpush1.msra.mxu0 %v1986
    %2116 = vmatprep.subr.mxu0 0.0
    %2117 = vmatpush1.msra.mxu0 0.0
    %2118 = vmatprep.subr.mxu0 0.0
    %2119 = vmatpush1.msra.mxu0 0.0
    %2120 = vmatprep.subr.mxu0 0.0
    %2121 = vmatpush1.msra.mxu0 0.0
    %2122 = vmatprep.subr.mxu0 0.0
    %2123 = vmatpush1.msra.mxu0 0.0
    %2124 = vmatprep.subr.mxu0 0.0
    %2125 = vmatpush1.msra.mxu0 0.0
    %2126 = vmatprep.subr.mxu0 0.0
    %2127 = vmatpush1.msra.mxu0 0.0
    %2128 = vmatprep.subr.mxu0 0.0
    %2129 = vmatpush1.msra.mxu0 0.0
    %2130 = vmatprep.subr.mxu0 0.0
    %2131 = vmatpush1.msra.mxu0 0.0
    %2132 = vmatprep.subr.mxu0 0.0
    %2133 = vmatpush1.msra.mxu0 0.0
    %2134 = vmatprep.subr.mxu0 0.0
    %2135 = vmatpush1.msra.mxu0 0.0
    %2136 = vmatprep.subr.mxu0 0.0
    %2137 = vmatpush1.msra.mxu0 0.0
    %2138 = vmatprep.subr.mxu0 0.0
    %2139 = vmatpush1.msra.mxu0 0.0
    %2140 = vmatprep.subr.mxu0 0.0
    %2141 = vmatpush1.msra.mxu0 0.0
    %2142 = vmatprep.subr.mxu0 0.0
    %2143 = vmatpush1.msra.mxu0 0.0
    %2144 = vmatprep.subr.mxu0 0.0
    %2145 = vmatpush1.msra.mxu0 0.0
    %2146 = vmatprep.subr.mxu0 0.0
    %2147 = vmatpush1.msra.mxu0 0.0
    %2148 = vmatprep.mubr.f32.mxu0 0.0
    %2149 = vmatmul.mubr.f32.gmra.mrb[0].mxu0 %v2055
    %v2150 = vpop.f32.mrb[0].mxu0
    %v2151 = vadd.f32 %v2067, %v2150
    %v2152 = vpop.f32.mrb[0].mxu0
    %v2153 = vadd.f32 %v2071, %v2152
    %2154 = vmatprep.mubr.f32.mxu0 0.0
    %2155 = vmatmul.mubr.f32.gmra.mrb[0].mxu0 %v2056
    %v2156 = vpop.f32.mrb[0].mxu0
    %v2157 = vadd.f32 %v2067, %v2156
    %v2158 = vpop.f32.mrb[0].mxu0
    %v2159 = vadd.f32 %v2071, %v2158
    %2160 = vmatprep.mubr.f32.mxu0 0.0
    %2161 = vmatmul.mubr.f32.gmra.mrb[0].mxu0 %v2057
    %v2162 = vpop.f32.mrb[0].mxu0
    %v2163 = vadd.f32 %v2067, %v2162
    %v2164 = vpop.f32.mrb[0].mxu0
    %v2165 = vadd.f32 %v2071, %v2164
    %2166 = vmatprep.mubr.f32.mxu0 0.0
    %2167 = vmatmul.mubr.f32.gmra.mrb[0].mxu0 %v2058
    %v2168 = vpop.f32.mrb[0].mxu0
    %v2169 = vadd.f32 %v2067, %v2168
    %v2170 = vpop.f32.mrb[0].mxu0
    %v2171 = vadd.f32 %v2071, %v2170
    %2172 = vmatprep.mubr.f32.mxu0 0.0
    %2173 = vmatmul.mubr.f32.gmra.mrb[0].mxu0 %v2059
    %v2174 = vpop.f32.mrb[0].mxu0
    %v2175 = vadd.f32 %v2067, %v2174
    %v2176 = vpop.f32.mrb[0].mxu0
    %v2177 = vadd.f32 %v2071, %v2176
    %2178 = vmatprep.mubr.f32.mxu0 0.0
    %2179 = vmatmul.mubr.f32.gmra.mrb[0].mxu0 %v2060
    %v2180 = vpop.f32.mrb[0].mxu0
    %v2181 = vadd.f32 %v2067, %v2180
    %v2182 = vpop.f32.mrb[0].mxu0
    %v2183 = vadd.f32 %v2071, %v2182
    %2184 = vmatprep.mubr.f32.mxu0 0.0
    %2185 = vmatmul.mubr.f32.gmra.mrb[0].mxu0 %v2061
    %v2186 = vpop.f32.mrb[0].mxu0
    %v2187 = vadd.f32 %v2067, %v2186
    %v2188 = vpop.f32.mrb[0].mxu0
    %v2189 = vadd.f32 %v2071, %v2188
    %2190 = vmatprep.mubr.f32.mxu0 0.0
    %2191 = vmatmul.mubr.f32.gmra.mrb[0].mxu0 %v2062
    %v2192 = vpop.f32.mrb[0].mxu0
    %v2193 = vadd.f32 %v2067, %v2192
    %v2194 = vpop.f32.mrb[0].mxu0
    %v2195 = vadd.f32 %v2071, %v2194
    %2196 = vdwg.mxu0
    %2197 = vmatprep.subr.mxu0 %v1929
    %2198 = vmatpush1.msra.mxu0 %v1928
    %2199 = vmatprep.subr.mxu0 %v1933
    %2200 = vmatpush1.msra.mxu0 %v1932
    %2201 = vmatprep.subr.mxu0 %v1937
    %2202 = vmatpush1.msra.mxu0 %v1936
    %2203 = vmatprep.subr.mxu0 %v1941
    %2204 = vmatpush1.msra.mxu0 %v1940
    %2205 = vmatprep.subr.mxu0 %v1945
    %2206 = vmatpush1.msra.mxu0 %v1944
    %2207 = vmatprep.subr.mxu0 %v1949
    %2208 = vmatpush1.msra.mxu0 %v1948
    %2209 = vmatprep.subr.mxu0 %v1953
    %2210 = vmatpush1.msra.mxu0 %v1952
    %2211 = vmatprep.subr.mxu0 %v1957
    %2212 = vmatpush1.msra.mxu0 %v1956
    %2213 = vmatprep.subr.mxu0 %v1961
    %2214 = vmatpush1.msra.mxu0 %v1960
    %2215 = vmatprep.subr.mxu0 %v1965
    %2216 = vmatpush1.msra.mxu0 %v1964
    %2217 = vmatprep.subr.mxu0 %v1969
    %2218 = vmatpush1.msra.mxu0 %v1968
    %2219 = vmatprep.subr.mxu0 %v1973
    %2220 = vmatpush1.msra.mxu0 %v1972
    %2221 = vmatprep.subr.mxu0 %v1977
    %2222 = vmatpush1.msra.mxu0 %v1976
    %2223 = vmatprep.subr.mxu0 %v1981
    %2224 = vmatpush1.msra.mxu0 %v1980
    %2225 = vmatprep.subr.mxu0 %v1985
    %2226 = vmatpush1.msra.mxu0 %v1984
    %2227 = vmatprep.subr.mxu0 %v1989
    %2228 = vmatpush1.msra.mxu0 %v1988
    %2229 = vmatprep.subr.mxu0 0.0
    %2230 = vmatpush1.msra.mxu0 0.0
    %2231 = vmatprep.subr.mxu0 0.0
    %2232 = vmatpush1.msra.mxu0 0.0
    %2233 = vmatprep.subr.mxu0 0.0
    %2234 = vmatpush1.msra.mxu0 0.0
    %2235 = vmatprep.subr.mxu0 0.0
    %2236 = vmatpush1.msra.mxu0 0.0
    %2237 = vmatprep.subr.mxu0 0.0
    %2238 = vmatpush1.msra.mxu0 0.0
    %2239 = vmatprep.subr.mxu0 0.0
    %2240 = vmatpush1.msra.mxu0 0.0
    %2241 = vmatprep.subr.mxu0 0.0
    %2242 = vmatpush1.msra.mxu0 0.0
    %2243 = vmatprep.subr.mxu0 0.0
    %2244 = vmatpush1.msra.mxu0 0.0
    %2245 = vmatprep.subr.mxu0 0.0
    %2246 = vmatpush1.msra.mxu0 0.0
    %2247 = vmatprep.subr.mxu0 0.0
    %2248 = vmatpush1.msra.mxu0 0.0
    %2249 = vmatprep.subr.mxu0 0.0
    %2250 = vmatpush1.msra.mxu0 0.0
    %2251 = vmatprep.subr.mxu0 0.0
    %2252 = vmatpush1.msra.mxu0 0.0
    %2253 = vmatprep.subr.mxu0 0.0
    %2254 = vmatpush1.msra.mxu0 0.0
    %2255 = vmatprep.subr.mxu0 0.0
    %2256 = vmatpush1.msra.mxu0 0.0
    %2257 = vmatprep.subr.mxu0 0.0
    %2258 = vmatpush1.msra.mxu0 0.0
    %2259 = vmatprep.subr.mxu0 0.0
    %2260 = vmatpush1.msra.mxu0 0.0
    %2261 = vmatprep.mubr.f32.mxu0 0.0
    %2262 = vmatmul.mubr.f32.gmra.mrb[0].mxu0 %v2055
    %v2263 = vpop.f32.mrb[0].mxu0
    %v2264 = vadd.f32 %v2075, %v2263
    %v2265 = vpop.f32.mrb[0].mxu0
    %v2266 = vadd.f32 %v2079, %v2265
    %2267 = vmatprep.mubr.f32.mxu0 0.0
    %2268 = vmatmul.mubr.f32.gmra.mrb[0].mxu0 %v2056
    %v2269 = vpop.f32.mrb[0].mxu0
    %v2270 = vadd.f32 %v2075, %v2269
    %v2271 = vpop.f32.mrb[0].mxu0
    %v2272 = vadd.f32 %v2079, %v2271
    %2273 = vmatprep.mubr.f32.mxu0 0.0
    %2274 = vmatmul.mubr.f32.gmra.mrb[0].mxu0 %v2057
    %v2275 = vpop.f32.mrb[0].mxu0
    %v2276 = vadd.f32 %v2075, %v2275
    %v2277 = vpop.f32.mrb[0].mxu0
    %v2278 = vadd.f32 %v2079, %v2277
    %2279 = vmatprep.mubr.f32.mxu0 0.0
    %2280 = vmatmul.mubr.f32.gmra.mrb[0].mxu0 %v2058
    %v2281 = vpop.f32.mrb[0].mxu0
    %v2282 = vadd.f32 %v2075, %v2281
    %v2283 = vpop.f32.mrb[0].mxu0
    %v2284 = vadd.f32 %v2079, %v2283
    %2285 = vmatprep.mubr.f32.mxu0 0.0
    %2286 = vmatmul.mubr.f32.gmra.mrb[0].mxu0 %v2059
    %v2287 = vpop.f32.mrb[0].mxu0
    %v2288 = vadd.f32 %v2075, %v2287
    %v2289 = vpop.f32.mrb[0].mxu0
    %v2290 = vadd.f32 %v2079, %v2289
    %2291 = vmatprep.mubr.f32.mxu0 0.0
    %2292 = vmatmul.mubr.f32.gmra.mrb[0].mxu0 %v2060
    %v2293 = vpop.f32.mrb[0].mxu0
    %v2294 = vadd.f32 %v2075, %v2293
    %v2295 = vpop.f32.mrb[0].mxu0
    %v2296 = vadd.f32 %v2079, %v2295
    %2297 = vmatprep.mubr.f32.mxu0 0.0
    %2298 = vmatmul.mubr.f32.gmra.mrb[0].mxu0 %v2061
    %v2299 = vpop.f32.mrb[0].mxu0
    %v2300 = vadd.f32 %v2075, %v2299
    %v2301 = vpop.f32.mrb[0].mxu0
    %v2302 = vadd.f32 %v2079, %v2301
    %2303 = vmatprep.mubr.f32.mxu0 0.0
    %2304 = vmatmul.mubr.f32.gmra.mrb[0].mxu0 %v2062
    %v2305 = vpop.f32.mrb[0].mxu0
    %v2306 = vadd.f32 %v2075, %v2305
    %v2307 = vpop.f32.mrb[0].mxu0
    %v2308 = vadd.f32 %v2079, %v2307
    %2309 = vdwg.mxu0
    %2310 = vst [vmem:[#allocation5] sm:$0xff] %v2151
    %2311 = vst [vmem:[#allocation5 + $0x8] sm:$0xff] %v2153
    %2312 = vst [vmem:[#allocation5 + $0x10] sm:$0xff] %v2264
    %2313 = vst [vmem:[#allocation5 + $0x18] sm:$0xff] %v2266
    %2314 = vst [vmem:[#allocation5 + $0x20] sm:$0xff] %v2157
    %2315 = vst [vmem:[#allocation5 + $0x28] sm:$0xff] %v2159
    %2316 = vst [vmem:[#allocation5 + $0x30] sm:$0xff] %v2270
    %2317 = vst [vmem:[#allocation5 + $0x38] sm:$0xff] %v2272
    %2318 = vst [vmem:[#allocation5 + $0x40] sm:$0xff] %v2163
    %2319 = vst [vmem:[#allocation5 + $0x48] sm:$0xff] %v2165
    %2320 = vst [vmem:[#allocation5 + $0x50] sm:$0xff] %v2276
    %2321 = vst [vmem:[#allocation5 + $0x58] sm:$0xff] %v2278
    %2322 = vst [vmem:[#allocation5 + $0x60] sm:$0xff] %v2169
    %2323 = vst [vmem:[#allocation5 + $0x68] sm:$0xff] %v2171
    %2324 = vst [vmem:[#allocation5 + $0x70] sm:$0xff] %v2282
    %2325 = vst [vmem:[#allocation5 + $0x78] sm:$0xff] %v2284
    %2326 = vst [vmem:[#allocation5 + $0x80] sm:$0xff] %v2175
    %2327 = vst [vmem:[#allocation5 + $0x88] sm:$0xff] %v2177
    %2328 = vst [vmem:[#allocation5 + $0x90] sm:$0xff] %v2288
    %2329 = vst [vmem:[#allocation5 + $0x98] sm:$0xff] %v2290
    %2330 = vst [vmem:[#allocation5 + $0xa0] sm:$0xff] %v2181
    %2331 = vst [vmem:[#allocation5 + $0xa8] sm:$0xff] %v2183
    %2332 = vst [vmem:[#allocation5 + $0xb0] sm:$0xff] %v2294
    %2333 = vst [vmem:[#allocation5 + $0xb8] sm:$0xff] %v2296
    %2334 = vst [vmem:[#allocation5 + $0xc0] sm:$0xff] %v2187
    %2335 = vst [vmem:[#allocation5 + $0xc8] sm:$0xff] %v2189
    %2336 = vst [vmem:[#allocation5 + $0xd0] sm:$0xff] %v2300
    %2337 = vst [vmem:[#allocation5 + $0xd8] sm:$0xff] %v2302
    %2338 = vst [vmem:[#allocation5 + $0xe0] sm:$0xff] %v2193
    %2339 = vst [vmem:[#allocation5 + $0xe8] sm:$0xff] %v2195
    %2340 = vst [vmem:[#allocation5 + $0xf0] sm:$0xff] %v2306
    %2341 = vst [vmem:[#allocation5 + $0xf8] sm:$0xff] %v2308
    %s2342 = scalar_lea.vmem [#allocation2], 8
    %v2343 = vld [vmem:[%s2342] sm:$0xff]
    %s2344 = scalar_lea.vmem [#allocation3], 8
    %v2345 = vld [vmem:[%s2344] sm:$0xff]
    %v2346 = vld [vmem:[#allocation5] sm:$0xff]
    %v2347 = vld [vmem:[#allocation5 + $0x8] sm:$0xff]
    %v2348 = vld [vmem:[#allocation5 + $0x10] sm:$0xff]
    %v2349 = vld [vmem:[#allocation5 + $0x18] sm:$0xff]
    %2350 = vmatprep.subr.mxu0 %v1991
    %2351 = vmatpush1.msra.mxu0 %v1990
    %2352 = vmatprep.subr.mxu0 %v1995
    %2353 = vmatpush1.msra.mxu0 %v1994
    %2354 = vmatprep.subr.mxu0 %v1999
    %2355 = vmatpush1.msra.mxu0 %v1998
    %2356 = vmatprep.subr.mxu0 %v2003
    %2357 = vmatpush1.msra.mxu0 %v2002
    %2358 = vmatprep.subr.mxu0 %v2007
    %2359 = vmatpush1.msra.mxu0 %v2006
    %2360 = vmatprep.subr.mxu0 %v2011
    %2361 = vmatpush1.msra.mxu0 %v2010
    %2362 = vmatprep.subr.mxu0 %v2015
    %2363 = vmatpush1.msra.mxu0 %v2014
    %2364 = vmatprep.subr.mxu0 %v2019
    %2365 = vmatpush1.msra.mxu0 %v2018
    %2366 = vmatprep.subr.mxu0 %v2023
    %2367 = vmatpush1.msra.mxu0 %v2022
    %2368 = vmatprep.subr.mxu0 %v2027
    %2369 = vmatpush1.msra.mxu0 %v2026
    %2370 = vmatprep.subr.mxu0 %v2031
    %2371 = vmatpush1.msra.mxu0 %v2030
    %2372 = vmatprep.subr.mxu0 %v2035
    %2373 = vmatpush1.msra.mxu0 %v2034
    %2374 = vmatprep.subr.mxu0 %v2039
    %2375 = vmatpush1.msra.mxu0 %v2038
    %2376 = vmatprep.subr.mxu0 %v2043
    %2377 = vmatpush1.msra.mxu0 %v2042
    %2378 = vmatprep.subr.mxu0 %v2047
    %2379 = vmatpush1.msra.mxu0 %v2046
    %2380 = vmatprep.subr.mxu0 %v2051
    %2381 = vmatpush1.msra.mxu0 %v2050
    %2382 = vmatprep.subr.mxu0 0.0
    %2383 = vmatpush1.msra.mxu0 0.0
    %2384 = vmatprep.subr.mxu0 0.0
    %2385 = vmatpush1.msra.mxu0 0.0
    %2386 = vmatprep.subr.mxu0 0.0
    %2387 = vmatpush1.msra.mxu0 0.0
    %2388 = vmatprep.subr.mxu0 0.0
    %2389 = vmatpush1.msra.mxu0 0.0
    %2390 = vmatprep.subr.mxu0 0.0
    %2391 = vmatpush1.msra.mxu0 0.0
    %2392 = vmatprep.subr.mxu0 0.0
    %2393 = vmatpush1.msra.mxu0 0.0
    %2394 = vmatprep.subr.mxu0 0.0
    %2395 = vmatpush1.msra.mxu0 0.0
    %2396 = vmatprep.subr.mxu0 0.0
    %2397 = vmatpush1.msra.mxu0 0.0
    %2398 = vmatprep.subr.mxu0 0.0
    %2399 = vmatpush1.msra.mxu0 0.0
    %2400 = vmatprep.subr.mxu0 0.0
    %2401 = vmatpush1.msra.mxu0 0.0
    %2402 = vmatprep.subr.mxu0 0.0
    %2403 = vmatpush1.msra.mxu0 0.0
    %2404 = vmatprep.subr.mxu0 0.0
    %2405 = vmatpush1.msra.mxu0 0.0
    %2406 = vmatprep.subr.mxu0 0.0
    %2407 = vmatpush1.msra.mxu0 0.0
    %2408 = vmatprep.subr.mxu0 0.0
    %2409 = vmatpush1.msra.mxu0 0.0
    %2410 = vmatprep.subr.mxu0 0.0
    %2411 = vmatpush1.msra.mxu0 0.0
    %2412 = vmatprep.subr.mxu0 0.0
    %2413 = vmatpush1.msra.mxu0 0.0
    %2414 = vmatprep.mubr.f32.mxu0 0.0
    %2415 = vmatmul.mubr.f32.gmra.mrb[0].mxu0 %v2343
    %v2416 = vpop.f32.mrb[0].mxu0
    %v2417 = vadd.f32 0.0, %v2416
    %v2418 = vpop.f32.mrb[0].mxu0
    %v2419 = vadd.f32 0.0, %v2418
    %2420 = vdwg.mxu0
    %2421 = vmatprep.subr.mxu0 %v1993
    %2422 = vmatpush1.msra.mxu0 %v1992
    %2423 = vmatprep.subr.mxu0 %v1997
    %2424 = vmatpush1.msra.mxu0 %v1996
    %2425 = vmatprep.subr.mxu0 %v2001
    %2426 = vmatpush1.msra.mxu0 %v2000
    %2427 = vmatprep.subr.mxu0 %v2005
    %2428 = vmatpush1.msra.mxu0 %v2004
    %2429 = vmatprep.subr.mxu0 %v2009
    %2430 = vmatpush1.msra.mxu0 %v2008
    %2431 = vmatprep.subr.mxu0 %v2013
    %2432 = vmatpush1.msra.mxu0 %v2012
    %2433 = vmatprep.subr.mxu0 %v2017
    %2434 = vmatpush1.msra.mxu0 %v2016
    %2435 = vmatprep.subr.mxu0 %v2021
    %2436 = vmatpush1.msra.mxu0 %v2020
    %2437 = vmatprep.subr.mxu0 %v2025
    %2438 = vmatpush1.msra.mxu0 %v2024
    %2439 = vmatprep.subr.mxu0 %v2029
    %2440 = vmatpush1.msra.mxu0 %v2028
    %2441 = vmatprep.subr.mxu0 %v2033
    %2442 = vmatpush1.msra.mxu0 %v2032
    %2443 = vmatprep.subr.mxu0 %v2037
    %2444 = vmatpush1.msra.mxu0 %v2036
    %2445 = vmatprep.subr.mxu0 %v2041
    %2446 = vmatpush1.msra.mxu0 %v2040
    %2447 = vmatprep.subr.mxu0 %v2045
    %2448 = vmatpush1.msra.mxu0 %v2044
    %2449 = vmatprep.subr.mxu0 %v2049
    %2450 = vmatpush1.msra.mxu0 %v2048
    %2451 = vmatprep.subr.mxu0 %v2053
    %2452 = vmatpush1.msra.mxu0 %v2052
    %2453 = vmatprep.subr.mxu0 0.0
    %2454 = vmatpush1.msra.mxu0 0.0
    %2455 = vmatprep.subr.mxu0 0.0
    %2456 = vmatpush1.msra.mxu0 0.0
    %2457 = vmatprep.subr.mxu0 0.0
    %2458 = vmatpush1.msra.mxu0 0.0
    %2459 = vmatprep.subr.mxu0 0.0
    %2460 = vmatpush1.msra.mxu0 0.0
    %2461 = vmatprep.subr.mxu0 0.0
    %2462 = vmatpush1.msra.mxu0 0.0
    %2463 = vmatprep.subr.mxu0 0.0
    %2464 = vmatpush1.msra.mxu0 0.0
    %2465 = vmatprep.subr.mxu0 0.0
    %2466 = vmatpush1.msra.mxu0 0.0
    %2467 = vmatprep.subr.mxu0 0.0
    %2468 = vmatpush1.msra.mxu0 0.0
    %2469 = vmatprep.subr.mxu0 0.0
    %2470 = vmatpush1.msra.mxu0 0.0
    %2471 = vmatprep.subr.mxu0 0.0
    %2472 = vmatpush1.msra.mxu0 0.0
    %2473 = vmatprep.subr.mxu0 0.0
    %2474 = vmatpush1.msra.mxu0 0.0
    %2475 = vmatprep.subr.mxu0 0.0
    %2476 = vmatpush1.msra.mxu0 0.0
    %2477 = vmatprep.subr.mxu0 0.0
    %2478 = vmatpush1.msra.mxu0 0.0
    %2479 = vmatprep.subr.mxu0 0.0
    %2480 = vmatpush1.msra.mxu0 0.0
    %2481 = vmatprep.subr.mxu0 0.0
    %2482 = vmatpush1.msra.mxu0 0.0
    %2483 = vmatprep.subr.mxu0 0.0
    %2484 = vmatpush1.msra.mxu0 0.0
    %2485 = vmatprep.mubr.f32.mxu0 0.0
    %2486 = vmatmul.mubr.f32.gmra.mrb[0].mxu0 %v2343
    %v2487 = vpop.f32.mrb[0].mxu0
    %v2488 = vadd.f32 0.0, %v2487
    %v2489 = vpop.f32.mrb[0].mxu0
    %v2490 = vadd.f32 0.0, %v2489
    %2491 = vdwg.mxu0
    %v2492 = vadd.f32 %v2346, %v2417
    %v2493 = vadd.f32 %v2347, %v2419
    %v2494 = vadd.f32 %v2348, %v2488
    %v2495 = vadd.f32 %v2349, %v2490
    %v2496 = vxor.u32 %v2492, 2147483648
    %v2497 = vmul.f32 %v2496, 1.442695
    %v2498 = vpow.pop %v2497
    %v2499 = vadd.f32 %v2498, 1.0
    %v2500 = vrcp.pop %v2499
    %v2501 = vmul.f32 1.0, %v2500
    %v2502 = vxor.u32 %v2493, 2147483648
    %v2503 = vmul.f32 %v2502, 1.442695
    %v2504 = vpow.pop %v2503
    %v2505 = vadd.f32 %v2504, 1.0
    %v2506 = vrcp.pop %v2505
    %v2507 = vmul.f32 1.0, %v2506
    %v2508 = vtanh.pop %v2494
    %v2509 = vxor.u32 %v2495, 2147483648
    %v2510 = vmul.f32 %v2509, 1.442695
    %v2511 = vpow.pop %v2510
    %v2512 = vadd.f32 %v2511, 1.0
    %v2513 = vrcp.pop %v2512
    %v2514 = vmul.f32 1.0, %v2513
    %v2515 = vmul.f32 %v2507, %v2345
    %v2516 = vmul.f32 %v2501, %v2508
    %v2517 = vadd.f32 %v2515, %v2516
    %v2518 = vtanh.pop %v2517
    %v2519 = vmul.f32 %v2514, %v2518
    %2520 = vst [vmem:[#allocation4] sm:$0xff] %v2519
    %v2521 = vld [vmem:[%s685] sm:$0xff]
    %v2522 = vld [vmem:[%s685 + $0x8] sm:$0xff]
    %v2523 = vld [vmem:[%s685 + $0x10] sm:$0xff]
    %v2524 = vld [vmem:[%s685 + $0x18] sm:$0xff]
    %2525 = vmatprep.subr.mxu0 %v1991
    %2526 = vmatpush1.msra.mxu0 %v1990
    %2527 = vmatprep.subr.mxu0 %v1995
    %2528 = vmatpush1.msra.mxu0 %v1994
    %2529 = vmatprep.subr.mxu0 %v1999
    %2530 = vmatpush1.msra.mxu0 %v1998
    %2531 = vmatprep.subr.mxu0 %v2003
    %2532 = vmatpush1.msra.mxu0 %v2002
    %2533 = vmatprep.subr.mxu0 %v2007
    %2534 = vmatpush1.msra.mxu0 %v2006
    %2535 = vmatprep.subr.mxu0 %v2011
    %2536 = vmatpush1.msra.mxu0 %v2010
    %2537 = vmatprep.subr.mxu0 %v2015
    %2538 = vmatpush1.msra.mxu0 %v2014
    %2539 = vmatprep.subr.mxu0 %v2019
    %2540 = vmatpush1.msra.mxu0 %v2018
    %2541 = vmatprep.subr.mxu0 %v2023
    %2542 = vmatpush1.msra.mxu0 %v2022
    %2543 = vmatprep.subr.mxu0 %v2027
    %2544 = vmatpush1.msra.mxu0 %v2026
    %2545 = vmatprep.subr.mxu0 %v2031
    %2546 = vmatpush1.msra.mxu0 %v2030
    %2547 = vmatprep.subr.mxu0 %v2035
    %2548 = vmatpush1.msra.mxu0 %v2034
    %2549 = vmatprep.subr.mxu0 %v2039
    %2550 = vmatpush1.msra.mxu0 %v2038
    %2551 = vmatprep.subr.mxu0 %v2043
    %2552 = vmatpush1.msra.mxu0 %v2042
    %2553 = vmatprep.subr.mxu0 %v2047
    %2554 = vmatpush1.msra.mxu0 %v2046
    %2555 = vmatprep.subr.mxu0 %v2051
    %2556 = vmatpush1.msra.mxu0 %v2050
    %2557 = vmatprep.subr.mxu0 0.0
    %2558 = vmatpush1.msra.mxu0 0.0
    %2559 = vmatprep.subr.mxu0 0.0
    %2560 = vmatpush1.msra.mxu0 0.0
    %2561 = vmatprep.subr.mxu0 0.0
    %2562 = vmatpush1.msra.mxu0 0.0
    %2563 = vmatprep.subr.mxu0 0.0
    %2564 = vmatpush1.msra.mxu0 0.0
    %2565 = vmatprep.subr.mxu0 0.0
    %2566 = vmatpush1.msra.mxu0 0.0
    %2567 = vmatprep.subr.mxu0 0.0
    %2568 = vmatpush1.msra.mxu0 0.0
    %2569 = vmatprep.subr.mxu0 0.0
    %2570 = vmatpush1.msra.mxu0 0.0
    %2571 = vmatprep.subr.mxu0 0.0
    %2572 = vmatpush1.msra.mxu0 0.0
    %2573 = vmatprep.subr.mxu0 0.0
    %2574 = vmatpush1.msra.mxu0 0.0
    %2575 = vmatprep.subr.mxu0 0.0
    %2576 = vmatpush1.msra.mxu0 0.0
    %2577 = vmatprep.subr.mxu0 0.0
    %2578 = vmatpush1.msra.mxu0 0.0
    %2579 = vmatprep.subr.mxu0 0.0
    %2580 = vmatpush1.msra.mxu0 0.0
    %2581 = vmatprep.subr.mxu0 0.0
    %2582 = vmatpush1.msra.mxu0 0.0
    %2583 = vmatprep.subr.mxu0 0.0
    %2584 = vmatpush1.msra.mxu0 0.0
    %2585 = vmatprep.subr.mxu0 0.0
    %2586 = vmatpush1.msra.mxu0 0.0
    %2587 = vmatprep.subr.mxu0 0.0
    %2588 = vmatpush1.msra.mxu0 0.0
    %2589 = vmatprep.mubr.f32.mxu0 0.0
    %2590 = vmatmul.mubr.f32.gmra.mrb[0].mxu0 %v2519
    %v2591 = vpop.f32.mrb[0].mxu0
    %v2592 = vadd.f32 0.0, %v2591
    %v2593 = vpop.f32.mrb[0].mxu0
    %v2594 = vadd.f32 0.0, %v2593
    %2595 = vdwg.mxu0
    %2596 = vmatprep.subr.mxu0 %v1993
    %2597 = vmatpush1.msra.mxu0 %v1992
    %2598 = vmatprep.subr.mxu0 %v1997
    %2599 = vmatpush1.msra.mxu0 %v1996
    %2600 = vmatprep.subr.mxu0 %v2001
    %2601 = vmatpush1.msra.mxu0 %v2000
    %2602 = vmatprep.subr.mxu0 %v2005
    %2603 = vmatpush1.msra.mxu0 %v2004
    %2604 = vmatprep.subr.mxu0 %v2009
    %2605 = vmatpush1.msra.mxu0 %v2008
    %2606 = vmatprep.subr.mxu0 %v2013
    %2607 = vmatpush1.msra.mxu0 %v2012
    %2608 = vmatprep.subr.mxu0 %v2017
    %2609 = vmatpush1.msra.mxu0 %v2016
    %2610 = vmatprep.subr.mxu0 %v2021
    %2611 = vmatpush1.msra.mxu0 %v2020
    %2612 = vmatprep.subr.mxu0 %v2025
    %2613 = vmatpush1.msra.mxu0 %v2024
    %2614 = vmatprep.subr.mxu0 %v2029
    %2615 = vmatpush1.msra.mxu0 %v2028
    %2616 = vmatprep.subr.mxu0 %v2033
    %2617 = vmatpush1.msra.mxu0 %v2032
    %2618 = vmatprep.subr.mxu0 %v2037
    %2619 = vmatpush1.msra.mxu0 %v2036
    %2620 = vmatprep.subr.mxu0 %v2041
    %2621 = vmatpush1.msra.mxu0 %v2040
    %2622 = vmatprep.subr.mxu0 %v2045
    %2623 = vmatpush1.msra.mxu0 %v2044
    %2624 = vmatprep.subr.mxu0 %v2049
    %2625 = vmatpush1.msra.mxu0 %v2048
    %2626 = vmatprep.subr.mxu0 %v2053
    %2627 = vmatpush1.msra.mxu0 %v2052
    %2628 = vmatprep.subr.mxu0 0.0
    %2629 = vmatpush1.msra.mxu0 0.0
    %2630 = vmatprep.subr.mxu0 0.0
    %2631 = vmatpush1.msra.mxu0 0.0
    %2632 = vmatprep.subr.mxu0 0.0
    %2633 = vmatpush1.msra.mxu0 0.0
    %2634 = vmatprep.subr.mxu0 0.0
    %2635 = vmatpush1.msra.mxu0 0.0
    %2636 = vmatprep.subr.mxu0 0.0
    %2637 = vmatpush1.msra.mxu0 0.0
    %2638 = vmatprep.subr.mxu0 0.0
    %2639 = vmatpush1.msra.mxu0 0.0
    %2640 = vmatprep.subr.mxu0 0.0
    %2641 = vmatpush1.msra.mxu0 0.0
    %2642 = vmatprep.subr.mxu0 0.0
    %2643 = vmatpush1.msra.mxu0 0.0
    %2644 = vmatprep.subr.mxu0 0.0
    %2645 = vmatpush1.msra.mxu0 0.0
    %2646 = vmatprep.subr.mxu0 0.0
    %2647 = vmatpush1.msra.mxu0 0.0
    %2648 = vmatprep.subr.mxu0 0.0
    %2649 = vmatpush1.msra.mxu0 0.0
    %2650 = vmatprep.subr.mxu0 0.0
    %2651 = vmatpush1.msra.mxu0 0.0
    %2652 = vmatprep.subr.mxu0 0.0
    %2653 = vmatpush1.msra.mxu0 0.0
    %2654 = vmatprep.subr.mxu0 0.0
    %2655 = vmatpush1.msra.mxu0 0.0
    %2656 = vmatprep.subr.mxu0 0.0
    %2657 = vmatpush1.msra.mxu0 0.0
    %2658 = vmatprep.subr.mxu0 0.0
    %2659 = vmatpush1.msra.mxu0 0.0
    %2660 = vmatprep.mubr.f32.mxu0 0.0
    %2661 = vmatmul.mubr.f32.gmra.mrb[0].mxu0 %v2519
    %v2662 = vpop.f32.mrb[0].mxu0
    %v2663 = vadd.f32 0.0, %v2662
    %v2664 = vpop.f32.mrb[0].mxu0
    %v2665 = vadd.f32 0.0, %v2664
    %2666 = vdwg.mxu0
    %v2667 = vadd.f32 %v2521, %v2592
    %v2668 = vadd.f32 %v2522, %v2594
    %v2669 = vadd.f32 %v2523, %v2663
    %v2670 = vadd.f32 %v2524, %v2665
    %v2671 = vxor.u32 %v2667, 2147483648
    %v2672 = vmul.f32 %v2671, 1.442695
    %v2673 = vpow.pop %v2672
    %v2674 = vadd.f32 %v2673, 1.0
    %v2675 = vrcp.pop %v2674
    %v2676 = vmul.f32 1.0, %v2675
    %v2677 = vxor.u32 %v2668, 2147483648
    %v2678 = vmul.f32 %v2677, 1.442695
    %v2679 = vpow.pop %v2678
    %v2680 = vadd.f32 %v2679, 1.0
    %v2681 = vrcp.pop %v2680
    %v2682 = vmul.f32 1.0, %v2681
    %v2683 = vtanh.pop %v2669
    %v2684 = vxor.u32 %v2670, 2147483648
    %v2685 = vmul.f32 %v2684, 1.442695
    %v2686 = vpow.pop %v2685
    %v2687 = vadd.f32 %v2686, 1.0
    %v2688 = vrcp.pop %v2687
    %v2689 = vmul.f32 1.0, %v2688
    %v2690 = vmul.f32 %v2682, %v2517
    %v2691 = vmul.f32 %v2676, %v2683
    %v2692 = vadd.f32 %v2690, %v2691
    %v2693 = vtanh.pop %v2692
    %v2694 = vmul.f32 %v2689, %v2693
    %2695 = vst [vmem:[%s860] sm:$0xff] %v2694
    %v2696 = vld [vmem:[%s862] sm:$0xff]
    %v2697 = vld [vmem:[%s862 + $0x8] sm:$0xff]
    %v2698 = vld [vmem:[%s862 + $0x10] sm:$0xff]
    %v2699 = vld [vmem:[%s862 + $0x18] sm:$0xff]
    %2700 = vmatprep.subr.mxu0 %v1991
    %2701 = vmatpush1.msra.mxu0 %v1990
    %2702 = vmatprep.subr.mxu0 %v1995
    %2703 = vmatpush1.msra.mxu0 %v1994
    %2704 = vmatprep.subr.mxu0 %v1999
    %2705 = vmatpush1.msra.mxu0 %v1998
    %2706 = vmatprep.subr.mxu0 %v2003
    %2707 = vmatpush1.msra.mxu0 %v2002
    %2708 = vmatprep.subr.mxu0 %v2007
    %2709 = vmatpush1.msra.mxu0 %v2006
    %2710 = vmatprep.subr.mxu0 %v2011
    %2711 = vmatpush1.msra.mxu0 %v2010
    %2712 = vmatprep.subr.mxu0 %v2015
    %2713 = vmatpush1.msra.mxu0 %v2014
    %2714 = vmatprep.subr.mxu0 %v2019
    %2715 = vmatpush1.msra.mxu0 %v2018
    %2716 = vmatprep.subr.mxu0 %v2023
    %2717 = vmatpush1.msra.mxu0 %v2022
    %2718 = vmatprep.subr.mxu0 %v2027
    %2719 = vmatpush1.msra.mxu0 %v2026
    %2720 = vmatprep.subr.mxu0 %v2031
    %2721 = vmatpush1.msra.mxu0 %v2030
    %2722 = vmatprep.subr.mxu0 %v2035
    %2723 = vmatpush1.msra.mxu0 %v2034
    %2724 = vmatprep.subr.mxu0 %v2039
    %2725 = vmatpush1.msra.mxu0 %v2038
    %2726 = vmatprep.subr.mxu0 %v2043
    %2727 = vmatpush1.msra.mxu0 %v2042
    %2728 = vmatprep.subr.mxu0 %v2047
    %2729 = vmatpush1.msra.mxu0 %v2046
    %2730 = vmatprep.subr.mxu0 %v2051
    %2731 = vmatpush1.msra.mxu0 %v2050
    %2732 = vmatprep.subr.mxu0 0.0
    %2733 = vmatpush1.msra.mxu0 0.0
    %2734 = vmatprep.subr.mxu0 0.0
    %2735 = vmatpush1.msra.mxu0 0.0
    %2736 = vmatprep.subr.mxu0 0.0
    %2737 = vmatpush1.msra.mxu0 0.0
    %2738 = vmatprep.subr.mxu0 0.0
    %2739 = vmatpush1.msra.mxu0 0.0
    %2740 = vmatprep.subr.mxu0 0.0
    %2741 = vmatpush1.msra.mxu0 0.0
    %2742 = vmatprep.subr.mxu0 0.0
    %2743 = vmatpush1.msra.mxu0 0.0
    %2744 = vmatprep.subr.mxu0 0.0
    %2745 = vmatpush1.msra.mxu0 0.0
    %2746 = vmatprep.subr.mxu0 0.0
    %2747 = vmatpush1.msra.mxu0 0.0
    %2748 = vmatprep.subr.mxu0 0.0
    %2749 = vmatpush1.msra.mxu0 0.0
    %2750 = vmatprep.subr.mxu0 0.0
    %2751 = vmatpush1.msra.mxu0 0.0
    %2752 = vmatprep.subr.mxu0 0.0
    %2753 = vmatpush1.msra.mxu0 0.0
    %2754 = vmatprep.subr.mxu0 0.0
    %2755 = vmatpush1.msra.mxu0 0.0
    %2756 = vmatprep.subr.mxu0 0.0
    %2757 = vmatpush1.msra.mxu0 0.0
    %2758 = vmatprep.subr.mxu0 0.0
    %2759 = vmatpush1.msra.mxu0 0.0
    %2760 = vmatprep.subr.mxu0 0.0
    %2761 = vmatpush1.msra.mxu0 0.0
    %2762 = vmatprep.subr.mxu0 0.0
    %2763 = vmatpush1.msra.mxu0 0.0
    %2764 = vmatprep.mubr.f32.mxu0 0.0
    %2765 = vmatmul.mubr.f32.gmra.mrb[0].mxu0 %v2694
    %v2766 = vpop.f32.mrb[0].mxu0
    %v2767 = vadd.f32 0.0, %v2766
    %v2768 = vpop.f32.mrb[0].mxu0
    %v2769 = vadd.f32 0.0, %v2768
    %2770 = vdwg.mxu0
    %2771 = vmatprep.subr.mxu0 %v1993
    %2772 = vmatpush1.msra.mxu0 %v1992
    %2773 = vmatprep.subr.mxu0 %v1997
    %2774 = vmatpush1.msra.mxu0 %v1996
    %2775 = vmatprep.subr.mxu0 %v2001
    %2776 = vmatpush1.msra.mxu0 %v2000
    %2777 = vmatprep.subr.mxu0 %v2005
    %2778 = vmatpush1.msra.mxu0 %v2004
    %2779 = vmatprep.subr.mxu0 %v2009
    %2780 = vmatpush1.msra.mxu0 %v2008
    %2781 = vmatprep.subr.mxu0 %v2013
    %2782 = vmatpush1.msra.mxu0 %v2012
    %2783 = vmatprep.subr.mxu0 %v2017
    %2784 = vmatpush1.msra.mxu0 %v2016
    %2785 = vmatprep.subr.mxu0 %v2021
    %2786 = vmatpush1.msra.mxu0 %v2020
    %2787 = vmatprep.subr.mxu0 %v2025
    %2788 = vmatpush1.msra.mxu0 %v2024
    %2789 = vmatprep.subr.mxu0 %v2029
    %2790 = vmatpush1.msra.mxu0 %v2028
    %2791 = vmatprep.subr.mxu0 %v2033
    %2792 = vmatpush1.msra.mxu0 %v2032
    %2793 = vmatprep.subr.mxu0 %v2037
    %2794 = vmatpush1.msra.mxu0 %v2036
    %2795 = vmatprep.subr.mxu0 %v2041
    %2796 = vmatpush1.msra.mxu0 %v2040
    %2797 = vmatprep.subr.mxu0 %v2045
    %2798 = vmatpush1.msra.mxu0 %v2044
    %2799 = vmatprep.subr.mxu0 %v2049
    %2800 = vmatpush1.msra.mxu0 %v2048
    %2801 = vmatprep.subr.mxu0 %v2053
    %2802 = vmatpush1.msra.mxu0 %v2052
    %2803 = vmatprep.subr.mxu0 0.0
    %2804 = vmatpush1.msra.mxu0 0.0
    %2805 = vmatprep.subr.mxu0 0.0
    %2806 = vmatpush1.msra.mxu0 0.0
    %2807 = vmatprep.subr.mxu0 0.0
    %2808 = vmatpush1.msra.mxu0 0.0
    %2809 = vmatprep.subr.mxu0 0.0
    %2810 = vmatpush1.msra.mxu0 0.0
    %2811 = vmatprep.subr.mxu0 0.0
    %2812 = vmatpush1.msra.mxu0 0.0
    %2813 = vmatprep.subr.mxu0 0.0
    %2814 = vmatpush1.msra.mxu0 0.0
    %2815 = vmatprep.subr.mxu0 0.0
    %2816 = vmatpush1.msra.mxu0 0.0
    %2817 = vmatprep.subr.mxu0 0.0
    %2818 = vmatpush1.msra.mxu0 0.0
    %2819 = vmatprep.subr.mxu0 0.0
    %2820 = vmatpush1.msra.mxu0 0.0
    %2821 = vmatprep.subr.mxu0 0.0
    %2822 = vmatpush1.msra.mxu0 0.0
    %2823 = vmatprep.subr.mxu0 0.0
    %2824 = vmatpush1.msra.mxu0 0.0
    %2825 = vmatprep.subr.mxu0 0.0
    %2826 = vmatpush1.msra.mxu0 0.0
    %2827 = vmatprep.subr.mxu0 0.0
    %2828 = vmatpush1.msra.mxu0 0.0
    %2829 = vmatprep.subr.mxu0 0.0
    %2830 = vmatpush1.msra.mxu0 0.0
    %2831 = vmatprep.subr.mxu0 0.0
    %2832 = vmatpush1.msra.mxu0 0.0
    %2833 = vmatprep.subr.mxu0 0.0
    %2834 = vmatpush1.msra.mxu0 0.0
    %2835 = vmatprep.mubr.f32.mxu0 0.0
    %2836 = vmatmul.mubr.f32.gmra.mrb[0].mxu0 %v2694
    %v2837 = vpop.f32.mrb[0].mxu0
    %v2838 = vadd.f32 0.0, %v2837
    %v2839 = vpop.f32.mrb[0].mxu0
    %v2840 = vadd.f32 0.0, %v2839
    %2841 = vdwg.mxu0
    %v2842 = vadd.f32 %v2696, %v2767
    %v2843 = vadd.f32 %v2697, %v2769
    %v2844 = vadd.f32 %v2698, %v2838
    %v2845 = vadd.f32 %v2699, %v2840
    %v2846 = vxor.u32 %v2842, 2147483648
    %v2847 = vmul.f32 %v2846, 1.442695
    %v2848 = vpow.pop %v2847
    %v2849 = vadd.f32 %v2848, 1.0
    %v2850 = vrcp.pop %v2849
    %v2851 = vmul.f32 1.0, %v2850
    %v2852 = vxor.u32 %v2843, 2147483648
    %v2853 = vmul.f32 %v2852, 1.442695
    %v2854 = vpow.pop %v2853
    %v2855 = vadd.f32 %v2854, 1.0
    %v2856 = vrcp.pop %v2855
    %v2857 = vmul.f32 1.0, %v2856
    %v2858 = vtanh.pop %v2844
    %v2859 = vxor.u32 %v2845, 2147483648
    %v2860 = vmul.f32 %v2859, 1.442695
    %v2861 = vpow.pop %v2860
    %v2862 = vadd.f32 %v2861, 1.0
    %v2863 = vrcp.pop %v2862
    %v2864 = vmul.f32 1.0, %v2863
    %v2865 = vmul.f32 %v2857, %v2692
    %v2866 = vmul.f32 %v2851, %v2858
    %v2867 = vadd.f32 %v2865, %v2866
    %v2868 = vtanh.pop %v2867
    %v2869 = vmul.f32 %v2864, %v2868
    %2870 = vst [vmem:[%s1037] sm:$0xff] %v2869
    %v2871 = vld [vmem:[%s1039] sm:$0xff]
    %v2872 = vld [vmem:[%s1039 + $0x8] sm:$0xff]
    %v2873 = vld [vmem:[%s1039 + $0x10] sm:$0xff]
    %v2874 = vld [vmem:[%s1039 + $0x18] sm:$0xff]
    %2875 = vmatprep.subr.mxu0 %v1991
    %2876 = vmatpush1.msra.mxu0 %v1990
    %2877 = vmatprep.subr.mxu0 %v1995
    %2878 = vmatpush1.msra.mxu0 %v1994
    %2879 = vmatprep.subr.mxu0 %v1999
    %2880 = vmatpush1.msra.mxu0 %v1998
    %2881 = vmatprep.subr.mxu0 %v2003
    %2882 = vmatpush1.msra.mxu0 %v2002
    %2883 = vmatprep.subr.mxu0 %v2007
    %2884 = vmatpush1.msra.mxu0 %v2006
    %2885 = vmatprep.subr.mxu0 %v2011
    %2886 = vmatpush1.msra.mxu0 %v2010
    %2887 = vmatprep.subr.mxu0 %v2015
    %2888 = vmatpush1.msra.mxu0 %v2014
    %2889 = vmatprep.subr.mxu0 %v2019
    %2890 = vmatpush1.msra.mxu0 %v2018
    %2891 = vmatprep.subr.mxu0 %v2023
    %2892 = vmatpush1.msra.mxu0 %v2022
    %2893 = vmatprep.subr.mxu0 %v2027
    %2894 = vmatpush1.msra.mxu0 %v2026
    %2895 = vmatprep.subr.mxu0 %v2031
    %2896 = vmatpush1.msra.mxu0 %v2030
    %2897 = vmatprep.subr.mxu0 %v2035
    %2898 = vmatpush1.msra.mxu0 %v2034
    %2899 = vmatprep.subr.mxu0 %v2039
    %2900 = vmatpush1.msra.mxu0 %v2038
    %2901 = vmatprep.subr.mxu0 %v2043
    %2902 = vmatpush1.msra.mxu0 %v2042
    %2903 = vmatprep.subr.mxu0 %v2047
    %2904 = vmatpush1.msra.mxu0 %v2046
    %2905 = vmatprep.subr.mxu0 %v2051
    %2906 = vmatpush1.msra.mxu0 %v2050
    %2907 = vmatprep.subr.mxu0 0.0
    %2908 = vmatpush1.msra.mxu0 0.0
    %2909 = vmatprep.subr.mxu0 0.0
    %2910 = vmatpush1.msra.mxu0 0.0
    %2911 = vmatprep.subr.mxu0 0.0
    %2912 = vmatpush1.msra.mxu0 0.0
    %2913 = vmatprep.subr.mxu0 0.0
    %2914 = vmatpush1.msra.mxu0 0.0
    %2915 = vmatprep.subr.mxu0 0.0
    %2916 = vmatpush1.msra.mxu0 0.0
    %2917 = vmatprep.subr.mxu0 0.0
    %2918 = vmatpush1.msra.mxu0 0.0
    %2919 = vmatprep.subr.mxu0 0.0
    %2920 = vmatpush1.msra.mxu0 0.0
    %2921 = vmatprep.subr.mxu0 0.0
    %2922 = vmatpush1.msra.mxu0 0.0
    %2923 = vmatprep.subr.mxu0 0.0
    %2924 = vmatpush1.msra.mxu0 0.0
    %2925 = vmatprep.subr.mxu0 0.0
    %2926 = vmatpush1.msra.mxu0 0.0
    %2927 = vmatprep.subr.mxu0 0.0
    %2928 = vmatpush1.msra.mxu0 0.0
    %2929 = vmatprep.subr.mxu0 0.0
    %2930 = vmatpush1.msra.mxu0 0.0
    %2931 = vmatprep.subr.mxu0 0.0
    %2932 = vmatpush1.msra.mxu0 0.0
    %2933 = vmatprep.subr.mxu0 0.0
    %2934 = vmatpush1.msra.mxu0 0.0
    %2935 = vmatprep.subr.mxu0 0.0
    %2936 = vmatpush1.msra.mxu0 0.0
    %2937 = vmatprep.subr.mxu0 0.0
    %2938 = vmatpush1.msra.mxu0 0.0
    %2939 = vmatprep.mubr.f32.mxu0 0.0
    %2940 = vmatmul.mubr.f32.gmra.mrb[0].mxu0 %v2869
    %v2941 = vpop.f32.mrb[0].mxu0
    %v2942 = vadd.f32 0.0, %v2941
    %v2943 = vpop.f32.mrb[0].mxu0
    %v2944 = vadd.f32 0.0, %v2943
    %2945 = vdwg.mxu0
    %2946 = vmatprep.subr.mxu0 %v1993
    %2947 = vmatpush1.msra.mxu0 %v1992
    %2948 = vmatprep.subr.mxu0 %v1997
    %2949 = vmatpush1.msra.mxu0 %v1996
    %2950 = vmatprep.subr.mxu0 %v2001
    %2951 = vmatpush1.msra.mxu0 %v2000
    %2952 = vmatprep.subr.mxu0 %v2005
    %2953 = vmatpush1.msra.mxu0 %v2004
    %2954 = vmatprep.subr.mxu0 %v2009
    %2955 = vmatpush1.msra.mxu0 %v2008
    %2956 = vmatprep.subr.mxu0 %v2013
    %2957 = vmatpush1.msra.mxu0 %v2012
    %2958 = vmatprep.subr.mxu0 %v2017
    %2959 = vmatpush1.msra.mxu0 %v2016
    %2960 = vmatprep.subr.mxu0 %v2021
    %2961 = vmatpush1.msra.mxu0 %v2020
    %2962 = vmatprep.subr.mxu0 %v2025
    %2963 = vmatpush1.msra.mxu0 %v2024
    %2964 = vmatprep.subr.mxu0 %v2029
    %2965 = vmatpush1.msra.mxu0 %v2028
    %2966 = vmatprep.subr.mxu0 %v2033
    %2967 = vmatpush1.msra.mxu0 %v2032
    %2968 = vmatprep.subr.mxu0 %v2037
    %2969 = vmatpush1.msra.mxu0 %v2036
    %2970 = vmatprep.subr.mxu0 %v2041
    %2971 = vmatpush1.msra.mxu0 %v2040
    %2972 = vmatprep.subr.mxu0 %v2045
    %2973 = vmatpush1.msra.mxu0 %v2044
    %2974 = vmatprep.subr.mxu0 %v2049
    %2975 = vmatpush1.msra.mxu0 %v2048
    %2976 = vmatprep.subr.mxu0 %v2053
    %2977 = vmatpush1.msra.mxu0 %v2052
    %2978 = vmatprep.subr.mxu0 0.0
    %2979 = vmatpush1.msra.mxu0 0.0
    %2980 = vmatprep.subr.mxu0 0.0
    %2981 = vmatpush1.msra.mxu0 0.0
    %2982 = vmatprep.subr.mxu0 0.0
    %2983 = vmatpush1.msra.mxu0 0.0
    %2984 = vmatprep.subr.mxu0 0.0
    %2985 = vmatpush1.msra.mxu0 0.0
    %2986 = vmatprep.subr.mxu0 0.0
    %2987 = vmatpush1.msra.mxu0 0.0
    %2988 = vmatprep.subr.mxu0 0.0
    %2989 = vmatpush1.msra.mxu0 0.0
    %2990 = vmatprep.subr.mxu0 0.0
    %2991 = vmatpush1.msra.mxu0 0.0
    %2992 = vmatprep.subr.mxu0 0.0
    %2993 = vmatpush1.msra.mxu0 0.0
    %2994 = vmatprep.subr.mxu0 0.0
    %2995 = vmatpush1.msra.mxu0 0.0
    %2996 = vmatprep.subr.mxu0 0.0
    %2997 = vmatpush1.msra.mxu0 0.0
    %2998 = vmatprep.subr.mxu0 0.0
    %2999 = vmatpush1.msra.mxu0 0.0
    %3000 = vmatprep.subr.mxu0 0.0
    %3001 = vmatpush1.msra.mxu0 0.0
    %3002 = vmatprep.subr.mxu0 0.0
    %3003 = vmatpush1.msra.mxu0 0.0
    %3004 = vmatprep.subr.mxu0 0.0
    %3005 = vmatpush1.msra.mxu0 0.0
    %3006 = vmatprep.subr.mxu0 0.0
    %3007 = vmatpush1.msra.mxu0 0.0
    %3008 = vmatprep.subr.mxu0 0.0
    %3009 = vmatpush1.msra.mxu0 0.0
    %3010 = vmatprep.mubr.f32.mxu0 0.0
    %3011 = vmatmul.mubr.f32.gmra.mrb[0].mxu0 %v2869
    %v3012 = vpop.f32.mrb[0].mxu0
    %v3013 = vadd.f32 0.0, %v3012
    %v3014 = vpop.f32.mrb[0].mxu0
    %v3015 = vadd.f32 0.0, %v3014
    %3016 = vdwg.mxu0
    %v3017 = vadd.f32 %v2871, %v2942
    %v3018 = vadd.f32 %v2872, %v2944
    %v3019 = vadd.f32 %v2873, %v3013
    %v3020 = vadd.f32 %v2874, %v3015
    %v3021 = vxor.u32 %v3017, 2147483648
    %v3022 = vmul.f32 %v3021, 1.442695
    %v3023 = vpow.pop %v3022
    %v3024 = vadd.f32 %v3023, 1.0
    %v3025 = vrcp.pop %v3024
    %v3026 = vmul.f32 1.0, %v3025
    %v3027 = vxor.u32 %v3018, 2147483648
    %v3028 = vmul.f32 %v3027, 1.442695
    %v3029 = vpow.pop %v3028
    %v3030 = vadd.f32 %v3029, 1.0
    %v3031 = vrcp.pop %v3030
    %v3032 = vmul.f32 1.0, %v3031
    %v3033 = vtanh.pop %v3019
    %v3034 = vxor.u32 %v3020, 2147483648
    %v3035 = vmul.f32 %v3034, 1.442695
    %v3036 = vpow.pop %v3035
    %v3037 = vadd.f32 %v3036, 1.0
    %v3038 = vrcp.pop %v3037
    %v3039 = vmul.f32 1.0, %v3038
    %v3040 = vmul.f32 %v3032, %v2867
    %v3041 = vmul.f32 %v3026, %v3033
    %v3042 = vadd.f32 %v3040, %v3041
    %v3043 = vtanh.pop %v3042
    %v3044 = vmul.f32 %v3039, %v3043
    %3045 = vst [vmem:[%s1214] sm:$0xff] %v3044
    %v3046 = vld [vmem:[%s1216] sm:$0xff]
    %v3047 = vld [vmem:[%s1216 + $0x8] sm:$0xff]
    %v3048 = vld [vmem:[%s1216 + $0x10] sm:$0xff]
    %v3049 = vld [vmem:[%s1216 + $0x18] sm:$0xff]
    %3050 = vmatprep.subr.mxu0 %v1991
    %3051 = vmatpush1.msra.mxu0 %v1990
    %3052 = vmatprep.subr.mxu0 %v1995
    %3053 = vmatpush1.msra.mxu0 %v1994
    %3054 = vmatprep.subr.mxu0 %v1999
    %3055 = vmatpush1.msra.mxu0 %v1998
    %3056 = vmatprep.subr.mxu0 %v2003
    %3057 = vmatpush1.msra.mxu0 %v2002
    %3058 = vmatprep.subr.mxu0 %v2007
    %3059 = vmatpush1.msra.mxu0 %v2006
    %3060 = vmatprep.subr.mxu0 %v2011
    %3061 = vmatpush1.msra.mxu0 %v2010
    %3062 = vmatprep.subr.mxu0 %v2015
    %3063 = vmatpush1.msra.mxu0 %v2014
    %3064 = vmatprep.subr.mxu0 %v2019
    %3065 = vmatpush1.msra.mxu0 %v2018
    %3066 = vmatprep.subr.mxu0 %v2023
    %3067 = vmatpush1.msra.mxu0 %v2022
    %3068 = vmatprep.subr.mxu0 %v2027
    %3069 = vmatpush1.msra.mxu0 %v2026
    %3070 = vmatprep.subr.mxu0 %v2031
    %3071 = vmatpush1.msra.mxu0 %v2030
    %3072 = vmatprep.subr.mxu0 %v2035
    %3073 = vmatpush1.msra.mxu0 %v2034
    %3074 = vmatprep.subr.mxu0 %v2039
    %3075 = vmatpush1.msra.mxu0 %v2038
    %3076 = vmatprep.subr.mxu0 %v2043
    %3077 = vmatpush1.msra.mxu0 %v2042
    %3078 = vmatprep.subr.mxu0 %v2047
    %3079 = vmatpush1.msra.mxu0 %v2046
    %3080 = vmatprep.subr.mxu0 %v2051
    %3081 = vmatpush1.msra.mxu0 %v2050
    %3082 = vmatprep.subr.mxu0 0.0
    %3083 = vmatpush1.msra.mxu0 0.0
    %3084 = vmatprep.subr.mxu0 0.0
    %3085 = vmatpush1.msra.mxu0 0.0
    %3086 = vmatprep.subr.mxu0 0.0
    %3087 = vmatpush1.msra.mxu0 0.0
    %3088 = vmatprep.subr.mxu0 0.0
    %3089 = vmatpush1.msra.mxu0 0.0
    %3090 = vmatprep.subr.mxu0 0.0
    %3091 = vmatpush1.msra.mxu0 0.0
    %3092 = vmatprep.subr.mxu0 0.0
    %3093 = vmatpush1.msra.mxu0 0.0
    %3094 = vmatprep.subr.mxu0 0.0
    %3095 = vmatpush1.msra.mxu0 0.0
    %3096 = vmatprep.subr.mxu0 0.0
    %3097 = vmatpush1.msra.mxu0 0.0
    %3098 = vmatprep.subr.mxu0 0.0
    %3099 = vmatpush1.msra.mxu0 0.0
    %3100 = vmatprep.subr.mxu0 0.0
    %3101 = vmatpush1.msra.mxu0 0.0
    %3102 = vmatprep.subr.mxu0 0.0
    %3103 = vmatpush1.msra.mxu0 0.0
    %3104 = vmatprep.subr.mxu0 0.0
    %3105 = vmatpush1.msra.mxu0 0.0
    %3106 = vmatprep.subr.mxu0 0.0
    %3107 = vmatpush1.msra.mxu0 0.0
    %3108 = vmatprep.subr.mxu0 0.0
    %3109 = vmatpush1.msra.mxu0 0.0
    %3110 = vmatprep.subr.mxu0 0.0
    %3111 = vmatpush1.msra.mxu0 0.0
    %3112 = vmatprep.subr.mxu0 0.0
    %3113 = vmatpush1.msra.mxu0 0.0
    %3114 = vmatprep.mubr.f32.mxu0 0.0
    %3115 = vmatmul.mubr.f32.gmra.mrb[0].mxu0 %v3044
    %v3116 = vpop.f32.mrb[0].mxu0
    %v3117 = vadd.f32 0.0, %v3116
    %v3118 = vpop.f32.mrb[0].mxu0
    %v3119 = vadd.f32 0.0, %v3118
    %3120 = vdwg.mxu0
    %3121 = vmatprep.subr.mxu0 %v1993
    %3122 = vmatpush1.msra.mxu0 %v1992
    %3123 = vmatprep.subr.mxu0 %v1997
    %3124 = vmatpush1.msra.mxu0 %v1996
    %3125 = vmatprep.subr.mxu0 %v2001
    %3126 = vmatpush1.msra.mxu0 %v2000
    %3127 = vmatprep.subr.mxu0 %v2005
    %3128 = vmatpush1.msra.mxu0 %v2004
    %3129 = vmatprep.subr.mxu0 %v2009
    %3130 = vmatpush1.msra.mxu0 %v2008
    %3131 = vmatprep.subr.mxu0 %v2013
    %3132 = vmatpush1.msra.mxu0 %v2012
    %3133 = vmatprep.subr.mxu0 %v2017
    %3134 = vmatpush1.msra.mxu0 %v2016
    %3135 = vmatprep.subr.mxu0 %v2021
    %3136 = vmatpush1.msra.mxu0 %v2020
    %3137 = vmatprep.subr.mxu0 %v2025
    %3138 = vmatpush1.msra.mxu0 %v2024
    %3139 = vmatprep.subr.mxu0 %v2029
    %3140 = vmatpush1.msra.mxu0 %v2028
    %3141 = vmatprep.subr.mxu0 %v2033
    %3142 = vmatpush1.msra.mxu0 %v2032
    %3143 = vmatprep.subr.mxu0 %v2037
    %3144 = vmatpush1.msra.mxu0 %v2036
    %3145 = vmatprep.subr.mxu0 %v2041
    %3146 = vmatpush1.msra.mxu0 %v2040
    %3147 = vmatprep.subr.mxu0 %v2045
    %3148 = vmatpush1.msra.mxu0 %v2044
    %3149 = vmatprep.subr.mxu0 %v2049
    %3150 = vmatpush1.msra.mxu0 %v2048
    %3151 = vmatprep.subr.mxu0 %v2053
    %3152 = vmatpush1.msra.mxu0 %v2052
    %3153 = vmatprep.subr.mxu0 0.0
    %3154 = vmatpush1.msra.mxu0 0.0
    %3155 = vmatprep.subr.mxu0 0.0
    %3156 = vmatpush1.msra.mxu0 0.0
    %3157 = vmatprep.subr.mxu0 0.0
    %3158 = vmatpush1.msra.mxu0 0.0
    %3159 = vmatprep.subr.mxu0 0.0
    %3160 = vmatpush1.msra.mxu0 0.0
    %3161 = vmatprep.subr.mxu0 0.0
    %3162 = vmatpush1.msra.mxu0 0.0
    %3163 = vmatprep.subr.mxu0 0.0
    %3164 = vmatpush1.msra.mxu0 0.0
    %3165 = vmatprep.subr.mxu0 0.0
    %3166 = vmatpush1.msra.mxu0 0.0
    %3167 = vmatprep.subr.mxu0 0.0
    %3168 = vmatpush1.msra.mxu0 0.0
    %3169 = vmatprep.subr.mxu0 0.0
    %3170 = vmatpush1.msra.mxu0 0.0
    %3171 = vmatprep.subr.mxu0 0.0
    %3172 = vmatpush1.msra.mxu0 0.0
    %3173 = vmatprep.subr.mxu0 0.0
    %3174 = vmatpush1.msra.mxu0 0.0
    %3175 = vmatprep.subr.mxu0 0.0
    %3176 = vmatpush1.msra.mxu0 0.0
    %3177 = vmatprep.subr.mxu0 0.0
    %3178 = vmatpush1.msra.mxu0 0.0
    %3179 = vmatprep.subr.mxu0 0.0
    %3180 = vmatpush1.msra.mxu0 0.0
    %3181 = vmatprep.subr.mxu0 0.0
    %3182 = vmatpush1.msra.mxu0 0.0
    %3183 = vmatprep.subr.mxu0 0.0
    %3184 = vmatpush1.msra.mxu0 0.0
    %3185 = vmatprep.mubr.f32.mxu0 0.0
    %3186 = vmatmul.mubr.f32.gmra.mrb[0].mxu0 %v3044
    %v3187 = vpop.f32.mrb[0].mxu0
    %v3188 = vadd.f32 0.0, %v3187
    %v3189 = vpop.f32.mrb[0].mxu0
    %v3190 = vadd.f32 0.0, %v3189
    %3191 = vdwg.mxu0
    %v3192 = vadd.f32 %v3046, %v3117
    %v3193 = vadd.f32 %v3047, %v3119
    %v3194 = vadd.f32 %v3048, %v3188
    %v3195 = vadd.f32 %v3049, %v3190
    %v3196 = vxor.u32 %v3192, 2147483648
    %v3197 = vmul.f32 %v3196, 1.442695
    %v3198 = vpow.pop %v3197
    %v3199 = vadd.f32 %v3198, 1.0
    %v3200 = vrcp.pop %v3199
    %v3201 = vmul.f32 1.0, %v3200
    %v3202 = vxor.u32 %v3193, 2147483648
    %v3203 = vmul.f32 %v3202, 1.442695
    %v3204 = vpow.pop %v3203
    %v3205 = vadd.f32 %v3204, 1.0
    %v3206 = vrcp.pop %v3205
    %v3207 = vmul.f32 1.0, %v3206
    %v3208 = vtanh.pop %v3194
    %v3209 = vxor.u32 %v3195, 2147483648
    %v3210 = vmul.f32 %v3209, 1.442695
    %v3211 = vpow.pop %v3210
    %v3212 = vadd.f32 %v3211, 1.0
    %v3213 = vrcp.pop %v3212
    %v3214 = vmul.f32 1.0, %v3213
    %v3215 = vmul.f32 %v3207, %v3042
    %v3216 = vmul.f32 %v3201, %v3208
    %v3217 = vadd.f32 %v3215, %v3216
    %v3218 = vtanh.pop %v3217
    %v3219 = vmul.f32 %v3214, %v3218
    %3220 = vst [vmem:[%s1391] sm:$0xff] %v3219
    %v3221 = vld [vmem:[%s1393] sm:$0xff]
    %v3222 = vld [vmem:[%s1393 + $0x8] sm:$0xff]
    %v3223 = vld [vmem:[%s1393 + $0x10] sm:$0xff]
    %v3224 = vld [vmem:[%s1393 + $0x18] sm:$0xff]
    %3225 = vmatprep.subr.mxu0 %v1991
    %3226 = vmatpush1.msra.mxu0 %v1990
    %3227 = vmatprep.subr.mxu0 %v1995
    %3228 = vmatpush1.msra.mxu0 %v1994
    %3229 = vmatprep.subr.mxu0 %v1999
    %3230 = vmatpush1.msra.mxu0 %v1998
    %3231 = vmatprep.subr.mxu0 %v2003
    %3232 = vmatpush1.msra.mxu0 %v2002
    %3233 = vmatprep.subr.mxu0 %v2007
    %3234 = vmatpush1.msra.mxu0 %v2006
    %3235 = vmatprep.subr.mxu0 %v2011
    %3236 = vmatpush1.msra.mxu0 %v2010
    %3237 = vmatprep.subr.mxu0 %v2015
    %3238 = vmatpush1.msra.mxu0 %v2014
    %3239 = vmatprep.subr.mxu0 %v2019
    %3240 = vmatpush1.msra.mxu0 %v2018
    %3241 = vmatprep.subr.mxu0 %v2023
    %3242 = vmatpush1.msra.mxu0 %v2022
    %3243 = vmatprep.subr.mxu0 %v2027
    %3244 = vmatpush1.msra.mxu0 %v2026
    %3245 = vmatprep.subr.mxu0 %v2031
    %3246 = vmatpush1.msra.mxu0 %v2030
    %3247 = vmatprep.subr.mxu0 %v2035
    %3248 = vmatpush1.msra.mxu0 %v2034
    %3249 = vmatprep.subr.mxu0 %v2039
    %3250 = vmatpush1.msra.mxu0 %v2038
    %3251 = vmatprep.subr.mxu0 %v2043
    %3252 = vmatpush1.msra.mxu0 %v2042
    %3253 = vmatprep.subr.mxu0 %v2047
    %3254 = vmatpush1.msra.mxu0 %v2046
    %3255 = vmatprep.subr.mxu0 %v2051
    %3256 = vmatpush1.msra.mxu0 %v2050
    %3257 = vmatprep.subr.mxu0 0.0
    %3258 = vmatpush1.msra.mxu0 0.0
    %3259 = vmatprep.subr.mxu0 0.0
    %3260 = vmatpush1.msra.mxu0 0.0
    %3261 = vmatprep.subr.mxu0 0.0
    %3262 = vmatpush1.msra.mxu0 0.0
    %3263 = vmatprep.subr.mxu0 0.0
    %3264 = vmatpush1.msra.mxu0 0.0
    %3265 = vmatprep.subr.mxu0 0.0
    %3266 = vmatpush1.msra.mxu0 0.0
    %3267 = vmatprep.subr.mxu0 0.0
    %3268 = vmatpush1.msra.mxu0 0.0
    %3269 = vmatprep.subr.mxu0 0.0
    %3270 = vmatpush1.msra.mxu0 0.0
    %3271 = vmatprep.subr.mxu0 0.0
    %3272 = vmatpush1.msra.mxu0 0.0
    %3273 = vmatprep.subr.mxu0 0.0
    %3274 = vmatpush1.msra.mxu0 0.0
    %3275 = vmatprep.subr.mxu0 0.0
    %3276 = vmatpush1.msra.mxu0 0.0
    %3277 = vmatprep.subr.mxu0 0.0
    %3278 = vmatpush1.msra.mxu0 0.0
    %3279 = vmatprep.subr.mxu0 0.0
    %3280 = vmatpush1.msra.mxu0 0.0
    %3281 = vmatprep.subr.mxu0 0.0
    %3282 = vmatpush1.msra.mxu0 0.0
    %3283 = vmatprep.subr.mxu0 0.0
    %3284 = vmatpush1.msra.mxu0 0.0
    %3285 = vmatprep.subr.mxu0 0.0
    %3286 = vmatpush1.msra.mxu0 0.0
    %3287 = vmatprep.subr.mxu0 0.0
    %3288 = vmatpush1.msra.mxu0 0.0
    %3289 = vmatprep.mubr.f32.mxu0 0.0
    %3290 = vmatmul.mubr.f32.gmra.mrb[0].mxu0 %v3219
    %v3291 = vpop.f32.mrb[0].mxu0
    %v3292 = vadd.f32 0.0, %v3291
    %v3293 = vpop.f32.mrb[0].mxu0
    %v3294 = vadd.f32 0.0, %v3293
    %3295 = vdwg.mxu0
    %3296 = vmatprep.subr.mxu0 %v1993
    %3297 = vmatpush1.msra.mxu0 %v1992
    %3298 = vmatprep.subr.mxu0 %v1997
    %3299 = vmatpush1.msra.mxu0 %v1996
    %3300 = vmatprep.subr.mxu0 %v2001
    %3301 = vmatpush1.msra.mxu0 %v2000
    %3302 = vmatprep.subr.mxu0 %v2005
    %3303 = vmatpush1.msra.mxu0 %v2004
    %3304 = vmatprep.subr.mxu0 %v2009
    %3305 = vmatpush1.msra.mxu0 %v2008
    %3306 = vmatprep.subr.mxu0 %v2013
    %3307 = vmatpush1.msra.mxu0 %v2012
    %3308 = vmatprep.subr.mxu0 %v2017
    %3309 = vmatpush1.msra.mxu0 %v2016
    %3310 = vmatprep.subr.mxu0 %v2021
    %3311 = vmatpush1.msra.mxu0 %v2020
    %3312 = vmatprep.subr.mxu0 %v2025
    %3313 = vmatpush1.msra.mxu0 %v2024
    %3314 = vmatprep.subr.mxu0 %v2029
    %3315 = vmatpush1.msra.mxu0 %v2028
    %3316 = vmatprep.subr.mxu0 %v2033
    %3317 = vmatpush1.msra.mxu0 %v2032
    %3318 = vmatprep.subr.mxu0 %v2037
    %3319 = vmatpush1.msra.mxu0 %v2036
    %3320 = vmatprep.subr.mxu0 %v2041
    %3321 = vmatpush1.msra.mxu0 %v2040
    %3322 = vmatprep.subr.mxu0 %v2045
    %3323 = vmatpush1.msra.mxu0 %v2044
    %3324 = vmatprep.subr.mxu0 %v2049
    %3325 = vmatpush1.msra.mxu0 %v2048
    %3326 = vmatprep.subr.mxu0 %v2053
    %3327 = vmatpush1.msra.mxu0 %v2052
    %3328 = vmatprep.subr.mxu0 0.0
    %3329 = vmatpush1.msra.mxu0 0.0
    %3330 = vmatprep.subr.mxu0 0.0
    %3331 = vmatpush1.msra.mxu0 0.0
    %3332 = vmatprep.subr.mxu0 0.0
    %3333 = vmatpush1.msra.mxu0 0.0
    %3334 = vmatprep.subr.mxu0 0.0
    %3335 = vmatpush1.msra.mxu0 0.0
    %3336 = vmatprep.subr.mxu0 0.0
    %3337 = vmatpush1.msra.mxu0 0.0
    %3338 = vmatprep.subr.mxu0 0.0
    %3339 = vmatpush1.msra.mxu0 0.0
    %3340 = vmatprep.subr.mxu0 0.0
    %3341 = vmatpush1.msra.mxu0 0.0
    %3342 = vmatprep.subr.mxu0 0.0
    %3343 = vmatpush1.msra.mxu0 0.0
    %3344 = vmatprep.subr.mxu0 0.0
    %3345 = vmatpush1.msra.mxu0 0.0
    %3346 = vmatprep.subr.mxu0 0.0
    %3347 = vmatpush1.msra.mxu0 0.0
    %3348 = vmatprep.subr.mxu0 0.0
    %3349 = vmatpush1.msra.mxu0 0.0
    %3350 = vmatprep.subr.mxu0 0.0
    %3351 = vmatpush1.msra.mxu0 0.0
    %3352 = vmatprep.subr.mxu0 0.0
    %3353 = vmatpush1.msra.mxu0 0.0
    %3354 = vmatprep.subr.mxu0 0.0
    %3355 = vmatpush1.msra.mxu0 0.0
    %3356 = vmatprep.subr.mxu0 0.0
    %3357 = vmatpush1.msra.mxu0 0.0
    %3358 = vmatprep.subr.mxu0 0.0
    %3359 = vmatpush1.msra.mxu0 0.0
    %3360 = vmatprep.mubr.f32.mxu0 0.0
    %3361 = vmatmul.mubr.f32.gmra.mrb[0].mxu0 %v3219
    %v3362 = vpop.f32.mrb[0].mxu0
    %v3363 = vadd.f32 0.0, %v3362
    %v3364 = vpop.f32.mrb[0].mxu0
    %v3365 = vadd.f32 0.0, %v3364
    %3366 = vdwg.mxu0
    %v3367 = vadd.f32 %v3221, %v3292
    %v3368 = vadd.f32 %v3222, %v3294
    %v3369 = vadd.f32 %v3223, %v3363
    %v3370 = vadd.f32 %v3224, %v3365
    %v3371 = vxor.u32 %v3367, 2147483648
    %v3372 = vmul.f32 %v3371, 1.442695
    %v3373 = vpow.pop %v3372
    %v3374 = vadd.f32 %v3373, 1.0
    %v3375 = vrcp.pop %v3374
    %v3376 = vmul.f32 1.0, %v3375
    %v3377 = vxor.u32 %v3368, 2147483648
    %v3378 = vmul.f32 %v3377, 1.442695
    %v3379 = vpow.pop %v3378
    %v3380 = vadd.f32 %v3379, 1.0
    %v3381 = vrcp.pop %v3380
    %v3382 = vmul.f32 1.0, %v3381
    %v3383 = vtanh.pop %v3369
    %v3384 = vxor.u32 %v3370, 2147483648
    %v3385 = vmul.f32 %v3384, 1.442695
    %v3386 = vpow.pop %v3385
    %v3387 = vadd.f32 %v3386, 1.0
    %v3388 = vrcp.pop %v3387
    %v3389 = vmul.f32 1.0, %v3388
    %v3390 = vmul.f32 %v3382, %v3217
    %v3391 = vmul.f32 %v3376, %v3383
    %v3392 = vadd.f32 %v3390, %v3391
    %v3393 = vtanh.pop %v3392
    %v3394 = vmul.f32 %v3389, %v3393
    %3395 = vst [vmem:[%s1568] sm:$0xff] %v3394
    %v3396 = vld [vmem:[%s1570] sm:$0xff]
    %v3397 = vld [vmem:[%s1570 + $0x8] sm:$0xff]
    %v3398 = vld [vmem:[%s1570 + $0x10] sm:$0xff]
    %v3399 = vld [vmem:[%s1570 + $0x18] sm:$0xff]
    %3400 = vmatprep.subr.mxu0 %v1991
    %3401 = vmatpush1.msra.mxu0 %v1990
    %3402 = vmatprep.subr.mxu0 %v1995
    %3403 = vmatpush1.msra.mxu0 %v1994
    %3404 = vmatprep.subr.mxu0 %v1999
    %3405 = vmatpush1.msra.mxu0 %v1998
    %3406 = vmatprep.subr.mxu0 %v2003
    %3407 = vmatpush1.msra.mxu0 %v2002
    %3408 = vmatprep.subr.mxu0 %v2007
    %3409 = vmatpush1.msra.mxu0 %v2006
    %3410 = vmatprep.subr.mxu0 %v2011
    %3411 = vmatpush1.msra.mxu0 %v2010
    %3412 = vmatprep.subr.mxu0 %v2015
    %3413 = vmatpush1.msra.mxu0 %v2014
    %3414 = vmatprep.subr.mxu0 %v2019
    %3415 = vmatpush1.msra.mxu0 %v2018
    %3416 = vmatprep.subr.mxu0 %v2023
    %3417 = vmatpush1.msra.mxu0 %v2022
    %3418 = vmatprep.subr.mxu0 %v2027
    %3419 = vmatpush1.msra.mxu0 %v2026
    %3420 = vmatprep.subr.mxu0 %v2031
    %3421 = vmatpush1.msra.mxu0 %v2030
    %3422 = vmatprep.subr.mxu0 %v2035
    %3423 = vmatpush1.msra.mxu0 %v2034
    %3424 = vmatprep.subr.mxu0 %v2039
    %3425 = vmatpush1.msra.mxu0 %v2038
    %3426 = vmatprep.subr.mxu0 %v2043
    %3427 = vmatpush1.msra.mxu0 %v2042
    %3428 = vmatprep.subr.mxu0 %v2047
    %3429 = vmatpush1.msra.mxu0 %v2046
    %3430 = vmatprep.subr.mxu0 %v2051
    %3431 = vmatpush1.msra.mxu0 %v2050
    %3432 = vmatprep.subr.mxu0 0.0
    %3433 = vmatpush1.msra.mxu0 0.0
    %3434 = vmatprep.subr.mxu0 0.0
    %3435 = vmatpush1.msra.mxu0 0.0
    %3436 = vmatprep.subr.mxu0 0.0
    %3437 = vmatpush1.msra.mxu0 0.0
    %3438 = vmatprep.subr.mxu0 0.0
    %3439 = vmatpush1.msra.mxu0 0.0
    %3440 = vmatprep.subr.mxu0 0.0
    %3441 = vmatpush1.msra.mxu0 0.0
    %3442 = vmatprep.subr.mxu0 0.0
    %3443 = vmatpush1.msra.mxu0 0.0
    %3444 = vmatprep.subr.mxu0 0.0
    %3445 = vmatpush1.msra.mxu0 0.0
    %3446 = vmatprep.subr.mxu0 0.0
    %3447 = vmatpush1.msra.mxu0 0.0
    %3448 = vmatprep.subr.mxu0 0.0
    %3449 = vmatpush1.msra.mxu0 0.0
    %3450 = vmatprep.subr.mxu0 0.0
    %3451 = vmatpush1.msra.mxu0 0.0
    %3452 = vmatprep.subr.mxu0 0.0
    %3453 = vmatpush1.msra.mxu0 0.0
    %3454 = vmatprep.subr.mxu0 0.0
    %3455 = vmatpush1.msra.mxu0 0.0
    %3456 = vmatprep.subr.mxu0 0.0
    %3457 = vmatpush1.msra.mxu0 0.0
    %3458 = vmatprep.subr.mxu0 0.0
    %3459 = vmatpush1.msra.mxu0 0.0
    %3460 = vmatprep.subr.mxu0 0.0
    %3461 = vmatpush1.msra.mxu0 0.0
    %3462 = vmatprep.subr.mxu0 0.0
    %3463 = vmatpush1.msra.mxu0 0.0
    %3464 = vmatprep.mubr.f32.mxu0 0.0
    %3465 = vmatmul.mubr.f32.gmra.mrb[0].mxu0 %v3394
    %v3466 = vpop.f32.mrb[0].mxu0
    %v3467 = vadd.f32 0.0, %v3466
    %v3468 = vpop.f32.mrb[0].mxu0
    %v3469 = vadd.f32 0.0, %v3468
    %3470 = vdwg.mxu0
    %3471 = vmatprep.subr.mxu0 %v1993
    %3472 = vmatpush1.msra.mxu0 %v1992
    %3473 = vmatprep.subr.mxu0 %v1997
    %3474 = vmatpush1.msra.mxu0 %v1996
    %3475 = vmatprep.subr.mxu0 %v2001
    %3476 = vmatpush1.msra.mxu0 %v2000
    %3477 = vmatprep.subr.mxu0 %v2005
    %3478 = vmatpush1.msra.mxu0 %v2004
    %3479 = vmatprep.subr.mxu0 %v2009
    %3480 = vmatpush1.msra.mxu0 %v2008
    %3481 = vmatprep.subr.mxu0 %v2013
    %3482 = vmatpush1.msra.mxu0 %v2012
    %3483 = vmatprep.subr.mxu0 %v2017
    %3484 = vmatpush1.msra.mxu0 %v2016
    %3485 = vmatprep.subr.mxu0 %v2021
    %3486 = vmatpush1.msra.mxu0 %v2020
    %3487 = vmatprep.subr.mxu0 %v2025
    %3488 = vmatpush1.msra.mxu0 %v2024
    %3489 = vmatprep.subr.mxu0 %v2029
    %3490 = vmatpush1.msra.mxu0 %v2028
    %3491 = vmatprep.subr.mxu0 %v2033
    %3492 = vmatpush1.msra.mxu0 %v2032
    %3493 = vmatprep.subr.mxu0 %v2037
    %3494 = vmatpush1.msra.mxu0 %v2036
    %3495 = vmatprep.subr.mxu0 %v2041
    %3496 = vmatpush1.msra.mxu0 %v2040
    %3497 = vmatprep.subr.mxu0 %v2045
    %3498 = vmatpush1.msra.mxu0 %v2044
    %3499 = vmatprep.subr.mxu0 %v2049
    %3500 = vmatpush1.msra.mxu0 %v2048
    %3501 = vmatprep.subr.mxu0 %v2053
    %3502 = vmatpush1.msra.mxu0 %v2052
    %3503 = vmatprep.subr.mxu0 0.0
    %3504 = vmatpush1.msra.mxu0 0.0
    %3505 = vmatprep.subr.mxu0 0.0
    %3506 = vmatpush1.msra.mxu0 0.0
    %3507 = vmatprep.subr.mxu0 0.0
    %3508 = vmatpush1.msra.mxu0 0.0
    %3509 = vmatprep.subr.mxu0 0.0
    %3510 = vmatpush1.msra.mxu0 0.0
    %3511 = vmatprep.subr.mxu0 0.0
    %3512 = vmatpush1.msra.mxu0 0.0
    %3513 = vmatprep.subr.mxu0 0.0
    %3514 = vmatpush1.msra.mxu0 0.0
    %3515 = vmatprep.subr.mxu0 0.0
    %3516 = vmatpush1.msra.mxu0 0.0
    %3517 = vmatprep.subr.mxu0 0.0
    %3518 = vmatpush1.msra.mxu0 0.0
    %3519 = vmatprep.subr.mxu0 0.0
    %3520 = vmatpush1.msra.mxu0 0.0
    %3521 = vmatprep.subr.mxu0 0.0
    %3522 = vmatpush1.msra.mxu0 0.0
    %3523 = vmatprep.subr.mxu0 0.0
    %3524 = vmatpush1.msra.mxu0 0.0
    %3525 = vmatprep.subr.mxu0 0.0
    %3526 = vmatpush1.msra.mxu0 0.0
    %3527 = vmatprep.subr.mxu0 0.0
    %3528 = vmatpush1.msra.mxu0 0.0
    %3529 = vmatprep.subr.mxu0 0.0
    %3530 = vmatpush1.msra.mxu0 0.0
    %3531 = vmatprep.subr.mxu0 0.0
    %3532 = vmatpush1.msra.mxu0 0.0
    %3533 = vmatprep.subr.mxu0 0.0
    %3534 = vmatpush1.msra.mxu0 0.0
    %3535 = vmatprep.mubr.f32.mxu0 0.0
    %3536 = vmatmul.mubr.f32.gmra.mrb[0].mxu0 %v3394
    %v3537 = vpop.f32.mrb[0].mxu0
    %v3538 = vadd.f32 0.0, %v3537
    %v3539 = vpop.f32.mrb[0].mxu0
    %v3540 = vadd.f32 0.0, %v3539
    %3541 = vdwg.mxu0
    %v3542 = vadd.f32 %v3396, %v3467
    %v3543 = vadd.f32 %v3397, %v3469
    %v3544 = vadd.f32 %v3398, %v3538
    %v3545 = vadd.f32 %v3399, %v3540
    %v3546 = vxor.u32 %v3542, 2147483648
    %v3547 = vmul.f32 %v3546, 1.442695
    %v3548 = vpow.pop %v3547
    %v3549 = vadd.f32 %v3548, 1.0
    %v3550 = vrcp.pop %v3549
    %v3551 = vmul.f32 1.0, %v3550
    %v3552 = vxor.u32 %v3543, 2147483648
    %v3553 = vmul.f32 %v3552, 1.442695
    %v3554 = vpow.pop %v3553
    %v3555 = vadd.f32 %v3554, 1.0
    %v3556 = vrcp.pop %v3555
    %v3557 = vmul.f32 1.0, %v3556
    %v3558 = vtanh.pop %v3544
    %v3559 = vxor.u32 %v3545, 2147483648
    %v3560 = vmul.f32 %v3559, 1.442695
    %v3561 = vpow.pop %v3560
    %v3562 = vadd.f32 %v3561, 1.0
    %v3563 = vrcp.pop %v3562
    %v3564 = vmul.f32 1.0, %v3563
    %v3565 = vmul.f32 %v3557, %v3392
    %v3566 = vmul.f32 %v3551, %v3558
    %v3567 = vadd.f32 %v3565, %v3566
    %v3568 = vtanh.pop %v3567
    %v3569 = vmul.f32 %v3564, %v3568
    %3570 = vst [vmem:[%s1745] sm:$0xff] %v3569
    %v3571 = vld [vmem:[%s1747] sm:$0xff]
    %v3572 = vld [vmem:[%s1747 + $0x8] sm:$0xff]
    %v3573 = vld [vmem:[%s1747 + $0x10] sm:$0xff]
    %v3574 = vld [vmem:[%s1747 + $0x18] sm:$0xff]
    %3575 = vmatprep.subr.mxu0 %v1991
    %3576 = vmatpush1.msra.mxu0 %v1990
    %3577 = vmatprep.subr.mxu0 %v1995
    %3578 = vmatpush1.msra.mxu0 %v1994
    %3579 = vmatprep.subr.mxu0 %v1999
    %3580 = vmatpush1.msra.mxu0 %v1998
    %3581 = vmatprep.subr.mxu0 %v2003
    %3582 = vmatpush1.msra.mxu0 %v2002
    %3583 = vmatprep.subr.mxu0 %v2007
    %3584 = vmatpush1.msra.mxu0 %v2006
    %3585 = vmatprep.subr.mxu0 %v2011
    %3586 = vmatpush1.msra.mxu0 %v2010
    %3587 = vmatprep.subr.mxu0 %v2015
    %3588 = vmatpush1.msra.mxu0 %v2014
    %3589 = vmatprep.subr.mxu0 %v2019
    %3590 = vmatpush1.msra.mxu0 %v2018
    %3591 = vmatprep.subr.mxu0 %v2023
    %3592 = vmatpush1.msra.mxu0 %v2022
    %3593 = vmatprep.subr.mxu0 %v2027
    %3594 = vmatpush1.msra.mxu0 %v2026
    %3595 = vmatprep.subr.mxu0 %v2031
    %3596 = vmatpush1.msra.mxu0 %v2030
    %3597 = vmatprep.subr.mxu0 %v2035
    %3598 = vmatpush1.msra.mxu0 %v2034
    %3599 = vmatprep.subr.mxu0 %v2039
    %3600 = vmatpush1.msra.mxu0 %v2038
    %3601 = vmatprep.subr.mxu0 %v2043
    %3602 = vmatpush1.msra.mxu0 %v2042
    %3603 = vmatprep.subr.mxu0 %v2047
    %3604 = vmatpush1.msra.mxu0 %v2046
    %3605 = vmatprep.subr.mxu0 %v2051
    %3606 = vmatpush1.msra.mxu0 %v2050
    %3607 = vmatprep.subr.mxu0 0.0
    %3608 = vmatpush1.msra.mxu0 0.0
    %3609 = vmatprep.subr.mxu0 0.0
    %3610 = vmatpush1.msra.mxu0 0.0
    %3611 = vmatprep.subr.mxu0 0.0
    %3612 = vmatpush1.msra.mxu0 0.0
    %3613 = vmatprep.subr.mxu0 0.0
    %3614 = vmatpush1.msra.mxu0 0.0
    %3615 = vmatprep.subr.mxu0 0.0
    %3616 = vmatpush1.msra.mxu0 0.0
    %3617 = vmatprep.subr.mxu0 0.0
    %3618 = vmatpush1.msra.mxu0 0.0
    %3619 = vmatprep.subr.mxu0 0.0
    %3620 = vmatpush1.msra.mxu0 0.0
    %3621 = vmatprep.subr.mxu0 0.0
    %3622 = vmatpush1.msra.mxu0 0.0
    %3623 = vmatprep.subr.mxu0 0.0
    %3624 = vmatpush1.msra.mxu0 0.0
    %3625 = vmatprep.subr.mxu0 0.0
    %3626 = vmatpush1.msra.mxu0 0.0
    %3627 = vmatprep.subr.mxu0 0.0
    %3628 = vmatpush1.msra.mxu0 0.0
    %3629 = vmatprep.subr.mxu0 0.0
    %3630 = vmatpush1.msra.mxu0 0.0
    %3631 = vmatprep.subr.mxu0 0.0
    %3632 = vmatpush1.msra.mxu0 0.0
    %3633 = vmatprep.subr.mxu0 0.0
    %3634 = vmatpush1.msra.mxu0 0.0
    %3635 = vmatprep.subr.mxu0 0.0
    %3636 = vmatpush1.msra.mxu0 0.0
    %3637 = vmatprep.subr.mxu0 0.0
    %3638 = vmatpush1.msra.mxu0 0.0
    %3639 = vmatprep.mubr.f32.mxu0 0.0
    %3640 = vmatmul.mubr.f32.gmra.mrb[0].mxu0 %v3569
    %v3641 = vpop.f32.mrb[0].mxu0
    %v3642 = vadd.f32 0.0, %v3641
    %v3643 = vpop.f32.mrb[0].mxu0
    %v3644 = vadd.f32 0.0, %v3643
    %3645 = vdwg.mxu0
    %3646 = vmatprep.subr.mxu0 %v1993
    %3647 = vmatpush1.msra.mxu0 %v1992
    %3648 = vmatprep.subr.mxu0 %v1997
    %3649 = vmatpush1.msra.mxu0 %v1996
    %3650 = vmatprep.subr.mxu0 %v2001
    %3651 = vmatpush1.msra.mxu0 %v2000
    %3652 = vmatprep.subr.mxu0 %v2005
    %3653 = vmatpush1.msra.mxu0 %v2004
    %3654 = vmatprep.subr.mxu0 %v2009
    %3655 = vmatpush1.msra.mxu0 %v2008
    %3656 = vmatprep.subr.mxu0 %v2013
    %3657 = vmatpush1.msra.mxu0 %v2012
    %3658 = vmatprep.subr.mxu0 %v2017
    %3659 = vmatpush1.msra.mxu0 %v2016
    %3660 = vmatprep.subr.mxu0 %v2021
    %3661 = vmatpush1.msra.mxu0 %v2020
    %3662 = vmatprep.subr.mxu0 %v2025
    %3663 = vmatpush1.msra.mxu0 %v2024
    %3664 = vmatprep.subr.mxu0 %v2029
    %3665 = vmatpush1.msra.mxu0 %v2028
    %3666 = vmatprep.subr.mxu0 %v2033
    %3667 = vmatpush1.msra.mxu0 %v2032
    %3668 = vmatprep.subr.mxu0 %v2037
    %3669 = vmatpush1.msra.mxu0 %v2036
    %3670 = vmatprep.subr.mxu0 %v2041
    %3671 = vmatpush1.msra.mxu0 %v2040
    %3672 = vmatprep.subr.mxu0 %v2045
    %3673 = vmatpush1.msra.mxu0 %v2044
    %3674 = vmatprep.subr.mxu0 %v2049
    %3675 = vmatpush1.msra.mxu0 %v2048
    %3676 = vmatprep.subr.mxu0 %v2053
    %3677 = vmatpush1.msra.mxu0 %v2052
    %3678 = vmatprep.subr.mxu0 0.0
    %3679 = vmatpush1.msra.mxu0 0.0
    %3680 = vmatprep.subr.mxu0 0.0
    %3681 = vmatpush1.msra.mxu0 0.0
    %3682 = vmatprep.subr.mxu0 0.0
    %3683 = vmatpush1.msra.mxu0 0.0
    %3684 = vmatprep.subr.mxu0 0.0
    %3685 = vmatpush1.msra.mxu0 0.0
    %3686 = vmatprep.subr.mxu0 0.0
    %3687 = vmatpush1.msra.mxu0 0.0
    %3688 = vmatprep.subr.mxu0 0.0
    %3689 = vmatpush1.msra.mxu0 0.0
    %3690 = vmatprep.subr.mxu0 0.0
    %3691 = vmatpush1.msra.mxu0 0.0
    %3692 = vmatprep.subr.mxu0 0.0
    %3693 = vmatpush1.msra.mxu0 0.0
    %3694 = vmatprep.subr.mxu0 0.0
    %3695 = vmatpush1.msra.mxu0 0.0
    %3696 = vmatprep.subr.mxu0 0.0
    %3697 = vmatpush1.msra.mxu0 0.0
    %3698 = vmatprep.subr.mxu0 0.0
    %3699 = vmatpush1.msra.mxu0 0.0
    %3700 = vmatprep.subr.mxu0 0.0
    %3701 = vmatpush1.msra.mxu0 0.0
    %3702 = vmatprep.subr.mxu0 0.0
    %3703 = vmatpush1.msra.mxu0 0.0
    %3704 = vmatprep.subr.mxu0 0.0
    %3705 = vmatpush1.msra.mxu0 0.0
    %3706 = vmatprep.subr.mxu0 0.0
    %3707 = vmatpush1.msra.mxu0 0.0
    %3708 = vmatprep.subr.mxu0 0.0
    %3709 = vmatpush1.msra.mxu0 0.0
    %3710 = vmatprep.mubr.f32.mxu0 0.0
    %3711 = vmatmul.mubr.f32.gmra.mrb[0].mxu0 %v3569
    %v3712 = vpop.f32.mrb[0].mxu0
    %v3713 = vadd.f32 0.0, %v3712
    %v3714 = vpop.f32.mrb[0].mxu0
    %v3715 = vadd.f32 0.0, %v3714
    %3716 = vdwg.mxu0
    %v3717 = vadd.f32 %v3571, %v3642
    %v3718 = vadd.f32 %v3572, %v3644
    %v3719 = vadd.f32 %v3573, %v3713
    %v3720 = vadd.f32 %v3574, %v3715
    %v3721 = vxor.u32 %v3717, 2147483648
    %v3722 = vmul.f32 %v3721, 1.442695
    %v3723 = vpow.pop %v3722
    %v3724 = vadd.f32 %v3723, 1.0
    %v3725 = vrcp.pop %v3724
    %v3726 = vmul.f32 1.0, %v3725
    %v3727 = vxor.u32 %v3718, 2147483648
    %v3728 = vmul.f32 %v3727, 1.442695
    %v3729 = vpow.pop %v3728
    %v3730 = vadd.f32 %v3729, 1.0
    %v3731 = vrcp.pop %v3730
    %v3732 = vmul.f32 1.0, %v3731
    %v3733 = vtanh.pop %v3719
    %v3734 = vxor.u32 %v3720, 2147483648
    %v3735 = vmul.f32 %v3734, 1.442695
    %v3736 = vpow.pop %v3735
    %v3737 = vadd.f32 %v3736, 1.0
    %v3738 = vrcp.pop %v3737
    %v3739 = vmul.f32 1.0, %v3738
    %v3740 = vmul.f32 %v3732, %v3567
    %v3741 = vmul.f32 %v3726, %v3733
    %v3742 = vadd.f32 %v3740, %v3741
    %v3743 = vtanh.pop %v3742
    %v3744 = vmul.f32 %v3739, %v3743
    %3745 = vst [vmem:[%s1922] sm:$0xff] %v3744
    %3746 = vst [vmem:[%s2342] sm:$0xff] %v3744
    %3747 = vst [vmem:[%s2344] sm:$0xff] %v3742
    %v3748 = vld [vmem:[#allocation15] sm:$0xff]
    %v3749 = vld [vmem:[#allocation15 + $0x8] sm:$0xff]
    %v3750 = vld [vmem:[#allocation15 + $0x10] sm:$0xff]
    %v3751 = vld [vmem:[#allocation15 + $0x18] sm:$0xff]
    %v3752 = vld [vmem:[#allocation15 + $0x20] sm:$0xff]
    %v3753 = vld [vmem:[#allocation15 + $0x28] sm:$0xff]
    %v3754 = vld [vmem:[#allocation15 + $0x30] sm:$0xff]
    %v3755 = vld [vmem:[#allocation15 + $0x38] sm:$0xff]
    %v3756 = vld [vmem:[#allocation15 + $0x40] sm:$0xff]
    %v3757 = vld [vmem:[#allocation15 + $0x48] sm:$0xff]
    %v3758 = vld [vmem:[#allocation15 + $0x50] sm:$0xff]
    %v3759 = vld [vmem:[#allocation15 + $0x58] sm:$0xff]
    %v3760 = vld [vmem:[#allocation15 + $0x60] sm:$0xff]
    %v3761 = vld [vmem:[#allocation15 + $0x68] sm:$0xff]
    %v3762 = vld [vmem:[#allocation15 + $0x70] sm:$0xff]
    %v3763 = vld [vmem:[#allocation15 + $0x78] sm:$0xff]
    %v3764 = vld [vmem:[#allocation4] sm:$0xff]
    %v3765 = vld [vmem:[#allocation4 + $0x8] sm:$0xff]
    %v3766 = vld [vmem:[#allocation4 + $0x10] sm:$0xff]
    %v3767 = vld [vmem:[#allocation4 + $0x18] sm:$0xff]
    %v3768 = vld [vmem:[#allocation4 + $0x20] sm:$0xff]
    %v3769 = vld [vmem:[#allocation4 + $0x28] sm:$0xff]
    %v3770 = vld [vmem:[#allocation4 + $0x30] sm:$0xff]
    %v3771 = vld [vmem:[#allocation4 + $0x38] sm:$0xff]
    %v3772 = vld [vmem:[%s8] sm:$0x1]
    %v3774 = vlaneseq
    %v3775 = vshrl.u32 %v3774, 7
    %v3776 = vsub.s32 0, %v3775
    %v3777 = vrot.slane %v3772, %v3776
    %3779 = vmatprep.subr.mxu0 0.0
    %3780 = vmatpush1.msra.mxu0 %v3748
    %3781 = vmatprep.subr.mxu0 0.0
    %3782 = vmatpush1.msra.mxu0 %v3749
    %3783 = vmatprep.subr.mxu0 0.0
    %3784 = vmatpush1.msra.mxu0 %v3750
    %3785 = vmatprep.subr.mxu0 0.0
    %3786 = vmatpush1.msra.mxu0 %v3751
    %3787 = vmatprep.subr.mxu0 0.0
    %3788 = vmatpush1.msra.mxu0 %v3752
    %3789 = vmatprep.subr.mxu0 0.0
    %3790 = vmatpush1.msra.mxu0 %v3753
    %3791 = vmatprep.subr.mxu0 0.0
    %3792 = vmatpush1.msra.mxu0 %v3754
    %3793 = vmatprep.subr.mxu0 0.0
    %3794 = vmatpush1.msra.mxu0 %v3755
    %3795 = vmatprep.subr.mxu0 0.0
    %3796 = vmatpush1.msra.mxu0 %v3756
    %3797 = vmatprep.subr.mxu0 0.0
    %3798 = vmatpush1.msra.mxu0 %v3757
    %3799 = vmatprep.subr.mxu0 0.0
    %3800 = vmatpush1.msra.mxu0 %v3758
    %3801 = vmatprep.subr.mxu0 0.0
    %3802 = vmatpush1.msra.mxu0 %v3759
    %3803 = vmatprep.subr.mxu0 0.0
    %3804 = vmatpush1.msra.mxu0 %v3760
    %3805 = vmatprep.subr.mxu0 0.0
    %3806 = vmatpush1.msra.mxu0 %v3761
    %3807 = vmatprep.subr.mxu0 0.0
    %3808 = vmatpush1.msra.mxu0 %v3762
    %3809 = vmatprep.subr.mxu0 0.0
    %3810 = vmatpush1.msra.mxu0 %v3763
    %3811 = vmatprep.subr.mxu0 0.0
    %3812 = vmatpush1.msra.mxu0 0.0
    %3813 = vmatprep.subr.mxu0 0.0
    %3814 = vmatpush1.msra.mxu0 0.0
    %3815 = vmatprep.subr.mxu0 0.0
    %3816 = vmatpush1.msra.mxu0 0.0
    %3817 = vmatprep.subr.mxu0 0.0
    %3818 = vmatpush1.msra.mxu0 0.0
    %3819 = vmatprep.subr.mxu0 0.0
    %3820 = vmatpush1.msra.mxu0 0.0
    %3821 = vmatprep.subr.mxu0 0.0
    %3822 = vmatpush1.msra.mxu0 0.0
    %3823 = vmatprep.subr.mxu0 0.0
    %3824 = vmatpush1.msra.mxu0 0.0
    %3825 = vmatprep.subr.mxu0 0.0
    %3826 = vmatpush1.msra.mxu0 0.0
    %3827 = vmatprep.subr.mxu0 0.0
    %3828 = vmatpush1.msra.mxu0 0.0
    %3829 = vmatprep.subr.mxu0 0.0
    %3830 = vmatpush1.msra.mxu0 0.0
    %3831 = vmatprep.subr.mxu0 0.0
    %3832 = vmatpush1.msra.mxu0 0.0
    %3833 = vmatprep.subr.mxu0 0.0
    %3834 = vmatpush1.msra.mxu0 0.0
    %3835 = vmatprep.subr.mxu0 0.0
    %3836 = vmatpush1.msra.mxu0 0.0
    %3837 = vmatprep.subr.mxu0 0.0
    %3838 = vmatpush1.msra.mxu0 0.0
    %3839 = vmatprep.subr.mxu0 0.0
    %3840 = vmatpush1.msra.mxu0 0.0
    %3841 = vmatprep.subr.mxu0 0.0
    %3842 = vmatpush1.msra.mxu0 0.0
    %3843 = vmatprep.mubr.f32.mxu0 0.0
    %3844 = vmatmul.mubr.f32.gmra.mrb[0].mxu0 %v3764
    %v3845 = vpop.f32.mrb[0].mxu0
    %v3846 = vadd.f32 %v3777, %v3845
    %v3847 = vpop.f32.mrb[0].mxu0
    %3848 = vmatprep.mubr.f32.mxu0 0.0
    %3849 = vmatmul.mubr.f32.gmra.mrb[0].mxu0 %v3765
    %v3850 = vpop.f32.mrb[0].mxu0
    %v3851 = vadd.f32 %v3777, %v3850
    %v3852 = vpop.f32.mrb[0].mxu0
    %3853 = vmatprep.mubr.f32.mxu0 0.0
    %3854 = vmatmul.mubr.f32.gmra.mrb[0].mxu0 %v3766
    %v3855 = vpop.f32.mrb[0].mxu0
    %v3856 = vadd.f32 %v3777, %v3855
    %v3857 = vpop.f32.mrb[0].mxu0
    %3858 = vmatprep.mubr.f32.mxu0 0.0
    %3859 = vmatmul.mubr.f32.gmra.mrb[0].mxu0 %v3767
    %v3860 = vpop.f32.mrb[0].mxu0
    %v3861 = vadd.f32 %v3777, %v3860
    %v3862 = vpop.f32.mrb[0].mxu0
    %3863 = vmatprep.mubr.f32.mxu0 0.0
    %3864 = vmatmul.mubr.f32.gmra.mrb[0].mxu0 %v3768
    %v3865 = vpop.f32.mrb[0].mxu0
    %v3866 = vadd.f32 %v3777, %v3865
    %v3867 = vpop.f32.mrb[0].mxu0
    %3868 = vmatprep.mubr.f32.mxu0 0.0
    %3869 = vmatmul.mubr.f32.gmra.mrb[0].mxu0 %v3769
    %v3870 = vpop.f32.mrb[0].mxu0
    %v3871 = vadd.f32 %v3777, %v3870
    %v3872 = vpop.f32.mrb[0].mxu0
    %3873 = vmatprep.mubr.f32.mxu0 0.0
    %3874 = vmatmul.mubr.f32.gmra.mrb[0].mxu0 %v3770
    %v3875 = vpop.f32.mrb[0].mxu0
    %v3876 = vadd.f32 %v3777, %v3875
    %v3877 = vpop.f32.mrb[0].mxu0
    %3878 = vmatprep.mubr.f32.mxu0 0.0
    %3879 = vmatmul.mubr.f32.gmra.mrb[0].mxu0 %v3771
    %v3880 = vpop.f32.mrb[0].mxu0
    %v3881 = vadd.f32 %v3777, %v3880
    %v3882 = vpop.f32.mrb[0].mxu0
    %3883 = vdwg.mxu0
    %3884 = vst [vmem:[#allocation17] sm:$0xff] %v3846
    %3885 = vst [vmem:[#allocation17 + $0x8] sm:$0xff] %v3851
    %3886 = vst [vmem:[#allocation17 + $0x10] sm:$0xff] %v3856
    %3887 = vst [vmem:[#allocation17 + $0x18] sm:$0xff] %v3861
    %3888 = vst [vmem:[#allocation17 + $0x20] sm:$0xff] %v3866
    %3889 = vst [vmem:[#allocation17 + $0x28] sm:$0xff] %v3871
    %3890 = vst [vmem:[#allocation17 + $0x30] sm:$0xff] %v3876
    %3891 = vst [vmem:[#allocation17 + $0x38] sm:$0xff] %v3881
    // Predicated region
    $region66: #{tpu_custom_call.1} parent=1 // pred_check
      _
    $region67: #{tpu_custom_call.1} parent=1 // pred_check_branch
      %3893 = sbr.rel (0) target = $region69
    $region68: #{tpu_custom_call.1} parent=1 // pred_region
      %s3895 = ssub.s32 1024, 1024
      %3896 = vsyncadd [#allocation8], %s3895
      %s3897 = sshll.u32 [#allocation17], 4
      %s3898 = int_to_ptr.vmem [resolvable:$true] %s3897
      %3903 = dma.vmem_to_hbm [thread:$0]  %s3898, 1024, %s9, [#allocation8], 128, 128, 8
    $region69: #{tpu_custom_call.1} parent=1 // pred_fallthru
      _
    // Predicated region
    $region70: #{tpu_custom_call.1} parent=1 // pred_check
      _
    $region71: #{tpu_custom_call.1} parent=1 // pred_check_branch
      %3905 = sbr.rel (0) target = $region73
    $region72: #{tpu_custom_call.1} parent=1 // pred_region
      %3906 = dma.done [#allocation8], 1024
    $region73: #{tpu_custom_call.1} parent=1 // pred_fallthru
      _
    %3907 = vsyncpa [#allocation7], 1
    %3908 = vsyncpa [#allocation10], 1
    %3909 = vsyncpa [#allocation13], 1
    %3910 = vsyncpa [#allocation16], 1
    %3911 = vsyncpa [#allocation8], 1

</llo_original>
